<compile_context>
chip_gen: v7x
topology: tpu7x:2x2x1
jax: 0.10.0
libtpu: 0.0.40
codegen_flags: <defaults>
</compile_context>

<pallas_src>
import jax
import jax.numpy as jnp
from jax.experimental import pallas as pl
from jax.experimental.pallas import tpu as pltpu


# ----------------------- InvConvNear -> effective CxC weight -----------------

def fold_invconv_weight(w, C, n_split):
    """Fold InvConvNear's (n_split, n_split) 1x1 conv + the surrounding group
    reshape/permutes into one (C, C) channel-mixing matrix:  z = W_eff @ x."""
    c_idx = jnp.arange(C)
    a = c_idx // (C // 2)            # which half
    rem = c_idx % (C // 2)
    q = rem // (n_split // 2)        # group index (C // n_split groups)
    r = rem % (n_split // 2)
    s = a * (n_split // 2) + r       # split-channel index inside the n_split conv
    same_group = (q[:, None] == q[None, :]).astype(w.dtype)
    return w[s[:, None], s[None, :]] * same_group


# ----------------------- fused per-block Pallas kernel -----------------------

def _make_block_kernel(*, n_layers, kernel_size, dilation_rate, hidden,
                       c_half, t_tile, halo, scr_pad, sigmoid_scale,
                       compute_dtype):
    half = (kernel_size - 1) // 2
    H = hidden
    Tt = t_tile
    Wp = Tt + 2 * halo                       # halo'd extent processed per step
    W_scr = Wp + 2 * scr_pad                 # + zero pad for the dilated taps

    def kernel(xl_ref, xc_ref, xr_ref, ml_ref, mc_ref, mr_ref,
               alogs_ref, abias_ref, weff_ref,
               ws_ref, bs_ref, win_ref, bin_ref, wrs_ref, brs_ref,
               we_ref, be_ref,
               z_ref, ld_ref, hpad_ref):
        mc = mc_ref[...]                                     # (1, Tt)  f32

        # ---- assemble the halo'd window from the neighbouring time tiles ----
        if halo > 0:
            j = pl.program_id(1)
            # halo beyond the true sequence ends must read zeros (torch zero-pad):
            # zeroing the MASK halo is enough, every downstream value is *mask'ed.
            lh = (j > 0).astype(jnp.float32)
            rh = (j < pl.num_programs(1) - 1).astype(jnp.float32)
            mp = jnp.concatenate(
                [ml_ref[...][:, Tt - halo:] * lh, mc, mr_ref[...][:, :halo] * rh],
                axis=1)                                      # (1, Wp)
            xp = jnp.concatenate(
                [xl_ref[...][:, Tt - halo:], xc_ref[...], xr_ref[...][:, :halo]],
                axis=1)                                      # (C, Wp)
        else:
            mp = mc
            xp = xc_ref[...]

        # ---- ActNorm (elementwise prologue, f32) ----
        y = (abias_ref[...] + jnp.exp(alogs_ref[...]) * xp) * mp

        # ---- InvConvNear folded to one channel-mixing matmul ----
        xin = jnp.dot(weff_ref[...], y,
                      preferred_element_type=jnp.float32) * mp        # (C, Wp)
        x0 = xin[:c_half, :]
        x1 = xin[c_half:, :]

        # ---- CouplingBlock: start 1x1 conv ----
        h = (jnp.dot(ws_ref[...], x0.astype(compute_dtype),
                     preferred_element_type=jnp.float32)
             + bs_ref[...]) * mp                                       # (H, Wp) f32

        # zero the tap padding once per step (borders are read-only zeros;
        # the centre is overwritten every layer below)
        hpad_ref[...] = jnp.zeros(hpad_ref.shape, hpad_ref.dtype)

        out_acc = jnp.zeros((H, Wp), jnp.float32)

        # ---- WaveNet layers: K dilated taps collapsed into ONE matmul/layer ----
        for i in range(n_layers):
            d = dilation_rate ** i
            # residual stream -> bf16, 128-lane-aligned centre of the scratch
            hpad_ref[:, scr_pad:scr_pad + Wp] = h.astype(compute_dtype)
            hp = hpad_ref[...]                                         # (H, W_scr) bf16
            taps = [hp[:, scr_pad + (k - half) * d: scr_pad + (k - half) * d + Wp]
                    for k in range(kernel_size)]
            slab = jnp.concatenate(taps, axis=0)                       # (K*H, Wp) bf16

            acts_pre = (jnp.dot(win_ref[i], slab,
                                preferred_element_type=jnp.float32)
                        + bin_ref[i])                                  # (2H, Wp) f32
            # fused_add_tanh_sigmoid_multiply (g = 0: gin_channels == 0), f32
            acts = (jnp.tanh(acts_pre[:H, :]) *
                    jax.nn.sigmoid(acts_pre[H:, :])).astype(compute_dtype)

            wrs_i = wrs_ref[i]                                         # (2H, H) bf16
            brs_i = brs_ref[i]                                         # (2H, 1) f32
            if i < n_layers - 1:
                rs = (jnp.dot(wrs_i, acts, preferred_element_type=jnp.float32)
                      + brs_i)                                         # (2H, Wp)
                h = (h + rs[:H, :]) * mp
                out_acc = out_acc + rs[H:, :]
            else:
                # torch's last WN layer has only the skip half -> (H,H) matmul
                skip = (jnp.dot(wrs_i[H:, :], acts,
                                preferred_element_type=jnp.float32)
                        + brs_i[H:, :])                                # (H, Wp)
                out_acc = out_acc + skip

        # ---- drop the halo; end 1x1 conv in f32 (logs fidelity) -> coupling ----
        out_c = out_acc[:, halo:halo + Tt] * mc                        # (H, Tt)
        out = jnp.dot(we_ref[...], out_c,
                      preferred_element_type=jnp.float32) + be_ref[...]  # (C, Tt)
        m_shift = out[:c_half, :]
        logs = out[c_half:, :]
        if sigmoid_scale:
            logs = jnp.log(1e-6 + jax.nn.sigmoid(logs + 2.0))
        x1_c = x1[:, halo:halo + Tt]
        z1 = (m_shift + jnp.exp(logs) * x1_c) * mc

        # single lane-dense full-tile store (sublane concat of the two halves)
        z_ref[...] = jnp.concatenate([x0[:, halo:halo + Tt], z1],
                                     axis=0).astype(z_ref.dtype)
        # per-(batch, time-tile) coupling logdet contribution
        ld_ref[...] = jnp.sum(logs * mc, axis=(0, 1), keepdims=True)

    return kernel


def flow_block_forward(x, x_mask, blk, hps, *, time_tile=128,
                       compute_dtype=jnp.bfloat16):
    """One fused flow block (ActNorm -> InvConvNear -> CouplingBlock), time-tiled.
    x: [B, C, T], x_mask: [B, 1, T].  Returns (z [B,C,T], coupling_logdet [B])."""
    B, C, T = x.shape
    c_half = C // 2
    cp = blk["coupling"]
    H = cp["w_start"].shape[0]
    n_layers = cp["w_in"].shape[0]
    K = hps["kernel_size"]
    assert K % 2 == 1, "odd kernel_size assumed (torch 'same' padding)"
    half = (K - 1) // 2
    dr = hps["dilation_rate"]

    # receptive-field half width of the whole WaveNet stack (halo per side)
    halo = half * sum(dr ** i for i in range(n_layers))
    # largest single-layer tap shift (zero pad needed around the scratch centre)
    p_max = half * dr ** (n_layers - 1)

    # time tile: lane-dense multiple of 128; production: 256/512 on v6e/v7x.
    Tt = time_tile
    if Tt > T or (T % Tt) != 0 or (Tt % 128) != 0 or halo >= Tt:
        Tt = T      # TODO(synk): pad T to a tile multiple instead of falling back
    n_t = T // Tt
    if n_t == 1:
        halo = 0    # single tile: the scratch zero pad IS the sequence pad

    scr_pad = max(128, -(-p_max // 128) * 128)   # lane-aligned centre store
    Wp = Tt + 2 * halo

    w_eff = fold_invconv_weight(blk["invconv"]["weight"], C, hps["n_split"])

    weights = [
        blk["actnorm"]["logs"], blk["actnorm"]["bias"], w_eff,
        cp["w_start"].astype(compute_dtype), cp["b_start"],
        cp["w_in"].astype(compute_dtype), cp["b_in"],
        cp["w_rs"].astype(compute_dtype), cp["b_rs"],
        cp["w_end"].astype(jnp.float32), cp["b_end"],   # end conv stays f32
    ]

    kern = _make_block_kernel(
        n_layers=n_layers, kernel_size=K, dilation_rate=dr, hidden=H,
        c_half=c_half, t_tile=Tt, halo=halo, scr_pad=scr_pad,
        sigmoid_scale=hps["sigmoid_scale"], compute_dtype=compute_dtype)

    def _full_spec(a):
        zeros = (0,) * a.ndim
        return pl.BlockSpec(a.shape, lambda b, j, _z=zeros: _z)

    t_left = lambda b, j: (b, 0, jnp.maximum(j - 1, 0))
    t_cent = lambda b, j: (b, 0, j)
    t_right = lambda b, j: (b, 0, jnp.minimum(j + 1, n_t - 1))

    in_specs = [
        pl.BlockSpec((None, C, Tt), t_left),    # x: previous time tile (halo)
        pl.BlockSpec((None, C, Tt), t_cent),    # x: centre tile
        pl.BlockSpec((None, C, Tt), t_right),   # x: next time tile (halo)
        pl.BlockSpec((None, 1, Tt), t_left),    # mask tiles
        pl.BlockSpec((None, 1, Tt), t_cent),
        pl.BlockSpec((None, 1, Tt), t_right),
    ] + [_full_spec(w) for w in weights]

    out_shapes = (
        jax.ShapeDtypeStruct((B, C, T), x.dtype),
        jax.ShapeDtypeStruct((B, n_t, 1, 1), jnp.float32),
    )
    out_specs = (
        pl.BlockSpec((None, C, Tt), lambda b, j: (b, 0, j)),
        pl.BlockSpec((None, None, 1, 1), lambda b, j: (b, j, 0, 0)),
    )

    z, ld = pl.pallas_call(
        kern,
        out_shape=out_shapes,
        grid=(B, n_t),
        in_specs=in_specs,
        out_specs=out_specs,
        scratch_shapes=[pltpu.VMEM((H, Wp + 2 * scr_pad), compute_dtype)],
        compiler_params=pltpu.CompilerParams(
            # batch x time tiles are fully independent -> shard across v7x's 2 TCs
            dimension_semantics=("parallel", "parallel"),
            # explicit budget; fits v7x's 64 MiB physical VMEM with headroom
            vmem_limit_bytes=48 * 1024 * 1024),
    )(x, x, x, x_mask, x_mask, x_mask, *weights)
    return z, jnp.sum(ld, axis=(1, 2, 3))


# ------------------------------- glue (JAX) ---------------------------------

def squeeze(x, x_mask, n_sqz):
    b, c, t = x.shape
    t = (t // n_sqz) * n_sqz
    x = x[:, :, :t]
    x_sqz = x.reshape(b, c, t // n_sqz, n_sqz)
    x_sqz = jnp.transpose(x_sqz, (0, 3, 1, 2)).reshape(b, c * n_sqz, t // n_sqz)
    x_mask = x_mask[:, :, n_sqz - 1::n_sqz]
    return x_sqz * x_mask, x_mask


def unsqueeze(x, x_mask, n_sqz):
    b, c, t = x.shape
    x_unsqz = x.reshape(b, n_sqz, c // n_sqz, t)
    x_unsqz = jnp.transpose(x_unsqz, (0, 2, 3, 1)).reshape(b, c // n_sqz, t * n_sqz)
    x_mask = jnp.repeat(x_mask[:, :, :, None], n_sqz, axis=3).reshape(b, 1, t * n_sqz)
    return x_unsqz * x_mask, x_mask


def flow_spec_decoder_forward(x, x_mask, params, hps, time_tile=128):
    """x: [B, in_channels, T], x_mask: [B, 1, T].  Returns (z, logdet_tot)."""
    n_sqz, n_split = hps["n_sqz"], hps["n_split"]
    if n_sqz > 1:
        x, x_mask = squeeze(x, x_mask, n_sqz)
    B, C, T = x.shape
    x_len = jnp.sum(x_mask, axis=(1, 2))                  # [B]
    logdet_tot = jnp.zeros((B,), jnp.float32)

    for blk in params["blocks"]:
        # scalar logdet contributions (host/XLA side, trivially cheap)
        logdet_tot = logdet_tot + jnp.sum(blk["actnorm"]["logs"]) * x_len
        # log|det|: QR init guarantees det > 0 (torch.logdet would NaN otherwise)
        _, logabsdet = jnp.linalg.slogdet(blk["invconv"]["weight"])
        logdet_tot = logdet_tot + logabsdet * (C / n_split) * x_len
        # fused ActNorm + InvConvNear + CouplingBlock Pallas kernel (time-tiled)
        x, ld = flow_block_forward(x, x_mask, blk, hps, time_tile=time_tile)
        logdet_tot = logdet_tot + ld

    if n_sqz > 1:
        x, x_mask = unsqueeze(x, x_mask, n_sqz)
    return x, logdet_tot


# ------------------------------ param init ----------------------------------

def init_params(key, hps):
    C = hps["in_channels"] * hps["n_sqz"]
    H = hps["hidden_channels"]
    K = hps["kernel_size"]
    ns = hps["n_split"]
    L = hps["n_layers"]
    c_half = C // 2
    blocks = []
    for _ in range(hps["n_blocks"]):
        key, *ks = jax.random.split(key, 12)
        actnorm = {
            "logs": 0.1 * jax.random.normal(ks[0], (C, 1), jnp.float32),
            "bias": 0.1 * jax.random.normal(ks[1], (C, 1), jnp.float32),
        }
        w = jax.random.normal(ks[2], (ns, ns), jnp.float32)
        q, _ = jnp.linalg.qr(w)
        sign = jnp.where(jnp.linalg.det(q) < 0, -1.0, 1.0)
        q = q.at[:, 0].set(q[:, 0] * sign)                 # det > 0
        invconv = {"weight": q}

        # dilated-conv weights packed k-major along the contraction axis
        w_in = 0.1 * jax.random.normal(ks[3], (L, 2 * H, K, H), jnp.float32)
        w_in = w_in.reshape(L, 2 * H, K * H)
        b_in = 0.01 * jax.random.normal(ks[4], (L, 2 * H, 1), jnp.float32)
        # res/skip 1x1 conv; rows [:H] of the LAST layer are never read
        # (torch's last WN layer only has the skip half)
        w_rs = 0.1 * jax.random.normal(ks[5], (L, 2 * H, H), jnp.float32)
        b_rs = 0.01 * jax.random.normal(ks[6], (L, 2 * H, 1), jnp.float32)
        coupling = {
            "w_start": 0.1 * jax.random.normal(ks[7], (H, c_half), jnp.float32),
            "b_start": 0.01 * jax.random.normal(ks[8], (H, 1), jnp.float32),
            "w_in": w_in, "b_in": b_in, "w_rs": w_rs, "b_rs": b_rs,
            # torch zero-inits `end`; random here so the demo is non-degenerate
            "w_end": 0.1 * jax.random.normal(ks[9], (C, H), jnp.float32),
            "b_end": 0.01 * jax.random.normal(ks[10], (C, 1), jnp.float32),
        }
        blocks.append({"actnorm": actnorm, "invconv": invconv, "coupling": coupling})
    return {"blocks": blocks}


# --------------------------------- main --------------------------------------

if __name__ == "__main__":
    hps = dict(in_channels=4, hidden_channels=32, kernel_size=5, dilation_rate=2,
               n_blocks=2, n_layers=3, p_dropout=0.0, n_split=4, n_sqz=2,
               sigmoid_scale=False, gin_channels=0)
    # T=512 -> after the n_sqz=2 squeeze: C=8, T=256 = two lane-dense 128 tiles.
    B, T = 2, 512
    key = jax.random.PRNGKey(0)
    kx, kp = jax.random.split(key)
    x = jax.random.normal(kx, (B, hps["in_channels"], T), jnp.float32)
    lengths = jnp.array([512, 391], jnp.int32)   # second sequence ends mid-tile
    x_mask = (jnp.arange(T)[None, None, :] < lengths[:, None, None]).astype(jnp.float32)

    params = init_params(kp, hps)
    fwd = jax.jit(lambda xx, mm, pp: flow_spec_decoder_forward(xx, mm, pp, hps))
    z, logdet = fwd(x, x_mask, params)
    jax.block_until_ready((z, logdet))
    assert z.shape == x.shape and logdet.shape == (B,)
    assert bool(jnp.all(jnp.isfinite(z))) and bool(jnp.all(jnp.isfinite(logdet)))
    print("KERNEL_OK")
</pallas_src>

<mosaic_0001>
module attributes {stable_mosaic.version = 11 : i64} {
  func.func @kernel(%arg0: i32, %arg1: i32, %arg2: memref<1x8x128xf32, #tpu.memory_space<vmem>>, %arg3: memref<1x8x128xf32, #tpu.memory_space<vmem>>, %arg4: memref<1x8x128xf32, #tpu.memory_space<vmem>>, %arg5: memref<1x1x128xf32, #tpu.memory_space<vmem>>, %arg6: memref<1x1x128xf32, #tpu.memory_space<vmem>>, %arg7: memref<1x1x128xf32, #tpu.memory_space<vmem>>, %arg8: memref<8x1xf32, #tpu.memory_space<vmem>>, %arg9: memref<8x1xf32, #tpu.memory_space<vmem>>, %arg10: memref<8x8xf32, #tpu.memory_space<vmem>>, %arg11: memref<32x4xbf16, #tpu.memory_space<vmem>>, %arg12: memref<32x1xf32, #tpu.memory_space<vmem>>, %arg13: memref<3x64x160xbf16, #tpu.memory_space<vmem>>, %arg14: memref<3x64x1xf32, #tpu.memory_space<vmem>>, %arg15: memref<3x64x32xbf16, #tpu.memory_space<vmem>>, %arg16: memref<3x64x1xf32, #tpu.memory_space<vmem>>, %arg17: memref<8x32xf32, #tpu.memory_space<vmem>>, %arg18: memref<8x1xf32, #tpu.memory_space<vmem>>, %arg19: memref<1x8x128xf32, #tpu.memory_space<vmem>>, %arg20: memref<1x1x1x1xf32, #tpu.memory_space<vmem>>, %arg21: memref<32x412xbf16, #tpu.memory_space<vmem>>) attributes {dimension_semantics = [#tpu.dimension_semantics<parallel>, #tpu.dimension_semantics<parallel>], iteration_bounds = array<i64: 2, 2>, scalar_prefetch = 0 : i64, scratch_operands = 1 : i64, tpu.core_type = #tpu.core_type<tc>, window_params = [{transform_indices = @transform_0, window_bounds = array<i64: 1, 8, 128>}, {transform_indices = @transform_1, window_bounds = array<i64: 1, 8, 128>}, {transform_indices = @transform_2, window_bounds = array<i64: 1, 8, 128>}, {transform_indices = @transform_3, window_bounds = array<i64: 1, 1, 128>}, {transform_indices = @transform_4, window_bounds = array<i64: 1, 1, 128>}, {transform_indices = @transform_5, window_bounds = array<i64: 1, 1, 128>}, {pipeline_mode = #tpu.pipeline_mode<synchronous>, transform_indices = @transform_6, window_bounds = array<i64: 8, 1>}, {pipeline_mode = #tpu.pipeline_mode<synchronous>, transform_indices = @transform_7, window_bounds = array<i64: 8, 1>}, {pipeline_mode = #tpu.pipeline_mode<synchronous>, transform_indices = @transform_8, window_bounds = array<i64: 8, 8>}, {pipeline_mode = #tpu.pipeline_mode<synchronous>, transform_indices = @transform_9, window_bounds = array<i64: 32, 4>}, {pipeline_mode = #tpu.pipeline_mode<synchronous>, transform_indices = @transform_10, window_bounds = array<i64: 32, 1>}, {pipeline_mode = #tpu.pipeline_mode<synchronous>, transform_indices = @transform_11, window_bounds = array<i64: 3, 64, 160>}, {pipeline_mode = #tpu.pipeline_mode<synchronous>, transform_indices = @transform_12, window_bounds = array<i64: 3, 64, 1>}, {pipeline_mode = #tpu.pipeline_mode<synchronous>, transform_indices = @transform_13, window_bounds = array<i64: 3, 64, 32>}, {pipeline_mode = #tpu.pipeline_mode<synchronous>, transform_indices = @transform_14, window_bounds = array<i64: 3, 64, 1>}, {pipeline_mode = #tpu.pipeline_mode<synchronous>, transform_indices = @transform_15, window_bounds = array<i64: 8, 32>}, {pipeline_mode = #tpu.pipeline_mode<synchronous>, transform_indices = @transform_16, window_bounds = array<i64: 8, 1>}, {transform_indices = @transform_17, window_bounds = array<i64: 1, 8, 128>}, {transform_indices = @transform_18, window_bounds = array<i64: 1, 1, 1, 1>}]} {
    %c0 = arith.constant 0 : index
    %c0_0 = arith.constant 0 : index
    %c0_1 = arith.constant 0 : index
    %0 = vector.load %arg6[%c0, %c0_0, %c0_1] : memref<1x1x128xf32, #tpu.memory_space<vmem>>, vector<1x1x128xf32>
    %1 = vector.shape_cast %0 : vector<1x1x128xf32> to vector<1x128xf32>
    %c0_i32 = arith.constant 0 : i32
    %2 = arith.cmpi sgt, %arg1, %c0_i32 : i32
    %3 = arith.extui %2 : i1 to i32
    %4 = arith.sitofp %3 : i32 to f32
    %c1_i32 = arith.constant 1 : i32
    %5 = arith.cmpi slt, %arg1, %c1_i32 : i32
    %6 = arith.extui %5 : i1 to i32
    %7 = arith.sitofp %6 : i32 to f32
    %c0_2 = arith.constant 0 : index
    %c0_3 = arith.constant 0 : index
    %c0_4 = arith.constant 0 : index
    %8 = vector.load %arg5[%c0_2, %c0_3, %c0_4] : memref<1x1x128xf32, #tpu.memory_space<vmem>>, vector<1x1x128xf32>
    %9 = vector.shape_cast %8 : vector<1x1x128xf32> to vector<1x128xf32>
    %10 = vector.extract_strided_slice %9 {offsets = [0, 114], sizes = [1, 14], strides = [1, 1]} : vector<1x128xf32> to vector<1x14xf32>
    %11 = vector.broadcast %4 : f32 to vector<1x14xf32>
    %12 = arith.mulf %10, %11 : vector<1x14xf32>
    %c0_5 = arith.constant 0 : index
    %c0_6 = arith.constant 0 : index
    %c0_7 = arith.constant 0 : index
    %13 = vector.load %arg7[%c0_5, %c0_6, %c0_7] : memref<1x1x128xf32, #tpu.memory_space<vmem>>, vector<1x1x128xf32>
    %14 = vector.shape_cast %13 : vector<1x1x128xf32> to vector<1x128xf32>
    %15 = vector.extract_strided_slice %14 {offsets = [0, 0], sizes = [1, 14], strides = [1, 1]} : vector<1x128xf32> to vector<1x14xf32>
    %16 = vector.broadcast %7 : f32 to vector<1x14xf32>
    %17 = arith.mulf %15, %16 : vector<1x14xf32>
    %18 = tpu.concatenate %12, %1, %17 in 1 : vector<1x14xf32>, vector<1x128xf32>, vector<1x14xf32> -> vector<1x156xf32>
    %c0_8 = arith.constant 0 : index
    %c0_9 = arith.constant 0 : index
    %c0_10 = arith.constant 0 : index
    %19 = vector.load %arg2[%c0_8, %c0_9, %c0_10] : memref<1x8x128xf32, #tpu.memory_space<vmem>>, vector<1x8x128xf32>
    %20 = vector.shape_cast %19 : vector<1x8x128xf32> to vector<8x128xf32>
    %21 = vector.extract_strided_slice %20 {offsets = [0, 114], sizes = [8, 14], strides = [1, 1]} : vector<8x128xf32> to vector<8x14xf32>
    %c0_11 = arith.constant 0 : index
    %c0_12 = arith.constant 0 : index
    %c0_13 = arith.constant 0 : index
    %22 = vector.load %arg3[%c0_11, %c0_12, %c0_13] : memref<1x8x128xf32, #tpu.memory_space<vmem>>, vector<1x8x128xf32>
    %23 = vector.shape_cast %22 : vector<1x8x128xf32> to vector<8x128xf32>
    %c0_14 = arith.constant 0 : index
    %c0_15 = arith.constant 0 : index
    %c0_16 = arith.constant 0 : index
    %24 = vector.load %arg4[%c0_14, %c0_15, %c0_16] : memref<1x8x128xf32, #tpu.memory_space<vmem>>, vector<1x8x128xf32>
    %25 = vector.shape_cast %24 : vector<1x8x128xf32> to vector<8x128xf32>
    %26 = vector.extract_strided_slice %25 {offsets = [0, 0], sizes = [8, 14], strides = [1, 1]} : vector<8x128xf32> to vector<8x14xf32>
    %27 = tpu.concatenate %21, %23, %26 in 1 : vector<8x14xf32>, vector<8x128xf32>, vector<8x14xf32> -> vector<8x156xf32>
    %c0_17 = arith.constant 0 : index
    %c0_18 = arith.constant 0 : index
    %28 = vector.load %arg9[%c0_17, %c0_18] : memref<8x1xf32, #tpu.memory_space<vmem>>, vector<8x1xf32>
    %c0_19 = arith.constant 0 : index
    %c0_20 = arith.constant 0 : index
    %29 = vector.load %arg8[%c0_19, %c0_20] : memref<8x1xf32, #tpu.memory_space<vmem>>, vector<8x1xf32>
    %30 = math.exp %29 : vector<8x1xf32>
    %31 = vector.broadcast %30 : vector<8x1xf32> to vector<8x156xf32>
    %32 = arith.mulf %31, %27 : vector<8x156xf32>
    %33 = vector.broadcast %28 : vector<8x1xf32> to vector<8x156xf32>
    %34 = arith.addf %33, %32 : vector<8x156xf32>
    %35 = vector.broadcast %18 : vector<1x156xf32> to vector<8x156xf32>
    %36 = arith.mulf %34, %35 : vector<8x156xf32>
    %c0_21 = arith.constant 0 : index
    %c0_22 = arith.constant 0 : index
    %37 = vector.load %arg10[%c0_21, %c0_22] : memref<8x8xf32, #tpu.memory_space<vmem>>, vector<8x8xf32>
    %cst = arith.constant dense<0.000000e+00> : vector<8x156xf32>
    %38 = tpu.matmul %37, %36, %cst {dimension_numbers = #tpu.dot_dimension_numbers<[1], [0], [0], [1], [0, 0, 1, 1], [], []>} : vector<8x8xf32>, vector<8x156xf32>, vector<8x156xf32> -> vector<8x156xf32>
    %39 = vector.broadcast %18 : vector<1x156xf32> to vector<8x156xf32>
    %40 = arith.mulf %38, %39 : vector<8x156xf32>
    %41 = vector.extract_strided_slice %40 {offsets = [0, 0], sizes = [4, 156], strides = [1, 1]} : vector<8x156xf32> to vector<4x156xf32>
    %42 = vector.extract_strided_slice %40 {offsets = [4, 0], sizes = [4, 156], strides = [1, 1]} : vector<8x156xf32> to vector<4x156xf32>
    %c0_23 = arith.constant 0 : index
    %c0_24 = arith.constant 0 : index
    %43 = vector.load %arg11[%c0_23, %c0_24] : memref<32x4xbf16, #tpu.memory_space<vmem>>, vector<32x4xbf16>
    %44 = arith.truncf %41 : vector<4x156xf32> to vector<4x156xbf16>
    %cst_25 = arith.constant dense<0.000000e+00> : vector<32x156xf32>
    %45 = tpu.matmul %43, %44, %cst_25 {dimension_numbers = #tpu.dot_dimension_numbers<[1], [0], [0], [1], [0, 0, 1, 1], [], []>} : vector<32x4xbf16>, vector<4x156xbf16>, vector<32x156xf32> -> vector<32x156xf32>
    %c0_26 = arith.constant 0 : index
    %c0_27 = arith.constant 0 : index
    %46 = vector.load %arg12[%c0_26, %c0_27] : memref<32x1xf32, #tpu.memory_space<vmem>>, vector<32x1xf32>
    %47 = vector.broadcast %46 : vector<32x1xf32> to vector<32x156xf32>
    %48 = arith.addf %45, %47 : vector<32x156xf32>
    %49 = vector.broadcast %18 : vector<1x156xf32> to vector<32x156xf32>
    %50 = arith.mulf %48, %49 : vector<32x156xf32>
    %cst_28 = arith.constant 0.000000e+00 : bf16
    %51 = vector.broadcast %cst_28 : bf16 to vector<32x412xbf16>
    %c0_29 = arith.constant 0 : index
    %c0_30 = arith.constant 0 : index
    %52 = vector.load %arg21[%c0_29, %c0_30] : memref<32x412xbf16, #tpu.memory_space<vmem>>, vector<32x412xbf16>
    tpu.vector_store %arg21[%c0_29, %c0_30], %51 {strides = array<i32>} : memref<32x412xbf16, #tpu.memory_space<vmem>>, vector<32x412xbf16>,
    %cst_31 = arith.constant 0.000000e+00 : f32
    %53 = vector.broadcast %cst_31 : f32 to vector<32x156xf32>
    %54 = arith.truncf %50 : vector<32x156xf32> to vector<32x156xbf16>
    %c0_32 = arith.constant 0 : index
    %c128 = arith.constant 128 : index
    %55 = vector.load %arg21[%c0_32, %c128] : memref<32x412xbf16, #tpu.memory_space<vmem>>, vector<32x156xbf16>
    tpu.vector_store %arg21[%c0_32, %c128], %54 {strides = array<i32>} : memref<32x412xbf16, #tpu.memory_space<vmem>>, vector<32x156xbf16>,
    %c0_33 = arith.constant 0 : index
    %c0_34 = arith.constant 0 : index
    %56 = vector.load %arg21[%c0_33, %c0_34] : memref<32x412xbf16, #tpu.memory_space<vmem>>, vector<32x412xbf16>
    %57 = vector.extract_strided_slice %56 {offsets = [0, 126], sizes = [32, 156], strides = [1, 1]} : vector<32x412xbf16> to vector<32x156xbf16>
    %58 = vector.extract_strided_slice %56 {offsets = [0, 127], sizes = [32, 156], strides = [1, 1]} : vector<32x412xbf16> to vector<32x156xbf16>
    %59 = vector.extract_strided_slice %56 {offsets = [0, 128], sizes = [32, 156], strides = [1, 1]} : vector<32x412xbf16> to vector<32x156xbf16>
    %60 = vector.extract_strided_slice %56 {offsets = [0, 129], sizes = [32, 156], strides = [1, 1]} : vector<32x412xbf16> to vector<32x156xbf16>
    %61 = vector.extract_strided_slice %56 {offsets = [0, 130], sizes = [32, 156], strides = [1, 1]} : vector<32x412xbf16> to vector<32x156xbf16>
    %62 = tpu.concatenate %57, %58, %59, %60, %61 in 0 : vector<32x156xbf16>, vector<32x156xbf16>, vector<32x156xbf16>, vector<32x156xbf16>, vector<32x156xbf16> -> vector<160x156xbf16>
    %c0_35 = arith.constant 0 : index
    %c0_36 = arith.constant 0 : index
    %c0_37 = arith.constant 0 : index
    %63 = vector.load %arg13[%c0_35, %c0_36, %c0_37] : memref<3x64x160xbf16, #tpu.memory_space<vmem>>, vector<1x64x160xbf16>
    %64 = vector.shape_cast %63 : vector<1x64x160xbf16> to vector<64x160xbf16>
    %cst_38 = arith.constant dense<0.000000e+00> : vector<64x156xf32>
    %65 = tpu.matmul %64, %62, %cst_38 {dimension_numbers = #tpu.dot_dimension_numbers<[1], [0], [0], [1], [0, 0, 1, 1], [], []>} : vector<64x160xbf16>, vector<160x156xbf16>, vector<64x156xf32> -> vector<64x156xf32>
    %c0_39 = arith.constant 0 : index
    %c0_40 = arith.constant 0 : index
    %c0_41 = arith.constant 0 : index
    %66 = vector.load %arg14[%c0_39, %c0_40, %c0_41] : memref<3x64x1xf32, #tpu.memory_space<vmem>>, vector<1x64x1xf32>
    %67 = vector.shape_cast %66 : vector<1x64x1xf32> to vector<64x1xf32>
    %68 = vector.broadcast %67 : vector<64x1xf32> to vector<64x156xf32>
    %69 = arith.addf %65, %68 : vector<64x156xf32>
    %70 = vector.extract_strided_slice %69 {offsets = [0, 0], sizes = [32, 156], strides = [1, 1]} : vector<64x156xf32> to vector<32x156xf32>
    %71 = math.tanh %70 : vector<32x156xf32>
    %72 = vector.extract_strided_slice %69 {offsets = [32, 0], sizes = [32, 156], strides = [1, 1]} : vector<64x156xf32> to vector<32x156xf32>
    %73 = arith.negf %72 : vector<32x156xf32>
    %74 = math.exp %73 : vector<32x156xf32>
    %cst_42 = arith.constant 1.000000e+00 : f32
    %75 = vector.broadcast %cst_42 : f32 to vector<32x156xf32>
    %76 = arith.addf %75, %74 : vector<32x156xf32>
    %77 = arith.divf %75, %76 : vector<32x156xf32>
    %78 = arith.mulf %71, %77 : vector<32x156xf32>
    %79 = arith.truncf %78 : vector<32x156xf32> to vector<32x156xbf16>
    %c0_43 = arith.constant 0 : index
    %c0_44 = arith.constant 0 : index
    %c0_45 = arith.constant 0 : index
    %80 = vector.load %arg15[%c0_43, %c0_44, %c0_45] : memref<3x64x32xbf16, #tpu.memory_space<vmem>>, vector<1x64x32xbf16>
    %81 = vector.shape_cast %80 : vector<1x64x32xbf16> to vector<64x32xbf16>
    %c0_46 = arith.constant 0 : index
    %c0_47 = arith.constant 0 : index
    %c0_48 = arith.constant 0 : index
    %82 = vector.load %arg16[%c0_46, %c0_47, %c0_48] : memref<3x64x1xf32, #tpu.memory_space<vmem>>, vector<1x64x1xf32>
    %83 = vector.shape_cast %82 : vector<1x64x1xf32> to vector<64x1xf32>
    %cst_49 = arith.constant dense<0.000000e+00> : vector<64x156xf32>
    %84 = tpu.matmul %81, %79, %cst_49 {dimension_numbers = #tpu.dot_dimension_numbers<[1], [0], [0], [1], [0, 0, 1, 1], [], []>} : vector<64x32xbf16>, vector<32x156xbf16>, vector<64x156xf32> -> vector<64x156xf32>
    %85 = vector.broadcast %83 : vector<64x1xf32> to vector<64x156xf32>
    %86 = arith.addf %84, %85 : vector<64x156xf32>
    %87 = vector.extract_strided_slice %86 {offsets = [0, 0], sizes = [32, 156], strides = [1, 1]} : vector<64x156xf32> to vector<32x156xf32>
    %88 = arith.addf %50, %87 : vector<32x156xf32>
    %89 = vector.broadcast %18 : vector<1x156xf32> to vector<32x156xf32>
    %90 = arith.mulf %88, %89 : vector<32x156xf32>
    %91 = vector.extract_strided_slice %86 {offsets = [32, 0], sizes = [32, 156], strides = [1, 1]} : vector<64x156xf32> to vector<32x156xf32>
    %92 = arith.addf %53, %91 : vector<32x156xf32>
    %93 = arith.truncf %90 : vector<32x156xf32> to vector<32x156xbf16>
    %c0_50 = arith.constant 0 : index
    %c128_51 = arith.constant 128 : index
    %94 = vector.load %arg21[%c0_50, %c128_51] : memref<32x412xbf16, #tpu.memory_space<vmem>>, vector<32x156xbf16>
    tpu.vector_store %arg21[%c0_50, %c128_51], %93 {strides = array<i32>} : memref<32x412xbf16, #tpu.memory_space<vmem>>, vector<32x156xbf16>,
    %c0_52 = arith.constant 0 : index
    %c0_53 = arith.constant 0 : index
    %95 = vector.load %arg21[%c0_52, %c0_53] : memref<32x412xbf16, #tpu.memory_space<vmem>>, vector<32x412xbf16>
    %96 = vector.extract_strided_slice %95 {offsets = [0, 124], sizes = [32, 156], strides = [1, 1]} : vector<32x412xbf16> to vector<32x156xbf16>
    %97 = vector.extract_strided_slice %95 {offsets = [0, 126], sizes = [32, 156], strides = [1, 1]} : vector<32x412xbf16> to vector<32x156xbf16>
    %98 = vector.extract_strided_slice %95 {offsets = [0, 128], sizes = [32, 156], strides = [1, 1]} : vector<32x412xbf16> to vector<32x156xbf16>
    %99 = vector.extract_strided_slice %95 {offsets = [0, 130], sizes = [32, 156], strides = [1, 1]} : vector<32x412xbf16> to vector<32x156xbf16>
    %100 = vector.extract_strided_slice %95 {offsets = [0, 132], sizes = [32, 156], strides = [1, 1]} : vector<32x412xbf16> to vector<32x156xbf16>
    %101 = tpu.concatenate %96, %97, %98, %99, %100 in 0 : vector<32x156xbf16>, vector<32x156xbf16>, vector<32x156xbf16>, vector<32x156xbf16>, vector<32x156xbf16> -> vector<160x156xbf16>
    %c1 = arith.constant 1 : index
    %c0_54 = arith.constant 0 : index
    %c0_55 = arith.constant 0 : index
    %102 = vector.load %arg13[%c1, %c0_54, %c0_55] : memref<3x64x160xbf16, #tpu.memory_space<vmem>>, vector<1x64x160xbf16>
    %103 = vector.shape_cast %102 : vector<1x64x160xbf16> to vector<64x160xbf16>
    %cst_56 = arith.constant dense<0.000000e+00> : vector<64x156xf32>
    %104 = tpu.matmul %103, %101, %cst_56 {dimension_numbers = #tpu.dot_dimension_numbers<[1], [0], [0], [1], [0, 0, 1, 1], [], []>} : vector<64x160xbf16>, vector<160x156xbf16>, vector<64x156xf32> -> vector<64x156xf32>
    %c1_57 = arith.constant 1 : index
    %c0_58 = arith.constant 0 : index
    %c0_59 = arith.constant 0 : index
    %105 = vector.load %arg14[%c1_57, %c0_58, %c0_59] : memref<3x64x1xf32, #tpu.memory_space<vmem>>, vector<1x64x1xf32>
    %106 = vector.shape_cast %105 : vector<1x64x1xf32> to vector<64x1xf32>
    %107 = vector.broadcast %106 : vector<64x1xf32> to vector<64x156xf32>
    %108 = arith.addf %104, %107 : vector<64x156xf32>
    %109 = vector.extract_strided_slice %108 {offsets = [0, 0], sizes = [32, 156], strides = [1, 1]} : vector<64x156xf32> to vector<32x156xf32>
    %110 = math.tanh %109 : vector<32x156xf32>
    %111 = vector.extract_strided_slice %108 {offsets = [32, 0], sizes = [32, 156], strides = [1, 1]} : vector<64x156xf32> to vector<32x156xf32>
    %112 = arith.negf %111 : vector<32x156xf32>
    %113 = math.exp %112 : vector<32x156xf32>
    %cst_60 = arith.constant 1.000000e+00 : f32
    %114 = vector.broadcast %cst_60 : f32 to vector<32x156xf32>
    %115 = arith.addf %114, %113 : vector<32x156xf32>
    %116 = arith.divf %114, %115 : vector<32x156xf32>
    %117 = arith.mulf %110, %116 : vector<32x156xf32>
    %118 = arith.truncf %117 : vector<32x156xf32> to vector<32x156xbf16>
    %c1_61 = arith.constant 1 : index
    %c0_62 = arith.constant 0 : index
    %c0_63 = arith.constant 0 : index
    %119 = vector.load %arg15[%c1_61, %c0_62, %c0_63] : memref<3x64x32xbf16, #tpu.memory_space<vmem>>, vector<1x64x32xbf16>
    %120 = vector.shape_cast %119 : vector<1x64x32xbf16> to vector<64x32xbf16>
    %c1_64 = arith.constant 1 : index
    %c0_65 = arith.constant 0 : index
    %c0_66 = arith.constant 0 : index
    %121 = vector.load %arg16[%c1_64, %c0_65, %c0_66] : memref<3x64x1xf32, #tpu.memory_space<vmem>>, vector<1x64x1xf32>
    %122 = vector.shape_cast %121 : vector<1x64x1xf32> to vector<64x1xf32>
    %cst_67 = arith.constant dense<0.000000e+00> : vector<64x156xf32>
    %123 = tpu.matmul %120, %118, %cst_67 {dimension_numbers = #tpu.dot_dimension_numbers<[1], [0], [0], [1], [0, 0, 1, 1], [], []>} : vector<64x32xbf16>, vector<32x156xbf16>, vector<64x156xf32> -> vector<64x156xf32>
    %124 = vector.broadcast %122 : vector<64x1xf32> to vector<64x156xf32>
    %125 = arith.addf %123, %124 : vector<64x156xf32>
    %126 = vector.extract_strided_slice %125 {offsets = [0, 0], sizes = [32, 156], strides = [1, 1]} : vector<64x156xf32> to vector<32x156xf32>
    %127 = arith.addf %90, %126 : vector<32x156xf32>
    %128 = vector.broadcast %18 : vector<1x156xf32> to vector<32x156xf32>
    %129 = arith.mulf %127, %128 : vector<32x156xf32>
    %130 = vector.extract_strided_slice %125 {offsets = [32, 0], sizes = [32, 156], strides = [1, 1]} : vector<64x156xf32> to vector<32x156xf32>
    %131 = arith.addf %92, %130 : vector<32x156xf32>
    %132 = arith.truncf %129 : vector<32x156xf32> to vector<32x156xbf16>
    %c0_68 = arith.constant 0 : index
    %c128_69 = arith.constant 128 : index
    %133 = vector.load %arg21[%c0_68, %c128_69] : memref<32x412xbf16, #tpu.memory_space<vmem>>, vector<32x156xbf16>
    tpu.vector_store %arg21[%c0_68, %c128_69], %132 {strides = array<i32>} : memref<32x412xbf16, #tpu.memory_space<vmem>>, vector<32x156xbf16>,
    %c0_70 = arith.constant 0 : index
    %c0_71 = arith.constant 0 : index
    %134 = vector.load %arg21[%c0_70, %c0_71] : memref<32x412xbf16, #tpu.memory_space<vmem>>, vector<32x412xbf16>
    %135 = vector.extract_strided_slice %134 {offsets = [0, 120], sizes = [32, 156], strides = [1, 1]} : vector<32x412xbf16> to vector<32x156xbf16>
    %136 = vector.extract_strided_slice %134 {offsets = [0, 124], sizes = [32, 156], strides = [1, 1]} : vector<32x412xbf16> to vector<32x156xbf16>
    %137 = vector.extract_strided_slice %134 {offsets = [0, 128], sizes = [32, 156], strides = [1, 1]} : vector<32x412xbf16> to vector<32x156xbf16>
    %138 = vector.extract_strided_slice %134 {offsets = [0, 132], sizes = [32, 156], strides = [1, 1]} : vector<32x412xbf16> to vector<32x156xbf16>
    %139 = vector.extract_strided_slice %134 {offsets = [0, 136], sizes = [32, 156], strides = [1, 1]} : vector<32x412xbf16> to vector<32x156xbf16>
    %140 = tpu.concatenate %135, %136, %137, %138, %139 in 0 : vector<32x156xbf16>, vector<32x156xbf16>, vector<32x156xbf16>, vector<32x156xbf16>, vector<32x156xbf16> -> vector<160x156xbf16>
    %c2 = arith.constant 2 : index
    %c0_72 = arith.constant 0 : index
    %c0_73 = arith.constant 0 : index
    %141 = vector.load %arg13[%c2, %c0_72, %c0_73] : memref<3x64x160xbf16, #tpu.memory_space<vmem>>, vector<1x64x160xbf16>
    %142 = vector.shape_cast %141 : vector<1x64x160xbf16> to vector<64x160xbf16>
    %cst_74 = arith.constant dense<0.000000e+00> : vector<64x156xf32>
    %143 = tpu.matmul %142, %140, %cst_74 {dimension_numbers = #tpu.dot_dimension_numbers<[1], [0], [0], [1], [0, 0, 1, 1], [], []>} : vector<64x160xbf16>, vector<160x156xbf16>, vector<64x156xf32> -> vector<64x156xf32>
    %c2_75 = arith.constant 2 : index
    %c0_76 = arith.constant 0 : index
    %c0_77 = arith.constant 0 : index
    %144 = vector.load %arg14[%c2_75, %c0_76, %c0_77] : memref<3x64x1xf32, #tpu.memory_space<vmem>>, vector<1x64x1xf32>
    %145 = vector.shape_cast %144 : vector<1x64x1xf32> to vector<64x1xf32>
    %146 = vector.broadcast %145 : vector<64x1xf32> to vector<64x156xf32>
    %147 = arith.addf %143, %146 : vector<64x156xf32>
    %148 = vector.extract_strided_slice %147 {offsets = [0, 0], sizes = [32, 156], strides = [1, 1]} : vector<64x156xf32> to vector<32x156xf32>
    %149 = math.tanh %148 : vector<32x156xf32>
    %150 = vector.extract_strided_slice %147 {offsets = [32, 0], sizes = [32, 156], strides = [1, 1]} : vector<64x156xf32> to vector<32x156xf32>
    %151 = arith.negf %150 : vector<32x156xf32>
    %152 = math.exp %151 : vector<32x156xf32>
    %cst_78 = arith.constant 1.000000e+00 : f32
    %153 = vector.broadcast %cst_78 : f32 to vector<32x156xf32>
    %154 = arith.addf %153, %152 : vector<32x156xf32>
    %155 = arith.divf %153, %154 : vector<32x156xf32>
    %156 = arith.mulf %149, %155 : vector<32x156xf32>
    %157 = arith.truncf %156 : vector<32x156xf32> to vector<32x156xbf16>
    %c2_79 = arith.constant 2 : index
    %c0_80 = arith.constant 0 : index
    %c0_81 = arith.constant 0 : index
    %158 = vector.load %arg15[%c2_79, %c0_80, %c0_81] : memref<3x64x32xbf16, #tpu.memory_space<vmem>>, vector<1x64x32xbf16>
    %159 = vector.shape_cast %158 : vector<1x64x32xbf16> to vector<64x32xbf16>
    %c2_82 = arith.constant 2 : index
    %c0_83 = arith.constant 0 : index
    %c0_84 = arith.constant 0 : index
    %160 = vector.load %arg16[%c2_82, %c0_83, %c0_84] : memref<3x64x1xf32, #tpu.memory_space<vmem>>, vector<1x64x1xf32>
    %161 = vector.shape_cast %160 : vector<1x64x1xf32> to vector<64x1xf32>
    %162 = vector.extract_strided_slice %159 {offsets = [32, 0], sizes = [32, 32], strides = [1, 1]} : vector<64x32xbf16> to vector<32x32xbf16>
    %cst_85 = arith.constant dense<0.000000e+00> : vector<32x156xf32>
    %163 = tpu.matmul %162, %157, %cst_85 {dimension_numbers = #tpu.dot_dimension_numbers<[1], [0], [0], [1], [0, 0, 1, 1], [], []>} : vector<32x32xbf16>, vector<32x156xbf16>, vector<32x156xf32> -> vector<32x156xf32>
    %164 = vector.extract_strided_slice %161 {offsets = [32, 0], sizes = [32, 1], strides = [1, 1]} : vector<64x1xf32> to vector<32x1xf32>
    %165 = vector.broadcast %164 : vector<32x1xf32> to vector<32x156xf32>
    %166 = arith.addf %163, %165 : vector<32x156xf32>
    %167 = arith.addf %131, %166 : vector<32x156xf32>
    %168 = vector.extract_strided_slice %167 {offsets = [0, 14], sizes = [32, 128], strides = [1, 1]} : vector<32x156xf32> to vector<32x128xf32>
    %169 = vector.broadcast %1 : vector<1x128xf32> to vector<32x128xf32>
    %170 = arith.mulf %168, %169 : vector<32x128xf32>
    %c0_86 = arith.constant 0 : index
    %c0_87 = arith.constant 0 : index
    %171 = vector.load %arg17[%c0_86, %c0_87] : memref<8x32xf32, #tpu.memory_space<vmem>>, vector<8x32xf32>
    %cst_88 = arith.constant dense<0.000000e+00> : vector<8x128xf32>
    %172 = tpu.matmul %171, %170, %cst_88 {dimension_numbers = #tpu.dot_dimension_numbers<[1], [0], [0], [1], [0, 0, 1, 1], [], []>} : vector<8x32xf32>, vector<32x128xf32>, vector<8x128xf32> -> vector<8x128xf32>
    %c0_89 = arith.constant 0 : index
    %c0_90 = arith.constant 0 : index
    %173 = vector.load %arg18[%c0_89, %c0_90] : memref<8x1xf32, #tpu.memory_space<vmem>>, vector<8x1xf32>
    %174 = vector.broadcast %173 : vector<8x1xf32> to vector<8x128xf32>
    %175 = arith.addf %172, %174 : vector<8x128xf32>
    %176 = vector.extract_strided_slice %175 {offsets = [0, 0], sizes = [4, 128], strides = [1, 1]} : vector<8x128xf32> to vector<4x128xf32>
    %177 = vector.extract_strided_slice %175 {offsets = [4, 0], sizes = [4, 128], strides = [1, 1]} : vector<8x128xf32> to vector<4x128xf32>
    %178 = vector.extract_strided_slice %42 {offsets = [0, 14], sizes = [4, 128], strides = [1, 1]} : vector<4x156xf32> to vector<4x128xf32>
    %179 = math.exp %177 : vector<4x128xf32>
    %180 = arith.mulf %179, %178 : vector<4x128xf32>
    %181 = arith.addf %176, %180 : vector<4x128xf32>
    %182 = vector.broadcast %1 : vector<1x128xf32> to vector<4x128xf32>
    %183 = arith.mulf %181, %182 : vector<4x128xf32>
    %184 = vector.extract_strided_slice %41 {offsets = [0, 14], sizes = [4, 128], strides = [1, 1]} : vector<4x156xf32> to vector<4x128xf32>
    %185 = tpu.concatenate %184, %183 in 0 : vector<4x128xf32>, vector<4x128xf32> -> vector<8x128xf32>
    %c0_91 = arith.constant 0 : index
    %c0_92 = arith.constant 0 : index
    %c0_93 = arith.constant 0 : index
    %186 = vector.load %arg19[%c0_91, %c0_92, %c0_93] : memref<1x8x128xf32, #tpu.memory_space<vmem>>, vector<1x8x128xf32>
    %187 = vector.shape_cast %186 : vector<1x8x128xf32> to vector<8x128xf32>
    %188 = vector.shape_cast %185 : vector<8x128xf32> to vector<1x8x128xf32>
    tpu.vector_store %arg19[%c0_91, %c0_92, %c0_93], %188 {strides = array<i32>} : memref<1x8x128xf32, #tpu.memory_space<vmem>>, vector<1x8x128xf32>,
    %189 = vector.broadcast %1 : vector<1x128xf32> to vector<4x128xf32>
    %190 = arith.mulf %177, %189 : vector<4x128xf32>
    %191 = vector.shape_cast %190 : vector<4x128xf32> to vector<1x4x128xf32>
    %cst_94 = arith.constant dense<0.000000e+00> : vector<1xf32>
    %192 = vector.multi_reduction <add>, %191, %cst_94 [1, 2] : vector<1x4x128xf32> to vector<1xf32>
    %193 = vector.shape_cast %192 : vector<1xf32> to vector<1x1x1xf32>
    %194 = vector.extract %193[0, 0, 0] : f32 from vector<1x1x1xf32>
    %195 = vector.broadcast %194 : f32 to vector<1x1xf32>
    %c0_95 = arith.constant 0 : index
    %c0_96 = arith.constant 0 : index
    %c0_97 = arith.constant 0 : index
    %c0_98 = arith.constant 0 : index
    %196 = vector.load %arg20[%c0_95, %c0_96, %c0_97, %c0_98] : memref<1x1x1x1xf32, #tpu.memory_space<vmem>>, vector<1x1x1x1xf32>
    %197 = vector.shape_cast %196 : vector<1x1x1x1xf32> to vector<1x1xf32>
    %198 = vector.shape_cast %195 : vector<1x1xf32> to vector<1x1x1x1xf32>
    tpu.vector_store %arg20[%c0_95, %c0_96, %c0_97, %c0_98], %198 {strides = array<i32>} : memref<1x1x1x1xf32, #tpu.memory_space<vmem>>, vector<1x1x1x1xf32>,
    return
  }
  func.func @transform_0(%arg0: i32, %arg1: i32) -> (i32, i32, i32) {
    %c1_i32 = arith.constant 1 : i32
    %0 = arith.subi %arg1, %c1_i32 : i32
    %c0_i32 = arith.constant 0 : i32
    %1 = arith.maxsi %0, %c0_i32 : i32
    %c0_i32_0 = arith.constant 0 : i32
    %c0_i32_1 = arith.constant 0 : i32
    return %arg0, %c0_i32_0, %1 : i32, i32, i32
  }
  func.func @transform_1(%arg0: i32, %arg1: i32) -> (i32, i32, i32) {
    %c0_i32 = arith.constant 0 : i32
    %c0_i32_0 = arith.constant 0 : i32
    return %arg0, %c0_i32, %arg1 : i32, i32, i32
  }
  func.func @transform_2(%arg0: i32, %arg1: i32) -> (i32, i32, i32) {
    %c1_i32 = arith.constant 1 : i32
    %0 = arith.addi %arg1, %c1_i32 : i32
    %c1_i32_0 = arith.constant 1 : i32
    %1 = arith.minsi %0, %c1_i32_0 : i32
    %c0_i32 = arith.constant 0 : i32
    %c0_i32_1 = arith.constant 0 : i32
    return %arg0, %c0_i32, %1 : i32, i32, i32
  }
  func.func @transform_3(%arg0: i32, %arg1: i32) -> (i32, i32, i32) {
    %c1_i32 = arith.constant 1 : i32
    %0 = arith.subi %arg1, %c1_i32 : i32
    %c0_i32 = arith.constant 0 : i32
    %1 = arith.maxsi %0, %c0_i32 : i32
    %c0_i32_0 = arith.constant 0 : i32
    %c0_i32_1 = arith.constant 0 : i32
    return %arg0, %c0_i32_0, %1 : i32, i32, i32
  }
  func.func @transform_4(%arg0: i32, %arg1: i32) -> (i32, i32, i32) {
    %c0_i32 = arith.constant 0 : i32
    %c0_i32_0 = arith.constant 0 : i32
    return %arg0, %c0_i32, %arg1 : i32, i32, i32
  }
  func.func @transform_5(%arg0: i32, %arg1: i32) -> (i32, i32, i32) {
    %c1_i32 = arith.constant 1 : i32
    %0 = arith.addi %arg1, %c1_i32 : i32
    %c1_i32_0 = arith.constant 1 : i32
    %1 = arith.minsi %0, %c1_i32_0 : i32
    %c0_i32 = arith.constant 0 : i32
    %c0_i32_1 = arith.constant 0 : i32
    return %arg0, %c0_i32, %1 : i32, i32, i32
  }
  func.func @transform_6(%arg0: i32, %arg1: i32) -> (i32, i32) {
    %c0_i32 = arith.constant 0 : i32
    %c0_i32_0 = arith.constant 0 : i32
    %c0_i32_1 = arith.constant 0 : i32
    return %c0_i32, %c0_i32_0 : i32, i32
  }
  func.func @transform_7(%arg0: i32, %arg1: i32) -> (i32, i32) {
    %c0_i32 = arith.constant 0 : i32
    %c0_i32_0 = arith.constant 0 : i32
    %c0_i32_1 = arith.constant 0 : i32
    return %c0_i32, %c0_i32_0 : i32, i32
  }
  func.func @transform_8(%arg0: i32, %arg1: i32) -> (i32, i32) {
    %c0_i32 = arith.constant 0 : i32
    %c0_i32_0 = arith.constant 0 : i32
    %c0_i32_1 = arith.constant 0 : i32
    return %c0_i32, %c0_i32_0 : i32, i32
  }
  func.func @transform_9(%arg0: i32, %arg1: i32) -> (i32, i32) {
    %c0_i32 = arith.constant 0 : i32
    %c0_i32_0 = arith.constant 0 : i32
    %c0_i32_1 = arith.constant 0 : i32
    return %c0_i32, %c0_i32_0 : i32, i32
  }
  func.func @transform_10(%arg0: i32, %arg1: i32) -> (i32, i32) {
    %c0_i32 = arith.constant 0 : i32
    %c0_i32_0 = arith.constant 0 : i32
    %c0_i32_1 = arith.constant 0 : i32
    return %c0_i32, %c0_i32_0 : i32, i32
  }
  func.func @transform_11(%arg0: i32, %arg1: i32) -> (i32, i32, i32) {
    %c0_i32 = arith.constant 0 : i32
    %c0_i32_0 = arith.constant 0 : i32
    %c0_i32_1 = arith.constant 0 : i32
    %c0_i32_2 = arith.constant 0 : i32
    return %c0_i32, %c0_i32_0, %c0_i32_1 : i32, i32, i32
  }
  func.func @transform_12(%arg0: i32, %arg1: i32) -> (i32, i32, i32) {
    %c0_i32 = arith.constant 0 : i32
    %c0_i32_0 = arith.constant 0 : i32
    %c0_i32_1 = arith.constant 0 : i32
    %c0_i32_2 = arith.constant 0 : i32
    return %c0_i32, %c0_i32_0, %c0_i32_1 : i32, i32, i32
  }
  func.func @transform_13(%arg0: i32, %arg1: i32) -> (i32, i32, i32) {
    %c0_i32 = arith.constant 0 : i32
    %c0_i32_0 = arith.constant 0 : i32
    %c0_i32_1 = arith.constant 0 : i32
    %c0_i32_2 = arith.constant 0 : i32
    return %c0_i32, %c0_i32_0, %c0_i32_1 : i32, i32, i32
  }
  func.func @transform_14(%arg0: i32, %arg1: i32) -> (i32, i32, i32) {
    %c0_i32 = arith.constant 0 : i32
    %c0_i32_0 = arith.constant 0 : i32
    %c0_i32_1 = arith.constant 0 : i32
    %c0_i32_2 = arith.constant 0 : i32
    return %c0_i32, %c0_i32_0, %c0_i32_1 : i32, i32, i32
  }
  func.func @transform_15(%arg0: i32, %arg1: i32) -> (i32, i32) {
    %c0_i32 = arith.constant 0 : i32
    %c0_i32_0 = arith.constant 0 : i32
    %c0_i32_1 = arith.constant 0 : i32
    return %c0_i32, %c0_i32_0 : i32, i32
  }
  func.func @transform_16(%arg0: i32, %arg1: i32) -> (i32, i32) {
    %c0_i32 = arith.constant 0 : i32
    %c0_i32_0 = arith.constant 0 : i32
    %c0_i32_1 = arith.constant 0 : i32
    return %c0_i32, %c0_i32_0 : i32, i32
  }
  func.func @transform_17(%arg0: i32, %arg1: i32) -> (i32, i32, i32) {
    %c0_i32 = arith.constant 0 : i32
    %c0_i32_0 = arith.constant 0 : i32
    return %arg0, %c0_i32, %arg1 : i32, i32, i32
  }
  func.func @transform_18(%arg0: i32, %arg1: i32) -> (i32, i32, i32, i32) {
    %c0_i32 = arith.constant 0 : i32
    %c0_i32_0 = arith.constant 0 : i32
    %c0_i32_1 = arith.constant 0 : i32
    return %arg0, %arg1, %c0_i32, %c0_i32_0 : i32, i32, i32, i32
  }
}

</mosaic_0001>

<llo_original>
// kernel: custom-call.11
$region0: #{custom-call.11}
  %s0 = inlined_call_operand.vmem [shape: f32[4,4], index: 0, kind: input, shape index: {}]
  %s1 = inlined_call_operand.vmem [shape: f32[4,4], index: 1, kind: output, shape index: {0}]
  %s2 = inlined_call_operand.hbm [shape: s32[4], index: 2, kind: output, shape index: {1}]
  %s3 = inlined_call_operand.hbm [shape: s32[4], index: 3, kind: output, shape index: {2}]
  %4 = xla_tuple %s1, %s2, %s3
  $region1: #{custom-call.11} parent=0
    #allocation0 [shape = 'u8[4096]{0}', space=vmem, size = 0x1000, scoped, tag = 'operand span for operand 0']
    #allocation1 [shape = 'u8[2048]{0}', space=vmem, size = 0x800, scoped, tag = 'packed  for operand 0']
    #allocation2 [shape = 'u8[4096]{0}', space=vmem, size = 0x1000, scoped, tag = 'operand span for operand 1']
    #allocation3 [shape = 'u8[2048]{0}', space=vmem, size = 0x800, scoped, tag = 'packed  for operand 1']
    #allocation4 [shape = 'u8[4096]{0}', space=vmem, size = 0x1000, scoped, tag = 'operand span for operand 2']
    #allocation5 [shape = 'u8[512]{0}', space=vmem, size = 0x400, scoped, tag = 'packed  for operand 2']
    #allocation6 [shape = 's32[1]{0}', space=sflag, size = 0x4, scoped, tag = 'scoped memory for custom-call.11']
    #allocation7 [shape = 'u8[4096]{0}', space=vmem, size = 0x1000, scoped, tag = 'operand span for operand 3']
    #allocation8 [shape = 'u8[512]{0}', space=vmem, size = 0x400, scoped, tag = 'packed  for operand 3']
    #allocation9 [shape = 's32[1]{0}', space=sflag, size = 0x4, scoped, tag = 'scoped memory for custom-call.11']
    #allocation10 [shape = 's32[4,128]{1,0}', space=vmem, size = 0x1000, scoped, tag = 'scratch for permutations']
    %5 = vsyncpa [#allocation6], 0
    %6 = vsyncpa [#allocation9], 0
    %p8 = scmp.gt.s32.totalorder 4, 0
    // Predicated region
    $region2: #{custom-call.11} parent=1 // pred_check
      %p9 = pneg %p8
    $region3: #{custom-call.11} parent=1 // pred_check_branch
      %11 = sbr.rel (%p9) target = $region5
    $region4: #{custom-call.11} parent=1 // pred_region
      %s12 = sshra.s32 4, 3
      %p13 = scmp.gt.s32.totalorder %s12, 0
      // Predicated region
      $region6: #{custom-call.11} parent=4 // pred_check
        %p14 = pneg %p13
      $region7: #{custom-call.11} parent=4 // pred_check_branch
        %16 = sbr.rel (%p14) target = $region9
      $region8: #{custom-call.11} parent=4 // pred_region
        %s17 = ssub.s32 %s12, 1
        %s18 = smul.u32 %s17, 128
        %s19 = sshra.s32 %s18, 4
        %s20 = scalar_lea.vmem %s0, %s19
        %v21 = vld [vmem:[%s0] sm:$0xff]
        // While loop
        $region10: #{custom-call.11} parent=8 // loop_pre_header
          _
        $region11: #{custom-call.11} parent=8 // loop_header
          %s22 = sphi %s0, %s44
          %s23 = sphi [#allocation1], %s45
          %v24 = vphi %v21, %v46
          %s25 = ssub.s32 %s20, 64
          %p26 = scmp.gt.s32.totalorder %s22, %s25
        $region12: #{custom-call.11} parent=8 // loop_header_branch
          %28 = sbr.rel (%p26) target = $region16
        $region13: #{custom-call.11} parent=8 // loop_body
          %29 = vst [vmem:[%s23] sm:$0xff] %v24
          %v30 = vld [vmem:[%s22 + $0x8] sm:$0xff]
          %31 = vst [vmem:[%s23 + $0x8] sm:$0xff] %v30
          %v32 = vld [vmem:[%s22 + $0x10] sm:$0xff]
          %33 = vst [vmem:[%s23 + $0x10] sm:$0xff] %v32
          %v34 = vld [vmem:[%s22 + $0x18] sm:$0xff]
          %35 = vst [vmem:[%s23 + $0x18] sm:$0xff] %v34
          %v36 = vld [vmem:[%s22 + $0x20] sm:$0xff]
          %37 = vst [vmem:[%s23 + $0x20] sm:$0xff] %v36
          %v38 = vld [vmem:[%s22 + $0x28] sm:$0xff]
          %39 = vst [vmem:[%s23 + $0x28] sm:$0xff] %v38
          %v40 = vld [vmem:[%s22 + $0x30] sm:$0xff]
          %41 = vst [vmem:[%s23 + $0x30] sm:$0xff] %v40
          %v42 = vld [vmem:[%s22 + $0x38] sm:$0xff]
          %43 = vst [vmem:[%s23 + $0x38] sm:$0xff] %v42
        $region14: #{custom-call.11} parent=8 // loop_footer
          %s44 = scalar_lea.vmem %s22, 64
          %s45 = scalar_lea.vmem %s23, 64
          %v46 = vld [vmem:[%s22 + $0x40] sm:$0xff]
        $region15: #{custom-call.11} parent=8 // loop_footer_branch
          %47 = sbr.rel target = $region11
        $region16: #{custom-call.11} parent=8 // loop_exit
          _
        // While loop
        $region17: #{custom-call.11} parent=8 // loop_pre_header
          _
        $region18: #{custom-call.11} parent=8 // loop_header
          %s48 = sphi %s22, %s56
          %s49 = sphi %s23, %s57
          %v50 = vphi %v24, %v50
          %p51 = scmp.gt.s32.totalorder %s48, %s20
        $region19: #{custom-call.11} parent=8 // loop_header_branch
          %53 = sbr.rel (%p51) target = $region23
        $region20: #{custom-call.11} parent=8 // loop_body
          %v54 = vld [vmem:[%s48] sm:$0xff]
          %55 = vst [vmem:[%s49] sm:$0xff] %v54
        $region21: #{custom-call.11} parent=8 // loop_footer
          %s56 = scalar_lea.vmem %s48, 8
          %s57 = scalar_lea.vmem %s49, 8
        $region22: #{custom-call.11} parent=8 // loop_footer_branch
          %58 = sbr.rel target = $region18
        $region23: #{custom-call.11} parent=8 // loop_exit
          _
      $region9: #{custom-call.11} parent=4 // pred_fallthru
        _
      %s59 = sand.u32 4, 7
      %s60 = sshllo.u32 0, %s59
      %s61 = smul.u32 %s12, 128
      %s62 = sshra.s32 %s61, 4
      %s63 = scalar_lea.vmem [#allocation1], %s62
      %s64 = smul.u32 %s12, 128
      %s65 = sshra.s32 %s64, 4
      %s66 = scalar_lea.vmem %s0, %s65
      %v67 = vld [vmem:[%s66] sm:%s60]
      %68 = vst [vmem:[%s63] sm:%s60] %v67
    $region5: #{custom-call.11} parent=1 // pred_fallthru
      _
    %s70 = sshllo.u32 0, 4
    %v71 = vld [vmem:[#allocation1] sm:%s70]
    %72 = vst [vmem:[#allocation0] sm:%s70] %v71
    %v73 = vld [vmem:[#allocation0] sm:$0xff]
    %74 = vst [vmem:[#allocation2] sm:$0xff] %v73
    %75 = vst [vmem:[#allocation4] sm:$0x1] 0
    %v76 = vlaneseq
    %v77 = vshrl.u32 %v76, 7
    %v78 = vmov %v77
    %80 = vst [vmem:[#allocation10] sm:$0xff] %v78
    loop: start=0, step=1, limit=4
    $region25: #{custom-call.11} parent=1 // loop_pre_header
      _
    $region26: #{custom-call.11} parent=1 // loop_header
      %s82 = sphi 0, %s86
      %p83 = scmp.ge.s32.totalorder %s82, 4
    $region27: #{custom-call.11} parent=1 // loop_header_branch
      %85 = sbr.rel (%p83) target = $region31
    $region28: #{custom-call.11} parent=1 // loop_body
      %v87 = vstv %s82
      %v88 = vlaneseq
      %v89 = vshrl.u32 %v88, 7
      %v90 = vmov %v89
      %v91 = vld [vmem:[#allocation2] sm:$0xff]
      %v92 = vand.u32 2147483647, %v91
      %v94 = vstv %s82
      %vm95 = vcmp.ge.s32.totalorder %v90, %v94
      %vm96 = vcmp.lt.s32.totalorder %v90, 4
      %vm97 = vmand %vm95, %vm96
      %vm98 = vcmp.lt.f32.partialorder -inf, %v92
      %vm99 = vmand %vm97, %vm98
      %v100 = vsel %vm99, %v90, %v87
      %v101 = vsel %vm99, %v92, -inf
      %v102 = vrot.slane %v101, 1
      %v103 = vrot.slane %v100, 1
      %vm104 = vcmp.ge.f32.partialorder %v102, %v101
      %v105 = vsel %vm104, %v102, %v101
      %v106 = vsel %vm104, %v103, %v100
      %v107 = vrot.slane %v102, 1
      %v108 = vrot.slane %v103, 1
      %vm109 = vcmp.ge.f32.partialorder %v107, %v105
      %v110 = vsel %vm109, %v107, %v105
      %v111 = vsel %vm109, %v108, %v106
      %v112 = vrot.slane %v107, 1
      %v113 = vrot.slane %v108, 1
      %vm114 = vcmp.ge.f32.partialorder %v112, %v110
      %v115 = vsel %vm114, %v112, %v110
      %v116 = vsel %vm114, %v113, %v111
      %v117 = vrot.slane %v112, 1
      %v118 = vrot.slane %v113, 1
      %vm119 = vcmp.ge.f32.partialorder %v117, %v115
      %v120 = vsel %vm119, %v117, %v115
      %v121 = vsel %vm119, %v118, %v116
      %v122 = vrot.slane %v117, 1
      %v123 = vrot.slane %v118, 1
      %vm124 = vcmp.ge.f32.partialorder %v122, %v120
      %v125 = vsel %vm124, %v122, %v120
      %v126 = vsel %vm124, %v123, %v121
      %v127 = vrot.slane %v122, 1
      %v128 = vrot.slane %v123, 1
      %vm129 = vcmp.ge.f32.partialorder %v127, %v125
      %v130 = vsel %vm129, %v127, %v125
      %v131 = vsel %vm129, %v128, %v126
      %v132 = vrot.slane %v127, 1
      %v133 = vrot.slane %v128, 1
      %vm134 = vcmp.ge.f32.partialorder %v132, %v130
      %v135 = vsel %vm134, %v132, %v130
      %v136 = vsel %vm134, %v133, %v131
      %s137 = ssub.s32 128, %s82
      %138 = vrot.lane.b32.xlu0 %v136, %s137
      %v139 = vpop.permute.xlu0 %138
      %s140 = vtos %v139
      %v141 = vstv %s82
      %v142 = vlaneseq
      %v143 = vand.u32 %v142, 127
      %vm144 = vcmp.eq.s32.totalorder %v143, %v141
      %v145 = vstv %s140
      %v146 = vld [vmem:[#allocation4] ss:$0 sm:$0xff]
      %v147 = vsel %vm144, %v145, %v146
      %148 = vst [vmem:[#allocation4] sm:$0x1] %v147
      %s149 = scalar_lea.vmem [#allocation2], %s82
      %s150 = scalar_lea.vmem [#allocation2], %s140
      %v151 = vld [vmem:[%s149] ss:$0 sm:$0xff]
      %v152 = vld [vmem:[%s150] ss:$0 sm:$0xff]
      %153 = vst [vmem:[%s150] sm:$0x1] %v151
      %154 = vst [vmem:[%s149] sm:$0x1] %v152
      %s155 = scalar_lea.vmem [#allocation10], %s82
      %s156 = scalar_lea.vmem [#allocation10], %s140
      %v157 = vld [vmem:[%s155] ss:$0 sm:$0xff]
      %v158 = vld [vmem:[%s156] ss:$0 sm:$0xff]
      %159 = vst [vmem:[%s156] sm:$0x1] %v157
      %160 = vst [vmem:[%s155] sm:$0x1] %v158
      %vm161 = vcmp.ne.f32.partialorder %v152, 0.0
      %vm162 = vmand %vm144, %vm161
      %v163 = vsel %vm162, %v152, 1.0
      %v164 = vlaneseq
      %v165 = vand.u32 %v164, 127
      %v166 = vstv %s82
      %vm167 = vcmp.gt.s32.totalorder %v165, %v166
      %v168 = vsel %vm167, %v152, 0.0
      %v169 = vlaneseq
      %v170 = vshrl.u32 %v169, 7
      %v171 = vmov %v170
      %v172 = vld [vmem:[#allocation2] sm:$0xff]
      %v174 = vstv %s82
      %vm175 = vcmp.gt.s32.totalorder %v171, %v174
      %v176 = vsel %vm175, %v163, 1.0
      %v177 = vrcp.pop %v176
      %v178 = vmul.f32 %v172, %v177
      %vm179 = vmand %vm175, %vm144
      %v180 = vsel %vm179, %v178, 0.0
      %181 = vadd.xlane.f32.xlu0 %v180
      %v182 = vpop.xlane.xlu0 %181
      %v183 = vmul.f32 %v182, %v168
      %v184 = vsub.f32 %v178, %v183
      %185 = vst [vmem:[#allocation2] sm:$0xff] %v184
    $region29: #{custom-call.11} parent=1 // loop_footer
      %s86 = sadd.s32 1, %s82
    $region30: #{custom-call.11} parent=1 // loop_footer_branch
      %81 = sbr.rel target = $region26
    $region31: #{custom-call.11} parent=1 // loop_exit
      _
    %v186 = vld [vmem:[#allocation10] sm:$0xff]
    %s187 = scalar_lea.vmem [#allocation10], 8
    %s188 = scalar_lea.vmem [#allocation10], 16
    %s189 = scalar_lea.vmem [#allocation10], 24
    %s190 = scalar_lea.vmem [#allocation10], 32
    %s191 = scalar_lea.vmem [#allocation10], 40
    %s192 = scalar_lea.vmem [#allocation10], 48
    %s193 = scalar_lea.vmem [#allocation10], 56
    %s194 = scalar_lea.vmem [#allocation10], 64
    %s195 = scalar_lea.vmem [#allocation10], 72
    %s196 = scalar_lea.vmem [#allocation10], 80
    %s197 = scalar_lea.vmem [#allocation10], 88
    %s198 = scalar_lea.vmem [#allocation10], 96
    %s199 = scalar_lea.vmem [#allocation10], 104
    %s200 = scalar_lea.vmem [#allocation10], 112
    %s201 = scalar_lea.vmem [#allocation10], 120
    %202 = vxpose.xlu0.b32.start [1/16] %v186, 128
    %203 = vxpose.xlu0.b32.cont [2/16] 0, 128
    %204 = vxpose.xlu0.b32.cont [3/16] 0, 128
    %205 = vxpose.xlu0.b32.cont [4/16] 0, 128
    %206 = vxpose.xlu0.b32.cont [5/16] 0, 128
    %207 = vxpose.xlu0.b32.cont [6/16] 0, 128
    %208 = vxpose.xlu0.b32.cont [7/16] 0, 128
    %209 = vxpose.xlu0.b32.cont [8/16] 0, 128
    %210 = vxpose.xlu0.b32.cont [9/16] 0, 128
    %211 = vxpose.xlu0.b32.cont [10/16] 0, 128
    %212 = vxpose.xlu0.b32.cont [11/16] 0, 128
    %213 = vxpose.xlu0.b32.cont [12/16] 0, 128
    %214 = vxpose.xlu0.b32.cont [13/16] 0, 128
    %215 = vxpose.xlu0.b32.cont [14/16] 0, 128
    %216 = vxpose.xlu0.b32.cont [15/16] 0, 128
    %217 = vxpose.xlu0.b32.end [16/16] 0, 128
    %v218 = vpop.trf.xlu0
    %v219 = vpop.trf.xlu0
    %v220 = vpop.trf.xlu0
    %v221 = vpop.trf.xlu0
    %v222 = vpop.trf.xlu0
    %v223 = vpop.trf.xlu0
    %v224 = vpop.trf.xlu0
    %v225 = vpop.trf.xlu0
    %v226 = vpop.trf.xlu0
    %v227 = vpop.trf.xlu0
    %v228 = vpop.trf.xlu0
    %v229 = vpop.trf.xlu0
    %v230 = vpop.trf.xlu0
    %v231 = vpop.trf.xlu0
    %v232 = vpop.trf.xlu0
    %v233 = vpop.trf.xlu0
    %234 = vst [vmem:[#allocation7] sm:$0x1] %v218
    %s236 = sshllo.u32 0, 4
    %v238 = vld [vmem:[#allocation2] sm:%s236]
    %s239 = sshllo.u32 0, 4
    %240 = vst [vmem:[#allocation3] sm:%s239] %v238
    %s242 = sshllo.u32 0, 1
    %v244 = vld [vmem:[#allocation4] sm:%s242]
    %s245 = sshllo.u32 0, 1
    %246 = vst [vmem:[#allocation5] sm:%s245] %v244
    %s248 = sshllo.u32 0, 1
    %v250 = vld [vmem:[#allocation7] sm:%s248]
    %s251 = sshllo.u32 0, 1
    %252 = vst [vmem:[#allocation8] sm:%s251] %v250
    %p254 = scmp.gt.s32.totalorder 4, 0
    // Predicated region
    $region32: #{custom-call.11} parent=1 // pred_check
      %p255 = pneg %p254
    $region33: #{custom-call.11} parent=1 // pred_check_branch
      %257 = sbr.rel (%p255) target = $region35
    $region34: #{custom-call.11} parent=1 // pred_region
      %s258 = sshra.s32 4, 3
      %p259 = scmp.gt.s32.totalorder %s258, 0
      // Predicated region
      $region36: #{custom-call.11} parent=34 // pred_check
        %p260 = pneg %p259
      $region37: #{custom-call.11} parent=34 // pred_check_branch
        %262 = sbr.rel (%p260) target = $region39
      $region38: #{custom-call.11} parent=34 // pred_region
        %s263 = ssub.s32 %s258, 1
        %s264 = smul.u32 %s263, 128
        %s265 = sshra.s32 %s264, 4
        %s266 = scalar_lea.vmem [#allocation3], %s265
        %v267 = vld [vmem:[#allocation3] sm:$0xff]
        // While loop
        $region40: #{custom-call.11} parent=38 // loop_pre_header
          _
        $region41: #{custom-call.11} parent=38 // loop_header
          %s268 = sphi [#allocation3], %s290
          %s269 = sphi %s1, %s291
          %v270 = vphi %v267, %v292
          %s271 = ssub.s32 %s266, 64
          %p272 = scmp.gt.s32.totalorder %s268, %s271
        $region42: #{custom-call.11} parent=38 // loop_header_branch
          %274 = sbr.rel (%p272) target = $region46
        $region43: #{custom-call.11} parent=38 // loop_body
          %275 = vst [vmem:[%s269] sm:$0xff] %v270
          %v276 = vld [vmem:[%s268 + $0x8] sm:$0xff]
          %277 = vst [vmem:[%s269 + $0x8] sm:$0xff] %v276
          %v278 = vld [vmem:[%s268 + $0x10] sm:$0xff]
          %279 = vst [vmem:[%s269 + $0x10] sm:$0xff] %v278
          %v280 = vld [vmem:[%s268 + $0x18] sm:$0xff]
          %281 = vst [vmem:[%s269 + $0x18] sm:$0xff] %v280
          %v282 = vld [vmem:[%s268 + $0x20] sm:$0xff]
          %283 = vst [vmem:[%s269 + $0x20] sm:$0xff] %v282
          %v284 = vld [vmem:[%s268 + $0x28] sm:$0xff]
          %285 = vst [vmem:[%s269 + $0x28] sm:$0xff] %v284
          %v286 = vld [vmem:[%s268 + $0x30] sm:$0xff]
          %287 = vst [vmem:[%s269 + $0x30] sm:$0xff] %v286
          %v288 = vld [vmem:[%s268 + $0x38] sm:$0xff]
          %289 = vst [vmem:[%s269 + $0x38] sm:$0xff] %v288
        $region44: #{custom-call.11} parent=38 // loop_footer
          %s290 = scalar_lea.vmem %s268, 64
          %s291 = scalar_lea.vmem %s269, 64
          %v292 = vld [vmem:[%s268 + $0x40] sm:$0xff]
        $region45: #{custom-call.11} parent=38 // loop_footer_branch
          %293 = sbr.rel target = $region41
        $region46: #{custom-call.11} parent=38 // loop_exit
          _
        // While loop
        $region47: #{custom-call.11} parent=38 // loop_pre_header
          _
        $region48: #{custom-call.11} parent=38 // loop_header
          %s294 = sphi %s268, %s302
          %s295 = sphi %s269, %s303
          %v296 = vphi %v270, %v296
          %p297 = scmp.gt.s32.totalorder %s294, %s266
        $region49: #{custom-call.11} parent=38 // loop_header_branch
          %299 = sbr.rel (%p297) target = $region53
        $region50: #{custom-call.11} parent=38 // loop_body
          %v300 = vld [vmem:[%s294] sm:$0xff]
          %301 = vst [vmem:[%s295] sm:$0xff] %v300
        $region51: #{custom-call.11} parent=38 // loop_footer
          %s302 = scalar_lea.vmem %s294, 8
          %s303 = scalar_lea.vmem %s295, 8
        $region52: #{custom-call.11} parent=38 // loop_footer_branch
          %304 = sbr.rel target = $region48
        $region53: #{custom-call.11} parent=38 // loop_exit
          _
      $region39: #{custom-call.11} parent=34 // pred_fallthru
        _
      %s305 = sand.u32 4, 7
      %s306 = sshllo.u32 0, %s305
      %s307 = smul.u32 %s258, 128
      %s308 = sshra.s32 %s307, 4
      %s309 = scalar_lea.vmem %s1, %s308
      %s310 = smul.u32 %s258, 128
      %s311 = sshra.s32 %s310, 4
      %s312 = scalar_lea.vmem [#allocation3], %s311
      %v313 = vld [vmem:[%s312] sm:%s306]
      %314 = vst [vmem:[%s309] sm:%s306] %v313
    $region35: #{custom-call.11} parent=1 // pred_fallthru
      _
    // Predicated region
    $region54: #{custom-call.11} parent=1 // pred_check
      _
    $region55: #{custom-call.11} parent=1 // pred_check_branch
      %316 = sbr.rel (0) target = $region57
    $region56: #{custom-call.11} parent=1 // pred_region
      %s318 = ssub.s32 16, 16
      %319 = vsyncadd [#allocation6], %s318
      %s320 = sshll.u32 [#allocation5], 4
      %s321 = int_to_ptr.vmem [resolvable:$true] %s320
      %323 = dma.vmem_to_hbm [thread:$0]  %s321, 16, %s2, [#allocation6]
    $region57: #{custom-call.11} parent=1 // pred_fallthru
      _
    // Predicated region
    $region58: #{custom-call.11} parent=1 // pred_check
      _
    $region59: #{custom-call.11} parent=1 // pred_check_branch
      %325 = sbr.rel (0) target = $region61
    $region60: #{custom-call.11} parent=1 // pred_region
      %s327 = ssub.s32 16, 16
      %328 = vsyncadd [#allocation9], %s327
      %s329 = sshll.u32 [#allocation8], 4
      %s330 = int_to_ptr.vmem [resolvable:$true] %s329
      %332 = dma.vmem_to_hbm [thread:$0]  %s330, 16, %s3, [#allocation9]
    $region61: #{custom-call.11} parent=1 // pred_fallthru
      _
    // Predicated region
    $region62: #{custom-call.11} parent=1 // pred_check
      _
    $region63: #{custom-call.11} parent=1 // pred_check_branch
      %334 = sbr.rel (0) target = $region65
    $region64: #{custom-call.11} parent=1 // pred_region
      %335 = dma.done [#allocation6], 16
    $region65: #{custom-call.11} parent=1 // pred_fallthru
      _
    // Predicated region
    $region66: #{custom-call.11} parent=1 // pred_check
      _
    $region67: #{custom-call.11} parent=1 // pred_check_branch
      %337 = sbr.rel (0) target = $region69
    $region68: #{custom-call.11} parent=1 // pred_region
      %338 = dma.done [#allocation9], 16
    $region69: #{custom-call.11} parent=1 // pred_fallthru
      _
    %339 = vsyncpa [#allocation6], 1
    %340 = vsyncpa [#allocation9], 1

// kernel: mul.41
$region0: #{mul.41}
  %s0 = inlined_call_operand.vmem [shape: f32[2,256,1,2], index: 0, kind: input, shape index: {}]
  %s1 = inlined_call_operand.vmem [shape: f32[2,512], index: 1, kind: output, shape index: {}]
  $region1: #{mul.41} parent=0
    #allocation0 [shape = 'u8[16384]{0}', space=vmem, size = 0x4000, scoped, tag = 'scoped mem for output reshape']
    %v2 = vld [vmem:[%s0] sm:$0x1]
    %s3 = scalar_lea.vmem %s0, 63
    %v4 = vld [vmem:[%s3] sm:$0x2]
    %vm5 = vcmask 1041409
    %v6 = vsel %vm5, %v4, %v2
    %s7 = scalar_lea.vmem %s0, 126
    %v8 = vld [vmem:[%s7] sm:$0x4]
    %vm9 = vcmask 1042434
    %v10 = vsel %vm9, %v8, %v6
    %s11 = scalar_lea.vmem %s0, 189
    %v12 = vld [vmem:[%s11] sm:$0x8]
    %vm13 = vcmask 1043459
    %v14 = vsel %vm13, %v12, %v10
    %s15 = scalar_lea.vmem %s0, 252
    %v16 = vld [vmem:[%s15] sm:$0x10]
    %vm17 = vcmask 1044484
    %v18 = vsel %vm17, %v16, %v14
    %s19 = scalar_lea.vmem %s0, 315
    %v20 = vld [vmem:[%s19] sm:$0x20]
    %vm21 = vcmask 1045509
    %v22 = vsel %vm21, %v20, %v18
    %s23 = scalar_lea.vmem %s0, 378
    %v24 = vld [vmem:[%s23] sm:$0x40]
    %vm25 = vcmask 1046534
    %v26 = vsel %vm25, %v24, %v22
    %s27 = scalar_lea.vmem %s0, 441
    %v28 = vld [vmem:[%s27] sm:$0x80]
    %vm29 = vcmask 1047559
    %v30 = vsel %vm29, %v28, %v26
    %vm31 = vcmask 15360
    %32 = vst.msk [vmem:[#allocation0] ss:$8 sm:$0xf] %vm31, %v30
    %s33 = scalar_lea.vmem [#allocation0], 4294967265
    %34 = vst.msk [vmem:[%s33] ss:$8 sm:$0xf0] %vm31, %v30
    %s35 = scalar_lea.vmem %s0, 63
    %v36 = vld [vmem:[%s35] sm:$0x1]
    %s37 = scalar_lea.vmem %s0, 318
    %v38 = vld [vmem:[%s37] sm:$0x2]
    %vm39 = vcmask 1041409
    %v40 = vsel %vm39, %v38, %v36
    %s41 = scalar_lea.vmem %s0, 125
    %v42 = vld [vmem:[%s41] sm:$0x4]
    %vm43 = vcmask 1042434
    %v44 = vsel %vm43, %v42, %v40
    %s45 = scalar_lea.vmem %s0, 380
    %v46 = vld [vmem:[%s45] sm:$0x8]
    %vm47 = vcmask 1043459
    %v48 = vsel %vm47, %v46, %v44
    %s49 = scalar_lea.vmem %s0, 187
    %v50 = vld [vmem:[%s49] sm:$0x10]
    %vm51 = vcmask 1044484
    %v52 = vsel %vm51, %v50, %v48
    %s53 = scalar_lea.vmem %s0, 442
    %v54 = vld [vmem:[%s53] sm:$0x20]
    %vm55 = vcmask 1045509
    %v56 = vsel %vm55, %v54, %v52
    %s57 = scalar_lea.vmem %s0, 249
    %v58 = vld [vmem:[%s57] sm:$0x40]
    %vm59 = vcmask 1046534
    %v60 = vsel %vm59, %v58, %v56
    %s61 = scalar_lea.vmem %s0, 504
    %v62 = vld [vmem:[%s61] sm:$0x80]
    %vm63 = vcmask 1047559
    %v64 = vsel %vm63, %v62, %v60
    %65 = vrot.lane.b32.xlu0 %v64, 126
    %v66 = vpop.permute.xlu0 %65
    %vm67 = vcmask 1048560
    %68 = vst.msk [vmem:[#allocation0] sm:$0x3] %vm67, %v66
    %s69 = scalar_lea.vmem [#allocation0], 6
    %70 = vst.msk [vmem:[%s69] sm:$0xc] %vm67, %v66
    %s71 = scalar_lea.vmem [#allocation0], 12
    %72 = vst.msk [vmem:[%s71] sm:$0x30] %vm67, %v66
    %s73 = scalar_lea.vmem [#allocation0], 18
    %74 = vst.msk [vmem:[%s73] sm:$0xc0] %vm67, %v66
    %s75 = scalar_lea.vmem %s0, 62
    %v76 = vld [vmem:[%s75] sm:$0x1]
    %s77 = scalar_lea.vmem %s0, 317
    %v78 = vld [vmem:[%s77] sm:$0x2]
    %vm79 = vcmask 1041409
    %v80 = vsel %vm79, %v78, %v76
    %s81 = scalar_lea.vmem %s0, 124
    %v82 = vld [vmem:[%s81] sm:$0x4]
    %vm83 = vcmask 1042434
    %v84 = vsel %vm83, %v82, %v80
    %s85 = scalar_lea.vmem %s0, 379
    %v86 = vld [vmem:[%s85] sm:$0x8]
    %vm87 = vcmask 1043459
    %v88 = vsel %vm87, %v86, %v84
    %s89 = scalar_lea.vmem %s0, 186
    %v90 = vld [vmem:[%s89] sm:$0x10]
    %vm91 = vcmask 1044484
    %v92 = vsel %vm91, %v90, %v88
    %s93 = scalar_lea.vmem %s0, 441
    %v94 = vld [vmem:[%s93] sm:$0x20]
    %vm95 = vcmask 1045509
    %v96 = vsel %vm95, %v94, %v92
    %s97 = scalar_lea.vmem %s0, 248
    %v98 = vld [vmem:[%s97] sm:$0x40]
    %vm99 = vcmask 1046534
    %v100 = vsel %vm99, %v98, %v96
    %s101 = scalar_lea.vmem %s0, 503
    %v102 = vld [vmem:[%s101] sm:$0x80]
    %vm103 = vcmask 1047559
    %v104 = vsel %vm103, %v102, %v100
    %105 = vrot.lane.b32.xlu0 %v104, 124
    %v106 = vpop.permute.xlu0 %105
    %vm107 = vcmask 1032160
    %108 = vst.msk [vmem:[#allocation0] sm:$0x3] %vm107, %v106
    %s109 = scalar_lea.vmem [#allocation0], 6
    %110 = vst.msk [vmem:[%s109] sm:$0xc] %vm107, %v106
    %s111 = scalar_lea.vmem [#allocation0], 12
    %112 = vst.msk [vmem:[%s111] sm:$0x30] %vm107, %v106
    %s113 = scalar_lea.vmem [#allocation0], 18
    %114 = vst.msk [vmem:[%s113] sm:$0xc0] %vm107, %v106
    %s115 = scalar_lea.vmem %s0, 61
    %v116 = vld [vmem:[%s115] sm:$0x1]
    %s117 = scalar_lea.vmem %s0, 316
    %v118 = vld [vmem:[%s117] sm:$0x2]
    %vm119 = vcmask 1041409
    %v120 = vsel %vm119, %v118, %v116
    %s121 = scalar_lea.vmem %s0, 123
    %v122 = vld [vmem:[%s121] sm:$0x4]
    %vm123 = vcmask 1042434
    %v124 = vsel %vm123, %v122, %v120
    %s125 = scalar_lea.vmem %s0, 378
    %v126 = vld [vmem:[%s125] sm:$0x8]
    %vm127 = vcmask 1043459
    %v128 = vsel %vm127, %v126, %v124
    %s129 = scalar_lea.vmem %s0, 185
    %v130 = vld [vmem:[%s129] sm:$0x10]
    %vm131 = vcmask 1044484
    %v132 = vsel %vm131, %v130, %v128
    %s133 = scalar_lea.vmem %s0, 440
    %v134 = vld [vmem:[%s133] sm:$0x20]
    %vm135 = vcmask 1045509
    %v136 = vsel %vm135, %v134, %v132
    %s137 = scalar_lea.vmem %s0, 247
    %v138 = vld [vmem:[%s137] sm:$0x40]
    %vm139 = vcmask 1046534
    %v140 = vsel %vm139, %v138, %v136
    %s141 = scalar_lea.vmem %s0, 502
    %v142 = vld [vmem:[%s141] sm:$0x80]
    %vm143 = vcmask 1047559
    %v144 = vsel %vm143, %v142, %v140
    %145 = vrot.lane.b32.xlu0 %v144, 122
    %v146 = vpop.permute.xlu0 %145
    %vm147 = vcmask 1015760
    %148 = vst.msk [vmem:[#allocation0] sm:$0x3] %vm147, %v146
    %s149 = scalar_lea.vmem [#allocation0], 6
    %150 = vst.msk [vmem:[%s149] sm:$0xc] %vm147, %v146
    %s151 = scalar_lea.vmem [#allocation0], 12
    %152 = vst.msk [vmem:[%s151] sm:$0x30] %vm147, %v146
    %s153 = scalar_lea.vmem [#allocation0], 18
    %154 = vst.msk [vmem:[%s153] sm:$0xc0] %vm147, %v146
    %s155 = scalar_lea.vmem %s0, 60
    %v156 = vld [vmem:[%s155] sm:$0x1]
    %s157 = scalar_lea.vmem %s0, 315
    %v158 = vld [vmem:[%s157] sm:$0x2]
    %vm159 = vcmask 1041409
    %v160 = vsel %vm159, %v158, %v156
    %s161 = scalar_lea.vmem %s0, 122
    %v162 = vld [vmem:[%s161] sm:$0x4]
    %vm163 = vcmask 1042434
    %v164 = vsel %vm163, %v162, %v160
    %s165 = scalar_lea.vmem %s0, 377
    %v166 = vld [vmem:[%s165] sm:$0x8]
    %vm167 = vcmask 1043459
    %v168 = vsel %vm167, %v166, %v164
    %s169 = scalar_lea.vmem %s0, 184
    %v170 = vld [vmem:[%s169] sm:$0x10]
    %vm171 = vcmask 1044484
    %v172 = vsel %vm171, %v170, %v168
    %s173 = scalar_lea.vmem %s0, 439
    %v174 = vld [vmem:[%s173] sm:$0x20]
    %vm175 = vcmask 1045509
    %v176 = vsel %vm175, %v174, %v172
    %s177 = scalar_lea.vmem %s0, 246
    %v178 = vld [vmem:[%s177] sm:$0x40]
    %vm179 = vcmask 1046534
    %v180 = vsel %vm179, %v178, %v176
    %s181 = scalar_lea.vmem %s0, 501
    %v182 = vld [vmem:[%s181] sm:$0x80]
    %vm183 = vcmask 1047559
    %v184 = vsel %vm183, %v182, %v180
    %185 = vrot.lane.b32.xlu0 %v184, 120
    %v186 = vpop.permute.xlu0 %185
    %vm187 = vcmask 999360
    %188 = vst.msk [vmem:[#allocation0] sm:$0x3] %vm187, %v186
    %s189 = scalar_lea.vmem [#allocation0], 6
    %190 = vst.msk [vmem:[%s189] sm:$0xc] %vm187, %v186
    %s191 = scalar_lea.vmem [#allocation0], 12
    %192 = vst.msk [vmem:[%s191] sm:$0x30] %vm187, %v186
    %s193 = scalar_lea.vmem [#allocation0], 18
    %194 = vst.msk [vmem:[%s193] sm:$0xc0] %vm187, %v186
    %s195 = scalar_lea.vmem %s0, 59
    %v196 = vld [vmem:[%s195] sm:$0x1]
    %s197 = scalar_lea.vmem %s0, 314
    %v198 = vld [vmem:[%s197] sm:$0x2]
    %vm199 = vcmask 1041409
    %v200 = vsel %vm199, %v198, %v196
    %s201 = scalar_lea.vmem %s0, 121
    %v202 = vld [vmem:[%s201] sm:$0x4]
    %vm203 = vcmask 1042434
    %v204 = vsel %vm203, %v202, %v200
    %s205 = scalar_lea.vmem %s0, 376
    %v206 = vld [vmem:[%s205] sm:$0x8]
    %vm207 = vcmask 1043459
    %v208 = vsel %vm207, %v206, %v204
    %s209 = scalar_lea.vmem %s0, 183
    %v210 = vld [vmem:[%s209] sm:$0x10]
    %vm211 = vcmask 1044484
    %v212 = vsel %vm211, %v210, %v208
    %s213 = scalar_lea.vmem %s0, 438
    %v214 = vld [vmem:[%s213] sm:$0x20]
    %vm215 = vcmask 1045509
    %v216 = vsel %vm215, %v214, %v212
    %s217 = scalar_lea.vmem %s0, 245
    %v218 = vld [vmem:[%s217] sm:$0x40]
    %vm219 = vcmask 1046534
    %v220 = vsel %vm219, %v218, %v216
    %s221 = scalar_lea.vmem %s0, 500
    %v222 = vld [vmem:[%s221] sm:$0x80]
    %vm223 = vcmask 1047559
    %v224 = vsel %vm223, %v222, %v220
    %225 = vrot.lane.b32.xlu0 %v224, 118
    %v226 = vpop.permute.xlu0 %225
    %vm227 = vcmask 982960
    %228 = vst.msk [vmem:[#allocation0] sm:$0x3] %vm227, %v226
    %s229 = scalar_lea.vmem [#allocation0], 6
    %230 = vst.msk [vmem:[%s229] sm:$0xc] %vm227, %v226
    %s231 = scalar_lea.vmem [#allocation0], 12
    %232 = vst.msk [vmem:[%s231] sm:$0x30] %vm227, %v226
    %s233 = scalar_lea.vmem [#allocation0], 18
    %234 = vst.msk [vmem:[%s233] sm:$0xc0] %vm227, %v226
    %s235 = scalar_lea.vmem %s0, 58
    %v236 = vld [vmem:[%s235] sm:$0x1]
    %s237 = scalar_lea.vmem %s0, 313
    %v238 = vld [vmem:[%s237] sm:$0x2]
    %vm239 = vcmask 1041409
    %v240 = vsel %vm239, %v238, %v236
    %s241 = scalar_lea.vmem %s0, 120
    %v242 = vld [vmem:[%s241] sm:$0x4]
    %vm243 = vcmask 1042434
    %v244 = vsel %vm243, %v242, %v240
    %s245 = scalar_lea.vmem %s0, 375
    %v246 = vld [vmem:[%s245] sm:$0x8]
    %vm247 = vcmask 1043459
    %v248 = vsel %vm247, %v246, %v244
    %s249 = scalar_lea.vmem %s0, 182
    %v250 = vld [vmem:[%s249] sm:$0x10]
    %vm251 = vcmask 1044484
    %v252 = vsel %vm251, %v250, %v248
    %s253 = scalar_lea.vmem %s0, 437
    %v254 = vld [vmem:[%s253] sm:$0x20]
    %vm255 = vcmask 1045509
    %v256 = vsel %vm255, %v254, %v252
    %s257 = scalar_lea.vmem %s0, 244
    %v258 = vld [vmem:[%s257] sm:$0x40]
    %vm259 = vcmask 1046534
    %v260 = vsel %vm259, %v258, %v256
    %s261 = scalar_lea.vmem %s0, 499
    %v262 = vld [vmem:[%s261] sm:$0x80]
    %vm263 = vcmask 1047559
    %v264 = vsel %vm263, %v262, %v260
    %265 = vrot.lane.b32.xlu0 %v264, 116
    %v266 = vpop.permute.xlu0 %265
    %vm267 = vcmask 966560
    %268 = vst.msk [vmem:[#allocation0] sm:$0x3] %vm267, %v266
    %s269 = scalar_lea.vmem [#allocation0], 6
    %270 = vst.msk [vmem:[%s269] sm:$0xc] %vm267, %v266
    %s271 = scalar_lea.vmem [#allocation0], 12
    %272 = vst.msk [vmem:[%s271] sm:$0x30] %vm267, %v266
    %s273 = scalar_lea.vmem [#allocation0], 18
    %274 = vst.msk [vmem:[%s273] sm:$0xc0] %vm267, %v266
    %s275 = scalar_lea.vmem %s0, 57
    %v276 = vld [vmem:[%s275] sm:$0x1]
    %s277 = scalar_lea.vmem %s0, 312
    %v278 = vld [vmem:[%s277] sm:$0x2]
    %vm279 = vcmask 1041409
    %v280 = vsel %vm279, %v278, %v276
    %s281 = scalar_lea.vmem %s0, 119
    %v282 = vld [vmem:[%s281] sm:$0x4]
    %vm283 = vcmask 1042434
    %v284 = vsel %vm283, %v282, %v280
    %s285 = scalar_lea.vmem %s0, 374
    %v286 = vld [vmem:[%s285] sm:$0x8]
    %vm287 = vcmask 1043459
    %v288 = vsel %vm287, %v286, %v284
    %s289 = scalar_lea.vmem %s0, 181
    %v290 = vld [vmem:[%s289] sm:$0x10]
    %vm291 = vcmask 1044484
    %v292 = vsel %vm291, %v290, %v288
    %s293 = scalar_lea.vmem %s0, 436
    %v294 = vld [vmem:[%s293] sm:$0x20]
    %vm295 = vcmask 1045509
    %v296 = vsel %vm295, %v294, %v292
    %s297 = scalar_lea.vmem %s0, 243
    %v298 = vld [vmem:[%s297] sm:$0x40]
    %vm299 = vcmask 1046534
    %v300 = vsel %vm299, %v298, %v296
    %s301 = scalar_lea.vmem %s0, 498
    %v302 = vld [vmem:[%s301] sm:$0x80]
    %vm303 = vcmask 1047559
    %v304 = vsel %vm303, %v302, %v300
    %305 = vrot.lane.b32.xlu0 %v304, 114
    %v306 = vpop.permute.xlu0 %305
    %vm307 = vcmask 950160
    %308 = vst.msk [vmem:[#allocation0] sm:$0x3] %vm307, %v306
    %s309 = scalar_lea.vmem [#allocation0], 6
    %310 = vst.msk [vmem:[%s309] sm:$0xc] %vm307, %v306
    %s311 = scalar_lea.vmem [#allocation0], 12
    %312 = vst.msk [vmem:[%s311] sm:$0x30] %vm307, %v306
    %s313 = scalar_lea.vmem [#allocation0], 18
    %314 = vst.msk [vmem:[%s313] sm:$0xc0] %vm307, %v306
    %s315 = scalar_lea.vmem %s0, 56
    %v316 = vld [vmem:[%s315] sm:$0x1]
    %s317 = scalar_lea.vmem %s0, 311
    %v318 = vld [vmem:[%s317] sm:$0x2]
    %vm319 = vcmask 1041409
    %v320 = vsel %vm319, %v318, %v316
    %s321 = scalar_lea.vmem %s0, 118
    %v322 = vld [vmem:[%s321] sm:$0x4]
    %vm323 = vcmask 1042434
    %v324 = vsel %vm323, %v322, %v320
    %s325 = scalar_lea.vmem %s0, 373
    %v326 = vld [vmem:[%s325] sm:$0x8]
    %vm327 = vcmask 1043459
    %v328 = vsel %vm327, %v326, %v324
    %s329 = scalar_lea.vmem %s0, 180
    %v330 = vld [vmem:[%s329] sm:$0x10]
    %vm331 = vcmask 1044484
    %v332 = vsel %vm331, %v330, %v328
    %s333 = scalar_lea.vmem %s0, 435
    %v334 = vld [vmem:[%s333] sm:$0x20]
    %vm335 = vcmask 1045509
    %v336 = vsel %vm335, %v334, %v332
    %s337 = scalar_lea.vmem %s0, 242
    %v338 = vld [vmem:[%s337] sm:$0x40]
    %vm339 = vcmask 1046534
    %v340 = vsel %vm339, %v338, %v336
    %s341 = scalar_lea.vmem %s0, 497
    %v342 = vld [vmem:[%s341] sm:$0x80]
    %vm343 = vcmask 1047559
    %v344 = vsel %vm343, %v342, %v340
    %345 = vrot.lane.b32.xlu0 %v344, 112
    %v346 = vpop.permute.xlu0 %345
    %vm347 = vcmask 933760
    %348 = vst.msk [vmem:[#allocation0] sm:$0x3] %vm347, %v346
    %s349 = scalar_lea.vmem [#allocation0], 6
    %350 = vst.msk [vmem:[%s349] sm:$0xc] %vm347, %v346
    %s351 = scalar_lea.vmem [#allocation0], 12
    %352 = vst.msk [vmem:[%s351] sm:$0x30] %vm347, %v346
    %s353 = scalar_lea.vmem [#allocation0], 18
    %354 = vst.msk [vmem:[%s353] sm:$0xc0] %vm347, %v346
    %s355 = scalar_lea.vmem %s0, 55
    %v356 = vld [vmem:[%s355] sm:$0x1]
    %s357 = scalar_lea.vmem %s0, 310
    %v358 = vld [vmem:[%s357] sm:$0x2]
    %vm359 = vcmask 1041409
    %v360 = vsel %vm359, %v358, %v356
    %s361 = scalar_lea.vmem %s0, 117
    %v362 = vld [vmem:[%s361] sm:$0x4]
    %vm363 = vcmask 1042434
    %v364 = vsel %vm363, %v362, %v360
    %s365 = scalar_lea.vmem %s0, 372
    %v366 = vld [vmem:[%s365] sm:$0x8]
    %vm367 = vcmask 1043459
    %v368 = vsel %vm367, %v366, %v364
    %s369 = scalar_lea.vmem %s0, 179
    %v370 = vld [vmem:[%s369] sm:$0x10]
    %vm371 = vcmask 1044484
    %v372 = vsel %vm371, %v370, %v368
    %s373 = scalar_lea.vmem %s0, 434
    %v374 = vld [vmem:[%s373] sm:$0x20]
    %vm375 = vcmask 1045509
    %v376 = vsel %vm375, %v374, %v372
    %s377 = scalar_lea.vmem %s0, 241
    %v378 = vld [vmem:[%s377] sm:$0x40]
    %vm379 = vcmask 1046534
    %v380 = vsel %vm379, %v378, %v376
    %s381 = scalar_lea.vmem %s0, 496
    %v382 = vld [vmem:[%s381] sm:$0x80]
    %vm383 = vcmask 1047559
    %v384 = vsel %vm383, %v382, %v380
    %385 = vrot.lane.b32.xlu0 %v384, 110
    %v386 = vpop.permute.xlu0 %385
    %vm387 = vcmask 917360
    %388 = vst.msk [vmem:[#allocation0] sm:$0x3] %vm387, %v386
    %s389 = scalar_lea.vmem [#allocation0], 6
    %390 = vst.msk [vmem:[%s389] sm:$0xc] %vm387, %v386
    %s391 = scalar_lea.vmem [#allocation0], 12
    %392 = vst.msk [vmem:[%s391] sm:$0x30] %vm387, %v386
    %s393 = scalar_lea.vmem [#allocation0], 18
    %394 = vst.msk [vmem:[%s393] sm:$0xc0] %vm387, %v386
    %s395 = scalar_lea.vmem %s0, 54
    %v396 = vld [vmem:[%s395] sm:$0x1]
    %s397 = scalar_lea.vmem %s0, 309
    %v398 = vld [vmem:[%s397] sm:$0x2]
    %vm399 = vcmask 1041409
    %v400 = vsel %vm399, %v398, %v396
    %s401 = scalar_lea.vmem %s0, 116
    %v402 = vld [vmem:[%s401] sm:$0x4]
    %vm403 = vcmask 1042434
    %v404 = vsel %vm403, %v402, %v400
    %s405 = scalar_lea.vmem %s0, 371
    %v406 = vld [vmem:[%s405] sm:$0x8]
    %vm407 = vcmask 1043459
    %v408 = vsel %vm407, %v406, %v404
    %s409 = scalar_lea.vmem %s0, 178
    %v410 = vld [vmem:[%s409] sm:$0x10]
    %vm411 = vcmask 1044484
    %v412 = vsel %vm411, %v410, %v408
    %s413 = scalar_lea.vmem %s0, 433
    %v414 = vld [vmem:[%s413] sm:$0x20]
    %vm415 = vcmask 1045509
    %v416 = vsel %vm415, %v414, %v412
    %s417 = scalar_lea.vmem %s0, 240
    %v418 = vld [vmem:[%s417] sm:$0x40]
    %vm419 = vcmask 1046534
    %v420 = vsel %vm419, %v418, %v416
    %s421 = scalar_lea.vmem %s0, 495
    %v422 = vld [vmem:[%s421] sm:$0x80]
    %vm423 = vcmask 1047559
    %v424 = vsel %vm423, %v422, %v420
    %425 = vrot.lane.b32.xlu0 %v424, 108
    %v426 = vpop.permute.xlu0 %425
    %vm427 = vcmask 900960
    %428 = vst.msk [vmem:[#allocation0] sm:$0x3] %vm427, %v426
    %s429 = scalar_lea.vmem [#allocation0], 6
    %430 = vst.msk [vmem:[%s429] sm:$0xc] %vm427, %v426
    %s431 = scalar_lea.vmem [#allocation0], 12
    %432 = vst.msk [vmem:[%s431] sm:$0x30] %vm427, %v426
    %s433 = scalar_lea.vmem [#allocation0], 18
    %434 = vst.msk [vmem:[%s433] sm:$0xc0] %vm427, %v426
    %s435 = scalar_lea.vmem %s0, 53
    %v436 = vld [vmem:[%s435] sm:$0x1]
    %s437 = scalar_lea.vmem %s0, 308
    %v438 = vld [vmem:[%s437] sm:$0x2]
    %vm439 = vcmask 1041409
    %v440 = vsel %vm439, %v438, %v436
    %s441 = scalar_lea.vmem %s0, 115
    %v442 = vld [vmem:[%s441] sm:$0x4]
    %vm443 = vcmask 1042434
    %v444 = vsel %vm443, %v442, %v440
    %s445 = scalar_lea.vmem %s0, 370
    %v446 = vld [vmem:[%s445] sm:$0x8]
    %vm447 = vcmask 1043459
    %v448 = vsel %vm447, %v446, %v444
    %s449 = scalar_lea.vmem %s0, 177
    %v450 = vld [vmem:[%s449] sm:$0x10]
    %vm451 = vcmask 1044484
    %v452 = vsel %vm451, %v450, %v448
    %s453 = scalar_lea.vmem %s0, 432
    %v454 = vld [vmem:[%s453] sm:$0x20]
    %vm455 = vcmask 1045509
    %v456 = vsel %vm455, %v454, %v452
    %s457 = scalar_lea.vmem %s0, 239
    %v458 = vld [vmem:[%s457] sm:$0x40]
    %vm459 = vcmask 1046534
    %v460 = vsel %vm459, %v458, %v456
    %s461 = scalar_lea.vmem %s0, 494
    %v462 = vld [vmem:[%s461] sm:$0x80]
    %vm463 = vcmask 1047559
    %v464 = vsel %vm463, %v462, %v460
    %465 = vrot.lane.b32.xlu0 %v464, 106
    %v466 = vpop.permute.xlu0 %465
    %vm467 = vcmask 884560
    %468 = vst.msk [vmem:[#allocation0] sm:$0x3] %vm467, %v466
    %s469 = scalar_lea.vmem [#allocation0], 6
    %470 = vst.msk [vmem:[%s469] sm:$0xc] %vm467, %v466
    %s471 = scalar_lea.vmem [#allocation0], 12
    %472 = vst.msk [vmem:[%s471] sm:$0x30] %vm467, %v466
    %s473 = scalar_lea.vmem [#allocation0], 18
    %474 = vst.msk [vmem:[%s473] sm:$0xc0] %vm467, %v466
    %s475 = scalar_lea.vmem %s0, 52
    %v476 = vld [vmem:[%s475] sm:$0x1]
    %s477 = scalar_lea.vmem %s0, 307
    %v478 = vld [vmem:[%s477] sm:$0x2]
    %vm479 = vcmask 1041409
    %v480 = vsel %vm479, %v478, %v476
    %s481 = scalar_lea.vmem %s0, 114
    %v482 = vld [vmem:[%s481] sm:$0x4]
    %vm483 = vcmask 1042434
    %v484 = vsel %vm483, %v482, %v480
    %s485 = scalar_lea.vmem %s0, 369
    %v486 = vld [vmem:[%s485] sm:$0x8]
    %vm487 = vcmask 1043459
    %v488 = vsel %vm487, %v486, %v484
    %s489 = scalar_lea.vmem %s0, 176
    %v490 = vld [vmem:[%s489] sm:$0x10]
    %vm491 = vcmask 1044484
    %v492 = vsel %vm491, %v490, %v488
    %s493 = scalar_lea.vmem %s0, 431
    %v494 = vld [vmem:[%s493] sm:$0x20]
    %vm495 = vcmask 1045509
    %v496 = vsel %vm495, %v494, %v492
    %s497 = scalar_lea.vmem %s0, 238
    %v498 = vld [vmem:[%s497] sm:$0x40]
    %vm499 = vcmask 1046534
    %v500 = vsel %vm499, %v498, %v496
    %s501 = scalar_lea.vmem %s0, 493
    %v502 = vld [vmem:[%s501] sm:$0x80]
    %vm503 = vcmask 1047559
    %v504 = vsel %vm503, %v502, %v500
    %505 = vrot.lane.b32.xlu0 %v504, 104
    %v506 = vpop.permute.xlu0 %505
    %vm507 = vcmask 868160
    %508 = vst.msk [vmem:[#allocation0] sm:$0x3] %vm507, %v506
    %s509 = scalar_lea.vmem [#allocation0], 6
    %510 = vst.msk [vmem:[%s509] sm:$0xc] %vm507, %v506
    %s511 = scalar_lea.vmem [#allocation0], 12
    %512 = vst.msk [vmem:[%s511] sm:$0x30] %vm507, %v506
    %s513 = scalar_lea.vmem [#allocation0], 18
    %514 = vst.msk [vmem:[%s513] sm:$0xc0] %vm507, %v506
    %s515 = scalar_lea.vmem %s0, 51
    %v516 = vld [vmem:[%s515] sm:$0x1]
    %s517 = scalar_lea.vmem %s0, 306
    %v518 = vld [vmem:[%s517] sm:$0x2]
    %vm519 = vcmask 1041409
    %v520 = vsel %vm519, %v518, %v516
    %s521 = scalar_lea.vmem %s0, 113
    %v522 = vld [vmem:[%s521] sm:$0x4]
    %vm523 = vcmask 1042434
    %v524 = vsel %vm523, %v522, %v520
    %s525 = scalar_lea.vmem %s0, 368
    %v526 = vld [vmem:[%s525] sm:$0x8]
    %vm527 = vcmask 1043459
    %v528 = vsel %vm527, %v526, %v524
    %s529 = scalar_lea.vmem %s0, 175
    %v530 = vld [vmem:[%s529] sm:$0x10]
    %vm531 = vcmask 1044484
    %v532 = vsel %vm531, %v530, %v528
    %s533 = scalar_lea.vmem %s0, 430
    %v534 = vld [vmem:[%s533] sm:$0x20]
    %vm535 = vcmask 1045509
    %v536 = vsel %vm535, %v534, %v532
    %s537 = scalar_lea.vmem %s0, 237
    %v538 = vld [vmem:[%s537] sm:$0x40]
    %vm539 = vcmask 1046534
    %v540 = vsel %vm539, %v538, %v536
    %s541 = scalar_lea.vmem %s0, 492
    %v542 = vld [vmem:[%s541] sm:$0x80]
    %vm543 = vcmask 1047559
    %v544 = vsel %vm543, %v542, %v540
    %545 = vrot.lane.b32.xlu0 %v544, 102
    %v546 = vpop.permute.xlu0 %545
    %vm547 = vcmask 851760
    %548 = vst.msk [vmem:[#allocation0] sm:$0x3] %vm547, %v546
    %s549 = scalar_lea.vmem [#allocation0], 6
    %550 = vst.msk [vmem:[%s549] sm:$0xc] %vm547, %v546
    %s551 = scalar_lea.vmem [#allocation0], 12
    %552 = vst.msk [vmem:[%s551] sm:$0x30] %vm547, %v546
    %s553 = scalar_lea.vmem [#allocation0], 18
    %554 = vst.msk [vmem:[%s553] sm:$0xc0] %vm547, %v546
    %s555 = scalar_lea.vmem %s0, 50
    %v556 = vld [vmem:[%s555] sm:$0x1]
    %s557 = scalar_lea.vmem %s0, 305
    %v558 = vld [vmem:[%s557] sm:$0x2]
    %vm559 = vcmask 1041409
    %v560 = vsel %vm559, %v558, %v556
    %s561 = scalar_lea.vmem %s0, 112
    %v562 = vld [vmem:[%s561] sm:$0x4]
    %vm563 = vcmask 1042434
    %v564 = vsel %vm563, %v562, %v560
    %s565 = scalar_lea.vmem %s0, 367
    %v566 = vld [vmem:[%s565] sm:$0x8]
    %vm567 = vcmask 1043459
    %v568 = vsel %vm567, %v566, %v564
    %s569 = scalar_lea.vmem %s0, 174
    %v570 = vld [vmem:[%s569] sm:$0x10]
    %vm571 = vcmask 1044484
    %v572 = vsel %vm571, %v570, %v568
    %s573 = scalar_lea.vmem %s0, 429
    %v574 = vld [vmem:[%s573] sm:$0x20]
    %vm575 = vcmask 1045509
    %v576 = vsel %vm575, %v574, %v572
    %s577 = scalar_lea.vmem %s0, 236
    %v578 = vld [vmem:[%s577] sm:$0x40]
    %vm579 = vcmask 1046534
    %v580 = vsel %vm579, %v578, %v576
    %s581 = scalar_lea.vmem %s0, 491
    %v582 = vld [vmem:[%s581] sm:$0x80]
    %vm583 = vcmask 1047559
    %v584 = vsel %vm583, %v582, %v580
    %585 = vrot.lane.b32.xlu0 %v584, 100
    %v586 = vpop.permute.xlu0 %585
    %vm587 = vcmask 835360
    %588 = vst.msk [vmem:[#allocation0] sm:$0x3] %vm587, %v586
    %s589 = scalar_lea.vmem [#allocation0], 6
    %590 = vst.msk [vmem:[%s589] sm:$0xc] %vm587, %v586
    %s591 = scalar_lea.vmem [#allocation0], 12
    %592 = vst.msk [vmem:[%s591] sm:$0x30] %vm587, %v586
    %s593 = scalar_lea.vmem [#allocation0], 18
    %594 = vst.msk [vmem:[%s593] sm:$0xc0] %vm587, %v586
    %s595 = scalar_lea.vmem %s0, 49
    %v596 = vld [vmem:[%s595] sm:$0x1]
    %s597 = scalar_lea.vmem %s0, 304
    %v598 = vld [vmem:[%s597] sm:$0x2]
    %vm599 = vcmask 1041409
    %v600 = vsel %vm599, %v598, %v596
    %s601 = scalar_lea.vmem %s0, 111
    %v602 = vld [vmem:[%s601] sm:$0x4]
    %vm603 = vcmask 1042434
    %v604 = vsel %vm603, %v602, %v600
    %s605 = scalar_lea.vmem %s0, 366
    %v606 = vld [vmem:[%s605] sm:$0x8]
    %vm607 = vcmask 1043459
    %v608 = vsel %vm607, %v606, %v604
    %s609 = scalar_lea.vmem %s0, 173
    %v610 = vld [vmem:[%s609] sm:$0x10]
    %vm611 = vcmask 1044484
    %v612 = vsel %vm611, %v610, %v608
    %s613 = scalar_lea.vmem %s0, 428
    %v614 = vld [vmem:[%s613] sm:$0x20]
    %vm615 = vcmask 1045509
    %v616 = vsel %vm615, %v614, %v612
    %s617 = scalar_lea.vmem %s0, 235
    %v618 = vld [vmem:[%s617] sm:$0x40]
    %vm619 = vcmask 1046534
    %v620 = vsel %vm619, %v618, %v616
    %s621 = scalar_lea.vmem %s0, 490
    %v622 = vld [vmem:[%s621] sm:$0x80]
    %vm623 = vcmask 1047559
    %v624 = vsel %vm623, %v622, %v620
    %625 = vrot.lane.b32.xlu0 %v624, 98
    %v626 = vpop.permute.xlu0 %625
    %vm627 = vcmask 818960
    %628 = vst.msk [vmem:[#allocation0] sm:$0x3] %vm627, %v626
    %s629 = scalar_lea.vmem [#allocation0], 6
    %630 = vst.msk [vmem:[%s629] sm:$0xc] %vm627, %v626
    %s631 = scalar_lea.vmem [#allocation0], 12
    %632 = vst.msk [vmem:[%s631] sm:$0x30] %vm627, %v626
    %s633 = scalar_lea.vmem [#allocation0], 18
    %634 = vst.msk [vmem:[%s633] sm:$0xc0] %vm627, %v626
    %s635 = scalar_lea.vmem %s0, 48
    %v636 = vld [vmem:[%s635] sm:$0x1]
    %s637 = scalar_lea.vmem %s0, 303
    %v638 = vld [vmem:[%s637] sm:$0x2]
    %vm639 = vcmask 1041409
    %v640 = vsel %vm639, %v638, %v636
    %s641 = scalar_lea.vmem %s0, 110
    %v642 = vld [vmem:[%s641] sm:$0x4]
    %vm643 = vcmask 1042434
    %v644 = vsel %vm643, %v642, %v640
    %s645 = scalar_lea.vmem %s0, 365
    %v646 = vld [vmem:[%s645] sm:$0x8]
    %vm647 = vcmask 1043459
    %v648 = vsel %vm647, %v646, %v644
    %s649 = scalar_lea.vmem %s0, 172
    %v650 = vld [vmem:[%s649] sm:$0x10]
    %vm651 = vcmask 1044484
    %v652 = vsel %vm651, %v650, %v648
    %s653 = scalar_lea.vmem %s0, 427
    %v654 = vld [vmem:[%s653] sm:$0x20]
    %vm655 = vcmask 1045509
    %v656 = vsel %vm655, %v654, %v652
    %s657 = scalar_lea.vmem %s0, 234
    %v658 = vld [vmem:[%s657] sm:$0x40]
    %vm659 = vcmask 1046534
    %v660 = vsel %vm659, %v658, %v656
    %s661 = scalar_lea.vmem %s0, 489
    %v662 = vld [vmem:[%s661] sm:$0x80]
    %vm663 = vcmask 1047559
    %v664 = vsel %vm663, %v662, %v660
    %665 = vrot.lane.b32.xlu0 %v664, 96
    %v666 = vpop.permute.xlu0 %665
    %vm667 = vcmask 802560
    %668 = vst.msk [vmem:[#allocation0] sm:$0x3] %vm667, %v666
    %s669 = scalar_lea.vmem [#allocation0], 6
    %670 = vst.msk [vmem:[%s669] sm:$0xc] %vm667, %v666
    %s671 = scalar_lea.vmem [#allocation0], 12
    %672 = vst.msk [vmem:[%s671] sm:$0x30] %vm667, %v666
    %s673 = scalar_lea.vmem [#allocation0], 18
    %674 = vst.msk [vmem:[%s673] sm:$0xc0] %vm667, %v666
    %s675 = scalar_lea.vmem %s0, 47
    %v676 = vld [vmem:[%s675] sm:$0x1]
    %s677 = scalar_lea.vmem %s0, 302
    %v678 = vld [vmem:[%s677] sm:$0x2]
    %vm679 = vcmask 1041409
    %v680 = vsel %vm679, %v678, %v676
    %s681 = scalar_lea.vmem %s0, 109
    %v682 = vld [vmem:[%s681] sm:$0x4]
    %vm683 = vcmask 1042434
    %v684 = vsel %vm683, %v682, %v680
    %s685 = scalar_lea.vmem %s0, 364
    %v686 = vld [vmem:[%s685] sm:$0x8]
    %vm687 = vcmask 1043459
    %v688 = vsel %vm687, %v686, %v684
    %s689 = scalar_lea.vmem %s0, 171
    %v690 = vld [vmem:[%s689] sm:$0x10]
    %vm691 = vcmask 1044484
    %v692 = vsel %vm691, %v690, %v688
    %s693 = scalar_lea.vmem %s0, 426
    %v694 = vld [vmem:[%s693] sm:$0x20]
    %vm695 = vcmask 1045509
    %v696 = vsel %vm695, %v694, %v692
    %s697 = scalar_lea.vmem %s0, 233
    %v698 = vld [vmem:[%s697] sm:$0x40]
    %vm699 = vcmask 1046534
    %v700 = vsel %vm699, %v698, %v696
    %s701 = scalar_lea.vmem %s0, 488
    %v702 = vld [vmem:[%s701] sm:$0x80]
    %vm703 = vcmask 1047559
    %v704 = vsel %vm703, %v702, %v700
    %705 = vrot.lane.b32.xlu0 %v704, 94
    %v706 = vpop.permute.xlu0 %705
    %vm707 = vcmask 786160
    %708 = vst.msk [vmem:[#allocation0] sm:$0x3] %vm707, %v706
    %s709 = scalar_lea.vmem [#allocation0], 6
    %710 = vst.msk [vmem:[%s709] sm:$0xc] %vm707, %v706
    %s711 = scalar_lea.vmem [#allocation0], 12
    %712 = vst.msk [vmem:[%s711] sm:$0x30] %vm707, %v706
    %s713 = scalar_lea.vmem [#allocation0], 18
    %714 = vst.msk [vmem:[%s713] sm:$0xc0] %vm707, %v706
    %s715 = scalar_lea.vmem %s0, 46
    %v716 = vld [vmem:[%s715] sm:$0x1]
    %s717 = scalar_lea.vmem %s0, 301
    %v718 = vld [vmem:[%s717] sm:$0x2]
    %vm719 = vcmask 1041409
    %v720 = vsel %vm719, %v718, %v716
    %s721 = scalar_lea.vmem %s0, 108
    %v722 = vld [vmem:[%s721] sm:$0x4]
    %vm723 = vcmask 1042434
    %v724 = vsel %vm723, %v722, %v720
    %s725 = scalar_lea.vmem %s0, 363
    %v726 = vld [vmem:[%s725] sm:$0x8]
    %vm727 = vcmask 1043459
    %v728 = vsel %vm727, %v726, %v724
    %s729 = scalar_lea.vmem %s0, 170
    %v730 = vld [vmem:[%s729] sm:$0x10]
    %vm731 = vcmask 1044484
    %v732 = vsel %vm731, %v730, %v728
    %s733 = scalar_lea.vmem %s0, 425
    %v734 = vld [vmem:[%s733] sm:$0x20]
    %vm735 = vcmask 1045509
    %v736 = vsel %vm735, %v734, %v732
    %s737 = scalar_lea.vmem %s0, 232
    %v738 = vld [vmem:[%s737] sm:$0x40]
    %vm739 = vcmask 1046534
    %v740 = vsel %vm739, %v738, %v736
    %s741 = scalar_lea.vmem %s0, 487
    %v742 = vld [vmem:[%s741] sm:$0x80]
    %vm743 = vcmask 1047559
    %v744 = vsel %vm743, %v742, %v740
    %745 = vrot.lane.b32.xlu0 %v744, 92
    %v746 = vpop.permute.xlu0 %745
    %vm747 = vcmask 769760
    %748 = vst.msk [vmem:[#allocation0] sm:$0x3] %vm747, %v746
    %s749 = scalar_lea.vmem [#allocation0], 6
    %750 = vst.msk [vmem:[%s749] sm:$0xc] %vm747, %v746
    %s751 = scalar_lea.vmem [#allocation0], 12
    %752 = vst.msk [vmem:[%s751] sm:$0x30] %vm747, %v746
    %s753 = scalar_lea.vmem [#allocation0], 18
    %754 = vst.msk [vmem:[%s753] sm:$0xc0] %vm747, %v746
    %s755 = scalar_lea.vmem %s0, 45
    %v756 = vld [vmem:[%s755] sm:$0x1]
    %s757 = scalar_lea.vmem %s0, 300
    %v758 = vld [vmem:[%s757] sm:$0x2]
    %vm759 = vcmask 1041409
    %v760 = vsel %vm759, %v758, %v756
    %s761 = scalar_lea.vmem %s0, 107
    %v762 = vld [vmem:[%s761] sm:$0x4]
    %vm763 = vcmask 1042434
    %v764 = vsel %vm763, %v762, %v760
    %s765 = scalar_lea.vmem %s0, 362
    %v766 = vld [vmem:[%s765] sm:$0x8]
    %vm767 = vcmask 1043459
    %v768 = vsel %vm767, %v766, %v764
    %s769 = scalar_lea.vmem %s0, 169
    %v770 = vld [vmem:[%s769] sm:$0x10]
    %vm771 = vcmask 1044484
    %v772 = vsel %vm771, %v770, %v768
    %s773 = scalar_lea.vmem %s0, 424
    %v774 = vld [vmem:[%s773] sm:$0x20]
    %vm775 = vcmask 1045509
    %v776 = vsel %vm775, %v774, %v772
    %s777 = scalar_lea.vmem %s0, 231
    %v778 = vld [vmem:[%s777] sm:$0x40]
    %vm779 = vcmask 1046534
    %v780 = vsel %vm779, %v778, %v776
    %s781 = scalar_lea.vmem %s0, 486
    %v782 = vld [vmem:[%s781] sm:$0x80]
    %vm783 = vcmask 1047559
    %v784 = vsel %vm783, %v782, %v780
    %785 = vrot.lane.b32.xlu0 %v784, 90
    %v786 = vpop.permute.xlu0 %785
    %vm787 = vcmask 753360
    %788 = vst.msk [vmem:[#allocation0] sm:$0x3] %vm787, %v786
    %s789 = scalar_lea.vmem [#allocation0], 6
    %790 = vst.msk [vmem:[%s789] sm:$0xc] %vm787, %v786
    %s791 = scalar_lea.vmem [#allocation0], 12
    %792 = vst.msk [vmem:[%s791] sm:$0x30] %vm787, %v786
    %s793 = scalar_lea.vmem [#allocation0], 18
    %794 = vst.msk [vmem:[%s793] sm:$0xc0] %vm787, %v786
    %s795 = scalar_lea.vmem %s0, 44
    %v796 = vld [vmem:[%s795] sm:$0x1]
    %s797 = scalar_lea.vmem %s0, 299
    %v798 = vld [vmem:[%s797] sm:$0x2]
    %vm799 = vcmask 1041409
    %v800 = vsel %vm799, %v798, %v796
    %s801 = scalar_lea.vmem %s0, 106
    %v802 = vld [vmem:[%s801] sm:$0x4]
    %vm803 = vcmask 1042434
    %v804 = vsel %vm803, %v802, %v800
    %s805 = scalar_lea.vmem %s0, 361
    %v806 = vld [vmem:[%s805] sm:$0x8]
    %vm807 = vcmask 1043459
    %v808 = vsel %vm807, %v806, %v804
    %s809 = scalar_lea.vmem %s0, 168
    %v810 = vld [vmem:[%s809] sm:$0x10]
    %vm811 = vcmask 1044484
    %v812 = vsel %vm811, %v810, %v808
    %s813 = scalar_lea.vmem %s0, 423
    %v814 = vld [vmem:[%s813] sm:$0x20]
    %vm815 = vcmask 1045509
    %v816 = vsel %vm815, %v814, %v812
    %s817 = scalar_lea.vmem %s0, 230
    %v818 = vld [vmem:[%s817] sm:$0x40]
    %vm819 = vcmask 1046534
    %v820 = vsel %vm819, %v818, %v816
    %s821 = scalar_lea.vmem %s0, 485
    %v822 = vld [vmem:[%s821] sm:$0x80]
    %vm823 = vcmask 1047559
    %v824 = vsel %vm823, %v822, %v820
    %825 = vrot.lane.b32.xlu0 %v824, 88
    %v826 = vpop.permute.xlu0 %825
    %vm827 = vcmask 736960
    %828 = vst.msk [vmem:[#allocation0] sm:$0x3] %vm827, %v826
    %s829 = scalar_lea.vmem [#allocation0], 6
    %830 = vst.msk [vmem:[%s829] sm:$0xc] %vm827, %v826
    %s831 = scalar_lea.vmem [#allocation0], 12
    %832 = vst.msk [vmem:[%s831] sm:$0x30] %vm827, %v826
    %s833 = scalar_lea.vmem [#allocation0], 18
    %834 = vst.msk [vmem:[%s833] sm:$0xc0] %vm827, %v826
    %s835 = scalar_lea.vmem %s0, 43
    %v836 = vld [vmem:[%s835] sm:$0x1]
    %s837 = scalar_lea.vmem %s0, 298
    %v838 = vld [vmem:[%s837] sm:$0x2]
    %vm839 = vcmask 1041409
    %v840 = vsel %vm839, %v838, %v836
    %s841 = scalar_lea.vmem %s0, 105
    %v842 = vld [vmem:[%s841] sm:$0x4]
    %vm843 = vcmask 1042434
    %v844 = vsel %vm843, %v842, %v840
    %s845 = scalar_lea.vmem %s0, 360
    %v846 = vld [vmem:[%s845] sm:$0x8]
    %vm847 = vcmask 1043459
    %v848 = vsel %vm847, %v846, %v844
    %s849 = scalar_lea.vmem %s0, 167
    %v850 = vld [vmem:[%s849] sm:$0x10]
    %vm851 = vcmask 1044484
    %v852 = vsel %vm851, %v850, %v848
    %s853 = scalar_lea.vmem %s0, 422
    %v854 = vld [vmem:[%s853] sm:$0x20]
    %vm855 = vcmask 1045509
    %v856 = vsel %vm855, %v854, %v852
    %s857 = scalar_lea.vmem %s0, 229
    %v858 = vld [vmem:[%s857] sm:$0x40]
    %vm859 = vcmask 1046534
    %v860 = vsel %vm859, %v858, %v856
    %s861 = scalar_lea.vmem %s0, 484
    %v862 = vld [vmem:[%s861] sm:$0x80]
    %vm863 = vcmask 1047559
    %v864 = vsel %vm863, %v862, %v860
    %865 = vrot.lane.b32.xlu0 %v864, 86
    %v866 = vpop.permute.xlu0 %865
    %vm867 = vcmask 720560
    %868 = vst.msk [vmem:[#allocation0] sm:$0x3] %vm867, %v866
    %s869 = scalar_lea.vmem [#allocation0], 6
    %870 = vst.msk [vmem:[%s869] sm:$0xc] %vm867, %v866
    %s871 = scalar_lea.vmem [#allocation0], 12
    %872 = vst.msk [vmem:[%s871] sm:$0x30] %vm867, %v866
    %s873 = scalar_lea.vmem [#allocation0], 18
    %874 = vst.msk [vmem:[%s873] sm:$0xc0] %vm867, %v866
    %s875 = scalar_lea.vmem %s0, 42
    %v876 = vld [vmem:[%s875] sm:$0x1]
    %s877 = scalar_lea.vmem %s0, 297
    %v878 = vld [vmem:[%s877] sm:$0x2]
    %vm879 = vcmask 1041409
    %v880 = vsel %vm879, %v878, %v876
    %s881 = scalar_lea.vmem %s0, 104
    %v882 = vld [vmem:[%s881] sm:$0x4]
    %vm883 = vcmask 1042434
    %v884 = vsel %vm883, %v882, %v880
    %s885 = scalar_lea.vmem %s0, 359
    %v886 = vld [vmem:[%s885] sm:$0x8]
    %vm887 = vcmask 1043459
    %v888 = vsel %vm887, %v886, %v884
    %s889 = scalar_lea.vmem %s0, 166
    %v890 = vld [vmem:[%s889] sm:$0x10]
    %vm891 = vcmask 1044484
    %v892 = vsel %vm891, %v890, %v888
    %s893 = scalar_lea.vmem %s0, 421
    %v894 = vld [vmem:[%s893] sm:$0x20]
    %vm895 = vcmask 1045509
    %v896 = vsel %vm895, %v894, %v892
    %s897 = scalar_lea.vmem %s0, 228
    %v898 = vld [vmem:[%s897] sm:$0x40]
    %vm899 = vcmask 1046534
    %v900 = vsel %vm899, %v898, %v896
    %s901 = scalar_lea.vmem %s0, 483
    %v902 = vld [vmem:[%s901] sm:$0x80]
    %vm903 = vcmask 1047559
    %v904 = vsel %vm903, %v902, %v900
    %905 = vrot.lane.b32.xlu0 %v904, 84
    %v906 = vpop.permute.xlu0 %905
    %vm907 = vcmask 704160
    %908 = vst.msk [vmem:[#allocation0] sm:$0x3] %vm907, %v906
    %s909 = scalar_lea.vmem [#allocation0], 6
    %910 = vst.msk [vmem:[%s909] sm:$0xc] %vm907, %v906
    %s911 = scalar_lea.vmem [#allocation0], 12
    %912 = vst.msk [vmem:[%s911] sm:$0x30] %vm907, %v906
    %s913 = scalar_lea.vmem [#allocation0], 18
    %914 = vst.msk [vmem:[%s913] sm:$0xc0] %vm907, %v906
    %s915 = scalar_lea.vmem %s0, 41
    %v916 = vld [vmem:[%s915] sm:$0x1]
    %s917 = scalar_lea.vmem %s0, 296
    %v918 = vld [vmem:[%s917] sm:$0x2]
    %vm919 = vcmask 1041409
    %v920 = vsel %vm919, %v918, %v916
    %s921 = scalar_lea.vmem %s0, 103
    %v922 = vld [vmem:[%s921] sm:$0x4]
    %vm923 = vcmask 1042434
    %v924 = vsel %vm923, %v922, %v920
    %s925 = scalar_lea.vmem %s0, 358
    %v926 = vld [vmem:[%s925] sm:$0x8]
    %vm927 = vcmask 1043459
    %v928 = vsel %vm927, %v926, %v924
    %s929 = scalar_lea.vmem %s0, 165
    %v930 = vld [vmem:[%s929] sm:$0x10]
    %vm931 = vcmask 1044484
    %v932 = vsel %vm931, %v930, %v928
    %s933 = scalar_lea.vmem %s0, 420
    %v934 = vld [vmem:[%s933] sm:$0x20]
    %vm935 = vcmask 1045509
    %v936 = vsel %vm935, %v934, %v932
    %s937 = scalar_lea.vmem %s0, 227
    %v938 = vld [vmem:[%s937] sm:$0x40]
    %vm939 = vcmask 1046534
    %v940 = vsel %vm939, %v938, %v936
    %s941 = scalar_lea.vmem %s0, 482
    %v942 = vld [vmem:[%s941] sm:$0x80]
    %vm943 = vcmask 1047559
    %v944 = vsel %vm943, %v942, %v940
    %945 = vrot.lane.b32.xlu0 %v944, 82
    %v946 = vpop.permute.xlu0 %945
    %vm947 = vcmask 687760
    %948 = vst.msk [vmem:[#allocation0] sm:$0x3] %vm947, %v946
    %s949 = scalar_lea.vmem [#allocation0], 6
    %950 = vst.msk [vmem:[%s949] sm:$0xc] %vm947, %v946
    %s951 = scalar_lea.vmem [#allocation0], 12
    %952 = vst.msk [vmem:[%s951] sm:$0x30] %vm947, %v946
    %s953 = scalar_lea.vmem [#allocation0], 18
    %954 = vst.msk [vmem:[%s953] sm:$0xc0] %vm947, %v946
    %s955 = scalar_lea.vmem %s0, 40
    %v956 = vld [vmem:[%s955] sm:$0x1]
    %s957 = scalar_lea.vmem %s0, 295
    %v958 = vld [vmem:[%s957] sm:$0x2]
    %vm959 = vcmask 1041409
    %v960 = vsel %vm959, %v958, %v956
    %s961 = scalar_lea.vmem %s0, 102
    %v962 = vld [vmem:[%s961] sm:$0x4]
    %vm963 = vcmask 1042434
    %v964 = vsel %vm963, %v962, %v960
    %s965 = scalar_lea.vmem %s0, 357
    %v966 = vld [vmem:[%s965] sm:$0x8]
    %vm967 = vcmask 1043459
    %v968 = vsel %vm967, %v966, %v964
    %s969 = scalar_lea.vmem %s0, 164
    %v970 = vld [vmem:[%s969] sm:$0x10]
    %vm971 = vcmask 1044484
    %v972 = vsel %vm971, %v970, %v968
    %s973 = scalar_lea.vmem %s0, 419
    %v974 = vld [vmem:[%s973] sm:$0x20]
    %vm975 = vcmask 1045509
    %v976 = vsel %vm975, %v974, %v972
    %s977 = scalar_lea.vmem %s0, 226
    %v978 = vld [vmem:[%s977] sm:$0x40]
    %vm979 = vcmask 1046534
    %v980 = vsel %vm979, %v978, %v976
    %s981 = scalar_lea.vmem %s0, 481
    %v982 = vld [vmem:[%s981] sm:$0x80]
    %vm983 = vcmask 1047559
    %v984 = vsel %vm983, %v982, %v980
    %985 = vrot.lane.b32.xlu0 %v984, 80
    %v986 = vpop.permute.xlu0 %985
    %vm987 = vcmask 671360
    %988 = vst.msk [vmem:[#allocation0] sm:$0x3] %vm987, %v986
    %s989 = scalar_lea.vmem [#allocation0], 6
    %990 = vst.msk [vmem:[%s989] sm:$0xc] %vm987, %v986
    %s991 = scalar_lea.vmem [#allocation0], 12
    %992 = vst.msk [vmem:[%s991] sm:$0x30] %vm987, %v986
    %s993 = scalar_lea.vmem [#allocation0], 18
    %994 = vst.msk [vmem:[%s993] sm:$0xc0] %vm987, %v986
    %s995 = scalar_lea.vmem %s0, 39
    %v996 = vld [vmem:[%s995] sm:$0x1]
    %s997 = scalar_lea.vmem %s0, 294
    %v998 = vld [vmem:[%s997] sm:$0x2]
    %vm999 = vcmask 1041409
    %v1000 = vsel %vm999, %v998, %v996
    %s1001 = scalar_lea.vmem %s0, 101
    %v1002 = vld [vmem:[%s1001] sm:$0x4]
    %vm1003 = vcmask 1042434
    %v1004 = vsel %vm1003, %v1002, %v1000
    %s1005 = scalar_lea.vmem %s0, 356
    %v1006 = vld [vmem:[%s1005] sm:$0x8]
    %vm1007 = vcmask 1043459
    %v1008 = vsel %vm1007, %v1006, %v1004
    %s1009 = scalar_lea.vmem %s0, 163
    %v1010 = vld [vmem:[%s1009] sm:$0x10]
    %vm1011 = vcmask 1044484
    %v1012 = vsel %vm1011, %v1010, %v1008
    %s1013 = scalar_lea.vmem %s0, 418
    %v1014 = vld [vmem:[%s1013] sm:$0x20]
    %vm1015 = vcmask 1045509
    %v1016 = vsel %vm1015, %v1014, %v1012
    %s1017 = scalar_lea.vmem %s0, 225
    %v1018 = vld [vmem:[%s1017] sm:$0x40]
    %vm1019 = vcmask 1046534
    %v1020 = vsel %vm1019, %v1018, %v1016
    %s1021 = scalar_lea.vmem %s0, 480
    %v1022 = vld [vmem:[%s1021] sm:$0x80]
    %vm1023 = vcmask 1047559
    %v1024 = vsel %vm1023, %v1022, %v1020
    %1025 = vrot.lane.b32.xlu0 %v1024, 78
    %v1026 = vpop.permute.xlu0 %1025
    %vm1027 = vcmask 654960
    %1028 = vst.msk [vmem:[#allocation0] sm:$0x3] %vm1027, %v1026
    %s1029 = scalar_lea.vmem [#allocation0], 6
    %1030 = vst.msk [vmem:[%s1029] sm:$0xc] %vm1027, %v1026
    %s1031 = scalar_lea.vmem [#allocation0], 12
    %1032 = vst.msk [vmem:[%s1031] sm:$0x30] %vm1027, %v1026
    %s1033 = scalar_lea.vmem [#allocation0], 18
    %1034 = vst.msk [vmem:[%s1033] sm:$0xc0] %vm1027, %v1026
    %s1035 = scalar_lea.vmem %s0, 38
    %v1036 = vld [vmem:[%s1035] sm:$0x1]
    %s1037 = scalar_lea.vmem %s0, 293
    %v1038 = vld [vmem:[%s1037] sm:$0x2]
    %vm1039 = vcmask 1041409
    %v1040 = vsel %vm1039, %v1038, %v1036
    %s1041 = scalar_lea.vmem %s0, 100
    %v1042 = vld [vmem:[%s1041] sm:$0x4]
    %vm1043 = vcmask 1042434
    %v1044 = vsel %vm1043, %v1042, %v1040
    %s1045 = scalar_lea.vmem %s0, 355
    %v1046 = vld [vmem:[%s1045] sm:$0x8]
    %vm1047 = vcmask 1043459
    %v1048 = vsel %vm1047, %v1046, %v1044
    %s1049 = scalar_lea.vmem %s0, 162
    %v1050 = vld [vmem:[%s1049] sm:$0x10]
    %vm1051 = vcmask 1044484
    %v1052 = vsel %vm1051, %v1050, %v1048
    %s1053 = scalar_lea.vmem %s0, 417
    %v1054 = vld [vmem:[%s1053] sm:$0x20]
    %vm1055 = vcmask 1045509
    %v1056 = vsel %vm1055, %v1054, %v1052
    %s1057 = scalar_lea.vmem %s0, 224
    %v1058 = vld [vmem:[%s1057] sm:$0x40]
    %vm1059 = vcmask 1046534
    %v1060 = vsel %vm1059, %v1058, %v1056
    %s1061 = scalar_lea.vmem %s0, 479
    %v1062 = vld [vmem:[%s1061] sm:$0x80]
    %vm1063 = vcmask 1047559
    %v1064 = vsel %vm1063, %v1062, %v1060
    %1065 = vrot.lane.b32.xlu0 %v1064, 76
    %v1066 = vpop.permute.xlu0 %1065
    %vm1067 = vcmask 638560
    %1068 = vst.msk [vmem:[#allocation0] sm:$0x3] %vm1067, %v1066
    %s1069 = scalar_lea.vmem [#allocation0], 6
    %1070 = vst.msk [vmem:[%s1069] sm:$0xc] %vm1067, %v1066
    %s1071 = scalar_lea.vmem [#allocation0], 12
    %1072 = vst.msk [vmem:[%s1071] sm:$0x30] %vm1067, %v1066
    %s1073 = scalar_lea.vmem [#allocation0], 18
    %1074 = vst.msk [vmem:[%s1073] sm:$0xc0] %vm1067, %v1066
    %s1075 = scalar_lea.vmem %s0, 37
    %v1076 = vld [vmem:[%s1075] sm:$0x1]
    %s1077 = scalar_lea.vmem %s0, 292
    %v1078 = vld [vmem:[%s1077] sm:$0x2]
    %vm1079 = vcmask 1041409
    %v1080 = vsel %vm1079, %v1078, %v1076
    %s1081 = scalar_lea.vmem %s0, 99
    %v1082 = vld [vmem:[%s1081] sm:$0x4]
    %vm1083 = vcmask 1042434
    %v1084 = vsel %vm1083, %v1082, %v1080
    %s1085 = scalar_lea.vmem %s0, 354
    %v1086 = vld [vmem:[%s1085] sm:$0x8]
    %vm1087 = vcmask 1043459
    %v1088 = vsel %vm1087, %v1086, %v1084
    %s1089 = scalar_lea.vmem %s0, 161
    %v1090 = vld [vmem:[%s1089] sm:$0x10]
    %vm1091 = vcmask 1044484
    %v1092 = vsel %vm1091, %v1090, %v1088
    %s1093 = scalar_lea.vmem %s0, 416
    %v1094 = vld [vmem:[%s1093] sm:$0x20]
    %vm1095 = vcmask 1045509
    %v1096 = vsel %vm1095, %v1094, %v1092
    %s1097 = scalar_lea.vmem %s0, 223
    %v1098 = vld [vmem:[%s1097] sm:$0x40]
    %vm1099 = vcmask 1046534
    %v1100 = vsel %vm1099, %v1098, %v1096
    %s1101 = scalar_lea.vmem %s0, 478
    %v1102 = vld [vmem:[%s1101] sm:$0x80]
    %vm1103 = vcmask 1047559
    %v1104 = vsel %vm1103, %v1102, %v1100
    %1105 = vrot.lane.b32.xlu0 %v1104, 74
    %v1106 = vpop.permute.xlu0 %1105
    %vm1107 = vcmask 622160
    %1108 = vst.msk [vmem:[#allocation0] sm:$0x3] %vm1107, %v1106
    %s1109 = scalar_lea.vmem [#allocation0], 6
    %1110 = vst.msk [vmem:[%s1109] sm:$0xc] %vm1107, %v1106
    %s1111 = scalar_lea.vmem [#allocation0], 12
    %1112 = vst.msk [vmem:[%s1111] sm:$0x30] %vm1107, %v1106
    %s1113 = scalar_lea.vmem [#allocation0], 18
    %1114 = vst.msk [vmem:[%s1113] sm:$0xc0] %vm1107, %v1106
    %s1115 = scalar_lea.vmem %s0, 36
    %v1116 = vld [vmem:[%s1115] sm:$0x1]
    %s1117 = scalar_lea.vmem %s0, 291
    %v1118 = vld [vmem:[%s1117] sm:$0x2]
    %vm1119 = vcmask 1041409
    %v1120 = vsel %vm1119, %v1118, %v1116
    %s1121 = scalar_lea.vmem %s0, 98
    %v1122 = vld [vmem:[%s1121] sm:$0x4]
    %vm1123 = vcmask 1042434
    %v1124 = vsel %vm1123, %v1122, %v1120
    %s1125 = scalar_lea.vmem %s0, 353
    %v1126 = vld [vmem:[%s1125] sm:$0x8]
    %vm1127 = vcmask 1043459
    %v1128 = vsel %vm1127, %v1126, %v1124
    %s1129 = scalar_lea.vmem %s0, 160
    %v1130 = vld [vmem:[%s1129] sm:$0x10]
    %vm1131 = vcmask 1044484
    %v1132 = vsel %vm1131, %v1130, %v1128
    %s1133 = scalar_lea.vmem %s0, 415
    %v1134 = vld [vmem:[%s1133] sm:$0x20]
    %vm1135 = vcmask 1045509
    %v1136 = vsel %vm1135, %v1134, %v1132
    %s1137 = scalar_lea.vmem %s0, 222
    %v1138 = vld [vmem:[%s1137] sm:$0x40]
    %vm1139 = vcmask 1046534
    %v1140 = vsel %vm1139, %v1138, %v1136
    %s1141 = scalar_lea.vmem %s0, 477
    %v1142 = vld [vmem:[%s1141] sm:$0x80]
    %vm1143 = vcmask 1047559
    %v1144 = vsel %vm1143, %v1142, %v1140
    %1145 = vrot.lane.b32.xlu0 %v1144, 72
    %v1146 = vpop.permute.xlu0 %1145
    %vm1147 = vcmask 605760
    %1148 = vst.msk [vmem:[#allocation0] sm:$0x3] %vm1147, %v1146
    %s1149 = scalar_lea.vmem [#allocation0], 6
    %1150 = vst.msk [vmem:[%s1149] sm:$0xc] %vm1147, %v1146
    %s1151 = scalar_lea.vmem [#allocation0], 12
    %1152 = vst.msk [vmem:[%s1151] sm:$0x30] %vm1147, %v1146
    %s1153 = scalar_lea.vmem [#allocation0], 18
    %1154 = vst.msk [vmem:[%s1153] sm:$0xc0] %vm1147, %v1146
    %s1155 = scalar_lea.vmem %s0, 35
    %v1156 = vld [vmem:[%s1155] sm:$0x1]
    %s1157 = scalar_lea.vmem %s0, 290
    %v1158 = vld [vmem:[%s1157] sm:$0x2]
    %vm1159 = vcmask 1041409
    %v1160 = vsel %vm1159, %v1158, %v1156
    %s1161 = scalar_lea.vmem %s0, 97
    %v1162 = vld [vmem:[%s1161] sm:$0x4]
    %vm1163 = vcmask 1042434
    %v1164 = vsel %vm1163, %v1162, %v1160
    %s1165 = scalar_lea.vmem %s0, 352
    %v1166 = vld [vmem:[%s1165] sm:$0x8]
    %vm1167 = vcmask 1043459
    %v1168 = vsel %vm1167, %v1166, %v1164
    %s1169 = scalar_lea.vmem %s0, 159
    %v1170 = vld [vmem:[%s1169] sm:$0x10]
    %vm1171 = vcmask 1044484
    %v1172 = vsel %vm1171, %v1170, %v1168
    %s1173 = scalar_lea.vmem %s0, 414
    %v1174 = vld [vmem:[%s1173] sm:$0x20]
    %vm1175 = vcmask 1045509
    %v1176 = vsel %vm1175, %v1174, %v1172
    %s1177 = scalar_lea.vmem %s0, 221
    %v1178 = vld [vmem:[%s1177] sm:$0x40]
    %vm1179 = vcmask 1046534
    %v1180 = vsel %vm1179, %v1178, %v1176
    %s1181 = scalar_lea.vmem %s0, 476
    %v1182 = vld [vmem:[%s1181] sm:$0x80]
    %vm1183 = vcmask 1047559
    %v1184 = vsel %vm1183, %v1182, %v1180
    %1185 = vrot.lane.b32.xlu0 %v1184, 70
    %v1186 = vpop.permute.xlu0 %1185
    %vm1187 = vcmask 589360
    %1188 = vst.msk [vmem:[#allocation0] sm:$0x3] %vm1187, %v1186
    %s1189 = scalar_lea.vmem [#allocation0], 6
    %1190 = vst.msk [vmem:[%s1189] sm:$0xc] %vm1187, %v1186
    %s1191 = scalar_lea.vmem [#allocation0], 12
    %1192 = vst.msk [vmem:[%s1191] sm:$0x30] %vm1187, %v1186
    %s1193 = scalar_lea.vmem [#allocation0], 18
    %1194 = vst.msk [vmem:[%s1193] sm:$0xc0] %vm1187, %v1186
    %s1195 = scalar_lea.vmem %s0, 34
    %v1196 = vld [vmem:[%s1195] sm:$0x1]
    %s1197 = scalar_lea.vmem %s0, 289
    %v1198 = vld [vmem:[%s1197] sm:$0x2]
    %vm1199 = vcmask 1041409
    %v1200 = vsel %vm1199, %v1198, %v1196
    %s1201 = scalar_lea.vmem %s0, 96
    %v1202 = vld [vmem:[%s1201] sm:$0x4]
    %vm1203 = vcmask 1042434
    %v1204 = vsel %vm1203, %v1202, %v1200
    %s1205 = scalar_lea.vmem %s0, 351
    %v1206 = vld [vmem:[%s1205] sm:$0x8]
    %vm1207 = vcmask 1043459
    %v1208 = vsel %vm1207, %v1206, %v1204
    %s1209 = scalar_lea.vmem %s0, 158
    %v1210 = vld [vmem:[%s1209] sm:$0x10]
    %vm1211 = vcmask 1044484
    %v1212 = vsel %vm1211, %v1210, %v1208
    %s1213 = scalar_lea.vmem %s0, 413
    %v1214 = vld [vmem:[%s1213] sm:$0x20]
    %vm1215 = vcmask 1045509
    %v1216 = vsel %vm1215, %v1214, %v1212
    %s1217 = scalar_lea.vmem %s0, 220
    %v1218 = vld [vmem:[%s1217] sm:$0x40]
    %vm1219 = vcmask 1046534
    %v1220 = vsel %vm1219, %v1218, %v1216
    %s1221 = scalar_lea.vmem %s0, 475
    %v1222 = vld [vmem:[%s1221] sm:$0x80]
    %vm1223 = vcmask 1047559
    %v1224 = vsel %vm1223, %v1222, %v1220
    %1225 = vrot.lane.b32.xlu0 %v1224, 68
    %v1226 = vpop.permute.xlu0 %1225
    %vm1227 = vcmask 572960
    %1228 = vst.msk [vmem:[#allocation0] sm:$0x3] %vm1227, %v1226
    %s1229 = scalar_lea.vmem [#allocation0], 6
    %1230 = vst.msk [vmem:[%s1229] sm:$0xc] %vm1227, %v1226
    %s1231 = scalar_lea.vmem [#allocation0], 12
    %1232 = vst.msk [vmem:[%s1231] sm:$0x30] %vm1227, %v1226
    %s1233 = scalar_lea.vmem [#allocation0], 18
    %1234 = vst.msk [vmem:[%s1233] sm:$0xc0] %vm1227, %v1226
    %s1235 = scalar_lea.vmem %s0, 33
    %v1236 = vld [vmem:[%s1235] sm:$0x1]
    %s1237 = scalar_lea.vmem %s0, 288
    %v1238 = vld [vmem:[%s1237] sm:$0x2]
    %vm1239 = vcmask 1041409
    %v1240 = vsel %vm1239, %v1238, %v1236
    %s1241 = scalar_lea.vmem %s0, 95
    %v1242 = vld [vmem:[%s1241] sm:$0x4]
    %vm1243 = vcmask 1042434
    %v1244 = vsel %vm1243, %v1242, %v1240
    %s1245 = scalar_lea.vmem %s0, 350
    %v1246 = vld [vmem:[%s1245] sm:$0x8]
    %vm1247 = vcmask 1043459
    %v1248 = vsel %vm1247, %v1246, %v1244
    %s1249 = scalar_lea.vmem %s0, 157
    %v1250 = vld [vmem:[%s1249] sm:$0x10]
    %vm1251 = vcmask 1044484
    %v1252 = vsel %vm1251, %v1250, %v1248
    %s1253 = scalar_lea.vmem %s0, 412
    %v1254 = vld [vmem:[%s1253] sm:$0x20]
    %vm1255 = vcmask 1045509
    %v1256 = vsel %vm1255, %v1254, %v1252
    %s1257 = scalar_lea.vmem %s0, 219
    %v1258 = vld [vmem:[%s1257] sm:$0x40]
    %vm1259 = vcmask 1046534
    %v1260 = vsel %vm1259, %v1258, %v1256
    %s1261 = scalar_lea.vmem %s0, 474
    %v1262 = vld [vmem:[%s1261] sm:$0x80]
    %vm1263 = vcmask 1047559
    %v1264 = vsel %vm1263, %v1262, %v1260
    %1265 = vrot.lane.b32.xlu0 %v1264, 66
    %v1266 = vpop.permute.xlu0 %1265
    %vm1267 = vcmask 556560
    %1268 = vst.msk [vmem:[#allocation0] sm:$0x3] %vm1267, %v1266
    %s1269 = scalar_lea.vmem [#allocation0], 6
    %1270 = vst.msk [vmem:[%s1269] sm:$0xc] %vm1267, %v1266
    %s1271 = scalar_lea.vmem [#allocation0], 12
    %1272 = vst.msk [vmem:[%s1271] sm:$0x30] %vm1267, %v1266
    %s1273 = scalar_lea.vmem [#allocation0], 18
    %1274 = vst.msk [vmem:[%s1273] sm:$0xc0] %vm1267, %v1266
    %s1275 = scalar_lea.vmem %s0, 32
    %v1276 = vld [vmem:[%s1275] sm:$0x1]
    %s1277 = scalar_lea.vmem %s0, 287
    %v1278 = vld [vmem:[%s1277] sm:$0x2]
    %vm1279 = vcmask 1041409
    %v1280 = vsel %vm1279, %v1278, %v1276
    %s1281 = scalar_lea.vmem %s0, 94
    %v1282 = vld [vmem:[%s1281] sm:$0x4]
    %vm1283 = vcmask 1042434
    %v1284 = vsel %vm1283, %v1282, %v1280
    %s1285 = scalar_lea.vmem %s0, 349
    %v1286 = vld [vmem:[%s1285] sm:$0x8]
    %vm1287 = vcmask 1043459
    %v1288 = vsel %vm1287, %v1286, %v1284
    %s1289 = scalar_lea.vmem %s0, 156
    %v1290 = vld [vmem:[%s1289] sm:$0x10]
    %vm1291 = vcmask 1044484
    %v1292 = vsel %vm1291, %v1290, %v1288
    %s1293 = scalar_lea.vmem %s0, 411
    %v1294 = vld [vmem:[%s1293] sm:$0x20]
    %vm1295 = vcmask 1045509
    %v1296 = vsel %vm1295, %v1294, %v1292
    %s1297 = scalar_lea.vmem %s0, 218
    %v1298 = vld [vmem:[%s1297] sm:$0x40]
    %vm1299 = vcmask 1046534
    %v1300 = vsel %vm1299, %v1298, %v1296
    %s1301 = scalar_lea.vmem %s0, 473
    %v1302 = vld [vmem:[%s1301] sm:$0x80]
    %vm1303 = vcmask 1047559
    %v1304 = vsel %vm1303, %v1302, %v1300
    %1305 = vrot.lane.b32.xlu0 %v1304, 64
    %v1306 = vpop.permute.xlu0 %1305
    %vm1307 = vcmask 540160
    %1308 = vst.msk [vmem:[#allocation0] sm:$0x3] %vm1307, %v1306
    %s1309 = scalar_lea.vmem [#allocation0], 6
    %1310 = vst.msk [vmem:[%s1309] sm:$0xc] %vm1307, %v1306
    %s1311 = scalar_lea.vmem [#allocation0], 12
    %1312 = vst.msk [vmem:[%s1311] sm:$0x30] %vm1307, %v1306
    %s1313 = scalar_lea.vmem [#allocation0], 18
    %1314 = vst.msk [vmem:[%s1313] sm:$0xc0] %vm1307, %v1306
    %s1315 = scalar_lea.vmem %s0, 31
    %v1316 = vld [vmem:[%s1315] sm:$0x1]
    %s1317 = scalar_lea.vmem %s0, 286
    %v1318 = vld [vmem:[%s1317] sm:$0x2]
    %vm1319 = vcmask 1041409
    %v1320 = vsel %vm1319, %v1318, %v1316
    %s1321 = scalar_lea.vmem %s0, 93
    %v1322 = vld [vmem:[%s1321] sm:$0x4]
    %vm1323 = vcmask 1042434
    %v1324 = vsel %vm1323, %v1322, %v1320
    %s1325 = scalar_lea.vmem %s0, 348
    %v1326 = vld [vmem:[%s1325] sm:$0x8]
    %vm1327 = vcmask 1043459
    %v1328 = vsel %vm1327, %v1326, %v1324
    %s1329 = scalar_lea.vmem %s0, 155
    %v1330 = vld [vmem:[%s1329] sm:$0x10]
    %vm1331 = vcmask 1044484
    %v1332 = vsel %vm1331, %v1330, %v1328
    %s1333 = scalar_lea.vmem %s0, 410
    %v1334 = vld [vmem:[%s1333] sm:$0x20]
    %vm1335 = vcmask 1045509
    %v1336 = vsel %vm1335, %v1334, %v1332
    %s1337 = scalar_lea.vmem %s0, 217
    %v1338 = vld [vmem:[%s1337] sm:$0x40]
    %vm1339 = vcmask 1046534
    %v1340 = vsel %vm1339, %v1338, %v1336
    %s1341 = scalar_lea.vmem %s0, 472
    %v1342 = vld [vmem:[%s1341] sm:$0x80]
    %vm1343 = vcmask 1047559
    %v1344 = vsel %vm1343, %v1342, %v1340
    %1345 = vrot.lane.b32.xlu0 %v1344, 62
    %v1346 = vpop.permute.xlu0 %1345
    %vm1347 = vcmask 523760
    %1348 = vst.msk [vmem:[#allocation0] sm:$0x3] %vm1347, %v1346
    %s1349 = scalar_lea.vmem [#allocation0], 6
    %1350 = vst.msk [vmem:[%s1349] sm:$0xc] %vm1347, %v1346
    %s1351 = scalar_lea.vmem [#allocation0], 12
    %1352 = vst.msk [vmem:[%s1351] sm:$0x30] %vm1347, %v1346
    %s1353 = scalar_lea.vmem [#allocation0], 18
    %1354 = vst.msk [vmem:[%s1353] sm:$0xc0] %vm1347, %v1346
    %s1355 = scalar_lea.vmem %s0, 30
    %v1356 = vld [vmem:[%s1355] sm:$0x1]
    %s1357 = scalar_lea.vmem %s0, 285
    %v1358 = vld [vmem:[%s1357] sm:$0x2]
    %vm1359 = vcmask 1041409
    %v1360 = vsel %vm1359, %v1358, %v1356
    %s1361 = scalar_lea.vmem %s0, 92
    %v1362 = vld [vmem:[%s1361] sm:$0x4]
    %vm1363 = vcmask 1042434
    %v1364 = vsel %vm1363, %v1362, %v1360
    %s1365 = scalar_lea.vmem %s0, 347
    %v1366 = vld [vmem:[%s1365] sm:$0x8]
    %vm1367 = vcmask 1043459
    %v1368 = vsel %vm1367, %v1366, %v1364
    %s1369 = scalar_lea.vmem %s0, 154
    %v1370 = vld [vmem:[%s1369] sm:$0x10]
    %vm1371 = vcmask 1044484
    %v1372 = vsel %vm1371, %v1370, %v1368
    %s1373 = scalar_lea.vmem %s0, 409
    %v1374 = vld [vmem:[%s1373] sm:$0x20]
    %vm1375 = vcmask 1045509
    %v1376 = vsel %vm1375, %v1374, %v1372
    %s1377 = scalar_lea.vmem %s0, 216
    %v1378 = vld [vmem:[%s1377] sm:$0x40]
    %vm1379 = vcmask 1046534
    %v1380 = vsel %vm1379, %v1378, %v1376
    %s1381 = scalar_lea.vmem %s0, 471
    %v1382 = vld [vmem:[%s1381] sm:$0x80]
    %vm1383 = vcmask 1047559
    %v1384 = vsel %vm1383, %v1382, %v1380
    %1385 = vrot.lane.b32.xlu0 %v1384, 60
    %v1386 = vpop.permute.xlu0 %1385
    %vm1387 = vcmask 507360
    %1388 = vst.msk [vmem:[#allocation0] sm:$0x3] %vm1387, %v1386
    %s1389 = scalar_lea.vmem [#allocation0], 6
    %1390 = vst.msk [vmem:[%s1389] sm:$0xc] %vm1387, %v1386
    %s1391 = scalar_lea.vmem [#allocation0], 12
    %1392 = vst.msk [vmem:[%s1391] sm:$0x30] %vm1387, %v1386
    %s1393 = scalar_lea.vmem [#allocation0], 18
    %1394 = vst.msk [vmem:[%s1393] sm:$0xc0] %vm1387, %v1386
    %s1395 = scalar_lea.vmem %s0, 29
    %v1396 = vld [vmem:[%s1395] sm:$0x1]
    %s1397 = scalar_lea.vmem %s0, 284
    %v1398 = vld [vmem:[%s1397] sm:$0x2]
    %vm1399 = vcmask 1041409
    %v1400 = vsel %vm1399, %v1398, %v1396
    %s1401 = scalar_lea.vmem %s0, 91
    %v1402 = vld [vmem:[%s1401] sm:$0x4]
    %vm1403 = vcmask 1042434
    %v1404 = vsel %vm1403, %v1402, %v1400
    %s1405 = scalar_lea.vmem %s0, 346
    %v1406 = vld [vmem:[%s1405] sm:$0x8]
    %vm1407 = vcmask 1043459
    %v1408 = vsel %vm1407, %v1406, %v1404
    %s1409 = scalar_lea.vmem %s0, 153
    %v1410 = vld [vmem:[%s1409] sm:$0x10]
    %vm1411 = vcmask 1044484
    %v1412 = vsel %vm1411, %v1410, %v1408
    %s1413 = scalar_lea.vmem %s0, 408
    %v1414 = vld [vmem:[%s1413] sm:$0x20]
    %vm1415 = vcmask 1045509
    %v1416 = vsel %vm1415, %v1414, %v1412
    %s1417 = scalar_lea.vmem %s0, 215
    %v1418 = vld [vmem:[%s1417] sm:$0x40]
    %vm1419 = vcmask 1046534
    %v1420 = vsel %vm1419, %v1418, %v1416
    %s1421 = scalar_lea.vmem %s0, 470
    %v1422 = vld [vmem:[%s1421] sm:$0x80]
    %vm1423 = vcmask 1047559
    %v1424 = vsel %vm1423, %v1422, %v1420
    %1425 = vrot.lane.b32.xlu0 %v1424, 58
    %v1426 = vpop.permute.xlu0 %1425
    %vm1427 = vcmask 490960
    %1428 = vst.msk [vmem:[#allocation0] sm:$0x3] %vm1427, %v1426
    %s1429 = scalar_lea.vmem [#allocation0], 6
    %1430 = vst.msk [vmem:[%s1429] sm:$0xc] %vm1427, %v1426
    %s1431 = scalar_lea.vmem [#allocation0], 12
    %1432 = vst.msk [vmem:[%s1431] sm:$0x30] %vm1427, %v1426
    %s1433 = scalar_lea.vmem [#allocation0], 18
    %1434 = vst.msk [vmem:[%s1433] sm:$0xc0] %vm1427, %v1426
    %s1435 = scalar_lea.vmem %s0, 28
    %v1436 = vld [vmem:[%s1435] sm:$0x1]
    %s1437 = scalar_lea.vmem %s0, 283
    %v1438 = vld [vmem:[%s1437] sm:$0x2]
    %vm1439 = vcmask 1041409
    %v1440 = vsel %vm1439, %v1438, %v1436
    %s1441 = scalar_lea.vmem %s0, 90
    %v1442 = vld [vmem:[%s1441] sm:$0x4]
    %vm1443 = vcmask 1042434
    %v1444 = vsel %vm1443, %v1442, %v1440
    %s1445 = scalar_lea.vmem %s0, 345
    %v1446 = vld [vmem:[%s1445] sm:$0x8]
    %vm1447 = vcmask 1043459
    %v1448 = vsel %vm1447, %v1446, %v1444
    %s1449 = scalar_lea.vmem %s0, 152
    %v1450 = vld [vmem:[%s1449] sm:$0x10]
    %vm1451 = vcmask 1044484
    %v1452 = vsel %vm1451, %v1450, %v1448
    %s1453 = scalar_lea.vmem %s0, 407
    %v1454 = vld [vmem:[%s1453] sm:$0x20]
    %vm1455 = vcmask 1045509
    %v1456 = vsel %vm1455, %v1454, %v1452
    %s1457 = scalar_lea.vmem %s0, 214
    %v1458 = vld [vmem:[%s1457] sm:$0x40]
    %vm1459 = vcmask 1046534
    %v1460 = vsel %vm1459, %v1458, %v1456
    %s1461 = scalar_lea.vmem %s0, 469
    %v1462 = vld [vmem:[%s1461] sm:$0x80]
    %vm1463 = vcmask 1047559
    %v1464 = vsel %vm1463, %v1462, %v1460
    %1465 = vrot.lane.b32.xlu0 %v1464, 56
    %v1466 = vpop.permute.xlu0 %1465
    %vm1467 = vcmask 474560
    %1468 = vst.msk [vmem:[#allocation0] sm:$0x3] %vm1467, %v1466
    %s1469 = scalar_lea.vmem [#allocation0], 6
    %1470 = vst.msk [vmem:[%s1469] sm:$0xc] %vm1467, %v1466
    %s1471 = scalar_lea.vmem [#allocation0], 12
    %1472 = vst.msk [vmem:[%s1471] sm:$0x30] %vm1467, %v1466
    %s1473 = scalar_lea.vmem [#allocation0], 18
    %1474 = vst.msk [vmem:[%s1473] sm:$0xc0] %vm1467, %v1466
    %s1475 = scalar_lea.vmem %s0, 27
    %v1476 = vld [vmem:[%s1475] sm:$0x1]
    %s1477 = scalar_lea.vmem %s0, 282
    %v1478 = vld [vmem:[%s1477] sm:$0x2]
    %vm1479 = vcmask 1041409
    %v1480 = vsel %vm1479, %v1478, %v1476
    %s1481 = scalar_lea.vmem %s0, 89
    %v1482 = vld [vmem:[%s1481] sm:$0x4]
    %vm1483 = vcmask 1042434
    %v1484 = vsel %vm1483, %v1482, %v1480
    %s1485 = scalar_lea.vmem %s0, 344
    %v1486 = vld [vmem:[%s1485] sm:$0x8]
    %vm1487 = vcmask 1043459
    %v1488 = vsel %vm1487, %v1486, %v1484
    %s1489 = scalar_lea.vmem %s0, 151
    %v1490 = vld [vmem:[%s1489] sm:$0x10]
    %vm1491 = vcmask 1044484
    %v1492 = vsel %vm1491, %v1490, %v1488
    %s1493 = scalar_lea.vmem %s0, 406
    %v1494 = vld [vmem:[%s1493] sm:$0x20]
    %vm1495 = vcmask 1045509
    %v1496 = vsel %vm1495, %v1494, %v1492
    %s1497 = scalar_lea.vmem %s0, 213
    %v1498 = vld [vmem:[%s1497] sm:$0x40]
    %vm1499 = vcmask 1046534
    %v1500 = vsel %vm1499, %v1498, %v1496
    %s1501 = scalar_lea.vmem %s0, 468
    %v1502 = vld [vmem:[%s1501] sm:$0x80]
    %vm1503 = vcmask 1047559
    %v1504 = vsel %vm1503, %v1502, %v1500
    %1505 = vrot.lane.b32.xlu0 %v1504, 54
    %v1506 = vpop.permute.xlu0 %1505
    %vm1507 = vcmask 458160
    %1508 = vst.msk [vmem:[#allocation0] sm:$0x3] %vm1507, %v1506
    %s1509 = scalar_lea.vmem [#allocation0], 6
    %1510 = vst.msk [vmem:[%s1509] sm:$0xc] %vm1507, %v1506
    %s1511 = scalar_lea.vmem [#allocation0], 12
    %1512 = vst.msk [vmem:[%s1511] sm:$0x30] %vm1507, %v1506
    %s1513 = scalar_lea.vmem [#allocation0], 18
    %1514 = vst.msk [vmem:[%s1513] sm:$0xc0] %vm1507, %v1506
    %s1515 = scalar_lea.vmem %s0, 26
    %v1516 = vld [vmem:[%s1515] sm:$0x1]
    %s1517 = scalar_lea.vmem %s0, 281
    %v1518 = vld [vmem:[%s1517] sm:$0x2]
    %vm1519 = vcmask 1041409
    %v1520 = vsel %vm1519, %v1518, %v1516
    %s1521 = scalar_lea.vmem %s0, 88
    %v1522 = vld [vmem:[%s1521] sm:$0x4]
    %vm1523 = vcmask 1042434
    %v1524 = vsel %vm1523, %v1522, %v1520
    %s1525 = scalar_lea.vmem %s0, 343
    %v1526 = vld [vmem:[%s1525] sm:$0x8]
    %vm1527 = vcmask 1043459
    %v1528 = vsel %vm1527, %v1526, %v1524
    %s1529 = scalar_lea.vmem %s0, 150
    %v1530 = vld [vmem:[%s1529] sm:$0x10]
    %vm1531 = vcmask 1044484
    %v1532 = vsel %vm1531, %v1530, %v1528
    %s1533 = scalar_lea.vmem %s0, 405
    %v1534 = vld [vmem:[%s1533] sm:$0x20]
    %vm1535 = vcmask 1045509
    %v1536 = vsel %vm1535, %v1534, %v1532
    %s1537 = scalar_lea.vmem %s0, 212
    %v1538 = vld [vmem:[%s1537] sm:$0x40]
    %vm1539 = vcmask 1046534
    %v1540 = vsel %vm1539, %v1538, %v1536
    %s1541 = scalar_lea.vmem %s0, 467
    %v1542 = vld [vmem:[%s1541] sm:$0x80]
    %vm1543 = vcmask 1047559
    %v1544 = vsel %vm1543, %v1542, %v1540
    %1545 = vrot.lane.b32.xlu0 %v1544, 52
    %v1546 = vpop.permute.xlu0 %1545
    %vm1547 = vcmask 441760
    %1548 = vst.msk [vmem:[#allocation0] sm:$0x3] %vm1547, %v1546
    %s1549 = scalar_lea.vmem [#allocation0], 6
    %1550 = vst.msk [vmem:[%s1549] sm:$0xc] %vm1547, %v1546
    %s1551 = scalar_lea.vmem [#allocation0], 12
    %1552 = vst.msk [vmem:[%s1551] sm:$0x30] %vm1547, %v1546
    %s1553 = scalar_lea.vmem [#allocation0], 18
    %1554 = vst.msk [vmem:[%s1553] sm:$0xc0] %vm1547, %v1546
    %s1555 = scalar_lea.vmem %s0, 25
    %v1556 = vld [vmem:[%s1555] sm:$0x1]
    %s1557 = scalar_lea.vmem %s0, 280
    %v1558 = vld [vmem:[%s1557] sm:$0x2]
    %vm1559 = vcmask 1041409
    %v1560 = vsel %vm1559, %v1558, %v1556
    %s1561 = scalar_lea.vmem %s0, 87
    %v1562 = vld [vmem:[%s1561] sm:$0x4]
    %vm1563 = vcmask 1042434
    %v1564 = vsel %vm1563, %v1562, %v1560
    %s1565 = scalar_lea.vmem %s0, 342
    %v1566 = vld [vmem:[%s1565] sm:$0x8]
    %vm1567 = vcmask 1043459
    %v1568 = vsel %vm1567, %v1566, %v1564
    %s1569 = scalar_lea.vmem %s0, 149
    %v1570 = vld [vmem:[%s1569] sm:$0x10]
    %vm1571 = vcmask 1044484
    %v1572 = vsel %vm1571, %v1570, %v1568
    %s1573 = scalar_lea.vmem %s0, 404
    %v1574 = vld [vmem:[%s1573] sm:$0x20]
    %vm1575 = vcmask 1045509
    %v1576 = vsel %vm1575, %v1574, %v1572
    %s1577 = scalar_lea.vmem %s0, 211
    %v1578 = vld [vmem:[%s1577] sm:$0x40]
    %vm1579 = vcmask 1046534
    %v1580 = vsel %vm1579, %v1578, %v1576
    %s1581 = scalar_lea.vmem %s0, 466
    %v1582 = vld [vmem:[%s1581] sm:$0x80]
    %vm1583 = vcmask 1047559
    %v1584 = vsel %vm1583, %v1582, %v1580
    %1585 = vrot.lane.b32.xlu0 %v1584, 50
    %v1586 = vpop.permute.xlu0 %1585
    %vm1587 = vcmask 425360
    %1588 = vst.msk [vmem:[#allocation0] sm:$0x3] %vm1587, %v1586
    %s1589 = scalar_lea.vmem [#allocation0], 6
    %1590 = vst.msk [vmem:[%s1589] sm:$0xc] %vm1587, %v1586
    %s1591 = scalar_lea.vmem [#allocation0], 12
    %1592 = vst.msk [vmem:[%s1591] sm:$0x30] %vm1587, %v1586
    %s1593 = scalar_lea.vmem [#allocation0], 18
    %1594 = vst.msk [vmem:[%s1593] sm:$0xc0] %vm1587, %v1586
    %s1595 = scalar_lea.vmem %s0, 24
    %v1596 = vld [vmem:[%s1595] sm:$0x1]
    %s1597 = scalar_lea.vmem %s0, 279
    %v1598 = vld [vmem:[%s1597] sm:$0x2]
    %vm1599 = vcmask 1041409
    %v1600 = vsel %vm1599, %v1598, %v1596
    %s1601 = scalar_lea.vmem %s0, 86
    %v1602 = vld [vmem:[%s1601] sm:$0x4]
    %vm1603 = vcmask 1042434
    %v1604 = vsel %vm1603, %v1602, %v1600
    %s1605 = scalar_lea.vmem %s0, 341
    %v1606 = vld [vmem:[%s1605] sm:$0x8]
    %vm1607 = vcmask 1043459
    %v1608 = vsel %vm1607, %v1606, %v1604
    %s1609 = scalar_lea.vmem %s0, 148
    %v1610 = vld [vmem:[%s1609] sm:$0x10]
    %vm1611 = vcmask 1044484
    %v1612 = vsel %vm1611, %v1610, %v1608
    %s1613 = scalar_lea.vmem %s0, 403
    %v1614 = vld [vmem:[%s1613] sm:$0x20]
    %vm1615 = vcmask 1045509
    %v1616 = vsel %vm1615, %v1614, %v1612
    %s1617 = scalar_lea.vmem %s0, 210
    %v1618 = vld [vmem:[%s1617] sm:$0x40]
    %vm1619 = vcmask 1046534
    %v1620 = vsel %vm1619, %v1618, %v1616
    %s1621 = scalar_lea.vmem %s0, 465
    %v1622 = vld [vmem:[%s1621] sm:$0x80]
    %vm1623 = vcmask 1047559
    %v1624 = vsel %vm1623, %v1622, %v1620
    %1625 = vrot.lane.b32.xlu0 %v1624, 48
    %v1626 = vpop.permute.xlu0 %1625
    %vm1627 = vcmask 408960
    %1628 = vst.msk [vmem:[#allocation0] sm:$0x3] %vm1627, %v1626
    %s1629 = scalar_lea.vmem [#allocation0], 6
    %1630 = vst.msk [vmem:[%s1629] sm:$0xc] %vm1627, %v1626
    %s1631 = scalar_lea.vmem [#allocation0], 12
    %1632 = vst.msk [vmem:[%s1631] sm:$0x30] %vm1627, %v1626
    %s1633 = scalar_lea.vmem [#allocation0], 18
    %1634 = vst.msk [vmem:[%s1633] sm:$0xc0] %vm1627, %v1626
    %s1635 = scalar_lea.vmem %s0, 23
    %v1636 = vld [vmem:[%s1635] sm:$0x1]
    %s1637 = scalar_lea.vmem %s0, 278
    %v1638 = vld [vmem:[%s1637] sm:$0x2]
    %vm1639 = vcmask 1041409
    %v1640 = vsel %vm1639, %v1638, %v1636
    %s1641 = scalar_lea.vmem %s0, 85
    %v1642 = vld [vmem:[%s1641] sm:$0x4]
    %vm1643 = vcmask 1042434
    %v1644 = vsel %vm1643, %v1642, %v1640
    %s1645 = scalar_lea.vmem %s0, 340
    %v1646 = vld [vmem:[%s1645] sm:$0x8]
    %vm1647 = vcmask 1043459
    %v1648 = vsel %vm1647, %v1646, %v1644
    %s1649 = scalar_lea.vmem %s0, 147
    %v1650 = vld [vmem:[%s1649] sm:$0x10]
    %vm1651 = vcmask 1044484
    %v1652 = vsel %vm1651, %v1650, %v1648
    %s1653 = scalar_lea.vmem %s0, 402
    %v1654 = vld [vmem:[%s1653] sm:$0x20]
    %vm1655 = vcmask 1045509
    %v1656 = vsel %vm1655, %v1654, %v1652
    %s1657 = scalar_lea.vmem %s0, 209
    %v1658 = vld [vmem:[%s1657] sm:$0x40]
    %vm1659 = vcmask 1046534
    %v1660 = vsel %vm1659, %v1658, %v1656
    %s1661 = scalar_lea.vmem %s0, 464
    %v1662 = vld [vmem:[%s1661] sm:$0x80]
    %vm1663 = vcmask 1047559
    %v1664 = vsel %vm1663, %v1662, %v1660
    %1665 = vrot.lane.b32.xlu0 %v1664, 46
    %v1666 = vpop.permute.xlu0 %1665
    %vm1667 = vcmask 392560
    %1668 = vst.msk [vmem:[#allocation0] sm:$0x3] %vm1667, %v1666
    %s1669 = scalar_lea.vmem [#allocation0], 6
    %1670 = vst.msk [vmem:[%s1669] sm:$0xc] %vm1667, %v1666
    %s1671 = scalar_lea.vmem [#allocation0], 12
    %1672 = vst.msk [vmem:[%s1671] sm:$0x30] %vm1667, %v1666
    %s1673 = scalar_lea.vmem [#allocation0], 18
    %1674 = vst.msk [vmem:[%s1673] sm:$0xc0] %vm1667, %v1666
    %s1675 = scalar_lea.vmem %s0, 22
    %v1676 = vld [vmem:[%s1675] sm:$0x1]
    %s1677 = scalar_lea.vmem %s0, 277
    %v1678 = vld [vmem:[%s1677] sm:$0x2]
    %vm1679 = vcmask 1041409
    %v1680 = vsel %vm1679, %v1678, %v1676
    %s1681 = scalar_lea.vmem %s0, 84
    %v1682 = vld [vmem:[%s1681] sm:$0x4]
    %vm1683 = vcmask 1042434
    %v1684 = vsel %vm1683, %v1682, %v1680
    %s1685 = scalar_lea.vmem %s0, 339
    %v1686 = vld [vmem:[%s1685] sm:$0x8]
    %vm1687 = vcmask 1043459
    %v1688 = vsel %vm1687, %v1686, %v1684
    %s1689 = scalar_lea.vmem %s0, 146
    %v1690 = vld [vmem:[%s1689] sm:$0x10]
    %vm1691 = vcmask 1044484
    %v1692 = vsel %vm1691, %v1690, %v1688
    %s1693 = scalar_lea.vmem %s0, 401
    %v1694 = vld [vmem:[%s1693] sm:$0x20]
    %vm1695 = vcmask 1045509
    %v1696 = vsel %vm1695, %v1694, %v1692
    %s1697 = scalar_lea.vmem %s0, 208
    %v1698 = vld [vmem:[%s1697] sm:$0x40]
    %vm1699 = vcmask 1046534
    %v1700 = vsel %vm1699, %v1698, %v1696
    %s1701 = scalar_lea.vmem %s0, 463
    %v1702 = vld [vmem:[%s1701] sm:$0x80]
    %vm1703 = vcmask 1047559
    %v1704 = vsel %vm1703, %v1702, %v1700
    %1705 = vrot.lane.b32.xlu0 %v1704, 44
    %v1706 = vpop.permute.xlu0 %1705
    %vm1707 = vcmask 376160
    %1708 = vst.msk [vmem:[#allocation0] sm:$0x3] %vm1707, %v1706
    %s1709 = scalar_lea.vmem [#allocation0], 6
    %1710 = vst.msk [vmem:[%s1709] sm:$0xc] %vm1707, %v1706
    %s1711 = scalar_lea.vmem [#allocation0], 12
    %1712 = vst.msk [vmem:[%s1711] sm:$0x30] %vm1707, %v1706
    %s1713 = scalar_lea.vmem [#allocation0], 18
    %1714 = vst.msk [vmem:[%s1713] sm:$0xc0] %vm1707, %v1706
    %s1715 = scalar_lea.vmem %s0, 21
    %v1716 = vld [vmem:[%s1715] sm:$0x1]
    %s1717 = scalar_lea.vmem %s0, 276
    %v1718 = vld [vmem:[%s1717] sm:$0x2]
    %vm1719 = vcmask 1041409
    %v1720 = vsel %vm1719, %v1718, %v1716
    %s1721 = scalar_lea.vmem %s0, 83
    %v1722 = vld [vmem:[%s1721] sm:$0x4]
    %vm1723 = vcmask 1042434
    %v1724 = vsel %vm1723, %v1722, %v1720
    %s1725 = scalar_lea.vmem %s0, 338
    %v1726 = vld [vmem:[%s1725] sm:$0x8]
    %vm1727 = vcmask 1043459
    %v1728 = vsel %vm1727, %v1726, %v1724
    %s1729 = scalar_lea.vmem %s0, 145
    %v1730 = vld [vmem:[%s1729] sm:$0x10]
    %vm1731 = vcmask 1044484
    %v1732 = vsel %vm1731, %v1730, %v1728
    %s1733 = scalar_lea.vmem %s0, 400
    %v1734 = vld [vmem:[%s1733] sm:$0x20]
    %vm1735 = vcmask 1045509
    %v1736 = vsel %vm1735, %v1734, %v1732
    %s1737 = scalar_lea.vmem %s0, 207
    %v1738 = vld [vmem:[%s1737] sm:$0x40]
    %vm1739 = vcmask 1046534
    %v1740 = vsel %vm1739, %v1738, %v1736
    %s1741 = scalar_lea.vmem %s0, 462
    %v1742 = vld [vmem:[%s1741] sm:$0x80]
    %vm1743 = vcmask 1047559
    %v1744 = vsel %vm1743, %v1742, %v1740
    %1745 = vrot.lane.b32.xlu0 %v1744, 42
    %v1746 = vpop.permute.xlu0 %1745
    %vm1747 = vcmask 359760
    %1748 = vst.msk [vmem:[#allocation0] sm:$0x3] %vm1747, %v1746
    %s1749 = scalar_lea.vmem [#allocation0], 6
    %1750 = vst.msk [vmem:[%s1749] sm:$0xc] %vm1747, %v1746
    %s1751 = scalar_lea.vmem [#allocation0], 12
    %1752 = vst.msk [vmem:[%s1751] sm:$0x30] %vm1747, %v1746
    %s1753 = scalar_lea.vmem [#allocation0], 18
    %1754 = vst.msk [vmem:[%s1753] sm:$0xc0] %vm1747, %v1746
    %s1755 = scalar_lea.vmem %s0, 20
    %v1756 = vld [vmem:[%s1755] sm:$0x1]
    %s1757 = scalar_lea.vmem %s0, 275
    %v1758 = vld [vmem:[%s1757] sm:$0x2]
    %vm1759 = vcmask 1041409
    %v1760 = vsel %vm1759, %v1758, %v1756
    %s1761 = scalar_lea.vmem %s0, 82
    %v1762 = vld [vmem:[%s1761] sm:$0x4]
    %vm1763 = vcmask 1042434
    %v1764 = vsel %vm1763, %v1762, %v1760
    %s1765 = scalar_lea.vmem %s0, 337
    %v1766 = vld [vmem:[%s1765] sm:$0x8]
    %vm1767 = vcmask 1043459
    %v1768 = vsel %vm1767, %v1766, %v1764
    %s1769 = scalar_lea.vmem %s0, 144
    %v1770 = vld [vmem:[%s1769] sm:$0x10]
    %vm1771 = vcmask 1044484
    %v1772 = vsel %vm1771, %v1770, %v1768
    %s1773 = scalar_lea.vmem %s0, 399
    %v1774 = vld [vmem:[%s1773] sm:$0x20]
    %vm1775 = vcmask 1045509
    %v1776 = vsel %vm1775, %v1774, %v1772
    %s1777 = scalar_lea.vmem %s0, 206
    %v1778 = vld [vmem:[%s1777] sm:$0x40]
    %vm1779 = vcmask 1046534
    %v1780 = vsel %vm1779, %v1778, %v1776
    %s1781 = scalar_lea.vmem %s0, 461
    %v1782 = vld [vmem:[%s1781] sm:$0x80]
    %vm1783 = vcmask 1047559
    %v1784 = vsel %vm1783, %v1782, %v1780
    %1785 = vrot.lane.b32.xlu0 %v1784, 40
    %v1786 = vpop.permute.xlu0 %1785
    %vm1787 = vcmask 343360
    %1788 = vst.msk [vmem:[#allocation0] sm:$0x3] %vm1787, %v1786
    %s1789 = scalar_lea.vmem [#allocation0], 6
    %1790 = vst.msk [vmem:[%s1789] sm:$0xc] %vm1787, %v1786
    %s1791 = scalar_lea.vmem [#allocation0], 12
    %1792 = vst.msk [vmem:[%s1791] sm:$0x30] %vm1787, %v1786
    %s1793 = scalar_lea.vmem [#allocation0], 18
    %1794 = vst.msk [vmem:[%s1793] sm:$0xc0] %vm1787, %v1786
    %s1795 = scalar_lea.vmem %s0, 19
    %v1796 = vld [vmem:[%s1795] sm:$0x1]
    %s1797 = scalar_lea.vmem %s0, 274
    %v1798 = vld [vmem:[%s1797] sm:$0x2]
    %vm1799 = vcmask 1041409
    %v1800 = vsel %vm1799, %v1798, %v1796
    %s1801 = scalar_lea.vmem %s0, 81
    %v1802 = vld [vmem:[%s1801] sm:$0x4]
    %vm1803 = vcmask 1042434
    %v1804 = vsel %vm1803, %v1802, %v1800
    %s1805 = scalar_lea.vmem %s0, 336
    %v1806 = vld [vmem:[%s1805] sm:$0x8]
    %vm1807 = vcmask 1043459
    %v1808 = vsel %vm1807, %v1806, %v1804
    %s1809 = scalar_lea.vmem %s0, 143
    %v1810 = vld [vmem:[%s1809] sm:$0x10]
    %vm1811 = vcmask 1044484
    %v1812 = vsel %vm1811, %v1810, %v1808
    %s1813 = scalar_lea.vmem %s0, 398
    %v1814 = vld [vmem:[%s1813] sm:$0x20]
    %vm1815 = vcmask 1045509
    %v1816 = vsel %vm1815, %v1814, %v1812
    %s1817 = scalar_lea.vmem %s0, 205
    %v1818 = vld [vmem:[%s1817] sm:$0x40]
    %vm1819 = vcmask 1046534
    %v1820 = vsel %vm1819, %v1818, %v1816
    %s1821 = scalar_lea.vmem %s0, 460
    %v1822 = vld [vmem:[%s1821] sm:$0x80]
    %vm1823 = vcmask 1047559
    %v1824 = vsel %vm1823, %v1822, %v1820
    %1825 = vrot.lane.b32.xlu0 %v1824, 38
    %v1826 = vpop.permute.xlu0 %1825
    %vm1827 = vcmask 326960
    %1828 = vst.msk [vmem:[#allocation0] sm:$0x3] %vm1827, %v1826
    %s1829 = scalar_lea.vmem [#allocation0], 6
    %1830 = vst.msk [vmem:[%s1829] sm:$0xc] %vm1827, %v1826
    %s1831 = scalar_lea.vmem [#allocation0], 12
    %1832 = vst.msk [vmem:[%s1831] sm:$0x30] %vm1827, %v1826
    %s1833 = scalar_lea.vmem [#allocation0], 18
    %1834 = vst.msk [vmem:[%s1833] sm:$0xc0] %vm1827, %v1826
    %s1835 = scalar_lea.vmem %s0, 18
    %v1836 = vld [vmem:[%s1835] sm:$0x1]
    %s1837 = scalar_lea.vmem %s0, 273
    %v1838 = vld [vmem:[%s1837] sm:$0x2]
    %vm1839 = vcmask 1041409
    %v1840 = vsel %vm1839, %v1838, %v1836
    %s1841 = scalar_lea.vmem %s0, 80
    %v1842 = vld [vmem:[%s1841] sm:$0x4]
    %vm1843 = vcmask 1042434
    %v1844 = vsel %vm1843, %v1842, %v1840
    %s1845 = scalar_lea.vmem %s0, 335
    %v1846 = vld [vmem:[%s1845] sm:$0x8]
    %vm1847 = vcmask 1043459
    %v1848 = vsel %vm1847, %v1846, %v1844
    %s1849 = scalar_lea.vmem %s0, 142
    %v1850 = vld [vmem:[%s1849] sm:$0x10]
    %vm1851 = vcmask 1044484
    %v1852 = vsel %vm1851, %v1850, %v1848
    %s1853 = scalar_lea.vmem %s0, 397
    %v1854 = vld [vmem:[%s1853] sm:$0x20]
    %vm1855 = vcmask 1045509
    %v1856 = vsel %vm1855, %v1854, %v1852
    %s1857 = scalar_lea.vmem %s0, 204
    %v1858 = vld [vmem:[%s1857] sm:$0x40]
    %vm1859 = vcmask 1046534
    %v1860 = vsel %vm1859, %v1858, %v1856
    %s1861 = scalar_lea.vmem %s0, 459
    %v1862 = vld [vmem:[%s1861] sm:$0x80]
    %vm1863 = vcmask 1047559
    %v1864 = vsel %vm1863, %v1862, %v1860
    %1865 = vrot.lane.b32.xlu0 %v1864, 36
    %v1866 = vpop.permute.xlu0 %1865
    %vm1867 = vcmask 310560
    %1868 = vst.msk [vmem:[#allocation0] sm:$0x3] %vm1867, %v1866
    %s1869 = scalar_lea.vmem [#allocation0], 6
    %1870 = vst.msk [vmem:[%s1869] sm:$0xc] %vm1867, %v1866
    %s1871 = scalar_lea.vmem [#allocation0], 12
    %1872 = vst.msk [vmem:[%s1871] sm:$0x30] %vm1867, %v1866
    %s1873 = scalar_lea.vmem [#allocation0], 18
    %1874 = vst.msk [vmem:[%s1873] sm:$0xc0] %vm1867, %v1866
    %s1875 = scalar_lea.vmem %s0, 17
    %v1876 = vld [vmem:[%s1875] sm:$0x1]
    %s1877 = scalar_lea.vmem %s0, 272
    %v1878 = vld [vmem:[%s1877] sm:$0x2]
    %vm1879 = vcmask 1041409
    %v1880 = vsel %vm1879, %v1878, %v1876
    %s1881 = scalar_lea.vmem %s0, 79
    %v1882 = vld [vmem:[%s1881] sm:$0x4]
    %vm1883 = vcmask 1042434
    %v1884 = vsel %vm1883, %v1882, %v1880
    %s1885 = scalar_lea.vmem %s0, 334
    %v1886 = vld [vmem:[%s1885] sm:$0x8]
    %vm1887 = vcmask 1043459
    %v1888 = vsel %vm1887, %v1886, %v1884
    %s1889 = scalar_lea.vmem %s0, 141
    %v1890 = vld [vmem:[%s1889] sm:$0x10]
    %vm1891 = vcmask 1044484
    %v1892 = vsel %vm1891, %v1890, %v1888
    %s1893 = scalar_lea.vmem %s0, 396
    %v1894 = vld [vmem:[%s1893] sm:$0x20]
    %vm1895 = vcmask 1045509
    %v1896 = vsel %vm1895, %v1894, %v1892
    %s1897 = scalar_lea.vmem %s0, 203
    %v1898 = vld [vmem:[%s1897] sm:$0x40]
    %vm1899 = vcmask 1046534
    %v1900 = vsel %vm1899, %v1898, %v1896
    %s1901 = scalar_lea.vmem %s0, 458
    %v1902 = vld [vmem:[%s1901] sm:$0x80]
    %vm1903 = vcmask 1047559
    %v1904 = vsel %vm1903, %v1902, %v1900
    %1905 = vrot.lane.b32.xlu0 %v1904, 34
    %v1906 = vpop.permute.xlu0 %1905
    %vm1907 = vcmask 294160
    %1908 = vst.msk [vmem:[#allocation0] sm:$0x3] %vm1907, %v1906
    %s1909 = scalar_lea.vmem [#allocation0], 6
    %1910 = vst.msk [vmem:[%s1909] sm:$0xc] %vm1907, %v1906
    %s1911 = scalar_lea.vmem [#allocation0], 12
    %1912 = vst.msk [vmem:[%s1911] sm:$0x30] %vm1907, %v1906
    %s1913 = scalar_lea.vmem [#allocation0], 18
    %1914 = vst.msk [vmem:[%s1913] sm:$0xc0] %vm1907, %v1906
    %s1915 = scalar_lea.vmem %s0, 16
    %v1916 = vld [vmem:[%s1915] sm:$0x1]
    %s1917 = scalar_lea.vmem %s0, 271
    %v1918 = vld [vmem:[%s1917] sm:$0x2]
    %vm1919 = vcmask 1041409
    %v1920 = vsel %vm1919, %v1918, %v1916
    %s1921 = scalar_lea.vmem %s0, 78
    %v1922 = vld [vmem:[%s1921] sm:$0x4]
    %vm1923 = vcmask 1042434
    %v1924 = vsel %vm1923, %v1922, %v1920
    %s1925 = scalar_lea.vmem %s0, 333
    %v1926 = vld [vmem:[%s1925] sm:$0x8]
    %vm1927 = vcmask 1043459
    %v1928 = vsel %vm1927, %v1926, %v1924
    %s1929 = scalar_lea.vmem %s0, 140
    %v1930 = vld [vmem:[%s1929] sm:$0x10]
    %vm1931 = vcmask 1044484
    %v1932 = vsel %vm1931, %v1930, %v1928
    %s1933 = scalar_lea.vmem %s0, 395
    %v1934 = vld [vmem:[%s1933] sm:$0x20]
    %vm1935 = vcmask 1045509
    %v1936 = vsel %vm1935, %v1934, %v1932
    %s1937 = scalar_lea.vmem %s0, 202
    %v1938 = vld [vmem:[%s1937] sm:$0x40]
    %vm1939 = vcmask 1046534
    %v1940 = vsel %vm1939, %v1938, %v1936
    %s1941 = scalar_lea.vmem %s0, 457
    %v1942 = vld [vmem:[%s1941] sm:$0x80]
    %vm1943 = vcmask 1047559
    %v1944 = vsel %vm1943, %v1942, %v1940
    %1945 = vrot.lane.b32.xlu0 %v1944, 32
    %v1946 = vpop.permute.xlu0 %1945
    %vm1947 = vcmask 277760
    %1948 = vst.msk [vmem:[#allocation0] sm:$0x3] %vm1947, %v1946
    %s1949 = scalar_lea.vmem [#allocation0], 6
    %1950 = vst.msk [vmem:[%s1949] sm:$0xc] %vm1947, %v1946
    %s1951 = scalar_lea.vmem [#allocation0], 12
    %1952 = vst.msk [vmem:[%s1951] sm:$0x30] %vm1947, %v1946
    %s1953 = scalar_lea.vmem [#allocation0], 18
    %1954 = vst.msk [vmem:[%s1953] sm:$0xc0] %vm1947, %v1946
    %s1955 = scalar_lea.vmem %s0, 15
    %v1956 = vld [vmem:[%s1955] sm:$0x1]
    %s1957 = scalar_lea.vmem %s0, 270
    %v1958 = vld [vmem:[%s1957] sm:$0x2]
    %vm1959 = vcmask 1041409
    %v1960 = vsel %vm1959, %v1958, %v1956
    %s1961 = scalar_lea.vmem %s0, 77
    %v1962 = vld [vmem:[%s1961] sm:$0x4]
    %vm1963 = vcmask 1042434
    %v1964 = vsel %vm1963, %v1962, %v1960
    %s1965 = scalar_lea.vmem %s0, 332
    %v1966 = vld [vmem:[%s1965] sm:$0x8]
    %vm1967 = vcmask 1043459
    %v1968 = vsel %vm1967, %v1966, %v1964
    %s1969 = scalar_lea.vmem %s0, 139
    %v1970 = vld [vmem:[%s1969] sm:$0x10]
    %vm1971 = vcmask 1044484
    %v1972 = vsel %vm1971, %v1970, %v1968
    %s1973 = scalar_lea.vmem %s0, 394
    %v1974 = vld [vmem:[%s1973] sm:$0x20]
    %vm1975 = vcmask 1045509
    %v1976 = vsel %vm1975, %v1974, %v1972
    %s1977 = scalar_lea.vmem %s0, 201
    %v1978 = vld [vmem:[%s1977] sm:$0x40]
    %vm1979 = vcmask 1046534
    %v1980 = vsel %vm1979, %v1978, %v1976
    %s1981 = scalar_lea.vmem %s0, 456
    %v1982 = vld [vmem:[%s1981] sm:$0x80]
    %vm1983 = vcmask 1047559
    %v1984 = vsel %vm1983, %v1982, %v1980
    %1985 = vrot.lane.b32.xlu0 %v1984, 30
    %v1986 = vpop.permute.xlu0 %1985
    %vm1987 = vcmask 261360
    %1988 = vst.msk [vmem:[#allocation0] sm:$0x3] %vm1987, %v1986
    %s1989 = scalar_lea.vmem [#allocation0], 6
    %1990 = vst.msk [vmem:[%s1989] sm:$0xc] %vm1987, %v1986
    %s1991 = scalar_lea.vmem [#allocation0], 12
    %1992 = vst.msk [vmem:[%s1991] sm:$0x30] %vm1987, %v1986
    %s1993 = scalar_lea.vmem [#allocation0], 18
    %1994 = vst.msk [vmem:[%s1993] sm:$0xc0] %vm1987, %v1986
    %s1995 = scalar_lea.vmem %s0, 14
    %v1996 = vld [vmem:[%s1995] sm:$0x1]
    %s1997 = scalar_lea.vmem %s0, 269
    %v1998 = vld [vmem:[%s1997] sm:$0x2]
    %vm1999 = vcmask 1041409
    %v2000 = vsel %vm1999, %v1998, %v1996
    %s2001 = scalar_lea.vmem %s0, 76
    %v2002 = vld [vmem:[%s2001] sm:$0x4]
    %vm2003 = vcmask 1042434
    %v2004 = vsel %vm2003, %v2002, %v2000
    %s2005 = scalar_lea.vmem %s0, 331
    %v2006 = vld [vmem:[%s2005] sm:$0x8]
    %vm2007 = vcmask 1043459
    %v2008 = vsel %vm2007, %v2006, %v2004
    %s2009 = scalar_lea.vmem %s0, 138
    %v2010 = vld [vmem:[%s2009] sm:$0x10]
    %vm2011 = vcmask 1044484
    %v2012 = vsel %vm2011, %v2010, %v2008
    %s2013 = scalar_lea.vmem %s0, 393
    %v2014 = vld [vmem:[%s2013] sm:$0x20]
    %vm2015 = vcmask 1045509
    %v2016 = vsel %vm2015, %v2014, %v2012
    %s2017 = scalar_lea.vmem %s0, 200
    %v2018 = vld [vmem:[%s2017] sm:$0x40]
    %vm2019 = vcmask 1046534
    %v2020 = vsel %vm2019, %v2018, %v2016
    %s2021 = scalar_lea.vmem %s0, 455
    %v2022 = vld [vmem:[%s2021] sm:$0x80]
    %vm2023 = vcmask 1047559
    %v2024 = vsel %vm2023, %v2022, %v2020
    %2025 = vrot.lane.b32.xlu0 %v2024, 28
    %v2026 = vpop.permute.xlu0 %2025
    %vm2027 = vcmask 244960
    %2028 = vst.msk [vmem:[#allocation0] sm:$0x3] %vm2027, %v2026
    %s2029 = scalar_lea.vmem [#allocation0], 6
    %2030 = vst.msk [vmem:[%s2029] sm:$0xc] %vm2027, %v2026
    %s2031 = scalar_lea.vmem [#allocation0], 12
    %2032 = vst.msk [vmem:[%s2031] sm:$0x30] %vm2027, %v2026
    %s2033 = scalar_lea.vmem [#allocation0], 18
    %2034 = vst.msk [vmem:[%s2033] sm:$0xc0] %vm2027, %v2026
    %s2035 = scalar_lea.vmem %s0, 13
    %v2036 = vld [vmem:[%s2035] sm:$0x1]
    %s2037 = scalar_lea.vmem %s0, 268
    %v2038 = vld [vmem:[%s2037] sm:$0x2]
    %vm2039 = vcmask 1041409
    %v2040 = vsel %vm2039, %v2038, %v2036
    %s2041 = scalar_lea.vmem %s0, 75
    %v2042 = vld [vmem:[%s2041] sm:$0x4]
    %vm2043 = vcmask 1042434
    %v2044 = vsel %vm2043, %v2042, %v2040
    %s2045 = scalar_lea.vmem %s0, 330
    %v2046 = vld [vmem:[%s2045] sm:$0x8]
    %vm2047 = vcmask 1043459
    %v2048 = vsel %vm2047, %v2046, %v2044
    %s2049 = scalar_lea.vmem %s0, 137
    %v2050 = vld [vmem:[%s2049] sm:$0x10]
    %vm2051 = vcmask 1044484
    %v2052 = vsel %vm2051, %v2050, %v2048
    %s2053 = scalar_lea.vmem %s0, 392
    %v2054 = vld [vmem:[%s2053] sm:$0x20]
    %vm2055 = vcmask 1045509
    %v2056 = vsel %vm2055, %v2054, %v2052
    %s2057 = scalar_lea.vmem %s0, 199
    %v2058 = vld [vmem:[%s2057] sm:$0x40]
    %vm2059 = vcmask 1046534
    %v2060 = vsel %vm2059, %v2058, %v2056
    %s2061 = scalar_lea.vmem %s0, 454
    %v2062 = vld [vmem:[%s2061] sm:$0x80]
    %vm2063 = vcmask 1047559
    %v2064 = vsel %vm2063, %v2062, %v2060
    %2065 = vrot.lane.b32.xlu0 %v2064, 26
    %v2066 = vpop.permute.xlu0 %2065
    %vm2067 = vcmask 228560
    %2068 = vst.msk [vmem:[#allocation0] sm:$0x3] %vm2067, %v2066
    %s2069 = scalar_lea.vmem [#allocation0], 6
    %2070 = vst.msk [vmem:[%s2069] sm:$0xc] %vm2067, %v2066
    %s2071 = scalar_lea.vmem [#allocation0], 12
    %2072 = vst.msk [vmem:[%s2071] sm:$0x30] %vm2067, %v2066
    %s2073 = scalar_lea.vmem [#allocation0], 18
    %2074 = vst.msk [vmem:[%s2073] sm:$0xc0] %vm2067, %v2066
    %s2075 = scalar_lea.vmem %s0, 12
    %v2076 = vld [vmem:[%s2075] sm:$0x1]
    %s2077 = scalar_lea.vmem %s0, 267
    %v2078 = vld [vmem:[%s2077] sm:$0x2]
    %vm2079 = vcmask 1041409
    %v2080 = vsel %vm2079, %v2078, %v2076
    %s2081 = scalar_lea.vmem %s0, 74
    %v2082 = vld [vmem:[%s2081] sm:$0x4]
    %vm2083 = vcmask 1042434
    %v2084 = vsel %vm2083, %v2082, %v2080
    %s2085 = scalar_lea.vmem %s0, 329
    %v2086 = vld [vmem:[%s2085] sm:$0x8]
    %vm2087 = vcmask 1043459
    %v2088 = vsel %vm2087, %v2086, %v2084
    %s2089 = scalar_lea.vmem %s0, 136
    %v2090 = vld [vmem:[%s2089] sm:$0x10]
    %vm2091 = vcmask 1044484
    %v2092 = vsel %vm2091, %v2090, %v2088
    %s2093 = scalar_lea.vmem %s0, 391
    %v2094 = vld [vmem:[%s2093] sm:$0x20]
    %vm2095 = vcmask 1045509
    %v2096 = vsel %vm2095, %v2094, %v2092
    %s2097 = scalar_lea.vmem %s0, 198
    %v2098 = vld [vmem:[%s2097] sm:$0x40]
    %vm2099 = vcmask 1046534
    %v2100 = vsel %vm2099, %v2098, %v2096
    %s2101 = scalar_lea.vmem %s0, 453
    %v2102 = vld [vmem:[%s2101] sm:$0x80]
    %vm2103 = vcmask 1047559
    %v2104 = vsel %vm2103, %v2102, %v2100
    %2105 = vrot.lane.b32.xlu0 %v2104, 24
    %v2106 = vpop.permute.xlu0 %2105
    %vm2107 = vcmask 212160
    %2108 = vst.msk [vmem:[#allocation0] sm:$0x3] %vm2107, %v2106
    %s2109 = scalar_lea.vmem [#allocation0], 6
    %2110 = vst.msk [vmem:[%s2109] sm:$0xc] %vm2107, %v2106
    %s2111 = scalar_lea.vmem [#allocation0], 12
    %2112 = vst.msk [vmem:[%s2111] sm:$0x30] %vm2107, %v2106
    %s2113 = scalar_lea.vmem [#allocation0], 18
    %2114 = vst.msk [vmem:[%s2113] sm:$0xc0] %vm2107, %v2106
    %s2115 = scalar_lea.vmem %s0, 11
    %v2116 = vld [vmem:[%s2115] sm:$0x1]
    %s2117 = scalar_lea.vmem %s0, 266
    %v2118 = vld [vmem:[%s2117] sm:$0x2]
    %vm2119 = vcmask 1041409
    %v2120 = vsel %vm2119, %v2118, %v2116
    %s2121 = scalar_lea.vmem %s0, 73
    %v2122 = vld [vmem:[%s2121] sm:$0x4]
    %vm2123 = vcmask 1042434
    %v2124 = vsel %vm2123, %v2122, %v2120
    %s2125 = scalar_lea.vmem %s0, 328
    %v2126 = vld [vmem:[%s2125] sm:$0x8]
    %vm2127 = vcmask 1043459
    %v2128 = vsel %vm2127, %v2126, %v2124
    %s2129 = scalar_lea.vmem %s0, 135
    %v2130 = vld [vmem:[%s2129] sm:$0x10]
    %vm2131 = vcmask 1044484
    %v2132 = vsel %vm2131, %v2130, %v2128
    %s2133 = scalar_lea.vmem %s0, 390
    %v2134 = vld [vmem:[%s2133] sm:$0x20]
    %vm2135 = vcmask 1045509
    %v2136 = vsel %vm2135, %v2134, %v2132
    %s2137 = scalar_lea.vmem %s0, 197
    %v2138 = vld [vmem:[%s2137] sm:$0x40]
    %vm2139 = vcmask 1046534
    %v2140 = vsel %vm2139, %v2138, %v2136
    %s2141 = scalar_lea.vmem %s0, 452
    %v2142 = vld [vmem:[%s2141] sm:$0x80]
    %vm2143 = vcmask 1047559
    %v2144 = vsel %vm2143, %v2142, %v2140
    %2145 = vrot.lane.b32.xlu0 %v2144, 22
    %v2146 = vpop.permute.xlu0 %2145
    %vm2147 = vcmask 195760
    %2148 = vst.msk [vmem:[#allocation0] sm:$0x3] %vm2147, %v2146
    %s2149 = scalar_lea.vmem [#allocation0], 6
    %2150 = vst.msk [vmem:[%s2149] sm:$0xc] %vm2147, %v2146
    %s2151 = scalar_lea.vmem [#allocation0], 12
    %2152 = vst.msk [vmem:[%s2151] sm:$0x30] %vm2147, %v2146
    %s2153 = scalar_lea.vmem [#allocation0], 18
    %2154 = vst.msk [vmem:[%s2153] sm:$0xc0] %vm2147, %v2146
    %s2155 = scalar_lea.vmem %s0, 10
    %v2156 = vld [vmem:[%s2155] sm:$0x1]
    %s2157 = scalar_lea.vmem %s0, 265
    %v2158 = vld [vmem:[%s2157] sm:$0x2]
    %vm2159 = vcmask 1041409
    %v2160 = vsel %vm2159, %v2158, %v2156
    %s2161 = scalar_lea.vmem %s0, 72
    %v2162 = vld [vmem:[%s2161] sm:$0x4]
    %vm2163 = vcmask 1042434
    %v2164 = vsel %vm2163, %v2162, %v2160
    %s2165 = scalar_lea.vmem %s0, 327
    %v2166 = vld [vmem:[%s2165] sm:$0x8]
    %vm2167 = vcmask 1043459
    %v2168 = vsel %vm2167, %v2166, %v2164
    %s2169 = scalar_lea.vmem %s0, 134
    %v2170 = vld [vmem:[%s2169] sm:$0x10]
    %vm2171 = vcmask 1044484
    %v2172 = vsel %vm2171, %v2170, %v2168
    %s2173 = scalar_lea.vmem %s0, 389
    %v2174 = vld [vmem:[%s2173] sm:$0x20]
    %vm2175 = vcmask 1045509
    %v2176 = vsel %vm2175, %v2174, %v2172
    %s2177 = scalar_lea.vmem %s0, 196
    %v2178 = vld [vmem:[%s2177] sm:$0x40]
    %vm2179 = vcmask 1046534
    %v2180 = vsel %vm2179, %v2178, %v2176
    %s2181 = scalar_lea.vmem %s0, 451
    %v2182 = vld [vmem:[%s2181] sm:$0x80]
    %vm2183 = vcmask 1047559
    %v2184 = vsel %vm2183, %v2182, %v2180
    %2185 = vrot.lane.b32.xlu0 %v2184, 20
    %v2186 = vpop.permute.xlu0 %2185
    %vm2187 = vcmask 179360
    %2188 = vst.msk [vmem:[#allocation0] sm:$0x3] %vm2187, %v2186
    %s2189 = scalar_lea.vmem [#allocation0], 6
    %2190 = vst.msk [vmem:[%s2189] sm:$0xc] %vm2187, %v2186
    %s2191 = scalar_lea.vmem [#allocation0], 12
    %2192 = vst.msk [vmem:[%s2191] sm:$0x30] %vm2187, %v2186
    %s2193 = scalar_lea.vmem [#allocation0], 18
    %2194 = vst.msk [vmem:[%s2193] sm:$0xc0] %vm2187, %v2186
    %s2195 = scalar_lea.vmem %s0, 9
    %v2196 = vld [vmem:[%s2195] sm:$0x1]
    %s2197 = scalar_lea.vmem %s0, 264
    %v2198 = vld [vmem:[%s2197] sm:$0x2]
    %vm2199 = vcmask 1041409
    %v2200 = vsel %vm2199, %v2198, %v2196
    %s2201 = scalar_lea.vmem %s0, 71
    %v2202 = vld [vmem:[%s2201] sm:$0x4]
    %vm2203 = vcmask 1042434
    %v2204 = vsel %vm2203, %v2202, %v2200
    %s2205 = scalar_lea.vmem %s0, 326
    %v2206 = vld [vmem:[%s2205] sm:$0x8]
    %vm2207 = vcmask 1043459
    %v2208 = vsel %vm2207, %v2206, %v2204
    %s2209 = scalar_lea.vmem %s0, 133
    %v2210 = vld [vmem:[%s2209] sm:$0x10]
    %vm2211 = vcmask 1044484
    %v2212 = vsel %vm2211, %v2210, %v2208
    %s2213 = scalar_lea.vmem %s0, 388
    %v2214 = vld [vmem:[%s2213] sm:$0x20]
    %vm2215 = vcmask 1045509
    %v2216 = vsel %vm2215, %v2214, %v2212
    %s2217 = scalar_lea.vmem %s0, 195
    %v2218 = vld [vmem:[%s2217] sm:$0x40]
    %vm2219 = vcmask 1046534
    %v2220 = vsel %vm2219, %v2218, %v2216
    %s2221 = scalar_lea.vmem %s0, 450
    %v2222 = vld [vmem:[%s2221] sm:$0x80]
    %vm2223 = vcmask 1047559
    %v2224 = vsel %vm2223, %v2222, %v2220
    %2225 = vrot.lane.b32.xlu0 %v2224, 18
    %v2226 = vpop.permute.xlu0 %2225
    %vm2227 = vcmask 162960
    %2228 = vst.msk [vmem:[#allocation0] sm:$0x3] %vm2227, %v2226
    %s2229 = scalar_lea.vmem [#allocation0], 6
    %2230 = vst.msk [vmem:[%s2229] sm:$0xc] %vm2227, %v2226
    %s2231 = scalar_lea.vmem [#allocation0], 12
    %2232 = vst.msk [vmem:[%s2231] sm:$0x30] %vm2227, %v2226
    %s2233 = scalar_lea.vmem [#allocation0], 18
    %2234 = vst.msk [vmem:[%s2233] sm:$0xc0] %vm2227, %v2226
    %s2235 = scalar_lea.vmem %s0, 8
    %v2236 = vld [vmem:[%s2235] sm:$0x1]
    %s2237 = scalar_lea.vmem %s0, 263
    %v2238 = vld [vmem:[%s2237] sm:$0x2]
    %vm2239 = vcmask 1041409
    %v2240 = vsel %vm2239, %v2238, %v2236
    %s2241 = scalar_lea.vmem %s0, 70
    %v2242 = vld [vmem:[%s2241] sm:$0x4]
    %vm2243 = vcmask 1042434
    %v2244 = vsel %vm2243, %v2242, %v2240
    %s2245 = scalar_lea.vmem %s0, 325
    %v2246 = vld [vmem:[%s2245] sm:$0x8]
    %vm2247 = vcmask 1043459
    %v2248 = vsel %vm2247, %v2246, %v2244
    %s2249 = scalar_lea.vmem %s0, 132
    %v2250 = vld [vmem:[%s2249] sm:$0x10]
    %vm2251 = vcmask 1044484
    %v2252 = vsel %vm2251, %v2250, %v2248
    %s2253 = scalar_lea.vmem %s0, 387
    %v2254 = vld [vmem:[%s2253] sm:$0x20]
    %vm2255 = vcmask 1045509
    %v2256 = vsel %vm2255, %v2254, %v2252
    %s2257 = scalar_lea.vmem %s0, 194
    %v2258 = vld [vmem:[%s2257] sm:$0x40]
    %vm2259 = vcmask 1046534
    %v2260 = vsel %vm2259, %v2258, %v2256
    %s2261 = scalar_lea.vmem %s0, 449
    %v2262 = vld [vmem:[%s2261] sm:$0x80]
    %vm2263 = vcmask 1047559
    %v2264 = vsel %vm2263, %v2262, %v2260
    %2265 = vrot.lane.b32.xlu0 %v2264, 16
    %v2266 = vpop.permute.xlu0 %2265
    %vm2267 = vcmask 146560
    %2268 = vst.msk [vmem:[#allocation0] sm:$0x3] %vm2267, %v2266
    %s2269 = scalar_lea.vmem [#allocation0], 6
    %2270 = vst.msk [vmem:[%s2269] sm:$0xc] %vm2267, %v2266
    %s2271 = scalar_lea.vmem [#allocation0], 12
    %2272 = vst.msk [vmem:[%s2271] sm:$0x30] %vm2267, %v2266
    %s2273 = scalar_lea.vmem [#allocation0], 18
    %2274 = vst.msk [vmem:[%s2273] sm:$0xc0] %vm2267, %v2266
    %s2275 = scalar_lea.vmem %s0, 7
    %v2276 = vld [vmem:[%s2275] sm:$0x1]
    %s2277 = scalar_lea.vmem %s0, 262
    %v2278 = vld [vmem:[%s2277] sm:$0x2]
    %vm2279 = vcmask 1041409
    %v2280 = vsel %vm2279, %v2278, %v2276
    %s2281 = scalar_lea.vmem %s0, 69
    %v2282 = vld [vmem:[%s2281] sm:$0x4]
    %vm2283 = vcmask 1042434
    %v2284 = vsel %vm2283, %v2282, %v2280
    %s2285 = scalar_lea.vmem %s0, 324
    %v2286 = vld [vmem:[%s2285] sm:$0x8]
    %vm2287 = vcmask 1043459
    %v2288 = vsel %vm2287, %v2286, %v2284
    %s2289 = scalar_lea.vmem %s0, 131
    %v2290 = vld [vmem:[%s2289] sm:$0x10]
    %vm2291 = vcmask 1044484
    %v2292 = vsel %vm2291, %v2290, %v2288
    %s2293 = scalar_lea.vmem %s0, 386
    %v2294 = vld [vmem:[%s2293] sm:$0x20]
    %vm2295 = vcmask 1045509
    %v2296 = vsel %vm2295, %v2294, %v2292
    %s2297 = scalar_lea.vmem %s0, 193
    %v2298 = vld [vmem:[%s2297] sm:$0x40]
    %vm2299 = vcmask 1046534
    %v2300 = vsel %vm2299, %v2298, %v2296
    %s2301 = scalar_lea.vmem %s0, 448
    %v2302 = vld [vmem:[%s2301] sm:$0x80]
    %vm2303 = vcmask 1047559
    %v2304 = vsel %vm2303, %v2302, %v2300
    %2305 = vrot.lane.b32.xlu0 %v2304, 14
    %v2306 = vpop.permute.xlu0 %2305
    %vm2307 = vcmask 130160
    %2308 = vst.msk [vmem:[#allocation0] sm:$0x3] %vm2307, %v2306
    %s2309 = scalar_lea.vmem [#allocation0], 6
    %2310 = vst.msk [vmem:[%s2309] sm:$0xc] %vm2307, %v2306
    %s2311 = scalar_lea.vmem [#allocation0], 12
    %2312 = vst.msk [vmem:[%s2311] sm:$0x30] %vm2307, %v2306
    %s2313 = scalar_lea.vmem [#allocation0], 18
    %2314 = vst.msk [vmem:[%s2313] sm:$0xc0] %vm2307, %v2306
    %s2315 = scalar_lea.vmem %s0, 6
    %v2316 = vld [vmem:[%s2315] sm:$0x1]
    %s2317 = scalar_lea.vmem %s0, 261
    %v2318 = vld [vmem:[%s2317] sm:$0x2]
    %vm2319 = vcmask 1041409
    %v2320 = vsel %vm2319, %v2318, %v2316
    %s2321 = scalar_lea.vmem %s0, 68
    %v2322 = vld [vmem:[%s2321] sm:$0x4]
    %vm2323 = vcmask 1042434
    %v2324 = vsel %vm2323, %v2322, %v2320
    %s2325 = scalar_lea.vmem %s0, 323
    %v2326 = vld [vmem:[%s2325] sm:$0x8]
    %vm2327 = vcmask 1043459
    %v2328 = vsel %vm2327, %v2326, %v2324
    %s2329 = scalar_lea.vmem %s0, 130
    %v2330 = vld [vmem:[%s2329] sm:$0x10]
    %vm2331 = vcmask 1044484
    %v2332 = vsel %vm2331, %v2330, %v2328
    %s2333 = scalar_lea.vmem %s0, 385
    %v2334 = vld [vmem:[%s2333] sm:$0x20]
    %vm2335 = vcmask 1045509
    %v2336 = vsel %vm2335, %v2334, %v2332
    %s2337 = scalar_lea.vmem %s0, 192
    %v2338 = vld [vmem:[%s2337] sm:$0x40]
    %vm2339 = vcmask 1046534
    %v2340 = vsel %vm2339, %v2338, %v2336
    %s2341 = scalar_lea.vmem %s0, 447
    %v2342 = vld [vmem:[%s2341] sm:$0x80]
    %vm2343 = vcmask 1047559
    %v2344 = vsel %vm2343, %v2342, %v2340
    %2345 = vrot.lane.b32.xlu0 %v2344, 12
    %v2346 = vpop.permute.xlu0 %2345
    %vm2347 = vcmask 113760
    %2348 = vst.msk [vmem:[#allocation0] sm:$0x3] %vm2347, %v2346
    %s2349 = scalar_lea.vmem [#allocation0], 6
    %2350 = vst.msk [vmem:[%s2349] sm:$0xc] %vm2347, %v2346
    %s2351 = scalar_lea.vmem [#allocation0], 12
    %2352 = vst.msk [vmem:[%s2351] sm:$0x30] %vm2347, %v2346
    %s2353 = scalar_lea.vmem [#allocation0], 18
    %2354 = vst.msk [vmem:[%s2353] sm:$0xc0] %vm2347, %v2346
    %s2355 = scalar_lea.vmem %s0, 5
    %v2356 = vld [vmem:[%s2355] sm:$0x1]
    %s2357 = scalar_lea.vmem %s0, 260
    %v2358 = vld [vmem:[%s2357] sm:$0x2]
    %vm2359 = vcmask 1041409
    %v2360 = vsel %vm2359, %v2358, %v2356
    %s2361 = scalar_lea.vmem %s0, 67
    %v2362 = vld [vmem:[%s2361] sm:$0x4]
    %vm2363 = vcmask 1042434
    %v2364 = vsel %vm2363, %v2362, %v2360
    %s2365 = scalar_lea.vmem %s0, 322
    %v2366 = vld [vmem:[%s2365] sm:$0x8]
    %vm2367 = vcmask 1043459
    %v2368 = vsel %vm2367, %v2366, %v2364
    %s2369 = scalar_lea.vmem %s0, 129
    %v2370 = vld [vmem:[%s2369] sm:$0x10]
    %vm2371 = vcmask 1044484
    %v2372 = vsel %vm2371, %v2370, %v2368
    %s2373 = scalar_lea.vmem %s0, 384
    %v2374 = vld [vmem:[%s2373] sm:$0x20]
    %vm2375 = vcmask 1045509
    %v2376 = vsel %vm2375, %v2374, %v2372
    %s2377 = scalar_lea.vmem %s0, 191
    %v2378 = vld [vmem:[%s2377] sm:$0x40]
    %vm2379 = vcmask 1046534
    %v2380 = vsel %vm2379, %v2378, %v2376
    %s2381 = scalar_lea.vmem %s0, 446
    %v2382 = vld [vmem:[%s2381] sm:$0x80]
    %vm2383 = vcmask 1047559
    %v2384 = vsel %vm2383, %v2382, %v2380
    %2385 = vrot.lane.b32.xlu0 %v2384, 10
    %v2386 = vpop.permute.xlu0 %2385
    %vm2387 = vcmask 97360
    %2388 = vst.msk [vmem:[#allocation0] sm:$0x3] %vm2387, %v2386
    %s2389 = scalar_lea.vmem [#allocation0], 6
    %2390 = vst.msk [vmem:[%s2389] sm:$0xc] %vm2387, %v2386
    %s2391 = scalar_lea.vmem [#allocation0], 12
    %2392 = vst.msk [vmem:[%s2391] sm:$0x30] %vm2387, %v2386
    %s2393 = scalar_lea.vmem [#allocation0], 18
    %2394 = vst.msk [vmem:[%s2393] sm:$0xc0] %vm2387, %v2386
    %s2395 = scalar_lea.vmem %s0, 4
    %v2396 = vld [vmem:[%s2395] sm:$0x1]
    %s2397 = scalar_lea.vmem %s0, 259
    %v2398 = vld [vmem:[%s2397] sm:$0x2]
    %vm2399 = vcmask 1041409
    %v2400 = vsel %vm2399, %v2398, %v2396
    %s2401 = scalar_lea.vmem %s0, 66
    %v2402 = vld [vmem:[%s2401] sm:$0x4]
    %vm2403 = vcmask 1042434
    %v2404 = vsel %vm2403, %v2402, %v2400
    %s2405 = scalar_lea.vmem %s0, 321
    %v2406 = vld [vmem:[%s2405] sm:$0x8]
    %vm2407 = vcmask 1043459
    %v2408 = vsel %vm2407, %v2406, %v2404
    %s2409 = scalar_lea.vmem %s0, 128
    %v2410 = vld [vmem:[%s2409] sm:$0x10]
    %vm2411 = vcmask 1044484
    %v2412 = vsel %vm2411, %v2410, %v2408
    %s2413 = scalar_lea.vmem %s0, 383
    %v2414 = vld [vmem:[%s2413] sm:$0x20]
    %vm2415 = vcmask 1045509
    %v2416 = vsel %vm2415, %v2414, %v2412
    %s2417 = scalar_lea.vmem %s0, 190
    %v2418 = vld [vmem:[%s2417] sm:$0x40]
    %vm2419 = vcmask 1046534
    %v2420 = vsel %vm2419, %v2418, %v2416
    %s2421 = scalar_lea.vmem %s0, 445
    %v2422 = vld [vmem:[%s2421] sm:$0x80]
    %vm2423 = vcmask 1047559
    %v2424 = vsel %vm2423, %v2422, %v2420
    %2425 = vrot.lane.b32.xlu0 %v2424, 8
    %v2426 = vpop.permute.xlu0 %2425
    %vm2427 = vcmask 80960
    %2428 = vst.msk [vmem:[#allocation0] sm:$0x3] %vm2427, %v2426
    %s2429 = scalar_lea.vmem [#allocation0], 6
    %2430 = vst.msk [vmem:[%s2429] sm:$0xc] %vm2427, %v2426
    %s2431 = scalar_lea.vmem [#allocation0], 12
    %2432 = vst.msk [vmem:[%s2431] sm:$0x30] %vm2427, %v2426
    %s2433 = scalar_lea.vmem [#allocation0], 18
    %2434 = vst.msk [vmem:[%s2433] sm:$0xc0] %vm2427, %v2426
    %s2435 = scalar_lea.vmem %s0, 3
    %v2436 = vld [vmem:[%s2435] sm:$0x1]
    %s2437 = scalar_lea.vmem %s0, 258
    %v2438 = vld [vmem:[%s2437] sm:$0x2]
    %vm2439 = vcmask 1041409
    %v2440 = vsel %vm2439, %v2438, %v2436
    %s2441 = scalar_lea.vmem %s0, 65
    %v2442 = vld [vmem:[%s2441] sm:$0x4]
    %vm2443 = vcmask 1042434
    %v2444 = vsel %vm2443, %v2442, %v2440
    %s2445 = scalar_lea.vmem %s0, 320
    %v2446 = vld [vmem:[%s2445] sm:$0x8]
    %vm2447 = vcmask 1043459
    %v2448 = vsel %vm2447, %v2446, %v2444
    %s2449 = scalar_lea.vmem %s0, 127
    %v2450 = vld [vmem:[%s2449] sm:$0x10]
    %vm2451 = vcmask 1044484
    %v2452 = vsel %vm2451, %v2450, %v2448
    %s2453 = scalar_lea.vmem %s0, 382
    %v2454 = vld [vmem:[%s2453] sm:$0x20]
    %vm2455 = vcmask 1045509
    %v2456 = vsel %vm2455, %v2454, %v2452
    %s2457 = scalar_lea.vmem %s0, 189
    %v2458 = vld [vmem:[%s2457] sm:$0x40]
    %vm2459 = vcmask 1046534
    %v2460 = vsel %vm2459, %v2458, %v2456
    %s2461 = scalar_lea.vmem %s0, 444
    %v2462 = vld [vmem:[%s2461] sm:$0x80]
    %vm2463 = vcmask 1047559
    %v2464 = vsel %vm2463, %v2462, %v2460
    %2465 = vrot.lane.b32.xlu0 %v2464, 6
    %v2466 = vpop.permute.xlu0 %2465
    %vm2467 = vcmask 64560
    %2468 = vst.msk [vmem:[#allocation0] sm:$0x3] %vm2467, %v2466
    %s2469 = scalar_lea.vmem [#allocation0], 6
    %2470 = vst.msk [vmem:[%s2469] sm:$0xc] %vm2467, %v2466
    %s2471 = scalar_lea.vmem [#allocation0], 12
    %2472 = vst.msk [vmem:[%s2471] sm:$0x30] %vm2467, %v2466
    %s2473 = scalar_lea.vmem [#allocation0], 18
    %2474 = vst.msk [vmem:[%s2473] sm:$0xc0] %vm2467, %v2466
    %s2475 = scalar_lea.vmem %s0, 2
    %v2476 = vld [vmem:[%s2475] sm:$0x1]
    %s2477 = scalar_lea.vmem %s0, 257
    %v2478 = vld [vmem:[%s2477] sm:$0x2]
    %vm2479 = vcmask 1041409
    %v2480 = vsel %vm2479, %v2478, %v2476
    %s2481 = scalar_lea.vmem %s0, 64
    %v2482 = vld [vmem:[%s2481] sm:$0x4]
    %vm2483 = vcmask 1042434
    %v2484 = vsel %vm2483, %v2482, %v2480
    %s2485 = scalar_lea.vmem %s0, 319
    %v2486 = vld [vmem:[%s2485] sm:$0x8]
    %vm2487 = vcmask 1043459
    %v2488 = vsel %vm2487, %v2486, %v2484
    %s2489 = scalar_lea.vmem %s0, 126
    %v2490 = vld [vmem:[%s2489] sm:$0x10]
    %vm2491 = vcmask 1044484
    %v2492 = vsel %vm2491, %v2490, %v2488
    %s2493 = scalar_lea.vmem %s0, 381
    %v2494 = vld [vmem:[%s2493] sm:$0x20]
    %vm2495 = vcmask 1045509
    %v2496 = vsel %vm2495, %v2494, %v2492
    %s2497 = scalar_lea.vmem %s0, 188
    %v2498 = vld [vmem:[%s2497] sm:$0x40]
    %vm2499 = vcmask 1046534
    %v2500 = vsel %vm2499, %v2498, %v2496
    %s2501 = scalar_lea.vmem %s0, 443
    %v2502 = vld [vmem:[%s2501] sm:$0x80]
    %vm2503 = vcmask 1047559
    %v2504 = vsel %vm2503, %v2502, %v2500
    %2505 = vrot.lane.b32.xlu0 %v2504, 4
    %v2506 = vpop.permute.xlu0 %2505
    %vm2507 = vcmask 48160
    %2508 = vst.msk [vmem:[#allocation0] sm:$0x3] %vm2507, %v2506
    %s2509 = scalar_lea.vmem [#allocation0], 6
    %2510 = vst.msk [vmem:[%s2509] sm:$0xc] %vm2507, %v2506
    %s2511 = scalar_lea.vmem [#allocation0], 12
    %2512 = vst.msk [vmem:[%s2511] sm:$0x30] %vm2507, %v2506
    %s2513 = scalar_lea.vmem [#allocation0], 18
    %2514 = vst.msk [vmem:[%s2513] sm:$0xc0] %vm2507, %v2506
    %s2515 = scalar_lea.vmem %s0, 1
    %v2516 = vld [vmem:[%s2515] sm:$0x1]
    %s2517 = scalar_lea.vmem %s0, 256
    %v2518 = vld [vmem:[%s2517] sm:$0x2]
    %vm2519 = vcmask 1041409
    %v2520 = vsel %vm2519, %v2518, %v2516
    %s2521 = scalar_lea.vmem %s0, 63
    %v2522 = vld [vmem:[%s2521] sm:$0x4]
    %vm2523 = vcmask 1042434
    %v2524 = vsel %vm2523, %v2522, %v2520
    %s2525 = scalar_lea.vmem %s0, 318
    %v2526 = vld [vmem:[%s2525] sm:$0x8]
    %vm2527 = vcmask 1043459
    %v2528 = vsel %vm2527, %v2526, %v2524
    %s2529 = scalar_lea.vmem %s0, 125
    %v2530 = vld [vmem:[%s2529] sm:$0x10]
    %vm2531 = vcmask 1044484
    %v2532 = vsel %vm2531, %v2530, %v2528
    %s2533 = scalar_lea.vmem %s0, 380
    %v2534 = vld [vmem:[%s2533] sm:$0x20]
    %vm2535 = vcmask 1045509
    %v2536 = vsel %vm2535, %v2534, %v2532
    %s2537 = scalar_lea.vmem %s0, 187
    %v2538 = vld [vmem:[%s2537] sm:$0x40]
    %vm2539 = vcmask 1046534
    %v2540 = vsel %vm2539, %v2538, %v2536
    %s2541 = scalar_lea.vmem %s0, 442
    %v2542 = vld [vmem:[%s2541] sm:$0x80]
    %vm2543 = vcmask 1047559
    %v2544 = vsel %vm2543, %v2542, %v2540
    %2545 = vrot.lane.b32.xlu0 %v2544, 2
    %v2546 = vpop.permute.xlu0 %2545
    %vm2547 = vcmask 31760
    %2548 = vst.msk [vmem:[#allocation0] sm:$0x3] %vm2547, %v2546
    %s2549 = scalar_lea.vmem [#allocation0], 6
    %2550 = vst.msk [vmem:[%s2549] sm:$0xc] %vm2547, %v2546
    %s2551 = scalar_lea.vmem [#allocation0], 12
    %2552 = vst.msk [vmem:[%s2551] sm:$0x30] %vm2547, %v2546
    %s2553 = scalar_lea.vmem [#allocation0], 18
    %2554 = vst.msk [vmem:[%s2553] sm:$0xc0] %vm2547, %v2546
    %s2556 = sshllo.u32 0, 2
    %v2558 = vld [vmem:[#allocation0] sm:%s2556]
    %s2559 = sshllo.u32 0, 2
    %2560 = vst [vmem:[%s1] sm:%s2559] %v2558
    %s2561 = scalar_lea.vmem [#allocation0], 8
    %v2562 = vld [vmem:[%s2561] sm:%s2556]
    %s2563 = sshllo.u32 0, 2
    %s2564 = scalar_lea.vmem %s1, 2
    %2565 = vst [vmem:[%s2564] sm:%s2563] %v2562
    %s2566 = scalar_lea.vmem [#allocation0], 16
    %v2567 = vld [vmem:[%s2566] sm:%s2556]
    %s2568 = sshllo.u32 0, 2
    %s2569 = smul.addr 2, 2
    %s2570 = scalar_lea.vmem %s1, %s2569
    %2571 = vst [vmem:[%s2570] sm:%s2568] %v2567
    %s2572 = scalar_lea.vmem [#allocation0], 24
    %v2573 = vld [vmem:[%s2572] sm:%s2556]
    %s2574 = sshllo.u32 0, 2
    %s2575 = smul.addr 2, 3
    %s2576 = scalar_lea.vmem %s1, %s2575
    %2577 = vst [vmem:[%s2576] sm:%s2574] %v2573

// kernel: _lambda_.2
$region0: #{_lambda_.2}
  #allocation0 [shape = 'u32[]', space=smem, size = 0x4, offset = 0x4, fixed_abs, tag = 'smem constant byte address 0x4 - core index']
  #allocation1 [shape = 'u32[144,128]{1,0:T(1,128)}', space=vmem, size = 0x12000, scoped, tag = 'internal scratch']
  #allocation2 [shape = 'bf16[32,412]{1,0:T(16,128)(2,1)}', space=vmem, size = 0x8000, scoped, tag = 'scratch operand']
  %s0 = inlined_call_operand.vmem [shape: f32[2,8,256], index: 0, kind: input, shape index: {}, may-alias: {0,1,2}]
  %s1 = inlined_call_operand.vmem [shape: f32[2,8,256], index: 1, kind: input, shape index: {}, may-alias: {0,1,2}]
  %s2 = inlined_call_operand.vmem [shape: f32[2,8,256], index: 2, kind: input, shape index: {}, may-alias: {0,1,2}]
  %s3 = inlined_call_operand.vmem [shape: f32[2,1,256], index: 3, kind: input, shape index: {}, may-alias: {3,4,5}]
  %s4 = inlined_call_operand.vmem [shape: f32[2,1,256], index: 4, kind: input, shape index: {}, may-alias: {3,4,5}]
  %s5 = inlined_call_operand.vmem [shape: f32[2,1,256], index: 5, kind: input, shape index: {}, may-alias: {3,4,5}]
  %s6 = inlined_call_operand.vmem [shape: f32[8,1], index: 6, kind: input, shape index: {}]
  %s7 = inlined_call_operand.vmem [shape: f32[8,1], index: 7, kind: input, shape index: {}]
  %s8 = inlined_call_operand.vmem [shape: f32[8,8], index: 8, kind: input, shape index: {}]
  %s9 = inlined_call_operand.vmem [shape: bf16[32,4], index: 9, kind: input, shape index: {}]
  %s10 = inlined_call_operand.vmem [shape: f32[32,1], index: 10, kind: input, shape index: {}]
  %s11 = inlined_call_operand.vmem [shape: bf16[3,64,160], index: 11, kind: input, shape index: {}]
  %s12 = inlined_call_operand.vmem [shape: f32[3,64,1], index: 12, kind: input, shape index: {}]
  %s13 = inlined_call_operand.vmem [shape: bf16[3,64,32], index: 13, kind: input, shape index: {}]
  %s14 = inlined_call_operand.vmem [shape: f32[3,64,1], index: 14, kind: input, shape index: {}]
  %s15 = inlined_call_operand.vmem [shape: f32[8,32], index: 15, kind: input, shape index: {}]
  %s16 = inlined_call_operand.vmem [shape: f32[8,1], index: 16, kind: input, shape index: {}]
  %s17 = inlined_call_operand.vmem [shape: f32[2,8,256], index: 17, kind: output, shape index: {0}]
  %s18 = inlined_call_operand.vmem [shape: f32[2,2,1,1], index: 18, kind: output, shape index: {1}]
  %19 = xla_tuple %s17, %s18
  %s20 = sld [smem:[#allocation0]]
  $region109: #{_lambda_.2} parent=0
    _
  %s22 = ssub.s32 1, %s20
  %s23 = scalar_select 0, %s22, %s20
  loop: start=0, step=1, limit=6
  $region2: #{_lambda_.2} parent=0 // loop_pre_header
    _
  $region3: #{_lambda_.2} parent=0 // loop_header
    %s25 = sphi 0, %s29
    %p26 = scmp.ge.s32.totalorder %s25, 6
    %s32 = sphi 0, %s44
    %s33 = sphi 0, %s40
    %s34 = sphi 0, %s32
    %s35 = sphi 0, %s33
    %s36 = sphi 0, %s34
    %s37 = sphi 0, %s35
    %s55 = sphi 0, %s57
    %s58 = sphi 0, %s55
    %s59 = sphi 0, %s58
    %s75 = sphi 0, %s59
    %s83 = sphi 0, %s85
    %s86 = sphi 0, %s83
    %s87 = sphi 0, %s86
    %s103 = sphi 0, %s87
    %s117 = sphi 0, %s119
    %s120 = sphi 0, %s117
    %s121 = sphi 0, %s120
    %s137 = sphi 0, %s121
    %s151 = sphi 0, %s153
    %s154 = sphi 0, %s151
    %s155 = sphi 0, %s154
    %s171 = sphi 0, %s155
    %s179 = sphi 0, %s181
    %s182 = sphi 0, %s179
    %s183 = sphi 0, %s182
    %s199 = sphi 0, %s183
    %s213 = sphi 0, %s215
    %s216 = sphi 0, %s213
    %s217 = sphi 0, %s216
    %s233 = sphi 0, %s217
    %s237 = sphi 0, %s237
    %s239 = sphi 0, %s237
    %s240 = sphi 0, %s239
    %s254 = sphi 0, %s240
    %s258 = sphi 0, %s258
    %s260 = sphi 0, %s258
    %s261 = sphi 0, %s260
    %s275 = sphi 0, %s261
    %s279 = sphi 0, %s279
    %s281 = sphi 0, %s279
    %s282 = sphi 0, %s281
    %s296 = sphi 0, %s282
    %s300 = sphi 0, %s300
    %s302 = sphi 0, %s300
    %s303 = sphi 0, %s302
    %s317 = sphi 0, %s303
    %s321 = sphi 0, %s321
    %s323 = sphi 0, %s321
    %s324 = sphi 0, %s323
    %s338 = sphi 0, %s324
    %s342 = sphi 0, %s342
    %s344 = sphi 0, %s342
    %s345 = sphi 0, %s344
    %s359 = sphi 0, %s345
    %s363 = sphi 0, %s363
    %s365 = sphi 0, %s363
    %s366 = sphi 0, %s365
    %s380 = sphi 0, %s366
    %s384 = sphi 0, %s384
    %s386 = sphi 0, %s384
    %s387 = sphi 0, %s386
    %s401 = sphi 0, %s387
    %s405 = sphi 0, %s405
    %s407 = sphi 0, %s405
    %s408 = sphi 0, %s407
    %s422 = sphi 0, %s408
    %s426 = sphi 0, %s426
    %s428 = sphi 0, %s426
    %s429 = sphi 0, %s428
    %s443 = sphi 0, %s429
    %s447 = sphi 0, %s447
    %s449 = sphi 0, %s447
    %s450 = sphi 0, %s449
    %s464 = sphi 0, %s450
    %s472 = sphi 0, %s474
    %s475 = sphi 0, %s472
    %s476 = sphi 0, %s475
    %s492 = sphi 0, %s476
    %s500 = sphi 0, %s502
    %s503 = sphi 0, %s500
    %s504 = sphi 0, %s503
    %s520 = sphi 0, %s504
  $region4: #{_lambda_.2} parent=0 // loop_header_branch
    %28 = sbr.rel (%p26) target = $region8
  $region5: #{_lambda_.2} parent=0 // loop_body
    %s30 = ssub.s32 %s25, 1
    %s31 = ssub.s32 %s25, 2
    %s38 = sadd.s32 1, %s33
    %p39 = scmp.ge.s32.totalorder %s38, 2
    %s40 = scalar_select %p39, 0, %s38
    %s41 = sadd.s32 1, %s32
    %s42 = scalar_select %p39, %s41, %s32
    %p43 = scmp.ge.s32.totalorder %s42, 2
    %s44 = scalar_select %p43, 0, %s42
    %s45 = ssub.s32 %s33, 1
    %p46 = scmp.gt.s32.totalorder %s45, 0
    %s47 = scalar_select %p46, %s45, 0
    %s48 = ssub.s32 %s40, 1
    %p49 = scmp.gt.s32.totalorder %s48, 0
    %s50 = scalar_select %p49, %s48, 0
    %s51 = ssub.s32 %s32, %s44
    %s52 = ssub.s32 %s47, %s50
    %s53 = sor.u32 %s51, %s52
    %p54 = scmp.eq.s32.totalorder %s53, 0
    %s56 = sadd.s32 %s55, 1
    %s57 = scalar_select %p54, %s55, %s56
    %p60 = pneg %p54
    %p61 = scmp.eq.s32.totalorder %s25, 3
    %p62 = por %p60, %p61
    %p63 = scmp.ne.s32.totalorder %s55, %s58
    %p64 = scmp.eq.s32.totalorder %s25, 0
    %p65 = por %p63, %p64
    %p66 = scmp.ne.s32.totalorder %s55, %s58
    %p67 = scmp.eq.s32.totalorder %s30, 3
    %p68 = por %p66, %p67
    %p69 = scmp.ne.s32.totalorder %s58, %s59
    %p70 = scmp.eq.s32.totalorder %s30, 0
    %p71 = por %p69, %p70
    %p72 = scmp.ne.s32.totalorder %s58, %s59
    %p73 = scmp.eq.s32.totalorder %s31, 3
    %p74 = por %p72, %p73
    %p76 = scmp.ne.s32.totalorder %s59, %s75
    %p77 = scmp.eq.s32.totalorder %s31, 0
    %p78 = por %p76, %p77
    %s79 = ssub.s32 %s32, %s44
    %s80 = ssub.s32 %s33, %s40
    %s81 = sor.u32 %s79, %s80
    %p82 = scmp.eq.s32.totalorder %s81, 0
    %s84 = sadd.s32 %s83, 1
    %s85 = scalar_select %p82, %s83, %s84
    %p88 = pneg %p82
    %p89 = scmp.eq.s32.totalorder %s25, 3
    %p90 = por %p88, %p89
    %p91 = scmp.ne.s32.totalorder %s83, %s86
    %p92 = scmp.eq.s32.totalorder %s25, 0
    %p93 = por %p91, %p92
    %p94 = scmp.ne.s32.totalorder %s83, %s86
    %p95 = scmp.eq.s32.totalorder %s30, 3
    %p96 = por %p94, %p95
    %p97 = scmp.ne.s32.totalorder %s86, %s87
    %p98 = scmp.eq.s32.totalorder %s30, 0
    %p99 = por %p97, %p98
    %p100 = scmp.ne.s32.totalorder %s86, %s87
    %p101 = scmp.eq.s32.totalorder %s31, 3
    %p102 = por %p100, %p101
    %p104 = scmp.ne.s32.totalorder %s87, %s103
    %p105 = scmp.eq.s32.totalorder %s31, 0
    %p106 = por %p104, %p105
    %s107 = sadd.s32 %s33, 1
    %p108 = scmp.lt.s32.totalorder %s107, 1
    %s109 = scalar_select %p108, %s107, 1
    %s110 = sadd.s32 %s40, 1
    %p111 = scmp.lt.s32.totalorder %s110, 1
    %s112 = scalar_select %p111, %s110, 1
    %s113 = ssub.s32 %s32, %s44
    %s114 = ssub.s32 %s109, %s112
    %s115 = sor.u32 %s113, %s114
    %p116 = scmp.eq.s32.totalorder %s115, 0
    %s118 = sadd.s32 %s117, 1
    %s119 = scalar_select %p116, %s117, %s118
    %p122 = pneg %p116
    %p123 = scmp.eq.s32.totalorder %s25, 3
    %p124 = por %p122, %p123
    %p125 = scmp.ne.s32.totalorder %s117, %s120
    %p126 = scmp.eq.s32.totalorder %s25, 0
    %p127 = por %p125, %p126
    %p128 = scmp.ne.s32.totalorder %s117, %s120
    %p129 = scmp.eq.s32.totalorder %s30, 3
    %p130 = por %p128, %p129
    %p131 = scmp.ne.s32.totalorder %s120, %s121
    %p132 = scmp.eq.s32.totalorder %s30, 0
    %p133 = por %p131, %p132
    %p134 = scmp.ne.s32.totalorder %s120, %s121
    %p135 = scmp.eq.s32.totalorder %s31, 3
    %p136 = por %p134, %p135
    %p138 = scmp.ne.s32.totalorder %s121, %s137
    %p139 = scmp.eq.s32.totalorder %s31, 0
    %p140 = por %p138, %p139
    %s141 = ssub.s32 %s33, 1
    %p142 = scmp.gt.s32.totalorder %s141, 0
    %s143 = scalar_select %p142, %s141, 0
    %s144 = ssub.s32 %s40, 1
    %p145 = scmp.gt.s32.totalorder %s144, 0
    %s146 = scalar_select %p145, %s144, 0
    %s147 = ssub.s32 %s32, %s44
    %s148 = ssub.s32 %s143, %s146
    %s149 = sor.u32 %s147, %s148
    %p150 = scmp.eq.s32.totalorder %s149, 0
    %s152 = sadd.s32 %s151, 1
    %s153 = scalar_select %p150, %s151, %s152
    %p156 = pneg %p150
    %p157 = scmp.eq.s32.totalorder %s25, 3
    %p158 = por %p156, %p157
    %p159 = scmp.ne.s32.totalorder %s151, %s154
    %p160 = scmp.eq.s32.totalorder %s25, 0
    %p161 = por %p159, %p160
    %p162 = scmp.ne.s32.totalorder %s151, %s154
    %p163 = scmp.eq.s32.totalorder %s30, 3
    %p164 = por %p162, %p163
    %p165 = scmp.ne.s32.totalorder %s154, %s155
    %p166 = scmp.eq.s32.totalorder %s30, 0
    %p167 = por %p165, %p166
    %p168 = scmp.ne.s32.totalorder %s154, %s155
    %p169 = scmp.eq.s32.totalorder %s31, 3
    %p170 = por %p168, %p169
    %p172 = scmp.ne.s32.totalorder %s155, %s171
    %p173 = scmp.eq.s32.totalorder %s31, 0
    %p174 = por %p172, %p173
    %s175 = ssub.s32 %s32, %s44
    %s176 = ssub.s32 %s33, %s40
    %s177 = sor.u32 %s175, %s176
    %p178 = scmp.eq.s32.totalorder %s177, 0
    %s180 = sadd.s32 %s179, 1
    %s181 = scalar_select %p178, %s179, %s180
    %p184 = pneg %p178
    %p185 = scmp.eq.s32.totalorder %s25, 3
    %p186 = por %p184, %p185
    %p187 = scmp.ne.s32.totalorder %s179, %s182
    %p188 = scmp.eq.s32.totalorder %s25, 0
    %p189 = por %p187, %p188
    %p190 = scmp.ne.s32.totalorder %s179, %s182
    %p191 = scmp.eq.s32.totalorder %s30, 3
    %p192 = por %p190, %p191
    %p193 = scmp.ne.s32.totalorder %s182, %s183
    %p194 = scmp.eq.s32.totalorder %s30, 0
    %p195 = por %p193, %p194
    %p196 = scmp.ne.s32.totalorder %s182, %s183
    %p197 = scmp.eq.s32.totalorder %s31, 3
    %p198 = por %p196, %p197
    %p200 = scmp.ne.s32.totalorder %s183, %s199
    %p201 = scmp.eq.s32.totalorder %s31, 0
    %p202 = por %p200, %p201
    %s203 = sadd.s32 %s33, 1
    %p204 = scmp.lt.s32.totalorder %s203, 1
    %s205 = scalar_select %p204, %s203, 1
    %s206 = sadd.s32 %s40, 1
    %p207 = scmp.lt.s32.totalorder %s206, 1
    %s208 = scalar_select %p207, %s206, 1
    %s209 = ssub.s32 %s32, %s44
    %s210 = ssub.s32 %s205, %s208
    %s211 = sor.u32 %s209, %s210
    %p212 = scmp.eq.s32.totalorder %s211, 0
    %s214 = sadd.s32 %s213, 1
    %s215 = scalar_select %p212, %s213, %s214
    %p218 = pneg %p212
    %p219 = scmp.eq.s32.totalorder %s25, 3
    %p220 = por %p218, %p219
    %p221 = scmp.ne.s32.totalorder %s213, %s216
    %p222 = scmp.eq.s32.totalorder %s25, 0
    %p223 = por %p221, %p222
    %p224 = scmp.ne.s32.totalorder %s213, %s216
    %p225 = scmp.eq.s32.totalorder %s30, 3
    %p226 = por %p224, %p225
    %p227 = scmp.ne.s32.totalorder %s216, %s217
    %p228 = scmp.eq.s32.totalorder %s30, 0
    %p229 = por %p227, %p228
    %p230 = scmp.ne.s32.totalorder %s216, %s217
    %p231 = scmp.eq.s32.totalorder %s31, 3
    %p232 = por %p230, %p231
    %p234 = scmp.ne.s32.totalorder %s217, %s233
    %p235 = scmp.eq.s32.totalorder %s31, 0
    %p236 = por %p234, %p235
    %s238 = sadd.s32 %s237, 1
    %p241 = scmp.eq.s32.totalorder %s25, 3
    %p242 = scmp.ne.s32.totalorder %s237, %s239
    %p243 = scmp.eq.s32.totalorder %s25, 0
    %p244 = por %p242, %p243
    %p245 = scmp.ne.s32.totalorder %s237, %s239
    %p246 = scmp.eq.s32.totalorder %s30, 3
    %p247 = por %p245, %p246
    %p248 = scmp.ne.s32.totalorder %s239, %s240
    %p249 = scmp.eq.s32.totalorder %s30, 0
    %p250 = por %p248, %p249
    %p251 = scmp.ne.s32.totalorder %s239, %s240
    %p252 = scmp.eq.s32.totalorder %s31, 3
    %p253 = por %p251, %p252
    %p255 = scmp.ne.s32.totalorder %s240, %s254
    %p256 = scmp.eq.s32.totalorder %s31, 0
    %p257 = por %p255, %p256
    %s259 = sadd.s32 %s258, 1
    %p262 = scmp.eq.s32.totalorder %s25, 3
    %p263 = scmp.ne.s32.totalorder %s258, %s260
    %p264 = scmp.eq.s32.totalorder %s25, 0
    %p265 = por %p263, %p264
    %p266 = scmp.ne.s32.totalorder %s258, %s260
    %p267 = scmp.eq.s32.totalorder %s30, 3
    %p268 = por %p266, %p267
    %p269 = scmp.ne.s32.totalorder %s260, %s261
    %p270 = scmp.eq.s32.totalorder %s30, 0
    %p271 = por %p269, %p270
    %p272 = scmp.ne.s32.totalorder %s260, %s261
    %p273 = scmp.eq.s32.totalorder %s31, 3
    %p274 = por %p272, %p273
    %p276 = scmp.ne.s32.totalorder %s261, %s275
    %p277 = scmp.eq.s32.totalorder %s31, 0
    %p278 = por %p276, %p277
    %s280 = sadd.s32 %s279, 1
    %p283 = scmp.eq.s32.totalorder %s25, 3
    %p284 = scmp.ne.s32.totalorder %s279, %s281
    %p285 = scmp.eq.s32.totalorder %s25, 0
    %p286 = por %p284, %p285
    %p287 = scmp.ne.s32.totalorder %s279, %s281
    %p288 = scmp.eq.s32.totalorder %s30, 3
    %p289 = por %p287, %p288
    %p290 = scmp.ne.s32.totalorder %s281, %s282
    %p291 = scmp.eq.s32.totalorder %s30, 0
    %p292 = por %p290, %p291
    %p293 = scmp.ne.s32.totalorder %s281, %s282
    %p294 = scmp.eq.s32.totalorder %s31, 3
    %p295 = por %p293, %p294
    %p297 = scmp.ne.s32.totalorder %s282, %s296
    %p298 = scmp.eq.s32.totalorder %s31, 0
    %p299 = por %p297, %p298
    %s301 = sadd.s32 %s300, 1
    %p304 = scmp.eq.s32.totalorder %s25, 3
    %p305 = scmp.ne.s32.totalorder %s300, %s302
    %p306 = scmp.eq.s32.totalorder %s25, 0
    %p307 = por %p305, %p306
    %p308 = scmp.ne.s32.totalorder %s300, %s302
    %p309 = scmp.eq.s32.totalorder %s30, 3
    %p310 = por %p308, %p309
    %p311 = scmp.ne.s32.totalorder %s302, %s303
    %p312 = scmp.eq.s32.totalorder %s30, 0
    %p313 = por %p311, %p312
    %p314 = scmp.ne.s32.totalorder %s302, %s303
    %p315 = scmp.eq.s32.totalorder %s31, 3
    %p316 = por %p314, %p315
    %p318 = scmp.ne.s32.totalorder %s303, %s317
    %p319 = scmp.eq.s32.totalorder %s31, 0
    %p320 = por %p318, %p319
    %s322 = sadd.s32 %s321, 1
    %p325 = scmp.eq.s32.totalorder %s25, 3
    %p326 = scmp.ne.s32.totalorder %s321, %s323
    %p327 = scmp.eq.s32.totalorder %s25, 0
    %p328 = por %p326, %p327
    %p329 = scmp.ne.s32.totalorder %s321, %s323
    %p330 = scmp.eq.s32.totalorder %s30, 3
    %p331 = por %p329, %p330
    %p332 = scmp.ne.s32.totalorder %s323, %s324
    %p333 = scmp.eq.s32.totalorder %s30, 0
    %p334 = por %p332, %p333
    %p335 = scmp.ne.s32.totalorder %s323, %s324
    %p336 = scmp.eq.s32.totalorder %s31, 3
    %p337 = por %p335, %p336
    %p339 = scmp.ne.s32.totalorder %s324, %s338
    %p340 = scmp.eq.s32.totalorder %s31, 0
    %p341 = por %p339, %p340
    %s343 = sadd.s32 %s342, 1
    %p346 = scmp.eq.s32.totalorder %s25, 3
    %p347 = scmp.ne.s32.totalorder %s342, %s344
    %p348 = scmp.eq.s32.totalorder %s25, 0
    %p349 = por %p347, %p348
    %p350 = scmp.ne.s32.totalorder %s342, %s344
    %p351 = scmp.eq.s32.totalorder %s30, 3
    %p352 = por %p350, %p351
    %p353 = scmp.ne.s32.totalorder %s344, %s345
    %p354 = scmp.eq.s32.totalorder %s30, 0
    %p355 = por %p353, %p354
    %p356 = scmp.ne.s32.totalorder %s344, %s345
    %p357 = scmp.eq.s32.totalorder %s31, 3
    %p358 = por %p356, %p357
    %p360 = scmp.ne.s32.totalorder %s345, %s359
    %p361 = scmp.eq.s32.totalorder %s31, 0
    %p362 = por %p360, %p361
    %s364 = sadd.s32 %s363, 1
    %p367 = scmp.eq.s32.totalorder %s25, 3
    %p368 = scmp.ne.s32.totalorder %s363, %s365
    %p369 = scmp.eq.s32.totalorder %s25, 0
    %p370 = por %p368, %p369
    %p371 = scmp.ne.s32.totalorder %s363, %s365
    %p372 = scmp.eq.s32.totalorder %s30, 3
    %p373 = por %p371, %p372
    %p374 = scmp.ne.s32.totalorder %s365, %s366
    %p375 = scmp.eq.s32.totalorder %s30, 0
    %p376 = por %p374, %p375
    %p377 = scmp.ne.s32.totalorder %s365, %s366
    %p378 = scmp.eq.s32.totalorder %s31, 3
    %p379 = por %p377, %p378
    %p381 = scmp.ne.s32.totalorder %s366, %s380
    %p382 = scmp.eq.s32.totalorder %s31, 0
    %p383 = por %p381, %p382
    %s385 = sadd.s32 %s384, 1
    %p388 = scmp.eq.s32.totalorder %s25, 3
    %p389 = scmp.ne.s32.totalorder %s384, %s386
    %p390 = scmp.eq.s32.totalorder %s25, 0
    %p391 = por %p389, %p390
    %p392 = scmp.ne.s32.totalorder %s384, %s386
    %p393 = scmp.eq.s32.totalorder %s30, 3
    %p394 = por %p392, %p393
    %p395 = scmp.ne.s32.totalorder %s386, %s387
    %p396 = scmp.eq.s32.totalorder %s30, 0
    %p397 = por %p395, %p396
    %p398 = scmp.ne.s32.totalorder %s386, %s387
    %p399 = scmp.eq.s32.totalorder %s31, 3
    %p400 = por %p398, %p399
    %p402 = scmp.ne.s32.totalorder %s387, %s401
    %p403 = scmp.eq.s32.totalorder %s31, 0
    %p404 = por %p402, %p403
    %s406 = sadd.s32 %s405, 1
    %p409 = scmp.eq.s32.totalorder %s25, 3
    %p410 = scmp.ne.s32.totalorder %s405, %s407
    %p411 = scmp.eq.s32.totalorder %s25, 0
    %p412 = por %p410, %p411
    %p413 = scmp.ne.s32.totalorder %s405, %s407
    %p414 = scmp.eq.s32.totalorder %s30, 3
    %p415 = por %p413, %p414
    %p416 = scmp.ne.s32.totalorder %s407, %s408
    %p417 = scmp.eq.s32.totalorder %s30, 0
    %p418 = por %p416, %p417
    %p419 = scmp.ne.s32.totalorder %s407, %s408
    %p420 = scmp.eq.s32.totalorder %s31, 3
    %p421 = por %p419, %p420
    %p423 = scmp.ne.s32.totalorder %s408, %s422
    %p424 = scmp.eq.s32.totalorder %s31, 0
    %p425 = por %p423, %p424
    %s427 = sadd.s32 %s426, 1
    %p430 = scmp.eq.s32.totalorder %s25, 3
    %p431 = scmp.ne.s32.totalorder %s426, %s428
    %p432 = scmp.eq.s32.totalorder %s25, 0
    %p433 = por %p431, %p432
    %p434 = scmp.ne.s32.totalorder %s426, %s428
    %p435 = scmp.eq.s32.totalorder %s30, 3
    %p436 = por %p434, %p435
    %p437 = scmp.ne.s32.totalorder %s428, %s429
    %p438 = scmp.eq.s32.totalorder %s30, 0
    %p439 = por %p437, %p438
    %p440 = scmp.ne.s32.totalorder %s428, %s429
    %p441 = scmp.eq.s32.totalorder %s31, 3
    %p442 = por %p440, %p441
    %p444 = scmp.ne.s32.totalorder %s429, %s443
    %p445 = scmp.eq.s32.totalorder %s31, 0
    %p446 = por %p444, %p445
    %s448 = sadd.s32 %s447, 1
    %p451 = scmp.eq.s32.totalorder %s25, 3
    %p452 = scmp.ne.s32.totalorder %s447, %s449
    %p453 = scmp.eq.s32.totalorder %s25, 0
    %p454 = por %p452, %p453
    %p455 = scmp.ne.s32.totalorder %s447, %s449
    %p456 = scmp.eq.s32.totalorder %s30, 3
    %p457 = por %p455, %p456
    %p458 = scmp.ne.s32.totalorder %s449, %s450
    %p459 = scmp.eq.s32.totalorder %s30, 0
    %p460 = por %p458, %p459
    %p461 = scmp.ne.s32.totalorder %s449, %s450
    %p462 = scmp.eq.s32.totalorder %s31, 3
    %p463 = por %p461, %p462
    %p465 = scmp.ne.s32.totalorder %s450, %s464
    %p466 = scmp.eq.s32.totalorder %s31, 0
    %p467 = por %p465, %p466
    %s468 = ssub.s32 %s32, %s44
    %s469 = ssub.s32 %s33, %s40
    %s470 = sor.u32 %s468, %s469
    %p471 = scmp.eq.s32.totalorder %s470, 0
    %s473 = sadd.s32 %s472, 1
    %s474 = scalar_select %p471, %s472, %s473
    %p477 = pneg %p471
    %p478 = scmp.eq.s32.totalorder %s25, 3
    %p479 = por %p477, %p478
    %p480 = scmp.ne.s32.totalorder %s472, %s475
    %p481 = scmp.eq.s32.totalorder %s25, 0
    %p482 = por %p480, %p481
    %p483 = scmp.ne.s32.totalorder %s472, %s475
    %p484 = scmp.eq.s32.totalorder %s30, 3
    %p485 = por %p483, %p484
    %p486 = scmp.ne.s32.totalorder %s475, %s476
    %p487 = scmp.eq.s32.totalorder %s30, 0
    %p488 = por %p486, %p487
    %p489 = scmp.ne.s32.totalorder %s475, %s476
    %p490 = scmp.eq.s32.totalorder %s31, 3
    %p491 = por %p489, %p490
    %p493 = scmp.ne.s32.totalorder %s476, %s492
    %p494 = scmp.eq.s32.totalorder %s31, 0
    %p495 = por %p493, %p494
    %s496 = ssub.s32 %s32, %s44
    %s497 = ssub.s32 %s33, %s40
    %s498 = sor.u32 %s496, %s497
    %p499 = scmp.eq.s32.totalorder %s498, 0
    %s501 = sadd.s32 %s500, 1
    %s502 = scalar_select %p499, %s500, %s501
    %p505 = pneg %p499
    %p506 = scmp.eq.s32.totalorder %s25, 3
    %p507 = por %p505, %p506
    %p508 = scmp.ne.s32.totalorder %s500, %s503
    %p509 = scmp.eq.s32.totalorder %s25, 0
    %p510 = por %p508, %p509
    %p511 = scmp.ne.s32.totalorder %s500, %s503
    %p512 = scmp.eq.s32.totalorder %s30, 3
    %p513 = por %p511, %p512
    %p514 = scmp.ne.s32.totalorder %s503, %s504
    %p515 = scmp.eq.s32.totalorder %s30, 0
    %p516 = por %p514, %p515
    %p517 = scmp.ne.s32.totalorder %s503, %s504
    %p518 = scmp.eq.s32.totalorder %s31, 3
    %p519 = por %p517, %p518
    %p521 = scmp.ne.s32.totalorder %s504, %s520
    %p522 = scmp.eq.s32.totalorder %s31, 0
    %p523 = por %p521, %p522
    %p524 = scmp.le.s32.totalorder 1, %s25
    %p525 = scmp.lt.s32.totalorder %s25, 5
    %p526 = pnand %p524, %p525
    %p527 = pneg %p526
    // Predicated region
    $region9: #{_lambda_.2} parent=5 // pred_check
      _
    $region10: #{_lambda_.2} parent=5 // pred_check_branch
      %529 = sbr.rel (%p526) target = $region12
    $region11: #{_lambda_.2} parent=5 // pred_region
      %s530 = ssub.s32 %s25, 1
      // Predicated region
      $region13: #{_lambda_.2} parent=11 // pred_check
        %p531 = pneg %p250
      $region14: #{_lambda_.2} parent=11 // pred_check_branch
        %533 = sbr.rel (%p531) target = $region16
      $region15: #{_lambda_.2} parent=11 // pred_region
        _
      $region16: #{_lambda_.2} parent=11 // pred_fallthru
        _
      // Predicated region
      $region17: #{_lambda_.2} parent=11 // pred_check
        %p534 = pneg %p271
      $region18: #{_lambda_.2} parent=11 // pred_check_branch
        %536 = sbr.rel (%p534) target = $region20
      $region19: #{_lambda_.2} parent=11 // pred_region
        _
      $region20: #{_lambda_.2} parent=11 // pred_fallthru
        _
      // Predicated region
      $region21: #{_lambda_.2} parent=11 // pred_check
        %p537 = pneg %p292
      $region22: #{_lambda_.2} parent=11 // pred_check_branch
        %539 = sbr.rel (%p537) target = $region24
      $region23: #{_lambda_.2} parent=11 // pred_region
        _
      $region24: #{_lambda_.2} parent=11 // pred_fallthru
        _
      // Predicated region
      $region25: #{_lambda_.2} parent=11 // pred_check
        %p540 = pneg %p313
      $region26: #{_lambda_.2} parent=11 // pred_check_branch
        %542 = sbr.rel (%p540) target = $region28
      $region27: #{_lambda_.2} parent=11 // pred_region
        _
      $region28: #{_lambda_.2} parent=11 // pred_fallthru
        _
      // Predicated region
      $region29: #{_lambda_.2} parent=11 // pred_check
        %p543 = pneg %p334
      $region30: #{_lambda_.2} parent=11 // pred_check_branch
        %545 = sbr.rel (%p543) target = $region32
      $region31: #{_lambda_.2} parent=11 // pred_region
        _
      $region32: #{_lambda_.2} parent=11 // pred_fallthru
        _
      // Predicated region
      $region33: #{_lambda_.2} parent=11 // pred_check
        %p546 = pneg %p355
      $region34: #{_lambda_.2} parent=11 // pred_check_branch
        %548 = sbr.rel (%p546) target = $region36
      $region35: #{_lambda_.2} parent=11 // pred_region
        _
      $region36: #{_lambda_.2} parent=11 // pred_fallthru
        _
      // Predicated region
      $region37: #{_lambda_.2} parent=11 // pred_check
        %p549 = pneg %p376
      $region38: #{_lambda_.2} parent=11 // pred_check_branch
        %551 = sbr.rel (%p549) target = $region40
      $region39: #{_lambda_.2} parent=11 // pred_region
        _
      $region40: #{_lambda_.2} parent=11 // pred_fallthru
        _
      // Predicated region
      $region41: #{_lambda_.2} parent=11 // pred_check
        %p552 = pneg %p397
      $region42: #{_lambda_.2} parent=11 // pred_check_branch
        %554 = sbr.rel (%p552) target = $region44
      $region43: #{_lambda_.2} parent=11 // pred_region
        _
      $region44: #{_lambda_.2} parent=11 // pred_fallthru
        _
      // Predicated region
      $region45: #{_lambda_.2} parent=11 // pred_check
        %p555 = pneg %p418
      $region46: #{_lambda_.2} parent=11 // pred_check_branch
        %557 = sbr.rel (%p555) target = $region48
      $region47: #{_lambda_.2} parent=11 // pred_region
        _
      $region48: #{_lambda_.2} parent=11 // pred_fallthru
        _
      // Predicated region
      $region49: #{_lambda_.2} parent=11 // pred_check
        %p558 = pneg %p439
      $region50: #{_lambda_.2} parent=11 // pred_check_branch
        %560 = sbr.rel (%p558) target = $region52
      $region51: #{_lambda_.2} parent=11 // pred_region
        _
      $region52: #{_lambda_.2} parent=11 // pred_fallthru
        _
      // Predicated region
      $region53: #{_lambda_.2} parent=11 // pred_check
        %p561 = pneg %p460
      $region54: #{_lambda_.2} parent=11 // pred_check_branch
        %563 = sbr.rel (%p561) target = $region56
      $region55: #{_lambda_.2} parent=11 // pred_region
        _
      $region56: #{_lambda_.2} parent=11 // pred_fallthru
        _
    $region12: #{_lambda_.2} parent=5 // pred_fallthru
      _
    %p564 = scmp.lt.s32.totalorder %s25, 4
    // Predicated region
    $region57: #{_lambda_.2} parent=5 // pred_check
      %p565 = pneg %p564
    $region58: #{_lambda_.2} parent=5 // pred_check_branch
      %567 = sbr.rel (%p565) target = $region60
    $region59: #{_lambda_.2} parent=5 // pred_region
      // Predicated region
      $region61: #{_lambda_.2} parent=59 // pred_check
        %p568 = pneg %p65
      $region62: #{_lambda_.2} parent=59 // pred_check_branch
        %570 = sbr.rel (%p568) target = $region64
      $region63: #{_lambda_.2} parent=59 // pred_region
        %s571 = ssub.s32 %s33, 1
        %p572 = scmp.gt.s32.totalorder %s571, 0
        %s573 = scalar_select %p572, %s571, 0
        %p574 = scmp.lt.s32.totalorder %s32, 1
        %s575 = scalar_select %p574, %s32, 1
        %p576 = scmp.lt.s32.totalorder %s573, 1
        %s577 = scalar_select %p576, %s573, 1
        %s578 = smul.addr %s575, 2
        %s579 = sadd.s32 %s577, %s578
        %s580 = smul.addr %s579, 8
        %s581 = scalar_lea.vmem %s0, %s580
        %s582 = ssub.s32 %s33, 1
        %p583 = scmp.gt.s32.totalorder %s582, 0
        %s584 = scalar_select %p583, %s582, 0
      $region64: #{_lambda_.2} parent=59 // pred_fallthru
        _
      // Predicated region
      $region65: #{_lambda_.2} parent=59 // pred_check
        %p585 = pneg %p93
      $region66: #{_lambda_.2} parent=59 // pred_check_branch
        %587 = sbr.rel (%p585) target = $region68
      $region67: #{_lambda_.2} parent=59 // pred_region
        %p588 = scmp.lt.s32.totalorder %s32, 1
        %s589 = scalar_select %p588, %s32, 1
        %p590 = scmp.lt.s32.totalorder %s33, 1
        %s591 = scalar_select %p590, %s33, 1
        %s592 = smul.addr %s589, 2
        %s593 = sadd.s32 %s591, %s592
        %s594 = smul.addr %s593, 8
        %s595 = scalar_lea.vmem %s1, %s594
      $region68: #{_lambda_.2} parent=59 // pred_fallthru
        _
      // Predicated region
      $region69: #{_lambda_.2} parent=59 // pred_check
        %p596 = pneg %p127
      $region70: #{_lambda_.2} parent=59 // pred_check_branch
        %598 = sbr.rel (%p596) target = $region72
      $region71: #{_lambda_.2} parent=59 // pred_region
        %s599 = sadd.s32 %s33, 1
        %p600 = scmp.lt.s32.totalorder %s599, 1
        %s601 = scalar_select %p600, %s599, 1
        %p602 = scmp.lt.s32.totalorder %s32, 1
        %s603 = scalar_select %p602, %s32, 1
        %p604 = scmp.lt.s32.totalorder %s601, 1
        %s605 = scalar_select %p604, %s601, 1
        %s606 = smul.addr %s603, 2
        %s607 = sadd.s32 %s605, %s606
        %s608 = smul.addr %s607, 8
        %s609 = scalar_lea.vmem %s2, %s608
        %s610 = sadd.s32 %s33, 1
        %p611 = scmp.lt.s32.totalorder %s610, 1
        %s612 = scalar_select %p611, %s610, 1
      $region72: #{_lambda_.2} parent=59 // pred_fallthru
        _
      // Predicated region
      $region73: #{_lambda_.2} parent=59 // pred_check
        %p613 = pneg %p161
      $region74: #{_lambda_.2} parent=59 // pred_check_branch
        %615 = sbr.rel (%p613) target = $region76
      $region75: #{_lambda_.2} parent=59 // pred_region
        %s616 = ssub.s32 %s33, 1
        %p617 = scmp.gt.s32.totalorder %s616, 0
        %s618 = scalar_select %p617, %s616, 0
        %p619 = scmp.lt.s32.totalorder %s32, 1
        %s620 = scalar_select %p619, %s32, 1
        %p621 = scmp.lt.s32.totalorder %s618, 1
        %s622 = scalar_select %p621, %s618, 1
        %s623 = smul.addr %s620, 2
        %s624 = sadd.s32 %s622, %s623
        %s625 = scalar_lea.vmem %s3, %s624
        %s626 = ssub.s32 %s33, 1
        %p627 = scmp.gt.s32.totalorder %s626, 0
        %s628 = scalar_select %p627, %s626, 0
      $region76: #{_lambda_.2} parent=59 // pred_fallthru
        _
      // Predicated region
      $region77: #{_lambda_.2} parent=59 // pred_check
        %p629 = pneg %p189
      $region78: #{_lambda_.2} parent=59 // pred_check_branch
        %631 = sbr.rel (%p629) target = $region80
      $region79: #{_lambda_.2} parent=59 // pred_region
        %p632 = scmp.lt.s32.totalorder %s32, 1
        %s633 = scalar_select %p632, %s32, 1
        %p634 = scmp.lt.s32.totalorder %s33, 1
        %s635 = scalar_select %p634, %s33, 1
        %s636 = smul.addr %s633, 2
        %s637 = sadd.s32 %s635, %s636
        %s638 = scalar_lea.vmem %s4, %s637
      $region80: #{_lambda_.2} parent=59 // pred_fallthru
        _
      // Predicated region
      $region81: #{_lambda_.2} parent=59 // pred_check
        %p639 = pneg %p223
      $region82: #{_lambda_.2} parent=59 // pred_check_branch
        %641 = sbr.rel (%p639) target = $region84
      $region83: #{_lambda_.2} parent=59 // pred_region
        %s642 = sadd.s32 %s33, 1
        %p643 = scmp.lt.s32.totalorder %s642, 1
        %s644 = scalar_select %p643, %s642, 1
        %p645 = scmp.lt.s32.totalorder %s32, 1
        %s646 = scalar_select %p645, %s32, 1
        %p647 = scmp.lt.s32.totalorder %s644, 1
        %s648 = scalar_select %p647, %s644, 1
        %s649 = smul.addr %s646, 2
        %s650 = sadd.s32 %s648, %s649
        %s651 = scalar_lea.vmem %s5, %s650
        %s652 = sadd.s32 %s33, 1
        %p653 = scmp.lt.s32.totalorder %s652, 1
        %s654 = scalar_select %p653, %s652, 1
      $region84: #{_lambda_.2} parent=59 // pred_fallthru
        _
    $region60: #{_lambda_.2} parent=5 // pred_fallthru
      _
    %p655 = scmp.le.s32.totalorder 1, %s25
    %p656 = scmp.lt.s32.totalorder %s25, 5
    %p657 = pnand %p655, %p656
    %p658 = pneg %p657
    // Predicated region
    $region85: #{_lambda_.2} parent=5 // pred_check
      _
    $region86: #{_lambda_.2} parent=5 // pred_check_branch
      %660 = sbr.rel (%p657) target = $region88
    $region87: #{_lambda_.2} parent=5 // pred_region
      %s661 = ssub.s32 %s25, 1
      %s662 = ssub.s32 %s35, 1
      %p663 = scmp.gt.s32.totalorder %s662, 0
      %s664 = scalar_select %p663, %s662, 0
      %p665 = scmp.lt.s32.totalorder %s34, 1
      %s666 = scalar_select %p665, %s34, 1
      %p667 = scmp.lt.s32.totalorder %s664, 1
      %s668 = scalar_select %p667, %s664, 1
      %s669 = smul.addr %s666, 2
      %s670 = sadd.s32 %s668, %s669
      %s671 = smul.addr %s670, 8
      %s672 = scalar_lea.vmem %s0, %s671
      %p673 = pneg %p71
      %p674 = pneg %p68
      %p675 = scmp.lt.s32.totalorder %s34, 1
      %s676 = scalar_select %p675, %s34, 1
      %p677 = scmp.lt.s32.totalorder %s35, 1
      %s678 = scalar_select %p677, %s35, 1
      %s679 = smul.addr %s676, 2
      %s680 = sadd.s32 %s678, %s679
      %s681 = smul.addr %s680, 8
      %s682 = scalar_lea.vmem %s1, %s681
      %p683 = pneg %p99
      %p684 = pneg %p96
      %s685 = sadd.s32 %s35, 1
      %p686 = scmp.lt.s32.totalorder %s685, 1
      %s687 = scalar_select %p686, %s685, 1
      %p688 = scmp.lt.s32.totalorder %s34, 1
      %s689 = scalar_select %p688, %s34, 1
      %p690 = scmp.lt.s32.totalorder %s687, 1
      %s691 = scalar_select %p690, %s687, 1
      %s692 = smul.addr %s689, 2
      %s693 = sadd.s32 %s691, %s692
      %s694 = smul.addr %s693, 8
      %s695 = scalar_lea.vmem %s2, %s694
      %p696 = pneg %p133
      %p697 = pneg %p130
      %s698 = ssub.s32 %s35, 1
      %p699 = scmp.gt.s32.totalorder %s698, 0
      %s700 = scalar_select %p699, %s698, 0
      %p701 = scmp.lt.s32.totalorder %s34, 1
      %s702 = scalar_select %p701, %s34, 1
      %p703 = scmp.lt.s32.totalorder %s700, 1
      %s704 = scalar_select %p703, %s700, 1
      %s705 = smul.addr %s702, 2
      %s706 = sadd.s32 %s704, %s705
      %s707 = scalar_lea.vmem %s3, %s706
      %p708 = pneg %p167
      %p709 = pneg %p164
      %p710 = scmp.lt.s32.totalorder %s34, 1
      %s711 = scalar_select %p710, %s34, 1
      %p712 = scmp.lt.s32.totalorder %s35, 1
      %s713 = scalar_select %p712, %s35, 1
      %s714 = smul.addr %s711, 2
      %s715 = sadd.s32 %s713, %s714
      %s716 = scalar_lea.vmem %s4, %s715
      %p717 = pneg %p195
      %p718 = pneg %p192
      %s719 = sadd.s32 %s35, 1
      %p720 = scmp.lt.s32.totalorder %s719, 1
      %s721 = scalar_select %p720, %s719, 1
      %p722 = scmp.lt.s32.totalorder %s34, 1
      %s723 = scalar_select %p722, %s34, 1
      %p724 = scmp.lt.s32.totalorder %s721, 1
      %s725 = scalar_select %p724, %s721, 1
      %s726 = smul.addr %s723, 2
      %s727 = sadd.s32 %s725, %s726
      %s728 = scalar_lea.vmem %s5, %s727
      %p729 = pneg %p229
      %p730 = pneg %p226
      %p731 = pneg %p250
      %p732 = pneg %p247
      %p733 = pneg %p271
      %p734 = pneg %p268
      %p735 = pneg %p292
      %p736 = pneg %p289
      %p737 = pneg %p313
      %p738 = pneg %p310
      %p739 = pneg %p334
      %p740 = pneg %p331
      %p741 = pneg %p355
      %p742 = pneg %p352
      %p743 = pneg %p376
      %p744 = pneg %p373
      %p745 = pneg %p397
      %p746 = pneg %p394
      %p747 = pneg %p418
      %p748 = pneg %p415
      %p749 = pneg %p439
      %p750 = pneg %p436
      %p751 = pneg %p460
      %p752 = pneg %p457
      %p753 = pneg %p488
      %p754 = pneg %p485
      %p755 = scmp.lt.s32.totalorder %s34, 1
      %s756 = scalar_select %p755, %s34, 1
      %p757 = scmp.lt.s32.totalorder %s35, 1
      %s758 = scalar_select %p757, %s35, 1
      %s759 = smul.addr %s756, 2
      %s760 = sadd.s32 %s758, %s759
      %s761 = smul.addr %s760, 8
      %s762 = scalar_lea.vmem %s17, %s761
      %p763 = pneg %p516
      %p764 = pneg %p513
      %p765 = scmp.lt.s32.totalorder %s34, 1
      %s766 = scalar_select %p765, %s34, 1
      %p767 = scmp.lt.s32.totalorder %s35, 1
      %s768 = scalar_select %p767, %s35, 1
      %s769 = smul.addr %s766, 2
      %s770 = sadd.s32 %s768, %s769
      %s771 = scalar_lea.vmem %s18, %s770
      %s772 = ssub.s32 %s35, 1
      %p773 = scmp.gt.s32.totalorder %s772, 0
      %s774 = scalar_select %p773, %s772, 0
      %p775 = scmp.lt.s32.totalorder %s34, 1
      %s776 = scalar_select %p775, %s34, 1
      %p777 = scmp.lt.s32.totalorder %s774, 1
      %s778 = scalar_select %p777, %s774, 1
      %s779 = smul.addr %s776, 2
      %s780 = sadd.s32 %s778, %s779
      %s781 = smul.addr %s780, 8
      %s782 = scalar_lea.vmem %s0, %s781
      %s783 = ssub.s32 %s35, 1
      %p784 = scmp.gt.s32.totalorder %s783, 0
      %s785 = scalar_select %p784, %s783, 0
      %p786 = scmp.lt.s32.totalorder %s34, 1
      %s787 = scalar_select %p786, %s34, 1
      %p788 = scmp.lt.s32.totalorder %s35, 1
      %s789 = scalar_select %p788, %s35, 1
      %s790 = smul.addr %s787, 2
      %s791 = sadd.s32 %s789, %s790
      %s792 = smul.addr %s791, 8
      %s793 = scalar_lea.vmem %s1, %s792
      %s794 = sadd.s32 %s35, 1
      %p795 = scmp.lt.s32.totalorder %s794, 1
      %s796 = scalar_select %p795, %s794, 1
      %p797 = scmp.lt.s32.totalorder %s34, 1
      %s798 = scalar_select %p797, %s34, 1
      %p799 = scmp.lt.s32.totalorder %s796, 1
      %s800 = scalar_select %p799, %s796, 1
      %s801 = smul.addr %s798, 2
      %s802 = sadd.s32 %s800, %s801
      %s803 = smul.addr %s802, 8
      %s804 = scalar_lea.vmem %s2, %s803
      %s805 = sadd.s32 %s35, 1
      %p806 = scmp.lt.s32.totalorder %s805, 1
      %s807 = scalar_select %p806, %s805, 1
      %s808 = ssub.s32 %s35, 1
      %p809 = scmp.gt.s32.totalorder %s808, 0
      %s810 = scalar_select %p809, %s808, 0
      %p811 = scmp.lt.s32.totalorder %s34, 1
      %s812 = scalar_select %p811, %s34, 1
      %p813 = scmp.lt.s32.totalorder %s810, 1
      %s814 = scalar_select %p813, %s810, 1
      %s815 = smul.addr %s812, 2
      %s816 = sadd.s32 %s814, %s815
      %s817 = scalar_lea.vmem %s3, %s816
      %s818 = ssub.s32 %s35, 1
      %p819 = scmp.gt.s32.totalorder %s818, 0
      %s820 = scalar_select %p819, %s818, 0
      %p821 = scmp.lt.s32.totalorder %s34, 1
      %s822 = scalar_select %p821, %s34, 1
      %p823 = scmp.lt.s32.totalorder %s35, 1
      %s824 = scalar_select %p823, %s35, 1
      %s825 = smul.addr %s822, 2
      %s826 = sadd.s32 %s824, %s825
      %s827 = scalar_lea.vmem %s4, %s826
      %s828 = sadd.s32 %s35, 1
      %p829 = scmp.lt.s32.totalorder %s828, 1
      %s830 = scalar_select %p829, %s828, 1
      %p831 = scmp.lt.s32.totalorder %s34, 1
      %s832 = scalar_select %p831, %s34, 1
      %p833 = scmp.lt.s32.totalorder %s830, 1
      %s834 = scalar_select %p833, %s830, 1
      %s835 = smul.addr %s832, 2
      %s836 = sadd.s32 %s834, %s835
      %s837 = scalar_lea.vmem %s5, %s836
      %s838 = sadd.s32 %s35, 1
      %p839 = scmp.lt.s32.totalorder %s838, 1
      %s840 = scalar_select %p839, %s838, 1
      %p841 = scmp.lt.s32.totalorder %s34, 1
      %s842 = scalar_select %p841, %s34, 1
      %p843 = scmp.lt.s32.totalorder %s35, 1
      %s844 = scalar_select %p843, %s35, 1
      %s845 = smul.addr %s842, 2
      %s846 = sadd.s32 %s844, %s845
      %s847 = smul.addr %s846, 8
      %s848 = scalar_lea.vmem %s17, %s847
      %p849 = scmp.lt.s32.totalorder %s34, 1
      %s850 = scalar_select %p849, %s34, 1
      %p851 = scmp.lt.s32.totalorder %s35, 1
      %s852 = scalar_select %p851, %s35, 1
      %s853 = smul.addr %s850, 2
      %s854 = sadd.s32 %s852, %s853
      %s855 = scalar_lea.vmem %s18, %s854
      %v857 = vld [vmem:[%s827] sm:$0x1]
      %p858 = scmp.gt.s32.totalorder %s35, 0
      %s859 = scalar_select %p858, 1, 0
      %s860 = scvt.s32.f32 %s859
      %p861 = scmp.lt.s32.totalorder %s35, 1
      %s862 = scalar_select %p861, 1, 0
      %s863 = scvt.s32.f32 %s862
      %v864 = vld [vmem:[%s817] sm:$0x1]
      %v865 = vstv %s860
      %v866 = vmul.f32 %v864, %v865
      %v867 = vld [vmem:[%s837] sm:$0x1]
      %v868 = vstv %s863
      %v869 = vmul.f32 %v867, %v868
      %v871 = vlaneseq
      %v872 = vshrl.u32 %v871, 7
      %v873 = vsub.s32 0, %v872
      %v874 = vrot.slane %v866, %v873
      %875 = vrot.lane.b32.xlu0 %v874, 14
      %v876 = vpop.permute.xlu0 %875
      %v879 = vlaneseq
      %v880 = vshrl.u32 %v879, 7
      %v881 = vsub.s32 0, %v880
      %v882 = vrot.slane %v857, %v881
      %883 = vrot.lane.b32.xlu0 %v882, 14
      %v884 = vpop.permute.xlu0 %883
      %v887 = vlaneseq
      %v888 = vshrl.u32 %v887, 7
      %v889 = vsub.s32 0, %v888
      %v890 = vrot.slane %v869, %v889
      %891 = vrot.lane.b32.xlu0 %v890, 14
      %v892 = vpop.permute.xlu0 %891
      %vm894 = vcmask 113664
      %v895 = vsel %vm894, %v876, %v884
      %v896 = vsel %vm894, %v884, %v892
      %v897 = vld [vmem:[%s782] sm:$0xff]
      %v898 = vld [vmem:[%s793] sm:$0xff]
      %v899 = vld [vmem:[%s804] sm:$0xff]
      %901 = vrot.lane.b32.xlu0 %v897, 14
      %v902 = vpop.permute.xlu0 %901
      %905 = vrot.lane.b32.xlu0 %v898, 14
      %v906 = vpop.permute.xlu0 %905
      %909 = vrot.lane.b32.xlu0 %v899, 14
      %v910 = vpop.permute.xlu0 %909
      %v912 = vsel %vm894, %v902, %v906
      %v913 = vsel %vm894, %v906, %v910
      %v914 = vld [vmem:[%s7] sm:$0xff]
      %v915 = vld [vmem:[%s6] sm:$0xff]
      %v916 = vmul.f32 %v915, 1.442695
      %v917 = vpow.pop %v916
      %919 = vset.pattern.permute.xlu0 0
      %920 = vperm.xlu0 %919, %v917
      %v921 = vpop.permute.xlu0 %920
      %v923 = vmul.f32 %v921, %v912
      %v924 = vmul.f32 %v921, %v913
      %926 = vset.pattern.permute.xlu0 0
      %927 = vperm.xlu0 %926, %v914
      %v928 = vpop.permute.xlu0 %927
      %v930 = vadd.f32 %v928, %v923
      %v931 = vadd.f32 %v928, %v924
      %v932 = vlaneseq
      %v933 = vshrl.u32 %v932, 7
      %v934 = vsub.s32 0, %v933
      %v935 = vrot.slane %v895, %v934
      %v936 = vlaneseq
      %v937 = vshrl.u32 %v936, 7
      %v938 = vsub.s32 0, %v937
      %v939 = vrot.slane %v896, %v938
      %v940 = vmul.f32 %v930, %v935
      %v941 = vmul.f32 %v931, %v939
      %v942 = vld [vmem:[%s8] sm:$0xff]
      %vm943 = vcmask 64512
      %v945 = vsel %vm943, %v942, 0
      %947 = vmatprep.subr.mxu0 %v941
      %948 = vmatpush1.msra.mxu0 %v940
      %949 = vmatprep.subr.mxu0 0.0
      %950 = vmatpush1.msra.mxu0 0.0
      %951 = vmatprep.subr.mxu0 0.0
      %952 = vmatpush1.msra.mxu0 0.0
      %953 = vmatprep.subr.mxu0 0.0
      %954 = vmatpush1.msra.mxu0 0.0
      %955 = vmatprep.subr.mxu0 0.0
      %956 = vmatpush1.msra.mxu0 0.0
      %957 = vmatprep.subr.mxu0 0.0
      %958 = vmatpush1.msra.mxu0 0.0
      %959 = vmatprep.subr.mxu0 0.0
      %960 = vmatpush1.msra.mxu0 0.0
      %961 = vmatprep.subr.mxu0 0.0
      %962 = vmatpush1.msra.mxu0 0.0
      %963 = vmatprep.subr.mxu0 0.0
      %964 = vmatpush1.msra.mxu0 0.0
      %965 = vmatprep.subr.mxu0 0.0
      %966 = vmatpush1.msra.mxu0 0.0
      %967 = vmatprep.subr.mxu0 0.0
      %968 = vmatpush1.msra.mxu0 0.0
      %969 = vmatprep.subr.mxu0 0.0
      %970 = vmatpush1.msra.mxu0 0.0
      %971 = vmatprep.subr.mxu0 0.0
      %972 = vmatpush1.msra.mxu0 0.0
      %973 = vmatprep.subr.mxu0 0.0
      %974 = vmatpush1.msra.mxu0 0.0
      %975 = vmatprep.subr.mxu0 0.0
      %976 = vmatpush1.msra.mxu0 0.0
      %977 = vmatprep.subr.mxu0 0.0
      %978 = vmatpush1.msra.mxu0 0.0
      %979 = vmatprep.subr.mxu0 0.0
      %980 = vmatpush1.msra.mxu0 0.0
      %981 = vmatprep.subr.mxu0 0.0
      %982 = vmatpush1.msra.mxu0 0.0
      %983 = vmatprep.subr.mxu0 0.0
      %984 = vmatpush1.msra.mxu0 0.0
      %985 = vmatprep.subr.mxu0 0.0
      %986 = vmatpush1.msra.mxu0 0.0
      %987 = vmatprep.subr.mxu0 0.0
      %988 = vmatpush1.msra.mxu0 0.0
      %989 = vmatprep.subr.mxu0 0.0
      %990 = vmatpush1.msra.mxu0 0.0
      %991 = vmatprep.subr.mxu0 0.0
      %992 = vmatpush1.msra.mxu0 0.0
      %993 = vmatprep.subr.mxu0 0.0
      %994 = vmatpush1.msra.mxu0 0.0
      %995 = vmatprep.subr.mxu0 0.0
      %996 = vmatpush1.msra.mxu0 0.0
      %997 = vmatprep.subr.mxu0 0.0
      %998 = vmatpush1.msra.mxu0 0.0
      %999 = vmatprep.subr.mxu0 0.0
      %1000 = vmatpush1.msra.mxu0 0.0
      %1001 = vmatprep.subr.mxu0 0.0
      %1002 = vmatpush1.msra.mxu0 0.0
      %1003 = vmatprep.subr.mxu0 0.0
      %1004 = vmatpush1.msra.mxu0 0.0
      %1005 = vmatprep.subr.mxu0 0.0
      %1006 = vmatpush1.msra.mxu0 0.0
      %1007 = vmatprep.subr.mxu0 0.0
      %1008 = vmatpush1.msra.mxu0 0.0
      %1009 = vmatprep.subr.mxu0 0.0
      %1010 = vmatpush1.msra.mxu0 0.0
      %1011 = vmatprep.mubr.f32.mxu0 0.0
      %1012 = vmatmul.mubr.f32.gmra.mrb[0].mxu0 %v945
      %v1013 = vpop.f32.mrb[0].mxu0
      %v1014 = vadd.f32 0.0, %v1013
      %v1015 = vpop.f32.mrb[0].mxu0
      %v1016 = vadd.f32 0.0, %v1015
      %1017 = vdwg.mxu0
      %v1018 = vmul.f32 %v1014, %v935
      %v1019 = vmul.f32 %v1016, %v939
      %v1020 = vld [vmem:[%s9] sm:$0xf]
      %v1021 = vld [vmem:[%s9 + $0x4] sm:$0xf]
      %v1022 = vld [vmem:[%s9 + $0x8] sm:$0xf]
      %v1023 = vld [vmem:[%s9 + $0xc] sm:$0xf]
      %v1024 = vpack.c.bf16 %v1018, %v1018
      %v1025 = vpack.c.bf16 %v1019, %v1019
      %v1026 = vld [vmem:[%s10] sm:$0xff]
      %v1027 = vld [vmem:[%s10 + $0x8] sm:$0xff]
      %v1028 = vld [vmem:[%s10 + $0x10] sm:$0xff]
      %v1029 = vld [vmem:[%s10 + $0x18] sm:$0xff]
      %1031 = vset.pattern.permute.xlu0 0
      %1032 = vperm.xlu0 %1031, %v1026
      %v1033 = vpop.permute.xlu0 %1032
      %1036 = vset.pattern.permute.xlu0 0
      %1037 = vperm.xlu0 %1036, %v1027
      %v1038 = vpop.permute.xlu0 %1037
      %1041 = vset.pattern.permute.xlu0 0
      %1042 = vperm.xlu0 %1041, %v1028
      %v1043 = vpop.permute.xlu0 %1042
      %1046 = vset.pattern.permute.xlu0 0
      %1047 = vperm.xlu0 %1046, %v1029
      %v1048 = vpop.permute.xlu0 %1047
      %v1054 = vunpack.c.l.b16 %v1020
      %v1055 = vunpack.c.l.b16 %v1021
      %v1056 = vunpack.c.l.b16 %v1022
      %v1057 = vunpack.c.l.b16 %v1023
      %v1058 = vpack.c.b16 %v1055, %v1054
      %v1059 = vpack.c.b16 %v1057, %v1056
      %vm1060 = vcmask 31744
      %v1062 = vsel %vm1060, %v1058, 0
      %v1065 = vsel %vm1060, %v1059, 0
      %vm1067 = vcmask 1041408
      %v1069 = vsel %vm1067, %v1024, 0
      %v1072 = vsel %vm1067, %v1025, 0
      %1074 = vmatprep.subr.bf16.mxu0 %v1072
      %1075 = vmatpush1.bf16.msra.mxu0 %v1069
      %1076 = vmatprep.subr.bf16.mxu0 0
      %1077 = vmatpush1.bf16.msra.mxu0 0
      %1078 = vmatprep.subr.bf16.mxu0 0
      %1079 = vmatpush1.bf16.msra.mxu0 0
      %1080 = vmatprep.subr.bf16.mxu0 0
      %1081 = vmatpush1.bf16.msra.mxu0 0
      %1082 = vmatprep.subr.bf16.mxu0 0
      %1083 = vmatpush1.bf16.msra.mxu0 0
      %1084 = vmatprep.subr.bf16.mxu0 0
      %1085 = vmatpush1.bf16.msra.mxu0 0
      %1086 = vmatprep.subr.bf16.mxu0 0
      %1087 = vmatpush1.bf16.msra.mxu0 0
      %1088 = vmatprep.subr.bf16.mxu0 0
      %1089 = vmatpush1.bf16.msra.mxu0 0
      %1090 = vmatprep.subr.bf16.mxu0 0
      %1091 = vmatpush1.bf16.msra.mxu0 0
      %1092 = vmatprep.subr.bf16.mxu0 0
      %1093 = vmatpush1.bf16.msra.mxu0 0
      %1094 = vmatprep.subr.bf16.mxu0 0
      %1095 = vmatpush1.bf16.msra.mxu0 0
      %1096 = vmatprep.subr.bf16.mxu0 0
      %1097 = vmatpush1.bf16.msra.mxu0 0
      %1098 = vmatprep.subr.bf16.mxu0 0
      %1099 = vmatpush1.bf16.msra.mxu0 0
      %1100 = vmatprep.subr.bf16.mxu0 0
      %1101 = vmatpush1.bf16.msra.mxu0 0
      %1102 = vmatprep.subr.bf16.mxu0 0
      %1103 = vmatpush1.bf16.msra.mxu0 0
      %1104 = vmatprep.subr.bf16.mxu0 0
      %1105 = vmatpush1.bf16.msra.mxu0 0
      %1106 = vmatprep.mubr.bf16.mxu0 0
      %1107 = vmatmul.mubr.bf16.gmra.mrb[0].mxu0 %v1062
      %v1108 = vpop.f32.mrb[0].mxu0
      %v1109 = vadd.f32 %v1033, %v1108
      %v1110 = vpop.f32.mrb[0].mxu0
      %v1111 = vadd.f32 %v1033, %v1110
      %v1112 = vpop.f32.mrb[0].mxu0
      %v1113 = vadd.f32 %v1038, %v1112
      %v1114 = vpop.f32.mrb[0].mxu0
      %v1115 = vadd.f32 %v1038, %v1114
      %1116 = vmatprep.mubr.bf16.mxu0 0
      %1117 = vmatmul.mubr.bf16.gmra.mrb[0].mxu0 %v1065
      %v1118 = vpop.f32.mrb[0].mxu0
      %v1119 = vadd.f32 %v1043, %v1118
      %v1120 = vpop.f32.mrb[0].mxu0
      %v1121 = vadd.f32 %v1043, %v1120
      %v1122 = vpop.f32.mrb[0].mxu0
      %v1123 = vadd.f32 %v1048, %v1122
      %v1124 = vpop.f32.mrb[0].mxu0
      %v1125 = vadd.f32 %v1048, %v1124
      %1126 = vdwg.mxu0
      %v1127 = vmul.f32 %v1109, %v935
      %v1128 = vmul.f32 %v1111, %v939
      %v1129 = vmul.f32 %v1113, %v935
      %v1130 = vmul.f32 %v1115, %v939
      %v1131 = vmul.f32 %v1119, %v935
      %v1132 = vmul.f32 %v1121, %v939
      %v1133 = vmul.f32 %v1123, %v935
      %v1134 = vmul.f32 %v1125, %v939
      %1135 = vst [vmem:[#allocation2] sm:$0xff] 0
      %1136 = vst [vmem:[#allocation2 + $0x8] sm:$0xff] 0
      %1137 = vst [vmem:[#allocation2 + $0x10] sm:$0xff] 0
      %vm1138 = vcmask 228352
      %1139 = vst.msk [vmem:[#allocation2 + $0x18] sm:$0xff] %vm1138, 0
      %1140 = vst [vmem:[#allocation2 + $0x20] sm:$0xff] 0
      %1141 = vst [vmem:[#allocation2 + $0x28] sm:$0xff] 0
      %1142 = vst [vmem:[#allocation2 + $0x30] sm:$0xff] 0
      %1143 = vst.msk [vmem:[#allocation2 + $0x38] sm:$0xff] %vm1138, 0
      %v1144 = vpack.c.bf16 %v1129, %v1127
      %v1145 = vpack.c.bf16 %v1130, %v1128
      %v1146 = vpack.c.bf16 %v1133, %v1131
      %v1147 = vpack.c.bf16 %v1134, %v1132
      %1148 = vst [vmem:[#allocation2 + $0x8] sm:$0xff] %v1144
      %1149 = vst.msk [vmem:[#allocation2 + $0x10] sm:$0xff] %vm1138, %v1145
      %1150 = vst [vmem:[#allocation2 + $0x28] sm:$0xff] %v1146
      %1151 = vst.msk [vmem:[#allocation2 + $0x30] sm:$0xff] %vm1138, %v1147
      %v1152 = vld [vmem:[#allocation2] sm:$0xff]
      %v1153 = vld [vmem:[#allocation2 + $0x8] sm:$0xff]
      %v1154 = vld [vmem:[#allocation2 + $0x10] sm:$0xff]
      %v1155 = vld [vmem:[#allocation2 + $0x20] sm:$0xff]
      %v1156 = vld [vmem:[#allocation2 + $0x28] sm:$0xff]
      %v1157 = vld [vmem:[#allocation2 + $0x30] sm:$0xff]
      %1164 = vrot.lane.b32.xlu0 %v1152, 127
      %v1165 = vpop.permute.xlu0 %1164
      %1166 = vrot.lane.b32.xlu0 %v1153, 127
      %v1167 = vpop.permute.xlu0 %1166
      %1168 = vrot.lane.b32.xlu0 %v1154, 127
      %v1169 = vpop.permute.xlu0 %1168
      %1170 = vrot.lane.b32.xlu0 %v1155, 127
      %v1171 = vpop.permute.xlu0 %1170
      %1172 = vrot.lane.b32.xlu0 %v1156, 127
      %v1173 = vpop.permute.xlu0 %1172
      %1174 = vrot.lane.b32.xlu0 %v1157, 127
      %v1175 = vpop.permute.xlu0 %1174
      %vm1176 = vcmask 1039360
      %v1177 = vsel %vm1176, %v1165, %v1167
      %v1178 = vsel %vm1176, %v1167, %v1169
      %v1179 = vsel %vm1176, %v1171, %v1173
      %v1180 = vsel %vm1176, %v1173, %v1175
      %1181 = vrot.lane.b32.xlu0 %v1153, 126
      %v1182 = vpop.permute.xlu0 %1181
      %1183 = vrot.lane.b32.xlu0 %v1154, 126
      %v1184 = vpop.permute.xlu0 %1183
      %1185 = vrot.lane.b32.xlu0 %v1156, 126
      %v1186 = vpop.permute.xlu0 %1185
      %1187 = vrot.lane.b32.xlu0 %v1157, 126
      %v1188 = vpop.permute.xlu0 %1187
      %vm1189 = vcmask 1031168
      %v1190 = vsel %vm1189, %v1182, %v1184
      %v1191 = vsel %vm1189, %v1186, %v1188
      %1192 = vrot.lane.b32.xlu0 %v1153, 125
      %v1193 = vpop.permute.xlu0 %1192
      %1194 = vrot.lane.b32.xlu0 %v1154, 125
      %v1195 = vpop.permute.xlu0 %1194
      %1196 = vrot.lane.b32.xlu0 %v1156, 125
      %v1197 = vpop.permute.xlu0 %1196
      %1198 = vrot.lane.b32.xlu0 %v1157, 125
      %v1199 = vpop.permute.xlu0 %1198
      %vm1200 = vcmask 1022976
      %v1201 = vsel %vm1200, %v1193, %v1195
      %v1202 = vsel %vm1200, %v1197, %v1199
      %1203 = vrot.lane.b32.xlu0 %v1153, 124
      %v1204 = vpop.permute.xlu0 %1203
      %1205 = vrot.lane.b32.xlu0 %v1154, 124
      %v1206 = vpop.permute.xlu0 %1205
      %1207 = vrot.lane.b32.xlu0 %v1156, 124
      %v1208 = vpop.permute.xlu0 %1207
      %1209 = vrot.lane.b32.xlu0 %v1157, 124
      %v1210 = vpop.permute.xlu0 %1209
      %vm1211 = vcmask 1014784
      %v1212 = vsel %vm1211, %v1204, %v1206
      %v1213 = vsel %vm1211, %v1208, %v1210
      %v1214 = vld [vmem:[%s11] sm:$0xff]
      %v1215 = vld [vmem:[%s11 + $0x8] sm:$0xff]
      %v1216 = vld [vmem:[%s11 + $0x10] sm:$0xff]
      %v1217 = vld [vmem:[%s11 + $0x18] sm:$0xff]
      %v1218 = vld [vmem:[%s11 + $0x20] sm:$0xff]
      %v1219 = vld [vmem:[%s11 + $0x28] sm:$0xff]
      %v1220 = vld [vmem:[%s11 + $0x30] sm:$0xff]
      %v1221 = vld [vmem:[%s11 + $0x38] sm:$0xff]
      %v1222 = vld [vmem:[%s12] sm:$0xff]
      %v1223 = vld [vmem:[%s12 + $0x8] sm:$0xff]
      %v1224 = vld [vmem:[%s12 + $0x10] sm:$0xff]
      %v1225 = vld [vmem:[%s12 + $0x18] sm:$0xff]
      %v1226 = vld [vmem:[%s12 + $0x20] sm:$0xff]
      %v1227 = vld [vmem:[%s12 + $0x28] sm:$0xff]
      %v1228 = vld [vmem:[%s12 + $0x30] sm:$0xff]
      %v1229 = vld [vmem:[%s12 + $0x38] sm:$0xff]
      %1231 = vset.pattern.permute.xlu0 0
      %1232 = vperm.xlu0 %1231, %v1222
      %v1233 = vpop.permute.xlu0 %1232
      %1236 = vset.pattern.permute.xlu0 0
      %1237 = vperm.xlu0 %1236, %v1223
      %v1238 = vpop.permute.xlu0 %1237
      %1241 = vset.pattern.permute.xlu0 0
      %1242 = vperm.xlu0 %1241, %v1224
      %v1243 = vpop.permute.xlu0 %1242
      %1246 = vset.pattern.permute.xlu0 0
      %1247 = vperm.xlu0 %1246, %v1225
      %v1248 = vpop.permute.xlu0 %1247
      %1251 = vset.pattern.permute.xlu0 0
      %1252 = vperm.xlu0 %1251, %v1226
      %v1253 = vpop.permute.xlu0 %1252
      %1256 = vset.pattern.permute.xlu0 0
      %1257 = vperm.xlu0 %1256, %v1227
      %v1258 = vpop.permute.xlu0 %1257
      %1261 = vset.pattern.permute.xlu0 0
      %1262 = vperm.xlu0 %1261, %v1228
      %v1263 = vpop.permute.xlu0 %1262
      %1266 = vset.pattern.permute.xlu0 0
      %1267 = vperm.xlu0 %1266, %v1229
      %v1268 = vpop.permute.xlu0 %1267
      %v1278 = vunpack.c.l.b16 %v1214
      %v1279 = vunpack.c.h.b16 %v1214
      %v1280 = vunpack.c.l.b16 %v1215
      %v1281 = vunpack.c.h.b16 %v1215
      %v1282 = vunpack.c.l.b16 %v1216
      %v1283 = vunpack.c.h.b16 %v1216
      %v1284 = vunpack.c.l.b16 %v1217
      %v1285 = vunpack.c.h.b16 %v1217
      %v1286 = vunpack.c.l.b16 %v1218
      %v1287 = vunpack.c.h.b16 %v1218
      %v1288 = vunpack.c.l.b16 %v1219
      %v1289 = vunpack.c.h.b16 %v1219
      %v1290 = vunpack.c.l.b16 %v1220
      %v1291 = vunpack.c.h.b16 %v1220
      %v1292 = vunpack.c.l.b16 %v1221
      %v1293 = vunpack.c.h.b16 %v1221
      %v1294 = vpack.c.b16 %v1280, %v1278
      %v1295 = vpack.c.b16 %v1281, %v1279
      %v1296 = vpack.c.b16 %v1284, %v1282
      %v1297 = vpack.c.b16 %v1285, %v1283
      %v1298 = vpack.c.b16 %v1288, %v1286
      %v1299 = vpack.c.b16 %v1289, %v1287
      %v1300 = vpack.c.b16 %v1292, %v1290
      %v1301 = vpack.c.b16 %v1293, %v1291
      %1306 = vrot.lane.b32.xlu0 %v1152, 2
      %v1307 = vpop.permute.xlu0 %1306
      %1308 = vrot.lane.b32.xlu0 %v1153, 2
      %v1309 = vpop.permute.xlu0 %1308
      %1310 = vrot.lane.b32.xlu0 %v1154, 2
      %v1311 = vpop.permute.xlu0 %1310
      %1312 = vrot.lane.b32.xlu0 %v1155, 2
      %v1313 = vpop.permute.xlu0 %1312
      %1314 = vrot.lane.b32.xlu0 %v1156, 2
      %v1315 = vpop.permute.xlu0 %1314
      %1316 = vrot.lane.b32.xlu0 %v1157, 2
      %v1317 = vpop.permute.xlu0 %1316
      %1318 = vrot.lane.b32.xlu0 %v1177, 2
      %v1319 = vpop.permute.xlu0 %1318
      %1320 = vrot.lane.b32.xlu0 %v1178, 2
      %v1321 = vpop.permute.xlu0 %1320
      %1322 = vrot.lane.b32.xlu0 %v1169, 2
      %v1323 = vpop.permute.xlu0 %1322
      %1324 = vrot.lane.b32.xlu0 %v1179, 2
      %v1325 = vpop.permute.xlu0 %1324
      %1326 = vrot.lane.b32.xlu0 %v1180, 2
      %v1327 = vpop.permute.xlu0 %1326
      %1328 = vrot.lane.b32.xlu0 %v1175, 2
      %v1329 = vpop.permute.xlu0 %1328
      %1330 = vrot.lane.b32.xlu0 %v1182, 2
      %v1331 = vpop.permute.xlu0 %1330
      %1332 = vrot.lane.b32.xlu0 %v1190, 2
      %v1333 = vpop.permute.xlu0 %1332
      %1334 = vrot.lane.b32.xlu0 %v1184, 2
      %v1335 = vpop.permute.xlu0 %1334
      %1336 = vrot.lane.b32.xlu0 %v1186, 2
      %v1337 = vpop.permute.xlu0 %1336
      %1338 = vrot.lane.b32.xlu0 %v1191, 2
      %v1339 = vpop.permute.xlu0 %1338
      %1340 = vrot.lane.b32.xlu0 %v1188, 2
      %v1341 = vpop.permute.xlu0 %1340
      %1342 = vrot.lane.b32.xlu0 %v1193, 2
      %v1343 = vpop.permute.xlu0 %1342
      %1344 = vrot.lane.b32.xlu0 %v1201, 2
      %v1345 = vpop.permute.xlu0 %1344
      %1346 = vrot.lane.b32.xlu0 %v1195, 2
      %v1347 = vpop.permute.xlu0 %1346
      %1348 = vrot.lane.b32.xlu0 %v1197, 2
      %v1349 = vpop.permute.xlu0 %1348
      %1350 = vrot.lane.b32.xlu0 %v1202, 2
      %v1351 = vpop.permute.xlu0 %1350
      %1352 = vrot.lane.b32.xlu0 %v1199, 2
      %v1353 = vpop.permute.xlu0 %1352
      %1354 = vrot.lane.b32.xlu0 %v1204, 2
      %v1355 = vpop.permute.xlu0 %1354
      %1356 = vrot.lane.b32.xlu0 %v1212, 2
      %v1357 = vpop.permute.xlu0 %1356
      %1358 = vrot.lane.b32.xlu0 %v1206, 2
      %v1359 = vpop.permute.xlu0 %1358
      %1360 = vrot.lane.b32.xlu0 %v1208, 2
      %v1361 = vpop.permute.xlu0 %1360
      %1362 = vrot.lane.b32.xlu0 %v1213, 2
      %v1363 = vpop.permute.xlu0 %1362
      %1364 = vrot.lane.b32.xlu0 %v1210, 2
      %v1365 = vpop.permute.xlu0 %1364
      %vm1366 = vcmask 15360
      %v1367 = vsel %vm1366, %v1307, %v1309
      %v1368 = vsel %vm1366, %v1309, %v1311
      %v1369 = vsel %vm1366, %v1313, %v1315
      %v1370 = vsel %vm1366, %v1315, %v1317
      %v1371 = vsel %vm1366, %v1319, %v1321
      %v1372 = vsel %vm1366, %v1321, %v1323
      %v1373 = vsel %vm1366, %v1325, %v1327
      %v1374 = vsel %vm1366, %v1327, %v1329
      %v1375 = vsel %vm1366, %v1331, %v1333
      %v1376 = vsel %vm1366, %v1333, %v1335
      %v1377 = vsel %vm1366, %v1337, %v1339
      %v1378 = vsel %vm1366, %v1339, %v1341
      %v1379 = vsel %vm1366, %v1343, %v1345
      %v1380 = vsel %vm1366, %v1345, %v1347
      %v1381 = vsel %vm1366, %v1349, %v1351
      %v1382 = vsel %vm1366, %v1351, %v1353
      %v1383 = vsel %vm1366, %v1355, %v1357
      %v1384 = vsel %vm1366, %v1357, %v1359
      %v1385 = vsel %vm1366, %v1361, %v1363
      %v1386 = vsel %vm1366, %v1363, %v1365
      %vm1407 = vcmask 261120
      %v1409 = vsel %vm1407, %v1295, 0
      %v1412 = vsel %vm1407, %v1297, 0
      %v1415 = vsel %vm1407, %v1299, 0
      %v1418 = vsel %vm1407, %v1301, 0
      %1420 = vmatprep.subr.bf16.mxu0 %v1368
      %1421 = vmatpush1.bf16.msra.mxu0 %v1367
      %1422 = vmatprep.subr.bf16.mxu0 %v1370
      %1423 = vmatpush1.bf16.msra.mxu0 %v1369
      %1424 = vmatprep.subr.bf16.mxu0 %v1372
      %1425 = vmatpush1.bf16.msra.mxu0 %v1371
      %1426 = vmatprep.subr.bf16.mxu0 %v1374
      %1427 = vmatpush1.bf16.msra.mxu0 %v1373
      %1428 = vmatprep.subr.bf16.mxu0 %v1376
      %1429 = vmatpush1.bf16.msra.mxu0 %v1375
      %1430 = vmatprep.subr.bf16.mxu0 %v1378
      %1431 = vmatpush1.bf16.msra.mxu0 %v1377
      %1432 = vmatprep.subr.bf16.mxu0 %v1380
      %1433 = vmatpush1.bf16.msra.mxu0 %v1379
      %1434 = vmatprep.subr.bf16.mxu0 %v1382
      %1435 = vmatpush1.bf16.msra.mxu0 %v1381
      %1436 = vmatprep.subr.bf16.mxu0 %v1384
      %1437 = vmatpush1.bf16.msra.mxu0 %v1383
      %1438 = vmatprep.subr.bf16.mxu0 %v1386
      %1439 = vmatpush1.bf16.msra.mxu0 %v1385
      %1440 = vmatprep.subr.bf16.mxu0 0
      %1441 = vmatpush1.bf16.msra.mxu0 0
      %1442 = vmatprep.subr.bf16.mxu0 0
      %1443 = vmatpush1.bf16.msra.mxu0 0
      %1444 = vmatprep.subr.bf16.mxu0 0
      %1445 = vmatpush1.bf16.msra.mxu0 0
      %1446 = vmatprep.subr.bf16.mxu0 0
      %1447 = vmatpush1.bf16.msra.mxu0 0
      %1448 = vmatprep.subr.bf16.mxu0 0
      %1449 = vmatpush1.bf16.msra.mxu0 0
      %1450 = vmatprep.subr.bf16.mxu0 0
      %1451 = vmatpush1.bf16.msra.mxu0 0
      %1452 = vmatprep.mubr.bf16.mxu0 %v1409
      %1453 = vmatmul.mubr.bf16.gmra.mrb[0].mxu0 %v1294
      %v1454 = vpop.f32.mrb[0].mxu0
      %v1455 = vadd.f32 %v1233, %v1454
      %v1456 = vpop.f32.mrb[0].mxu0
      %v1457 = vadd.f32 %v1233, %v1456
      %v1458 = vpop.f32.mrb[0].mxu0
      %v1459 = vadd.f32 %v1238, %v1458
      %v1460 = vpop.f32.mrb[0].mxu0
      %v1461 = vadd.f32 %v1238, %v1460
      %1462 = vmatprep.mubr.bf16.mxu0 %v1412
      %1463 = vmatmul.mubr.bf16.gmra.mrb[0].mxu0 %v1296
      %v1464 = vpop.f32.mrb[0].mxu0
      %v1465 = vadd.f32 %v1243, %v1464
      %v1466 = vpop.f32.mrb[0].mxu0
      %v1467 = vadd.f32 %v1243, %v1466
      %v1468 = vpop.f32.mrb[0].mxu0
      %v1469 = vadd.f32 %v1248, %v1468
      %v1470 = vpop.f32.mrb[0].mxu0
      %v1471 = vadd.f32 %v1248, %v1470
      %1472 = vmatprep.mubr.bf16.mxu0 %v1415
      %1473 = vmatmul.mubr.bf16.gmra.mrb[0].mxu0 %v1298
      %v1474 = vpop.f32.mrb[0].mxu0
      %v1475 = vadd.f32 %v1253, %v1474
      %v1476 = vpop.f32.mrb[0].mxu0
      %v1477 = vadd.f32 %v1253, %v1476
      %v1478 = vpop.f32.mrb[0].mxu0
      %v1479 = vadd.f32 %v1258, %v1478
      %v1480 = vpop.f32.mrb[0].mxu0
      %v1481 = vadd.f32 %v1258, %v1480
      %1482 = vmatprep.mubr.bf16.mxu0 %v1418
      %1483 = vmatmul.mubr.bf16.gmra.mrb[0].mxu0 %v1300
      %v1484 = vpop.f32.mrb[0].mxu0
      %v1485 = vadd.f32 %v1263, %v1484
      %v1486 = vpop.f32.mrb[0].mxu0
      %v1487 = vadd.f32 %v1263, %v1486
      %v1488 = vpop.f32.mrb[0].mxu0
      %v1489 = vadd.f32 %v1268, %v1488
      %v1490 = vpop.f32.mrb[0].mxu0
      %v1491 = vadd.f32 %v1268, %v1490
      %1492 = vdwg.mxu0
      %v1493 = vtanh.pop %v1455
      %v1494 = vtanh.pop %v1457
      %v1495 = vtanh.pop %v1459
      %v1496 = vtanh.pop %v1461
      %v1497 = vtanh.pop %v1465
      %v1498 = vtanh.pop %v1467
      %v1499 = vtanh.pop %v1469
      %v1500 = vtanh.pop %v1471
      %v1501 = vxor.u32 %v1475, 2147483648
      %v1502 = vxor.u32 %v1477, 2147483648
      %v1503 = vxor.u32 %v1479, 2147483648
      %v1504 = vxor.u32 %v1481, 2147483648
      %v1505 = vxor.u32 %v1485, 2147483648
      %v1506 = vxor.u32 %v1487, 2147483648
      %v1507 = vxor.u32 %v1489, 2147483648
      %v1508 = vxor.u32 %v1491, 2147483648
      %v1509 = vmul.f32 %v1501, 1.442695
      %v1510 = vpow.pop %v1509
      %v1511 = vmul.f32 %v1502, 1.442695
      %v1512 = vpow.pop %v1511
      %v1513 = vmul.f32 %v1503, 1.442695
      %v1514 = vpow.pop %v1513
      %v1515 = vmul.f32 %v1504, 1.442695
      %v1516 = vpow.pop %v1515
      %v1517 = vmul.f32 %v1505, 1.442695
      %v1518 = vpow.pop %v1517
      %v1519 = vmul.f32 %v1506, 1.442695
      %v1520 = vpow.pop %v1519
      %v1521 = vmul.f32 %v1507, 1.442695
      %v1522 = vpow.pop %v1521
      %v1523 = vmul.f32 %v1508, 1.442695
      %v1524 = vpow.pop %v1523
      %v1525 = vadd.f32 %v1510, 1.0
      %v1526 = vadd.f32 %v1512, 1.0
      %v1527 = vadd.f32 %v1514, 1.0
      %v1528 = vadd.f32 %v1516, 1.0
      %v1529 = vadd.f32 %v1518, 1.0
      %v1530 = vadd.f32 %v1520, 1.0
      %v1531 = vadd.f32 %v1522, 1.0
      %v1532 = vadd.f32 %v1524, 1.0
      %v1533 = vrcp.pop %v1525
      %v1534 = vmul.f32 1.0, %v1533
      %v1535 = vrcp.pop %v1526
      %v1536 = vmul.f32 1.0, %v1535
      %v1537 = vrcp.pop %v1527
      %v1538 = vmul.f32 1.0, %v1537
      %v1539 = vrcp.pop %v1528
      %v1540 = vmul.f32 1.0, %v1539
      %v1541 = vrcp.pop %v1529
      %v1542 = vmul.f32 1.0, %v1541
      %v1543 = vrcp.pop %v1530
      %v1544 = vmul.f32 1.0, %v1543
      %v1545 = vrcp.pop %v1531
      %v1546 = vmul.f32 1.0, %v1545
      %v1547 = vrcp.pop %v1532
      %v1548 = vmul.f32 1.0, %v1547
      %v1549 = vmul.f32 %v1493, %v1534
      %v1550 = vmul.f32 %v1494, %v1536
      %v1551 = vmul.f32 %v1495, %v1538
      %v1552 = vmul.f32 %v1496, %v1540
      %v1553 = vmul.f32 %v1497, %v1542
      %v1554 = vmul.f32 %v1498, %v1544
      %v1555 = vmul.f32 %v1499, %v1546
      %v1556 = vmul.f32 %v1500, %v1548
      %v1557 = vpack.c.bf16 %v1551, %v1549
      %v1558 = vpack.c.bf16 %v1552, %v1550
      %v1559 = vpack.c.bf16 %v1555, %v1553
      %v1560 = vpack.c.bf16 %v1556, %v1554
      %v1561 = vld [vmem:[%s13] sm:$0xf]
      %v1562 = vld [vmem:[%s13 + $0x4] sm:$0xf]
      %v1563 = vld [vmem:[%s13 + $0x8] sm:$0xf]
      %v1564 = vld [vmem:[%s13 + $0xc] sm:$0xf]
      %v1565 = vld [vmem:[%s13 + $0x10] sm:$0xf]
      %v1566 = vld [vmem:[%s13 + $0x14] sm:$0xf]
      %v1567 = vld [vmem:[%s13 + $0x18] sm:$0xf]
      %v1568 = vld [vmem:[%s13 + $0x1c] sm:$0xf]
      %v1569 = vld [vmem:[%s14] sm:$0xff]
      %v1570 = vld [vmem:[%s14 + $0x8] sm:$0xff]
      %v1571 = vld [vmem:[%s14 + $0x10] sm:$0xff]
      %v1572 = vld [vmem:[%s14 + $0x18] sm:$0xff]
      %v1573 = vld [vmem:[%s14 + $0x20] sm:$0xff]
      %v1574 = vld [vmem:[%s14 + $0x28] sm:$0xff]
      %v1575 = vld [vmem:[%s14 + $0x30] sm:$0xff]
      %v1576 = vld [vmem:[%s14 + $0x38] sm:$0xff]
      %1578 = vset.pattern.permute.xlu0 0
      %1579 = vperm.xlu0 %1578, %v1569
      %v1580 = vpop.permute.xlu0 %1579
      %1583 = vset.pattern.permute.xlu0 0
      %1584 = vperm.xlu0 %1583, %v1570
      %v1585 = vpop.permute.xlu0 %1584
      %1588 = vset.pattern.permute.xlu0 0
      %1589 = vperm.xlu0 %1588, %v1571
      %v1590 = vpop.permute.xlu0 %1589
      %1593 = vset.pattern.permute.xlu0 0
      %1594 = vperm.xlu0 %1593, %v1572
      %v1595 = vpop.permute.xlu0 %1594
      %1598 = vset.pattern.permute.xlu0 0
      %1599 = vperm.xlu0 %1598, %v1573
      %v1600 = vpop.permute.xlu0 %1599
      %1603 = vset.pattern.permute.xlu0 0
      %1604 = vperm.xlu0 %1603, %v1574
      %v1605 = vpop.permute.xlu0 %1604
      %1608 = vset.pattern.permute.xlu0 0
      %1609 = vperm.xlu0 %1608, %v1575
      %v1610 = vpop.permute.xlu0 %1609
      %1613 = vset.pattern.permute.xlu0 0
      %1614 = vperm.xlu0 %1613, %v1576
      %v1615 = vpop.permute.xlu0 %1614
      %v1625 = vunpack.c.l.b16 %v1561
      %v1626 = vunpack.c.l.b16 %v1562
      %v1627 = vunpack.c.l.b16 %v1563
      %v1628 = vunpack.c.l.b16 %v1564
      %v1629 = vunpack.c.l.b16 %v1565
      %v1630 = vunpack.c.l.b16 %v1566
      %v1631 = vunpack.c.l.b16 %v1567
      %v1632 = vunpack.c.l.b16 %v1568
      %v1633 = vpack.c.b16 %v1626, %v1625
      %v1634 = vpack.c.b16 %v1628, %v1627
      %v1635 = vpack.c.b16 %v1630, %v1629
      %v1636 = vpack.c.b16 %v1632, %v1631
      %v1638 = vsel %vm1407, %v1633, 0
      %v1641 = vsel %vm1407, %v1634, 0
      %v1644 = vsel %vm1407, %v1635, 0
      %v1647 = vsel %vm1407, %v1636, 0
      %1649 = vmatprep.subr.bf16.mxu0 %v1558
      %1650 = vmatpush1.bf16.msra.mxu0 %v1557
      %1651 = vmatprep.subr.bf16.mxu0 %v1560
      %1652 = vmatpush1.bf16.msra.mxu0 %v1559
      %1653 = vmatprep.subr.bf16.mxu0 0
      %1654 = vmatpush1.bf16.msra.mxu0 0
      %1655 = vmatprep.subr.bf16.mxu0 0
      %1656 = vmatpush1.bf16.msra.mxu0 0
      %1657 = vmatprep.subr.bf16.mxu0 0
      %1658 = vmatpush1.bf16.msra.mxu0 0
      %1659 = vmatprep.subr.bf16.mxu0 0
      %1660 = vmatpush1.bf16.msra.mxu0 0
      %1661 = vmatprep.subr.bf16.mxu0 0
      %1662 = vmatpush1.bf16.msra.mxu0 0
      %1663 = vmatprep.subr.bf16.mxu0 0
      %1664 = vmatpush1.bf16.msra.mxu0 0
      %1665 = vmatprep.subr.bf16.mxu0 0
      %1666 = vmatpush1.bf16.msra.mxu0 0
      %1667 = vmatprep.subr.bf16.mxu0 0
      %1668 = vmatpush1.bf16.msra.mxu0 0
      %1669 = vmatprep.subr.bf16.mxu0 0
      %1670 = vmatpush1.bf16.msra.mxu0 0
      %1671 = vmatprep.subr.bf16.mxu0 0
      %1672 = vmatpush1.bf16.msra.mxu0 0
      %1673 = vmatprep.subr.bf16.mxu0 0
      %1674 = vmatpush1.bf16.msra.mxu0 0
      %1675 = vmatprep.subr.bf16.mxu0 0
      %1676 = vmatpush1.bf16.msra.mxu0 0
      %1677 = vmatprep.subr.bf16.mxu0 0
      %1678 = vmatpush1.bf16.msra.mxu0 0
      %1679 = vmatprep.subr.bf16.mxu0 0
      %1680 = vmatpush1.bf16.msra.mxu0 0
      %1681 = vmatprep.mubr.bf16.mxu0 0
      %1682 = vmatmul.mubr.bf16.gmra.mrb[0].mxu0 %v1638
      %v1683 = vpop.f32.mrb[0].mxu0
      %v1684 = vadd.f32 %v1580, %v1683
      %v1685 = vpop.f32.mrb[0].mxu0
      %v1686 = vadd.f32 %v1580, %v1685
      %v1687 = vpop.f32.mrb[0].mxu0
      %v1688 = vadd.f32 %v1585, %v1687
      %v1689 = vpop.f32.mrb[0].mxu0
      %v1690 = vadd.f32 %v1585, %v1689
      %1691 = vmatprep.mubr.bf16.mxu0 0
      %1692 = vmatmul.mubr.bf16.gmra.mrb[0].mxu0 %v1641
      %v1693 = vpop.f32.mrb[0].mxu0
      %v1694 = vadd.f32 %v1590, %v1693
      %v1695 = vpop.f32.mrb[0].mxu0
      %v1696 = vadd.f32 %v1590, %v1695
      %v1697 = vpop.f32.mrb[0].mxu0
      %v1698 = vadd.f32 %v1595, %v1697
      %v1699 = vpop.f32.mrb[0].mxu0
      %v1700 = vadd.f32 %v1595, %v1699
      %1701 = vmatprep.mubr.bf16.mxu0 0
      %1702 = vmatmul.mubr.bf16.gmra.mrb[0].mxu0 %v1644
      %v1703 = vpop.f32.mrb[0].mxu0
      %v1704 = vadd.f32 %v1600, %v1703
      %v1705 = vpop.f32.mrb[0].mxu0
      %v1706 = vadd.f32 %v1600, %v1705
      %v1707 = vpop.f32.mrb[0].mxu0
      %v1708 = vadd.f32 %v1605, %v1707
      %v1709 = vpop.f32.mrb[0].mxu0
      %v1710 = vadd.f32 %v1605, %v1709
      %1711 = vmatprep.mubr.bf16.mxu0 0
      %1712 = vmatmul.mubr.bf16.gmra.mrb[0].mxu0 %v1647
      %v1713 = vpop.f32.mrb[0].mxu0
      %v1714 = vadd.f32 %v1610, %v1713
      %v1715 = vpop.f32.mrb[0].mxu0
      %v1716 = vadd.f32 %v1610, %v1715
      %v1717 = vpop.f32.mrb[0].mxu0
      %v1718 = vadd.f32 %v1615, %v1717
      %v1719 = vpop.f32.mrb[0].mxu0
      %v1720 = vadd.f32 %v1615, %v1719
      %1721 = vdwg.mxu0
      %v1722 = vadd.f32 %v1127, %v1684
      %v1723 = vadd.f32 %v1128, %v1686
      %v1724 = vadd.f32 %v1129, %v1688
      %v1725 = vadd.f32 %v1130, %v1690
      %v1726 = vadd.f32 %v1131, %v1694
      %v1727 = vadd.f32 %v1132, %v1696
      %v1728 = vadd.f32 %v1133, %v1698
      %v1729 = vadd.f32 %v1134, %v1700
      %v1730 = vmul.f32 %v1722, %v935
      %v1731 = vmul.f32 %v1723, %v939
      %v1732 = vmul.f32 %v1724, %v935
      %v1733 = vmul.f32 %v1725, %v939
      %v1734 = vmul.f32 %v1726, %v935
      %v1735 = vmul.f32 %v1727, %v939
      %v1736 = vmul.f32 %v1728, %v935
      %v1737 = vmul.f32 %v1729, %v939
      %v1738 = vadd.f32 %v1704, 0.0
      %v1739 = vadd.f32 %v1706, 0.0
      %v1740 = vadd.f32 %v1708, 0.0
      %v1741 = vadd.f32 %v1710, 0.0
      %v1742 = vadd.f32 %v1714, 0.0
      %v1743 = vadd.f32 %v1716, 0.0
      %v1744 = vadd.f32 %v1718, 0.0
      %v1745 = vadd.f32 %v1720, 0.0
      %v1746 = vpack.c.bf16 %v1732, %v1730
      %v1747 = vpack.c.bf16 %v1733, %v1731
      %v1748 = vpack.c.bf16 %v1736, %v1734
      %v1749 = vpack.c.bf16 %v1737, %v1735
      %1750 = vst [vmem:[#allocation2 + $0x8] sm:$0xff] %v1746
      %1751 = vst.msk [vmem:[#allocation2 + $0x10] sm:$0xff] %vm1138, %v1747
      %1752 = vst [vmem:[#allocation2 + $0x28] sm:$0xff] %v1748
      %1753 = vst.msk [vmem:[#allocation2 + $0x30] sm:$0xff] %vm1138, %v1749
      %v1754 = vld [vmem:[#allocation2] sm:$0xff]
      %v1755 = vld [vmem:[#allocation2 + $0x8] sm:$0xff]
      %v1756 = vld [vmem:[#allocation2 + $0x10] sm:$0xff]
      %v1757 = vld [vmem:[#allocation2 + $0x20] sm:$0xff]
      %v1758 = vld [vmem:[#allocation2 + $0x28] sm:$0xff]
      %v1759 = vld [vmem:[#allocation2 + $0x30] sm:$0xff]
      %1766 = vrot.lane.b32.xlu0 %v1754, 126
      %v1767 = vpop.permute.xlu0 %1766
      %1768 = vrot.lane.b32.xlu0 %v1755, 126
      %v1769 = vpop.permute.xlu0 %1768
      %1770 = vrot.lane.b32.xlu0 %v1756, 126
      %v1771 = vpop.permute.xlu0 %1770
      %1772 = vrot.lane.b32.xlu0 %v1757, 126
      %v1773 = vpop.permute.xlu0 %1772
      %1774 = vrot.lane.b32.xlu0 %v1758, 126
      %v1775 = vpop.permute.xlu0 %1774
      %1776 = vrot.lane.b32.xlu0 %v1759, 126
      %v1777 = vpop.permute.xlu0 %1776
      %v1778 = vsel %vm1189, %v1767, %v1769
      %v1779 = vsel %vm1189, %v1769, %v1771
      %v1780 = vsel %vm1189, %v1773, %v1775
      %v1781 = vsel %vm1189, %v1775, %v1777
      %1782 = vrot.lane.b32.xlu0 %v1755, 124
      %v1783 = vpop.permute.xlu0 %1782
      %1784 = vrot.lane.b32.xlu0 %v1756, 124
      %v1785 = vpop.permute.xlu0 %1784
      %1786 = vrot.lane.b32.xlu0 %v1758, 124
      %v1787 = vpop.permute.xlu0 %1786
      %1788 = vrot.lane.b32.xlu0 %v1759, 124
      %v1789 = vpop.permute.xlu0 %1788
      %v1790 = vsel %vm1211, %v1783, %v1785
      %v1791 = vsel %vm1211, %v1787, %v1789
      %1792 = vrot.lane.b32.xlu0 %v1755, 122
      %v1793 = vpop.permute.xlu0 %1792
      %1794 = vrot.lane.b32.xlu0 %v1756, 122
      %v1795 = vpop.permute.xlu0 %1794
      %1796 = vrot.lane.b32.xlu0 %v1758, 122
      %v1797 = vpop.permute.xlu0 %1796
      %1798 = vrot.lane.b32.xlu0 %v1759, 122
      %v1799 = vpop.permute.xlu0 %1798
      %vm1800 = vcmask 998400
      %v1801 = vsel %vm1800, %v1793, %v1795
      %v1802 = vsel %vm1800, %v1797, %v1799
      %1803 = vrot.lane.b32.xlu0 %v1755, 120
      %v1804 = vpop.permute.xlu0 %1803
      %1805 = vrot.lane.b32.xlu0 %v1756, 120
      %v1806 = vpop.permute.xlu0 %1805
      %1807 = vrot.lane.b32.xlu0 %v1758, 120
      %v1808 = vpop.permute.xlu0 %1807
      %1809 = vrot.lane.b32.xlu0 %v1759, 120
      %v1810 = vpop.permute.xlu0 %1809
      %vm1811 = vcmask 982016
      %v1812 = vsel %vm1811, %v1804, %v1806
      %v1813 = vsel %vm1811, %v1808, %v1810
      %s1814 = scalar_lea.vmem %s11, 64
      %v1815 = vld [vmem:[%s1814] sm:$0xff]
      %v1816 = vld [vmem:[%s1814 + $0x8] sm:$0xff]
      %v1817 = vld [vmem:[%s1814 + $0x10] sm:$0xff]
      %v1818 = vld [vmem:[%s1814 + $0x18] sm:$0xff]
      %v1819 = vld [vmem:[%s1814 + $0x20] sm:$0xff]
      %v1820 = vld [vmem:[%s1814 + $0x28] sm:$0xff]
      %v1821 = vld [vmem:[%s1814 + $0x30] sm:$0xff]
      %v1822 = vld [vmem:[%s1814 + $0x38] sm:$0xff]
      %s1823 = scalar_lea.vmem %s12, 64
      %v1824 = vld [vmem:[%s1823] sm:$0xff]
      %v1825 = vld [vmem:[%s1823 + $0x8] sm:$0xff]
      %v1826 = vld [vmem:[%s1823 + $0x10] sm:$0xff]
      %v1827 = vld [vmem:[%s1823 + $0x18] sm:$0xff]
      %v1828 = vld [vmem:[%s1823 + $0x20] sm:$0xff]
      %v1829 = vld [vmem:[%s1823 + $0x28] sm:$0xff]
      %v1830 = vld [vmem:[%s1823 + $0x30] sm:$0xff]
      %v1831 = vld [vmem:[%s1823 + $0x38] sm:$0xff]
      %1833 = vset.pattern.permute.xlu0 0
      %1834 = vperm.xlu0 %1833, %v1824
      %v1835 = vpop.permute.xlu0 %1834
      %1838 = vset.pattern.permute.xlu0 0
      %1839 = vperm.xlu0 %1838, %v1825
      %v1840 = vpop.permute.xlu0 %1839
      %1843 = vset.pattern.permute.xlu0 0
      %1844 = vperm.xlu0 %1843, %v1826
      %v1845 = vpop.permute.xlu0 %1844
      %1848 = vset.pattern.permute.xlu0 0
      %1849 = vperm.xlu0 %1848, %v1827
      %v1850 = vpop.permute.xlu0 %1849
      %1853 = vset.pattern.permute.xlu0 0
      %1854 = vperm.xlu0 %1853, %v1828
      %v1855 = vpop.permute.xlu0 %1854
      %1858 = vset.pattern.permute.xlu0 0
      %1859 = vperm.xlu0 %1858, %v1829
      %v1860 = vpop.permute.xlu0 %1859
      %1863 = vset.pattern.permute.xlu0 0
      %1864 = vperm.xlu0 %1863, %v1830
      %v1865 = vpop.permute.xlu0 %1864
      %1868 = vset.pattern.permute.xlu0 0
      %1869 = vperm.xlu0 %1868, %v1831
      %v1870 = vpop.permute.xlu0 %1869
      %v1880 = vunpack.c.l.b16 %v1815
      %v1881 = vunpack.c.h.b16 %v1815
      %v1882 = vunpack.c.l.b16 %v1816
      %v1883 = vunpack.c.h.b16 %v1816
      %v1884 = vunpack.c.l.b16 %v1817
      %v1885 = vunpack.c.h.b16 %v1817
      %v1886 = vunpack.c.l.b16 %v1818
      %v1887 = vunpack.c.h.b16 %v1818
      %v1888 = vunpack.c.l.b16 %v1819
      %v1889 = vunpack.c.h.b16 %v1819
      %v1890 = vunpack.c.l.b16 %v1820
      %v1891 = vunpack.c.h.b16 %v1820
      %v1892 = vunpack.c.l.b16 %v1821
      %v1893 = vunpack.c.h.b16 %v1821
      %v1894 = vunpack.c.l.b16 %v1822
      %v1895 = vunpack.c.h.b16 %v1822
      %v1896 = vpack.c.b16 %v1882, %v1880
      %v1897 = vpack.c.b16 %v1883, %v1881
      %v1898 = vpack.c.b16 %v1886, %v1884
      %v1899 = vpack.c.b16 %v1887, %v1885
      %v1900 = vpack.c.b16 %v1890, %v1888
      %v1901 = vpack.c.b16 %v1891, %v1889
      %v1902 = vpack.c.b16 %v1894, %v1892
      %v1903 = vpack.c.b16 %v1895, %v1893
      %1908 = vrot.lane.b32.xlu0 %v1754, 4
      %v1909 = vpop.permute.xlu0 %1908
      %1910 = vrot.lane.b32.xlu0 %v1755, 4
      %v1911 = vpop.permute.xlu0 %1910
      %1912 = vrot.lane.b32.xlu0 %v1756, 4
      %v1913 = vpop.permute.xlu0 %1912
      %1914 = vrot.lane.b32.xlu0 %v1757, 4
      %v1915 = vpop.permute.xlu0 %1914
      %1916 = vrot.lane.b32.xlu0 %v1758, 4
      %v1917 = vpop.permute.xlu0 %1916
      %1918 = vrot.lane.b32.xlu0 %v1759, 4
      %v1919 = vpop.permute.xlu0 %1918
      %1920 = vrot.lane.b32.xlu0 %v1778, 4
      %v1921 = vpop.permute.xlu0 %1920
      %1922 = vrot.lane.b32.xlu0 %v1779, 4
      %v1923 = vpop.permute.xlu0 %1922
      %1924 = vrot.lane.b32.xlu0 %v1771, 4
      %v1925 = vpop.permute.xlu0 %1924
      %1926 = vrot.lane.b32.xlu0 %v1780, 4
      %v1927 = vpop.permute.xlu0 %1926
      %1928 = vrot.lane.b32.xlu0 %v1781, 4
      %v1929 = vpop.permute.xlu0 %1928
      %1930 = vrot.lane.b32.xlu0 %v1777, 4
      %v1931 = vpop.permute.xlu0 %1930
      %1932 = vrot.lane.b32.xlu0 %v1783, 4
      %v1933 = vpop.permute.xlu0 %1932
      %1934 = vrot.lane.b32.xlu0 %v1790, 4
      %v1935 = vpop.permute.xlu0 %1934
      %1936 = vrot.lane.b32.xlu0 %v1785, 4
      %v1937 = vpop.permute.xlu0 %1936
      %1938 = vrot.lane.b32.xlu0 %v1787, 4
      %v1939 = vpop.permute.xlu0 %1938
      %1940 = vrot.lane.b32.xlu0 %v1791, 4
      %v1941 = vpop.permute.xlu0 %1940
      %1942 = vrot.lane.b32.xlu0 %v1789, 4
      %v1943 = vpop.permute.xlu0 %1942
      %1944 = vrot.lane.b32.xlu0 %v1793, 4
      %v1945 = vpop.permute.xlu0 %1944
      %1946 = vrot.lane.b32.xlu0 %v1801, 4
      %v1947 = vpop.permute.xlu0 %1946
      %1948 = vrot.lane.b32.xlu0 %v1795, 4
      %v1949 = vpop.permute.xlu0 %1948
      %1950 = vrot.lane.b32.xlu0 %v1797, 4
      %v1951 = vpop.permute.xlu0 %1950
      %1952 = vrot.lane.b32.xlu0 %v1802, 4
      %v1953 = vpop.permute.xlu0 %1952
      %1954 = vrot.lane.b32.xlu0 %v1799, 4
      %v1955 = vpop.permute.xlu0 %1954
      %1956 = vrot.lane.b32.xlu0 %v1804, 4
      %v1957 = vpop.permute.xlu0 %1956
      %1958 = vrot.lane.b32.xlu0 %v1812, 4
      %v1959 = vpop.permute.xlu0 %1958
      %1960 = vrot.lane.b32.xlu0 %v1806, 4
      %v1961 = vpop.permute.xlu0 %1960
      %1962 = vrot.lane.b32.xlu0 %v1808, 4
      %v1963 = vpop.permute.xlu0 %1962
      %1964 = vrot.lane.b32.xlu0 %v1813, 4
      %v1965 = vpop.permute.xlu0 %1964
      %1966 = vrot.lane.b32.xlu0 %v1810, 4
      %v1967 = vpop.permute.xlu0 %1966
      %vm1968 = vcmask 31744
      %v1969 = vsel %vm1968, %v1909, %v1911
      %v1970 = vsel %vm1968, %v1911, %v1913
      %v1971 = vsel %vm1968, %v1915, %v1917
      %v1972 = vsel %vm1968, %v1917, %v1919
      %v1973 = vsel %vm1968, %v1921, %v1923
      %v1974 = vsel %vm1968, %v1923, %v1925
      %v1975 = vsel %vm1968, %v1927, %v1929
      %v1976 = vsel %vm1968, %v1929, %v1931
      %v1977 = vsel %vm1968, %v1933, %v1935
      %v1978 = vsel %vm1968, %v1935, %v1937
      %v1979 = vsel %vm1968, %v1939, %v1941
      %v1980 = vsel %vm1968, %v1941, %v1943
      %v1981 = vsel %vm1968, %v1945, %v1947
      %v1982 = vsel %vm1968, %v1947, %v1949
      %v1983 = vsel %vm1968, %v1951, %v1953
      %v1984 = vsel %vm1968, %v1953, %v1955
      %v1985 = vsel %vm1968, %v1957, %v1959
      %v1986 = vsel %vm1968, %v1959, %v1961
      %v1987 = vsel %vm1968, %v1963, %v1965
      %v1988 = vsel %vm1968, %v1965, %v1967
      %v2010 = vsel %vm1407, %v1897, 0
      %v2013 = vsel %vm1407, %v1899, 0
      %v2016 = vsel %vm1407, %v1901, 0
      %v2019 = vsel %vm1407, %v1903, 0
      %2021 = vmatprep.subr.bf16.mxu0 %v1970
      %2022 = vmatpush1.bf16.msra.mxu0 %v1969
      %2023 = vmatprep.subr.bf16.mxu0 %v1972
      %2024 = vmatpush1.bf16.msra.mxu0 %v1971
      %2025 = vmatprep.subr.bf16.mxu0 %v1974
      %2026 = vmatpush1.bf16.msra.mxu0 %v1973
      %2027 = vmatprep.subr.bf16.mxu0 %v1976
      %2028 = vmatpush1.bf16.msra.mxu0 %v1975
      %2029 = vmatprep.subr.bf16.mxu0 %v1978
      %2030 = vmatpush1.bf16.msra.mxu0 %v1977
      %2031 = vmatprep.subr.bf16.mxu0 %v1980
      %2032 = vmatpush1.bf16.msra.mxu0 %v1979
      %2033 = vmatprep.subr.bf16.mxu0 %v1982
      %2034 = vmatpush1.bf16.msra.mxu0 %v1981
      %2035 = vmatprep.subr.bf16.mxu0 %v1984
      %2036 = vmatpush1.bf16.msra.mxu0 %v1983
      %2037 = vmatprep.subr.bf16.mxu0 %v1986
      %2038 = vmatpush1.bf16.msra.mxu0 %v1985
      %2039 = vmatprep.subr.bf16.mxu0 %v1988
      %2040 = vmatpush1.bf16.msra.mxu0 %v1987
      %2041 = vmatprep.subr.bf16.mxu0 0
      %2042 = vmatpush1.bf16.msra.mxu0 0
      %2043 = vmatprep.subr.bf16.mxu0 0
      %2044 = vmatpush1.bf16.msra.mxu0 0
      %2045 = vmatprep.subr.bf16.mxu0 0
      %2046 = vmatpush1.bf16.msra.mxu0 0
      %2047 = vmatprep.subr.bf16.mxu0 0
      %2048 = vmatpush1.bf16.msra.mxu0 0
      %2049 = vmatprep.subr.bf16.mxu0 0
      %2050 = vmatpush1.bf16.msra.mxu0 0
      %2051 = vmatprep.subr.bf16.mxu0 0
      %2052 = vmatpush1.bf16.msra.mxu0 0
      %2053 = vmatprep.mubr.bf16.mxu0 %v2010
      %2054 = vmatmul.mubr.bf16.gmra.mrb[0].mxu0 %v1896
      %v2055 = vpop.f32.mrb[0].mxu0
      %v2056 = vadd.f32 %v1835, %v2055
      %v2057 = vpop.f32.mrb[0].mxu0
      %v2058 = vadd.f32 %v1835, %v2057
      %v2059 = vpop.f32.mrb[0].mxu0
      %v2060 = vadd.f32 %v1840, %v2059
      %v2061 = vpop.f32.mrb[0].mxu0
      %v2062 = vadd.f32 %v1840, %v2061
      %2063 = vmatprep.mubr.bf16.mxu0 %v2013
      %2064 = vmatmul.mubr.bf16.gmra.mrb[0].mxu0 %v1898
      %v2065 = vpop.f32.mrb[0].mxu0
      %v2066 = vadd.f32 %v1845, %v2065
      %v2067 = vpop.f32.mrb[0].mxu0
      %v2068 = vadd.f32 %v1845, %v2067
      %v2069 = vpop.f32.mrb[0].mxu0
      %v2070 = vadd.f32 %v1850, %v2069
      %v2071 = vpop.f32.mrb[0].mxu0
      %v2072 = vadd.f32 %v1850, %v2071
      %2073 = vmatprep.mubr.bf16.mxu0 %v2016
      %2074 = vmatmul.mubr.bf16.gmra.mrb[0].mxu0 %v1900
      %v2075 = vpop.f32.mrb[0].mxu0
      %v2076 = vadd.f32 %v1855, %v2075
      %v2077 = vpop.f32.mrb[0].mxu0
      %v2078 = vadd.f32 %v1855, %v2077
      %v2079 = vpop.f32.mrb[0].mxu0
      %v2080 = vadd.f32 %v1860, %v2079
      %v2081 = vpop.f32.mrb[0].mxu0
      %v2082 = vadd.f32 %v1860, %v2081
      %2083 = vmatprep.mubr.bf16.mxu0 %v2019
      %2084 = vmatmul.mubr.bf16.gmra.mrb[0].mxu0 %v1902
      %v2085 = vpop.f32.mrb[0].mxu0
      %v2086 = vadd.f32 %v1865, %v2085
      %v2087 = vpop.f32.mrb[0].mxu0
      %v2088 = vadd.f32 %v1865, %v2087
      %v2089 = vpop.f32.mrb[0].mxu0
      %v2090 = vadd.f32 %v1870, %v2089
      %v2091 = vpop.f32.mrb[0].mxu0
      %v2092 = vadd.f32 %v1870, %v2091
      %2093 = vdwg.mxu0
      %v2094 = vtanh.pop %v2056
      %v2095 = vtanh.pop %v2058
      %v2096 = vtanh.pop %v2060
      %v2097 = vtanh.pop %v2062
      %v2098 = vtanh.pop %v2066
      %v2099 = vtanh.pop %v2068
      %v2100 = vtanh.pop %v2070
      %v2101 = vtanh.pop %v2072
      %v2102 = vxor.u32 %v2076, 2147483648
      %v2103 = vxor.u32 %v2078, 2147483648
      %v2104 = vxor.u32 %v2080, 2147483648
      %v2105 = vxor.u32 %v2082, 2147483648
      %v2106 = vxor.u32 %v2086, 2147483648
      %v2107 = vxor.u32 %v2088, 2147483648
      %v2108 = vxor.u32 %v2090, 2147483648
      %v2109 = vxor.u32 %v2092, 2147483648
      %v2110 = vmul.f32 %v2102, 1.442695
      %v2111 = vpow.pop %v2110
      %v2112 = vmul.f32 %v2103, 1.442695
      %v2113 = vpow.pop %v2112
      %v2114 = vmul.f32 %v2104, 1.442695
      %v2115 = vpow.pop %v2114
      %v2116 = vmul.f32 %v2105, 1.442695
      %v2117 = vpow.pop %v2116
      %v2118 = vmul.f32 %v2106, 1.442695
      %v2119 = vpow.pop %v2118
      %v2120 = vmul.f32 %v2107, 1.442695
      %v2121 = vpow.pop %v2120
      %v2122 = vmul.f32 %v2108, 1.442695
      %v2123 = vpow.pop %v2122
      %v2124 = vmul.f32 %v2109, 1.442695
      %v2125 = vpow.pop %v2124
      %v2126 = vadd.f32 %v2111, 1.0
      %v2127 = vadd.f32 %v2113, 1.0
      %v2128 = vadd.f32 %v2115, 1.0
      %v2129 = vadd.f32 %v2117, 1.0
      %v2130 = vadd.f32 %v2119, 1.0
      %v2131 = vadd.f32 %v2121, 1.0
      %v2132 = vadd.f32 %v2123, 1.0
      %v2133 = vadd.f32 %v2125, 1.0
      %v2134 = vrcp.pop %v2126
      %v2135 = vmul.f32 1.0, %v2134
      %v2136 = vrcp.pop %v2127
      %v2137 = vmul.f32 1.0, %v2136
      %v2138 = vrcp.pop %v2128
      %v2139 = vmul.f32 1.0, %v2138
      %v2140 = vrcp.pop %v2129
      %v2141 = vmul.f32 1.0, %v2140
      %v2142 = vrcp.pop %v2130
      %v2143 = vmul.f32 1.0, %v2142
      %v2144 = vrcp.pop %v2131
      %v2145 = vmul.f32 1.0, %v2144
      %v2146 = vrcp.pop %v2132
      %v2147 = vmul.f32 1.0, %v2146
      %v2148 = vrcp.pop %v2133
      %v2149 = vmul.f32 1.0, %v2148
      %v2150 = vmul.f32 %v2094, %v2135
      %v2151 = vmul.f32 %v2095, %v2137
      %v2152 = vmul.f32 %v2096, %v2139
      %v2153 = vmul.f32 %v2097, %v2141
      %v2154 = vmul.f32 %v2098, %v2143
      %v2155 = vmul.f32 %v2099, %v2145
      %v2156 = vmul.f32 %v2100, %v2147
      %v2157 = vmul.f32 %v2101, %v2149
      %v2158 = vpack.c.bf16 %v2152, %v2150
      %v2159 = vpack.c.bf16 %v2153, %v2151
      %v2160 = vpack.c.bf16 %v2156, %v2154
      %v2161 = vpack.c.bf16 %v2157, %v2155
      %s2162 = scalar_lea.vmem %s13, 32
      %v2163 = vld [vmem:[%s2162] sm:$0xf]
      %v2164 = vld [vmem:[%s2162 + $0x4] sm:$0xf]
      %v2165 = vld [vmem:[%s2162 + $0x8] sm:$0xf]
      %v2166 = vld [vmem:[%s2162 + $0xc] sm:$0xf]
      %v2167 = vld [vmem:[%s2162 + $0x10] sm:$0xf]
      %v2168 = vld [vmem:[%s2162 + $0x14] sm:$0xf]
      %v2169 = vld [vmem:[%s2162 + $0x18] sm:$0xf]
      %v2170 = vld [vmem:[%s2162 + $0x1c] sm:$0xf]
      %s2171 = scalar_lea.vmem %s14, 64
      %v2172 = vld [vmem:[%s2171] sm:$0xff]
      %v2173 = vld [vmem:[%s2171 + $0x8] sm:$0xff]
      %v2174 = vld [vmem:[%s2171 + $0x10] sm:$0xff]
      %v2175 = vld [vmem:[%s2171 + $0x18] sm:$0xff]
      %v2176 = vld [vmem:[%s2171 + $0x20] sm:$0xff]
      %v2177 = vld [vmem:[%s2171 + $0x28] sm:$0xff]
      %v2178 = vld [vmem:[%s2171 + $0x30] sm:$0xff]
      %v2179 = vld [vmem:[%s2171 + $0x38] sm:$0xff]
      %2181 = vset.pattern.permute.xlu0 0
      %2182 = vperm.xlu0 %2181, %v2172
      %v2183 = vpop.permute.xlu0 %2182
      %2186 = vset.pattern.permute.xlu0 0
      %2187 = vperm.xlu0 %2186, %v2173
      %v2188 = vpop.permute.xlu0 %2187
      %2191 = vset.pattern.permute.xlu0 0
      %2192 = vperm.xlu0 %2191, %v2174
      %v2193 = vpop.permute.xlu0 %2192
      %2196 = vset.pattern.permute.xlu0 0
      %2197 = vperm.xlu0 %2196, %v2175
      %v2198 = vpop.permute.xlu0 %2197
      %2201 = vset.pattern.permute.xlu0 0
      %2202 = vperm.xlu0 %2201, %v2176
      %v2203 = vpop.permute.xlu0 %2202
      %2206 = vset.pattern.permute.xlu0 0
      %2207 = vperm.xlu0 %2206, %v2177
      %v2208 = vpop.permute.xlu0 %2207
      %2211 = vset.pattern.permute.xlu0 0
      %2212 = vperm.xlu0 %2211, %v2178
      %v2213 = vpop.permute.xlu0 %2212
      %2216 = vset.pattern.permute.xlu0 0
      %2217 = vperm.xlu0 %2216, %v2179
      %v2218 = vpop.permute.xlu0 %2217
      %v2228 = vunpack.c.l.b16 %v2163
      %v2229 = vunpack.c.l.b16 %v2164
      %v2230 = vunpack.c.l.b16 %v2165
      %v2231 = vunpack.c.l.b16 %v2166
      %v2232 = vunpack.c.l.b16 %v2167
      %v2233 = vunpack.c.l.b16 %v2168
      %v2234 = vunpack.c.l.b16 %v2169
      %v2235 = vunpack.c.l.b16 %v2170
      %v2236 = vpack.c.b16 %v2229, %v2228
      %v2237 = vpack.c.b16 %v2231, %v2230
      %v2238 = vpack.c.b16 %v2233, %v2232
      %v2239 = vpack.c.b16 %v2235, %v2234
      %v2241 = vsel %vm1407, %v2236, 0
      %v2244 = vsel %vm1407, %v2237, 0
      %v2247 = vsel %vm1407, %v2238, 0
      %v2250 = vsel %vm1407, %v2239, 0
      %2252 = vmatprep.subr.bf16.mxu0 %v2159
      %2253 = vmatpush1.bf16.msra.mxu0 %v2158
      %2254 = vmatprep.subr.bf16.mxu0 %v2161
      %2255 = vmatpush1.bf16.msra.mxu0 %v2160
      %2256 = vmatprep.subr.bf16.mxu0 0
      %2257 = vmatpush1.bf16.msra.mxu0 0
      %2258 = vmatprep.subr.bf16.mxu0 0
      %2259 = vmatpush1.bf16.msra.mxu0 0
      %2260 = vmatprep.subr.bf16.mxu0 0
      %2261 = vmatpush1.bf16.msra.mxu0 0
      %2262 = vmatprep.subr.bf16.mxu0 0
      %2263 = vmatpush1.bf16.msra.mxu0 0
      %2264 = vmatprep.subr.bf16.mxu0 0
      %2265 = vmatpush1.bf16.msra.mxu0 0
      %2266 = vmatprep.subr.bf16.mxu0 0
      %2267 = vmatpush1.bf16.msra.mxu0 0
      %2268 = vmatprep.subr.bf16.mxu0 0
      %2269 = vmatpush1.bf16.msra.mxu0 0
      %2270 = vmatprep.subr.bf16.mxu0 0
      %2271 = vmatpush1.bf16.msra.mxu0 0
      %2272 = vmatprep.subr.bf16.mxu0 0
      %2273 = vmatpush1.bf16.msra.mxu0 0
      %2274 = vmatprep.subr.bf16.mxu0 0
      %2275 = vmatpush1.bf16.msra.mxu0 0
      %2276 = vmatprep.subr.bf16.mxu0 0
      %2277 = vmatpush1.bf16.msra.mxu0 0
      %2278 = vmatprep.subr.bf16.mxu0 0
      %2279 = vmatpush1.bf16.msra.mxu0 0
      %2280 = vmatprep.subr.bf16.mxu0 0
      %2281 = vmatpush1.bf16.msra.mxu0 0
      %2282 = vmatprep.subr.bf16.mxu0 0
      %2283 = vmatpush1.bf16.msra.mxu0 0
      %2284 = vmatprep.mubr.bf16.mxu0 0
      %2285 = vmatmul.mubr.bf16.gmra.mrb[0].mxu0 %v2241
      %v2286 = vpop.f32.mrb[0].mxu0
      %v2287 = vadd.f32 %v2183, %v2286
      %v2288 = vpop.f32.mrb[0].mxu0
      %v2289 = vadd.f32 %v2183, %v2288
      %v2290 = vpop.f32.mrb[0].mxu0
      %v2291 = vadd.f32 %v2188, %v2290
      %v2292 = vpop.f32.mrb[0].mxu0
      %v2293 = vadd.f32 %v2188, %v2292
      %2294 = vmatprep.mubr.bf16.mxu0 0
      %2295 = vmatmul.mubr.bf16.gmra.mrb[0].mxu0 %v2244
      %v2296 = vpop.f32.mrb[0].mxu0
      %v2297 = vadd.f32 %v2193, %v2296
      %v2298 = vpop.f32.mrb[0].mxu0
      %v2299 = vadd.f32 %v2193, %v2298
      %v2300 = vpop.f32.mrb[0].mxu0
      %v2301 = vadd.f32 %v2198, %v2300
      %v2302 = vpop.f32.mrb[0].mxu0
      %v2303 = vadd.f32 %v2198, %v2302
      %2304 = vmatprep.mubr.bf16.mxu0 0
      %2305 = vmatmul.mubr.bf16.gmra.mrb[0].mxu0 %v2247
      %v2306 = vpop.f32.mrb[0].mxu0
      %v2307 = vadd.f32 %v2203, %v2306
      %v2308 = vpop.f32.mrb[0].mxu0
      %v2309 = vadd.f32 %v2203, %v2308
      %v2310 = vpop.f32.mrb[0].mxu0
      %v2311 = vadd.f32 %v2208, %v2310
      %v2312 = vpop.f32.mrb[0].mxu0
      %v2313 = vadd.f32 %v2208, %v2312
      %2314 = vmatprep.mubr.bf16.mxu0 0
      %2315 = vmatmul.mubr.bf16.gmra.mrb[0].mxu0 %v2250
      %v2316 = vpop.f32.mrb[0].mxu0
      %v2317 = vadd.f32 %v2213, %v2316
      %v2318 = vpop.f32.mrb[0].mxu0
      %v2319 = vadd.f32 %v2213, %v2318
      %v2320 = vpop.f32.mrb[0].mxu0
      %v2321 = vadd.f32 %v2218, %v2320
      %v2322 = vpop.f32.mrb[0].mxu0
      %v2323 = vadd.f32 %v2218, %v2322
      %2324 = vdwg.mxu0
      %v2325 = vadd.f32 %v1730, %v2287
      %v2326 = vadd.f32 %v1731, %v2289
      %v2327 = vadd.f32 %v1732, %v2291
      %v2328 = vadd.f32 %v1733, %v2293
      %v2329 = vadd.f32 %v1734, %v2297
      %v2330 = vadd.f32 %v1735, %v2299
      %v2331 = vadd.f32 %v1736, %v2301
      %v2332 = vadd.f32 %v1737, %v2303
      %v2333 = vmul.f32 %v2325, %v935
      %v2334 = vmul.f32 %v2326, %v939
      %v2335 = vmul.f32 %v2327, %v935
      %v2336 = vmul.f32 %v2328, %v939
      %v2337 = vmul.f32 %v2329, %v935
      %v2338 = vmul.f32 %v2330, %v939
      %v2339 = vmul.f32 %v2331, %v935
      %v2340 = vmul.f32 %v2332, %v939
      %v2341 = vadd.f32 %v1738, %v2307
      %v2342 = vadd.f32 %v1739, %v2309
      %v2343 = vadd.f32 %v1740, %v2311
      %v2344 = vadd.f32 %v1741, %v2313
      %v2345 = vadd.f32 %v1742, %v2317
      %v2346 = vadd.f32 %v1743, %v2319
      %v2347 = vadd.f32 %v1744, %v2321
      %v2348 = vadd.f32 %v1745, %v2323
      %v2349 = vpack.c.bf16 %v2335, %v2333
      %v2350 = vpack.c.bf16 %v2336, %v2334
      %v2351 = vpack.c.bf16 %v2339, %v2337
      %v2352 = vpack.c.bf16 %v2340, %v2338
      %2353 = vst [vmem:[#allocation2 + $0x8] sm:$0xff] %v2349
      %2354 = vst.msk [vmem:[#allocation2 + $0x10] sm:$0xff] %vm1138, %v2350
      %2355 = vst [vmem:[#allocation2 + $0x28] sm:$0xff] %v2351
      %2356 = vst.msk [vmem:[#allocation2 + $0x30] sm:$0xff] %vm1138, %v2352
      %v2357 = vld [vmem:[#allocation2] sm:$0xff]
      %v2358 = vld [vmem:[#allocation2 + $0x8] sm:$0xff]
      %v2359 = vld [vmem:[#allocation2 + $0x10] sm:$0xff]
      %v2360 = vld [vmem:[#allocation2 + $0x20] sm:$0xff]
      %v2361 = vld [vmem:[#allocation2 + $0x28] sm:$0xff]
      %v2362 = vld [vmem:[#allocation2 + $0x30] sm:$0xff]
      %2369 = vrot.lane.b32.xlu0 %v2357, 124
      %v2370 = vpop.permute.xlu0 %2369
      %2371 = vrot.lane.b32.xlu0 %v2358, 124
      %v2372 = vpop.permute.xlu0 %2371
      %2373 = vrot.lane.b32.xlu0 %v2359, 124
      %v2374 = vpop.permute.xlu0 %2373
      %2375 = vrot.lane.b32.xlu0 %v2360, 124
      %v2376 = vpop.permute.xlu0 %2375
      %2377 = vrot.lane.b32.xlu0 %v2361, 124
      %v2378 = vpop.permute.xlu0 %2377
      %2379 = vrot.lane.b32.xlu0 %v2362, 124
      %v2380 = vpop.permute.xlu0 %2379
      %v2381 = vsel %vm1211, %v2370, %v2372
      %v2382 = vsel %vm1211, %v2372, %v2374
      %v2383 = vsel %vm1211, %v2376, %v2378
      %v2384 = vsel %vm1211, %v2378, %v2380
      %2385 = vrot.lane.b32.xlu0 %v2358, 120
      %v2386 = vpop.permute.xlu0 %2385
      %2387 = vrot.lane.b32.xlu0 %v2359, 120
      %v2388 = vpop.permute.xlu0 %2387
      %2389 = vrot.lane.b32.xlu0 %v2361, 120
      %v2390 = vpop.permute.xlu0 %2389
      %2391 = vrot.lane.b32.xlu0 %v2362, 120
      %v2392 = vpop.permute.xlu0 %2391
      %v2393 = vsel %vm1811, %v2386, %v2388
      %v2394 = vsel %vm1811, %v2390, %v2392
      %2395 = vrot.lane.b32.xlu0 %v2358, 116
      %v2396 = vpop.permute.xlu0 %2395
      %2397 = vrot.lane.b32.xlu0 %v2359, 116
      %v2398 = vpop.permute.xlu0 %2397
      %2399 = vrot.lane.b32.xlu0 %v2361, 116
      %v2400 = vpop.permute.xlu0 %2399
      %2401 = vrot.lane.b32.xlu0 %v2362, 116
      %v2402 = vpop.permute.xlu0 %2401
      %vm2403 = vcmask 949248
      %v2404 = vsel %vm2403, %v2396, %v2398
      %v2405 = vsel %vm2403, %v2400, %v2402
      %2406 = vrot.lane.b32.xlu0 %v2358, 112
      %v2407 = vpop.permute.xlu0 %2406
      %2408 = vrot.lane.b32.xlu0 %v2359, 112
      %v2409 = vpop.permute.xlu0 %2408
      %2410 = vrot.lane.b32.xlu0 %v2361, 112
      %v2411 = vpop.permute.xlu0 %2410
      %2412 = vrot.lane.b32.xlu0 %v2362, 112
      %v2413 = vpop.permute.xlu0 %2412
      %vm2414 = vcmask 916480
      %v2415 = vsel %vm2414, %v2407, %v2409
      %v2416 = vsel %vm2414, %v2411, %v2413
      %s2417 = scalar_lea.vmem %s11, 128
      %v2418 = vld [vmem:[%s2417] sm:$0xff]
      %v2419 = vld [vmem:[%s2417 + $0x8] sm:$0xff]
      %v2420 = vld [vmem:[%s2417 + $0x10] sm:$0xff]
      %v2421 = vld [vmem:[%s2417 + $0x18] sm:$0xff]
      %v2422 = vld [vmem:[%s2417 + $0x20] sm:$0xff]
      %v2423 = vld [vmem:[%s2417 + $0x28] sm:$0xff]
      %v2424 = vld [vmem:[%s2417 + $0x30] sm:$0xff]
      %v2425 = vld [vmem:[%s2417 + $0x38] sm:$0xff]
      %s2426 = scalar_lea.vmem %s12, 128
      %v2427 = vld [vmem:[%s2426] sm:$0xff]
      %v2428 = vld [vmem:[%s2426 + $0x8] sm:$0xff]
      %v2429 = vld [vmem:[%s2426 + $0x10] sm:$0xff]
      %v2430 = vld [vmem:[%s2426 + $0x18] sm:$0xff]
      %v2431 = vld [vmem:[%s2426 + $0x20] sm:$0xff]
      %v2432 = vld [vmem:[%s2426 + $0x28] sm:$0xff]
      %v2433 = vld [vmem:[%s2426 + $0x30] sm:$0xff]
      %v2434 = vld [vmem:[%s2426 + $0x38] sm:$0xff]
      %2436 = vset.pattern.permute.xlu0 0
      %2437 = vperm.xlu0 %2436, %v2427
      %v2438 = vpop.permute.xlu0 %2437
      %2441 = vset.pattern.permute.xlu0 0
      %2442 = vperm.xlu0 %2441, %v2428
      %v2443 = vpop.permute.xlu0 %2442
      %2446 = vset.pattern.permute.xlu0 0
      %2447 = vperm.xlu0 %2446, %v2429
      %v2448 = vpop.permute.xlu0 %2447
      %2451 = vset.pattern.permute.xlu0 0
      %2452 = vperm.xlu0 %2451, %v2430
      %v2453 = vpop.permute.xlu0 %2452
      %2456 = vset.pattern.permute.xlu0 0
      %2457 = vperm.xlu0 %2456, %v2431
      %v2458 = vpop.permute.xlu0 %2457
      %2461 = vset.pattern.permute.xlu0 0
      %2462 = vperm.xlu0 %2461, %v2432
      %v2463 = vpop.permute.xlu0 %2462
      %2466 = vset.pattern.permute.xlu0 0
      %2467 = vperm.xlu0 %2466, %v2433
      %v2468 = vpop.permute.xlu0 %2467
      %2471 = vset.pattern.permute.xlu0 0
      %2472 = vperm.xlu0 %2471, %v2434
      %v2473 = vpop.permute.xlu0 %2472
      %v2483 = vunpack.c.l.b16 %v2418
      %v2484 = vunpack.c.h.b16 %v2418
      %v2485 = vunpack.c.l.b16 %v2419
      %v2486 = vunpack.c.h.b16 %v2419
      %v2487 = vunpack.c.l.b16 %v2420
      %v2488 = vunpack.c.h.b16 %v2420
      %v2489 = vunpack.c.l.b16 %v2421
      %v2490 = vunpack.c.h.b16 %v2421
      %v2491 = vunpack.c.l.b16 %v2422
      %v2492 = vunpack.c.h.b16 %v2422
      %v2493 = vunpack.c.l.b16 %v2423
      %v2494 = vunpack.c.h.b16 %v2423
      %v2495 = vunpack.c.l.b16 %v2424
      %v2496 = vunpack.c.h.b16 %v2424
      %v2497 = vunpack.c.l.b16 %v2425
      %v2498 = vunpack.c.h.b16 %v2425
      %v2499 = vpack.c.b16 %v2485, %v2483
      %v2500 = vpack.c.b16 %v2486, %v2484
      %v2501 = vpack.c.b16 %v2489, %v2487
      %v2502 = vpack.c.b16 %v2490, %v2488
      %v2503 = vpack.c.b16 %v2493, %v2491
      %v2504 = vpack.c.b16 %v2494, %v2492
      %v2505 = vpack.c.b16 %v2497, %v2495
      %v2506 = vpack.c.b16 %v2498, %v2496
      %2511 = vrot.lane.b32.xlu0 %v2357, 8
      %v2512 = vpop.permute.xlu0 %2511
      %2513 = vrot.lane.b32.xlu0 %v2358, 8
      %v2514 = vpop.permute.xlu0 %2513
      %2515 = vrot.lane.b32.xlu0 %v2359, 8
      %v2516 = vpop.permute.xlu0 %2515
      %2517 = vrot.lane.b32.xlu0 %v2360, 8
      %v2518 = vpop.permute.xlu0 %2517
      %2519 = vrot.lane.b32.xlu0 %v2361, 8
      %v2520 = vpop.permute.xlu0 %2519
      %2521 = vrot.lane.b32.xlu0 %v2362, 8
      %v2522 = vpop.permute.xlu0 %2521
      %2523 = vrot.lane.b32.xlu0 %v2381, 8
      %v2524 = vpop.permute.xlu0 %2523
      %2525 = vrot.lane.b32.xlu0 %v2382, 8
      %v2526 = vpop.permute.xlu0 %2525
      %2527 = vrot.lane.b32.xlu0 %v2374, 8
      %v2528 = vpop.permute.xlu0 %2527
      %2529 = vrot.lane.b32.xlu0 %v2383, 8
      %v2530 = vpop.permute.xlu0 %2529
      %2531 = vrot.lane.b32.xlu0 %v2384, 8
      %v2532 = vpop.permute.xlu0 %2531
      %2533 = vrot.lane.b32.xlu0 %v2380, 8
      %v2534 = vpop.permute.xlu0 %2533
      %2535 = vrot.lane.b32.xlu0 %v2386, 8
      %v2536 = vpop.permute.xlu0 %2535
      %2537 = vrot.lane.b32.xlu0 %v2393, 8
      %v2538 = vpop.permute.xlu0 %2537
      %2539 = vrot.lane.b32.xlu0 %v2388, 8
      %v2540 = vpop.permute.xlu0 %2539
      %2541 = vrot.lane.b32.xlu0 %v2390, 8
      %v2542 = vpop.permute.xlu0 %2541
      %2543 = vrot.lane.b32.xlu0 %v2394, 8
      %v2544 = vpop.permute.xlu0 %2543
      %2545 = vrot.lane.b32.xlu0 %v2392, 8
      %v2546 = vpop.permute.xlu0 %2545
      %2547 = vrot.lane.b32.xlu0 %v2396, 8
      %v2548 = vpop.permute.xlu0 %2547
      %2549 = vrot.lane.b32.xlu0 %v2404, 8
      %v2550 = vpop.permute.xlu0 %2549
      %2551 = vrot.lane.b32.xlu0 %v2398, 8
      %v2552 = vpop.permute.xlu0 %2551
      %2553 = vrot.lane.b32.xlu0 %v2400, 8
      %v2554 = vpop.permute.xlu0 %2553
      %2555 = vrot.lane.b32.xlu0 %v2405, 8
      %v2556 = vpop.permute.xlu0 %2555
      %2557 = vrot.lane.b32.xlu0 %v2402, 8
      %v2558 = vpop.permute.xlu0 %2557
      %2559 = vrot.lane.b32.xlu0 %v2407, 8
      %v2560 = vpop.permute.xlu0 %2559
      %2561 = vrot.lane.b32.xlu0 %v2415, 8
      %v2562 = vpop.permute.xlu0 %2561
      %2563 = vrot.lane.b32.xlu0 %v2409, 8
      %v2564 = vpop.permute.xlu0 %2563
      %2565 = vrot.lane.b32.xlu0 %v2411, 8
      %v2566 = vpop.permute.xlu0 %2565
      %2567 = vrot.lane.b32.xlu0 %v2416, 8
      %v2568 = vpop.permute.xlu0 %2567
      %2569 = vrot.lane.b32.xlu0 %v2413, 8
      %v2570 = vpop.permute.xlu0 %2569
      %vm2571 = vcmask 64512
      %v2572 = vsel %vm2571, %v2512, %v2514
      %v2573 = vsel %vm2571, %v2514, %v2516
      %v2574 = vsel %vm2571, %v2518, %v2520
      %v2575 = vsel %vm2571, %v2520, %v2522
      %v2576 = vsel %vm2571, %v2524, %v2526
      %v2577 = vsel %vm2571, %v2526, %v2528
      %v2578 = vsel %vm2571, %v2530, %v2532
      %v2579 = vsel %vm2571, %v2532, %v2534
      %v2580 = vsel %vm2571, %v2536, %v2538
      %v2581 = vsel %vm2571, %v2538, %v2540
      %v2582 = vsel %vm2571, %v2542, %v2544
      %v2583 = vsel %vm2571, %v2544, %v2546
      %v2584 = vsel %vm2571, %v2548, %v2550
      %v2585 = vsel %vm2571, %v2550, %v2552
      %v2586 = vsel %vm2571, %v2554, %v2556
      %v2587 = vsel %vm2571, %v2556, %v2558
      %v2588 = vsel %vm2571, %v2560, %v2562
      %v2589 = vsel %vm2571, %v2562, %v2564
      %v2590 = vsel %vm2571, %v2566, %v2568
      %v2591 = vsel %vm2571, %v2568, %v2570
      %v2613 = vsel %vm1407, %v2500, 0
      %v2616 = vsel %vm1407, %v2502, 0
      %v2619 = vsel %vm1407, %v2504, 0
      %v2622 = vsel %vm1407, %v2506, 0
      %2624 = vmatprep.subr.bf16.mxu0 %v2573
      %2625 = vmatpush1.bf16.msra.mxu0 %v2572
      %2626 = vmatprep.subr.bf16.mxu0 %v2575
      %2627 = vmatpush1.bf16.msra.mxu0 %v2574
      %2628 = vmatprep.subr.bf16.mxu0 %v2577
      %2629 = vmatpush1.bf16.msra.mxu0 %v2576
      %2630 = vmatprep.subr.bf16.mxu0 %v2579
      %2631 = vmatpush1.bf16.msra.mxu0 %v2578
      %2632 = vmatprep.subr.bf16.mxu0 %v2581
      %2633 = vmatpush1.bf16.msra.mxu0 %v2580
      %2634 = vmatprep.subr.bf16.mxu0 %v2583
      %2635 = vmatpush1.bf16.msra.mxu0 %v2582
      %2636 = vmatprep.subr.bf16.mxu0 %v2585
      %2637 = vmatpush1.bf16.msra.mxu0 %v2584
      %2638 = vmatprep.subr.bf16.mxu0 %v2587
      %2639 = vmatpush1.bf16.msra.mxu0 %v2586
      %2640 = vmatprep.subr.bf16.mxu0 %v2589
      %2641 = vmatpush1.bf16.msra.mxu0 %v2588
      %2642 = vmatprep.subr.bf16.mxu0 %v2591
      %2643 = vmatpush1.bf16.msra.mxu0 %v2590
      %2644 = vmatprep.subr.bf16.mxu0 0
      %2645 = vmatpush1.bf16.msra.mxu0 0
      %2646 = vmatprep.subr.bf16.mxu0 0
      %2647 = vmatpush1.bf16.msra.mxu0 0
      %2648 = vmatprep.subr.bf16.mxu0 0
      %2649 = vmatpush1.bf16.msra.mxu0 0
      %2650 = vmatprep.subr.bf16.mxu0 0
      %2651 = vmatpush1.bf16.msra.mxu0 0
      %2652 = vmatprep.subr.bf16.mxu0 0
      %2653 = vmatpush1.bf16.msra.mxu0 0
      %2654 = vmatprep.subr.bf16.mxu0 0
      %2655 = vmatpush1.bf16.msra.mxu0 0
      %2656 = vmatprep.mubr.bf16.mxu0 %v2613
      %2657 = vmatmul.mubr.bf16.gmra.mrb[0].mxu0 %v2499
      %v2658 = vpop.f32.mrb[0].mxu0
      %v2659 = vadd.f32 %v2438, %v2658
      %v2660 = vpop.f32.mrb[0].mxu0
      %v2661 = vadd.f32 %v2438, %v2660
      %v2662 = vpop.f32.mrb[0].mxu0
      %v2663 = vadd.f32 %v2443, %v2662
      %v2664 = vpop.f32.mrb[0].mxu0
      %v2665 = vadd.f32 %v2443, %v2664
      %2666 = vmatprep.mubr.bf16.mxu0 %v2616
      %2667 = vmatmul.mubr.bf16.gmra.mrb[0].mxu0 %v2501
      %v2668 = vpop.f32.mrb[0].mxu0
      %v2669 = vadd.f32 %v2448, %v2668
      %v2670 = vpop.f32.mrb[0].mxu0
      %v2671 = vadd.f32 %v2448, %v2670
      %v2672 = vpop.f32.mrb[0].mxu0
      %v2673 = vadd.f32 %v2453, %v2672
      %v2674 = vpop.f32.mrb[0].mxu0
      %v2675 = vadd.f32 %v2453, %v2674
      %2676 = vmatprep.mubr.bf16.mxu0 %v2619
      %2677 = vmatmul.mubr.bf16.gmra.mrb[0].mxu0 %v2503
      %v2678 = vpop.f32.mrb[0].mxu0
      %v2679 = vadd.f32 %v2458, %v2678
      %v2680 = vpop.f32.mrb[0].mxu0
      %v2681 = vadd.f32 %v2458, %v2680
      %v2682 = vpop.f32.mrb[0].mxu0
      %v2683 = vadd.f32 %v2463, %v2682
      %v2684 = vpop.f32.mrb[0].mxu0
      %v2685 = vadd.f32 %v2463, %v2684
      %2686 = vmatprep.mubr.bf16.mxu0 %v2622
      %2687 = vmatmul.mubr.bf16.gmra.mrb[0].mxu0 %v2505
      %v2688 = vpop.f32.mrb[0].mxu0
      %v2689 = vadd.f32 %v2468, %v2688
      %v2690 = vpop.f32.mrb[0].mxu0
      %v2691 = vadd.f32 %v2468, %v2690
      %v2692 = vpop.f32.mrb[0].mxu0
      %v2693 = vadd.f32 %v2473, %v2692
      %v2694 = vpop.f32.mrb[0].mxu0
      %v2695 = vadd.f32 %v2473, %v2694
      %2696 = vdwg.mxu0
      %v2697 = vtanh.pop %v2659
      %v2698 = vtanh.pop %v2661
      %v2699 = vtanh.pop %v2663
      %v2700 = vtanh.pop %v2665
      %v2701 = vtanh.pop %v2669
      %v2702 = vtanh.pop %v2671
      %v2703 = vtanh.pop %v2673
      %v2704 = vtanh.pop %v2675
      %v2705 = vxor.u32 %v2679, 2147483648
      %v2706 = vxor.u32 %v2681, 2147483648
      %v2707 = vxor.u32 %v2683, 2147483648
      %v2708 = vxor.u32 %v2685, 2147483648
      %v2709 = vxor.u32 %v2689, 2147483648
      %v2710 = vxor.u32 %v2691, 2147483648
      %v2711 = vxor.u32 %v2693, 2147483648
      %v2712 = vxor.u32 %v2695, 2147483648
      %v2713 = vmul.f32 %v2705, 1.442695
      %v2714 = vpow.pop %v2713
      %v2715 = vmul.f32 %v2706, 1.442695
      %v2716 = vpow.pop %v2715
      %v2717 = vmul.f32 %v2707, 1.442695
      %v2718 = vpow.pop %v2717
      %v2719 = vmul.f32 %v2708, 1.442695
      %v2720 = vpow.pop %v2719
      %v2721 = vmul.f32 %v2709, 1.442695
      %v2722 = vpow.pop %v2721
      %v2723 = vmul.f32 %v2710, 1.442695
      %v2724 = vpow.pop %v2723
      %v2725 = vmul.f32 %v2711, 1.442695
      %v2726 = vpow.pop %v2725
      %v2727 = vmul.f32 %v2712, 1.442695
      %v2728 = vpow.pop %v2727
      %v2729 = vadd.f32 %v2714, 1.0
      %v2730 = vadd.f32 %v2716, 1.0
      %v2731 = vadd.f32 %v2718, 1.0
      %v2732 = vadd.f32 %v2720, 1.0
      %v2733 = vadd.f32 %v2722, 1.0
      %v2734 = vadd.f32 %v2724, 1.0
      %v2735 = vadd.f32 %v2726, 1.0
      %v2736 = vadd.f32 %v2728, 1.0
      %v2737 = vrcp.pop %v2729
      %v2738 = vmul.f32 1.0, %v2737
      %v2739 = vrcp.pop %v2730
      %v2740 = vmul.f32 1.0, %v2739
      %v2741 = vrcp.pop %v2731
      %v2742 = vmul.f32 1.0, %v2741
      %v2743 = vrcp.pop %v2732
      %v2744 = vmul.f32 1.0, %v2743
      %v2745 = vrcp.pop %v2733
      %v2746 = vmul.f32 1.0, %v2745
      %v2747 = vrcp.pop %v2734
      %v2748 = vmul.f32 1.0, %v2747
      %v2749 = vrcp.pop %v2735
      %v2750 = vmul.f32 1.0, %v2749
      %v2751 = vrcp.pop %v2736
      %v2752 = vmul.f32 1.0, %v2751
      %v2753 = vmul.f32 %v2697, %v2738
      %v2754 = vmul.f32 %v2698, %v2740
      %v2755 = vmul.f32 %v2699, %v2742
      %v2756 = vmul.f32 %v2700, %v2744
      %v2757 = vmul.f32 %v2701, %v2746
      %v2758 = vmul.f32 %v2702, %v2748
      %v2759 = vmul.f32 %v2703, %v2750
      %v2760 = vmul.f32 %v2704, %v2752
      %v2761 = vpack.c.bf16 %v2755, %v2753
      %v2762 = vpack.c.bf16 %v2756, %v2754
      %v2763 = vpack.c.bf16 %v2759, %v2757
      %v2764 = vpack.c.bf16 %v2760, %v2758
      %s2765 = scalar_lea.vmem %s13, 64
      %v2766 = vld [vmem:[%s2765 + $0x10] sm:$0xf]
      %v2767 = vld [vmem:[%s2765 + $0x14] sm:$0xf]
      %v2768 = vld [vmem:[%s2765 + $0x18] sm:$0xf]
      %v2769 = vld [vmem:[%s2765 + $0x1c] sm:$0xf]
      %s2770 = scalar_lea.vmem %s14, 128
      %v2771 = vld [vmem:[%s2770 + $0x20] sm:$0xff]
      %v2772 = vld [vmem:[%s2770 + $0x28] sm:$0xff]
      %v2773 = vld [vmem:[%s2770 + $0x30] sm:$0xff]
      %v2774 = vld [vmem:[%s2770 + $0x38] sm:$0xff]
      %2776 = vset.pattern.permute.xlu0 0
      %2777 = vperm.xlu0 %2776, %v2771
      %v2778 = vpop.permute.xlu0 %2777
      %2781 = vset.pattern.permute.xlu0 0
      %2782 = vperm.xlu0 %2781, %v2772
      %v2783 = vpop.permute.xlu0 %2782
      %2786 = vset.pattern.permute.xlu0 0
      %2787 = vperm.xlu0 %2786, %v2773
      %v2788 = vpop.permute.xlu0 %2787
      %2791 = vset.pattern.permute.xlu0 0
      %2792 = vperm.xlu0 %2791, %v2774
      %v2793 = vpop.permute.xlu0 %2792
      %v2799 = vunpack.c.l.b16 %v2766
      %v2800 = vunpack.c.l.b16 %v2767
      %v2801 = vunpack.c.l.b16 %v2768
      %v2802 = vunpack.c.l.b16 %v2769
      %v2803 = vpack.c.b16 %v2800, %v2799
      %v2804 = vpack.c.b16 %v2802, %v2801
      %v2806 = vsel %vm1407, %v2803, 0
      %v2809 = vsel %vm1407, %v2804, 0
      %2811 = vmatprep.subr.bf16.mxu0 %v2762
      %2812 = vmatpush1.bf16.msra.mxu0 %v2761
      %2813 = vmatprep.subr.bf16.mxu0 %v2764
      %2814 = vmatpush1.bf16.msra.mxu0 %v2763
      %2815 = vmatprep.subr.bf16.mxu0 0
      %2816 = vmatpush1.bf16.msra.mxu0 0
      %2817 = vmatprep.subr.bf16.mxu0 0
      %2818 = vmatpush1.bf16.msra.mxu0 0
      %2819 = vmatprep.subr.bf16.mxu0 0
      %2820 = vmatpush1.bf16.msra.mxu0 0
      %2821 = vmatprep.subr.bf16.mxu0 0
      %2822 = vmatpush1.bf16.msra.mxu0 0
      %2823 = vmatprep.subr.bf16.mxu0 0
      %2824 = vmatpush1.bf16.msra.mxu0 0
      %2825 = vmatprep.subr.bf16.mxu0 0
      %2826 = vmatpush1.bf16.msra.mxu0 0
      %2827 = vmatprep.subr.bf16.mxu0 0
      %2828 = vmatpush1.bf16.msra.mxu0 0
      %2829 = vmatprep.subr.bf16.mxu0 0
      %2830 = vmatpush1.bf16.msra.mxu0 0
      %2831 = vmatprep.subr.bf16.mxu0 0
      %2832 = vmatpush1.bf16.msra.mxu0 0
      %2833 = vmatprep.subr.bf16.mxu0 0
      %2834 = vmatpush1.bf16.msra.mxu0 0
      %2835 = vmatprep.subr.bf16.mxu0 0
      %2836 = vmatpush1.bf16.msra.mxu0 0
      %2837 = vmatprep.subr.bf16.mxu0 0
      %2838 = vmatpush1.bf16.msra.mxu0 0
      %2839 = vmatprep.subr.bf16.mxu0 0
      %2840 = vmatpush1.bf16.msra.mxu0 0
      %2841 = vmatprep.subr.bf16.mxu0 0
      %2842 = vmatpush1.bf16.msra.mxu0 0
      %2843 = vmatprep.mubr.bf16.mxu0 0
      %2844 = vmatmul.mubr.bf16.gmra.mrb[0].mxu0 %v2806
      %v2845 = vpop.f32.mrb[0].mxu0
      %v2846 = vadd.f32 %v2778, %v2845
      %v2847 = vpop.f32.mrb[0].mxu0
      %v2848 = vadd.f32 %v2778, %v2847
      %v2849 = vpop.f32.mrb[0].mxu0
      %v2850 = vadd.f32 %v2783, %v2849
      %v2851 = vpop.f32.mrb[0].mxu0
      %v2852 = vadd.f32 %v2783, %v2851
      %2853 = vmatprep.mubr.bf16.mxu0 0
      %2854 = vmatmul.mubr.bf16.gmra.mrb[0].mxu0 %v2809
      %v2855 = vpop.f32.mrb[0].mxu0
      %v2856 = vadd.f32 %v2788, %v2855
      %v2857 = vpop.f32.mrb[0].mxu0
      %v2858 = vadd.f32 %v2788, %v2857
      %v2859 = vpop.f32.mrb[0].mxu0
      %v2860 = vadd.f32 %v2793, %v2859
      %v2861 = vpop.f32.mrb[0].mxu0
      %v2862 = vadd.f32 %v2793, %v2861
      %2863 = vdwg.mxu0
      %v2864 = vadd.f32 %v2341, %v2846
      %v2865 = vadd.f32 %v2342, %v2848
      %v2866 = vadd.f32 %v2343, %v2850
      %v2867 = vadd.f32 %v2344, %v2852
      %v2868 = vadd.f32 %v2345, %v2856
      %v2869 = vadd.f32 %v2346, %v2858
      %v2870 = vadd.f32 %v2347, %v2860
      %v2871 = vadd.f32 %v2348, %v2862
      %v2872 = vmul.f32 %v2864, %v884
      %v2873 = vmul.f32 %v2865, %v884
      %v2874 = vmul.f32 %v2866, %v884
      %v2875 = vmul.f32 %v2867, %v884
      %v2876 = vmul.f32 %v2868, %v884
      %v2877 = vmul.f32 %v2869, %v884
      %v2878 = vmul.f32 %v2870, %v884
      %v2879 = vmul.f32 %v2871, %v884
      %v2880 = vld [vmem:[%s15] sm:$0xff]
      %v2881 = vld [vmem:[%s16] sm:$0xff]
      %2883 = vset.pattern.permute.xlu0 0
      %2884 = vperm.xlu0 %2883, %v2881
      %v2885 = vpop.permute.xlu0 %2884
      %2895 = vrot.lane.b32.xlu0 %v2872, 114
      %v2896 = vpop.permute.xlu0 %2895
      %2897 = vrot.lane.b32.xlu0 %v2873, 114
      %v2898 = vpop.permute.xlu0 %2897
      %2899 = vrot.lane.b32.xlu0 %v2874, 114
      %v2900 = vpop.permute.xlu0 %2899
      %2901 = vrot.lane.b32.xlu0 %v2875, 114
      %v2902 = vpop.permute.xlu0 %2901
      %2903 = vrot.lane.b32.xlu0 %v2876, 114
      %v2904 = vpop.permute.xlu0 %2903
      %2905 = vrot.lane.b32.xlu0 %v2877, 114
      %v2906 = vpop.permute.xlu0 %2905
      %2907 = vrot.lane.b32.xlu0 %v2878, 114
      %v2908 = vpop.permute.xlu0 %2907
      %2909 = vrot.lane.b32.xlu0 %v2879, 114
      %v2910 = vpop.permute.xlu0 %2909
      %vm2911 = vcmask 932864
      %v2912 = vsel %vm2911, %v2896, %v2898
      %v2913 = vsel %vm2911, %v2900, %v2902
      %v2914 = vsel %vm2911, %v2904, %v2906
      %v2915 = vsel %vm2911, %v2908, %v2910
      %v2921 = vsel %vm1407, %v2880, 0
      %2923 = vmatprep.subr.mxu0 0.0
      %2924 = vmatpush1.msra.mxu0 %v2912
      %2925 = vmatprep.subr.mxu0 0.0
      %2926 = vmatpush1.msra.mxu0 %v2913
      %2927 = vmatprep.subr.mxu0 0.0
      %2928 = vmatpush1.msra.mxu0 %v2914
      %2929 = vmatprep.subr.mxu0 0.0
      %2930 = vmatpush1.msra.mxu0 %v2915
      %2931 = vmatprep.subr.mxu0 0.0
      %2932 = vmatpush1.msra.mxu0 0.0
      %2933 = vmatprep.subr.mxu0 0.0
      %2934 = vmatpush1.msra.mxu0 0.0
      %2935 = vmatprep.subr.mxu0 0.0
      %2936 = vmatpush1.msra.mxu0 0.0
      %2937 = vmatprep.subr.mxu0 0.0
      %2938 = vmatpush1.msra.mxu0 0.0
      %2939 = vmatprep.subr.mxu0 0.0
      %2940 = vmatpush1.msra.mxu0 0.0
      %2941 = vmatprep.subr.mxu0 0.0
      %2942 = vmatpush1.msra.mxu0 0.0
      %2943 = vmatprep.subr.mxu0 0.0
      %2944 = vmatpush1.msra.mxu0 0.0
      %2945 = vmatprep.subr.mxu0 0.0
      %2946 = vmatpush1.msra.mxu0 0.0
      %2947 = vmatprep.subr.mxu0 0.0
      %2948 = vmatpush1.msra.mxu0 0.0
      %2949 = vmatprep.subr.mxu0 0.0
      %2950 = vmatpush1.msra.mxu0 0.0
      %2951 = vmatprep.subr.mxu0 0.0
      %2952 = vmatpush1.msra.mxu0 0.0
      %2953 = vmatprep.subr.mxu0 0.0
      %2954 = vmatpush1.msra.mxu0 0.0
      %2955 = vmatprep.subr.mxu0 0.0
      %2956 = vmatpush1.msra.mxu0 0.0
      %2957 = vmatprep.subr.mxu0 0.0
      %2958 = vmatpush1.msra.mxu0 0.0
      %2959 = vmatprep.subr.mxu0 0.0
      %2960 = vmatpush1.msra.mxu0 0.0
      %2961 = vmatprep.subr.mxu0 0.0
      %2962 = vmatpush1.msra.mxu0 0.0
      %2963 = vmatprep.subr.mxu0 0.0
      %2964 = vmatpush1.msra.mxu0 0.0
      %2965 = vmatprep.subr.mxu0 0.0
      %2966 = vmatpush1.msra.mxu0 0.0
      %2967 = vmatprep.subr.mxu0 0.0
      %2968 = vmatpush1.msra.mxu0 0.0
      %2969 = vmatprep.subr.mxu0 0.0
      %2970 = vmatpush1.msra.mxu0 0.0
      %2971 = vmatprep.subr.mxu0 0.0
      %2972 = vmatpush1.msra.mxu0 0.0
      %2973 = vmatprep.subr.mxu0 0.0
      %2974 = vmatpush1.msra.mxu0 0.0
      %2975 = vmatprep.subr.mxu0 0.0
      %2976 = vmatpush1.msra.mxu0 0.0
      %2977 = vmatprep.subr.mxu0 0.0
      %2978 = vmatpush1.msra.mxu0 0.0
      %2979 = vmatprep.subr.mxu0 0.0
      %2980 = vmatpush1.msra.mxu0 0.0
      %2981 = vmatprep.subr.mxu0 0.0
      %2982 = vmatpush1.msra.mxu0 0.0
      %2983 = vmatprep.subr.mxu0 0.0
      %2984 = vmatpush1.msra.mxu0 0.0
      %2985 = vmatprep.subr.mxu0 0.0
      %2986 = vmatpush1.msra.mxu0 0.0
      %2987 = vmatprep.mubr.f32.mxu0 0.0
      %2988 = vmatmul.mubr.f32.gmra.mrb[0].mxu0 %v2921
      %v2989 = vpop.f32.mrb[0].mxu0
      %v2990 = vadd.f32 %v2885, %v2989
      %v2991 = vpop.f32.mrb[0].mxu0
      %2992 = vdwg.mxu0
      %v2993 = vmul.f32 %v2990, 1.442695
      %v2994 = vpow.pop %v2993
      %2997 = vrot.lane.b32.xlu0 %v1018, 114
      %v2998 = vpop.permute.xlu0 %2997
      %2999 = vrot.lane.b32.xlu0 %v1019, 114
      %v3000 = vpop.permute.xlu0 %2999
      %v3001 = vsel %vm2911, %v2998, %v3000
      %v3003 = vmul.f32 %v2994, %v3001
      %v3005 = vrot.slane %v3003, 4
      %v3007 = vadd.f32 %v2990, %v3005
      %v3009 = vmul.f32 %v3007, %v882
      %v3011 = vrot.slane %v3009, 4
      %3012 = vrot.lane.b32.xlu0 %v3011, 14
      %v3013 = vpop.permute.xlu0 %3012
      %vm3015 = vcmask 1043456
      %v3016 = vsel %vm3015, %v1018, %v3013
      %v3017 = vsel %vm3015, %v1019, %v3013
      %3020 = vrot.lane.b32.xlu0 %v3016, 114
      %v3021 = vpop.permute.xlu0 %3020
      %3022 = vrot.lane.b32.xlu0 %v3017, 114
      %v3023 = vpop.permute.xlu0 %3022
      %v3024 = vsel %vm2911, %v3021, %v3023
      %3026 = vst [vmem:[%s848] sm:$0xff] %v3024
      %v3027 = vmul.f32 %v2990, %v882
      %v3029 = vrot.slane %v3027, 4
      %v3031 = vsel %vm3015, %v3029, 0.0
      %3032 = vadd.xlane.f32.xlu0 %v3031
      %v3033 = vpop.xlane.xlu0 %3032
      %v3034 = vrot.slane %v3033, 4
      %v3035 = vadd.f32 %v3033, %v3034
      %v3036 = vrot.slane %v3035, 2
      %v3037 = vadd.f32 %v3035, %v3036
      %v3038 = vrot.slane %v3037, 1
      %v3039 = vadd.f32 %v3037, %v3038
      %s3040 = vtos %v3039
      %v3041 = vstv %s3040
      %vm3042 = vcmask 0
      %3043 = vst.msk [vmem:[%s855] sm:$0x1] %vm3042, %v3041
      %p3044 = scmp.lt.s32.totalorder %s34, 1
      %s3045 = scalar_select %p3044, %s34, 1
      %p3046 = scmp.lt.s32.totalorder %s35, 1
      %s3047 = scalar_select %p3046, %s35, 1
      %s3048 = smul.addr %s3045, 2
      %s3049 = sadd.s32 %s3047, %s3048
      %s3050 = smul.addr %s3049, 8
      %s3051 = scalar_lea.vmem %s17, %s3050
      %p3052 = scmp.lt.s32.totalorder %s34, 1
      %s3053 = scalar_select %p3052, %s34, 1
      %p3054 = scmp.lt.s32.totalorder %s35, 1
      %s3055 = scalar_select %p3054, %s35, 1
      %s3056 = smul.addr %s3053, 2
      %s3057 = sadd.s32 %s3055, %s3056
      %s3058 = scalar_lea.vmem %s18, %s3057
      // Predicated region
      $region89: #{_lambda_.2} parent=87 // pred_check
        %p3059 = pneg %p485
      $region90: #{_lambda_.2} parent=87 // pred_check_branch
        %3061 = sbr.rel (%p3059) target = $region92
      $region91: #{_lambda_.2} parent=87 // pred_region
        _
      $region92: #{_lambda_.2} parent=87 // pred_fallthru
        _
      // Predicated region
      $region93: #{_lambda_.2} parent=87 // pred_check
        %p3062 = pneg %p513
      $region94: #{_lambda_.2} parent=87 // pred_check_branch
        %3064 = sbr.rel (%p3062) target = $region96
      $region95: #{_lambda_.2} parent=87 // pred_region
        _
      $region96: #{_lambda_.2} parent=87 // pred_fallthru
        _
    $region88: #{_lambda_.2} parent=5 // pred_fallthru
      _
    %p3065 = scmp.le.s32.totalorder 2, %s25
    // Predicated region
    $region97: #{_lambda_.2} parent=5 // pred_check
      %p3066 = pneg %p3065
    $region98: #{_lambda_.2} parent=5 // pred_check_branch
      %3068 = sbr.rel (%p3066) target = $region100
    $region99: #{_lambda_.2} parent=5 // pred_region
      %s3069 = ssub.s32 %s25, 2
      // Predicated region
      $region101: #{_lambda_.2} parent=99 // pred_check
        %p3070 = pneg %p491
      $region102: #{_lambda_.2} parent=99 // pred_check_branch
        %3072 = sbr.rel (%p3070) target = $region104
      $region103: #{_lambda_.2} parent=99 // pred_region
        %p3073 = scmp.lt.s32.totalorder %s36, 1
        %s3074 = scalar_select %p3073, %s36, 1
        %p3075 = scmp.lt.s32.totalorder %s37, 1
        %s3076 = scalar_select %p3075, %s37, 1
        %s3077 = smul.addr %s3074, 2
        %s3078 = sadd.s32 %s3076, %s3077
        %s3079 = smul.addr %s3078, 8
        %s3080 = scalar_lea.vmem %s17, %s3079
      $region104: #{_lambda_.2} parent=99 // pred_fallthru
        _
      // Predicated region
      $region105: #{_lambda_.2} parent=99 // pred_check
        %p3081 = pneg %p519
      $region106: #{_lambda_.2} parent=99 // pred_check_branch
        %3083 = sbr.rel (%p3081) target = $region108
      $region107: #{_lambda_.2} parent=99 // pred_region
        %p3084 = scmp.lt.s32.totalorder %s36, 1
        %s3085 = scalar_select %p3084, %s36, 1
        %p3086 = scmp.lt.s32.totalorder %s37, 1
        %s3087 = scalar_select %p3086, %s37, 1
        %s3088 = smul.addr %s3085, 2
        %s3089 = sadd.s32 %s3087, %s3088
        %s3090 = scalar_lea.vmem %s18, %s3089
      $region108: #{_lambda_.2} parent=99 // pred_fallthru
        _
    $region100: #{_lambda_.2} parent=5 // pred_fallthru
      _
  $region6: #{_lambda_.2} parent=0 // loop_footer
    %s29 = sadd.s32 1, %s25
  $region7: #{_lambda_.2} parent=0 // loop_footer_branch
    %24 = sbr.rel target = $region3
  $region8: #{_lambda_.2} parent=0 // loop_exit
    _

</llo_original>
